<compile_context>
chip_gen: v5e
topology: v5e:2x2
jax: 0.10.0
libtpu: 0.0.40
codegen_flags: <defaults>
</compile_context>

<pallas_src>
import functools

import jax
import jax.numpy as jnp
from jax.experimental import pallas as pl
from jax.experimental.pallas import tpu as pltpu

LANE = 128


def _round_up(x, m):
    return (x + m - 1) // m * m


# --------------------------- fused ResBlock kernel ---------------------------

def _resblock_kernel(x_ref, col_ref, g1_ref, b1_ref, g2_ref, b2_ref, m_ref,
                     w1_ref, w2_ref, o_ref, pad_ref, acc_ref, *,
                     H, W, inv_count):
    """Whole ResBlock for one sample (channels-last, lane-padded).

    x_ref   : (1, HW, C_pad)   f32  input activations (also the shortcut)
    col_ref : (HW, 1)          i32  column index of each flattened output row
    g*/b*   : (1, C_pad)       f32  GroupNorm affine params (0 in pad lanes)
    m_ref   : (C_pad, C_pad)   f32  group-membership matrix
    w*_ref  : (9, C_pad, C_pad) bf16 conv weights, tap-major (kh*3+kw, Cin, Cout)
    o_ref   : (1, HW, C_pad)   f32  block output
    pad_ref : (ROWS, C_pad)    bf16 flat zero-bordered conv-input scratch
    acc_ref : (HW, C_pad)      f32  conv accumulator / conv1 output scratch
    """
    HW = H * W
    PAD = W + 1                          # halo rows above / below the interior
    ROWS = pad_ref.shape[0]
    C_pad = pad_ref.shape[1]
    cdt = pad_ref.dtype

    # Column-edge masks: kill the cross-row wrap of the flattened tap slices.
    col = col_ref[...]                   # (HW, 1) int32
    mask_l = col >= 1                    # reading column j-1 is valid
    mask_r = col <= W - 2                # reading column j+1 is valid

    def gn_stats(v):
        """Two-pass (subtract-mean) GroupNorm statistics in f32."""
        ch_sum = jnp.sum(v, axis=0, keepdims=True)                       # (1, C_pad)
        mean = jnp.dot(ch_sum, m_ref[...],
                       preferred_element_type=jnp.float32) * inv_count
        d = v - mean
        ch_sq = jnp.sum(d * d, axis=0, keepdims=True)
        var = jnp.dot(ch_sq, m_ref[...],
                      preferred_element_type=jnp.float32) * inv_count
        return mean, jax.lax.rsqrt(var + 1e-5)

    def store_norm_relu(v, gamma, beta):
        """GroupNorm + ReLU -> bf16, written into the scratch interior."""
        mean, inv = gn_stats(v)
        scale = inv * gamma
        shift = beta - mean * scale
        y = jnp.maximum(v * scale + shift, 0.0)
        pad_ref[pl.ds(PAD, HW), :] = y.astype(cdt)

    def conv_taps(w_ref):
        """Accumulate all 9 3x3 taps via contiguous slab slices (MXU, f32 acc)."""
        for kh in range(3):
            for kw in range(3):
                start = PAD + (kh - 1) * W + (kw - 1)      # static offset
                lhs = pad_ref[pl.ds(start, HW), :]         # contiguous (HW, C_pad)
                if kw == 0:
                    lhs = jnp.where(mask_l, lhs, jnp.zeros_like(lhs))
                elif kw == 2:
                    lhs = jnp.where(mask_r, lhs, jnp.zeros_like(lhs))
                acc_ref[...] += jnp.dot(lhs, w_ref[kh * 3 + kw],
                                        preferred_element_type=jnp.float32)

    # Zero the halo once per sample (the interior is fully overwritten below).
    pad_ref[pl.ds(0, PAD), :] = jnp.zeros((PAD, C_pad), cdt)
    pad_ref[pl.ds(PAD + HW, ROWS - PAD - HW), :] = jnp.zeros(
        (ROWS - PAD - HW, C_pad), cdt)

    # ---- norm1 -> relu -> conv1 (result stays in the f32 VMEM accumulator) ----
    store_norm_relu(x_ref[0].astype(jnp.float32), g1_ref[...], b1_ref[...])
    acc_ref[...] = jnp.zeros_like(acc_ref)
    conv_taps(w1_ref)

    # ---- norm2 -> relu -> conv2 (+ shortcut fused into the accumulator init) ----
    store_norm_relu(acc_ref[...], g2_ref[...], b2_ref[...])
    acc_ref[...] = x_ref[0].astype(jnp.float32)            # shortcut
    conv_taps(w2_ref)

    o_ref[0] = acc_ref[...].astype(o_ref.dtype)


# --------------------------- wrapper ------------------------------------------

def resblock_forward(x, params):
    """ResBlock.forward with stride=1, downsample=None (shortcut = x). NCHW I/O."""
    N, C, H, W = x.shape
    G = min(32, C)
    if C % G != 0:
        raise ValueError(f"GroupNorm needs C divisible by min(32, C); got C={C}")
    gs = C // G
    C_pad = _round_up(C, LANE)
    HW = H * W
    ROWS = _round_up(HW + 2 * (W + 1), 16)

    # ---- parameter prep (tiny, fused by XLA under jit) ----
    def pad_vec(v):
        return jnp.pad(v.astype(jnp.float32), (0, C_pad - C)).reshape(1, C_pad)

    def prep_w(w):  # (Cout, Cin, 3, 3) -> (9, C_pad, C_pad) bf16, tap-major
        wt = jnp.transpose(w, (2, 3, 1, 0)).reshape(9, C, C)       # (tap, Cin, Cout)
        wt = jnp.pad(wt, ((0, 0), (0, C_pad - C), (0, C_pad - C)))
        return wt.astype(jnp.bfloat16)

    cidx = jnp.arange(C_pad)
    valid = cidx < C
    grp = cidx // gs
    member = ((grp[:, None] == grp[None, :])
              & valid[:, None] & valid[None, :]).astype(jnp.float32)

    gamma1, beta1 = pad_vec(params["gamma1"]), pad_vec(params["beta1"])
    gamma2, beta2 = pad_vec(params["gamma2"]), pad_vec(params["beta2"])
    w1, w2 = prep_w(params["w1"]), prep_w(params["w2"])
    colv = (jnp.arange(HW, dtype=jnp.int32) % W).reshape(HW, 1)

    # ---- single layout change at the block boundary: NCHW -> lane-padded NHWC ----
    x_flat = jnp.pad(jnp.transpose(x, (0, 2, 3, 1)).astype(jnp.float32),
                     ((0, 0), (0, 0), (0, 0), (0, C_pad - C))).reshape(N, HW, C_pad)

    kernel = functools.partial(_resblock_kernel, H=H, W=W,
                               inv_count=1.0 / (gs * HW))

    out_flat = pl.pallas_call(
        kernel,
        out_shape=jax.ShapeDtypeStruct((N, HW, C_pad), jnp.float32),
        grid=(N,),
        in_specs=[
            pl.BlockSpec((1, HW, C_pad), lambda n: (n, 0, 0)),       # x / shortcut
            pl.BlockSpec((HW, 1), lambda n: (0, 0)),                 # column index
            pl.BlockSpec((1, C_pad), lambda n: (0, 0)),              # gamma1
            pl.BlockSpec((1, C_pad), lambda n: (0, 0)),              # beta1
            pl.BlockSpec((1, C_pad), lambda n: (0, 0)),              # gamma2
            pl.BlockSpec((1, C_pad), lambda n: (0, 0)),              # beta2
            pl.BlockSpec((C_pad, C_pad), lambda n: (0, 0)),          # group membership
            pl.BlockSpec((9, C_pad, C_pad), lambda n: (0, 0, 0)),    # w1 (tap-major)
            pl.BlockSpec((9, C_pad, C_pad), lambda n: (0, 0, 0)),    # w2 (tap-major)
        ],
        out_specs=pl.BlockSpec((1, HW, C_pad), lambda n: (n, 0, 0)),
        scratch_shapes=[
            pltpu.VMEM((ROWS, C_pad), jnp.bfloat16),   # zero-bordered conv input slab
            pltpu.VMEM((HW, C_pad), jnp.float32),      # conv accumulator / conv1 out
        ],
        compiler_params=pltpu.CompilerParams(dimension_semantics=("parallel",)),
    )(x_flat, colv, gamma1, beta1, gamma2, beta2, member, w1, w2)

    out = out_flat.reshape(N, H, W, C_pad)[..., :C]
    return jnp.transpose(out, (0, 3, 1, 2)).astype(x.dtype)


# --------------------------- pure-JAX reference --------------------------------

def _resblock_ref(x, params):
    def gn(x, gamma, beta):
        N, C, H, W = x.shape
        G = min(32, C)
        xr = x.reshape(N, G, C // G, H, W)
        mean = xr.mean(axis=(2, 3, 4), keepdims=True)
        var = ((xr - mean) ** 2).mean(axis=(2, 3, 4), keepdims=True)
        xn = ((xr - mean) / jnp.sqrt(var + 1e-5)).reshape(N, C, H, W)
        return xn * gamma[None, :, None, None] + beta[None, :, None, None]

    def conv(x, w):
        return jax.lax.conv_general_dilated(
            x, w, (1, 1), "SAME", dimension_numbers=("NCHW", "OIHW", "NCHW"))

    out = jax.nn.relu(gn(x, params["gamma1"], params["beta1"]))
    out = conv(out, params["w1"])
    out = jax.nn.relu(gn(out, params["gamma2"], params["beta2"]))
    out = conv(out, params["w2"])
    return out + x


# --------------------------- main ----------------------------------------------

if __name__ == "__main__":
    # inplanes = planes = 4 so the identity shortcut (downsample=None) type-checks.
    N, C, H, W = 2, 4, 16, 16

    key = jax.random.PRNGKey(0)
    kx, k1, k2, k3, k4, k5, k6 = jax.random.split(key, 7)

    x = jax.random.normal(kx, (N, C, H, W), dtype=jnp.float32)
    params = {
        "gamma1": 1.0 + 0.1 * jax.random.normal(k1, (C,), dtype=jnp.float32),
        "beta1": 0.1 * jax.random.normal(k2, (C,), dtype=jnp.float32),
        "w1": 0.2 * jax.random.normal(k3, (C, C, 3, 3), dtype=jnp.float32),
        "gamma2": 1.0 + 0.1 * jax.random.normal(k4, (C,), dtype=jnp.float32),
        "beta2": 0.1 * jax.random.normal(k5, (C,), dtype=jnp.float32),
        "w2": 0.2 * jax.random.normal(k6, (C, C, 3, 3), dtype=jnp.float32),
    }

    out = jax.block_until_ready(jax.jit(resblock_forward)(x, params))
    ref = jax.block_until_ready(_resblock_ref(x, params))
    max_err = float(jnp.max(jnp.abs(out - ref)))
    if out.shape == (N, C, H, W) and max_err < 1e-1:
        print("KERNEL_OK")
    else:
        print(f"MISMATCH max_abs_err={max_err}")
</pallas_src>

<mosaic_0001>
module attributes {stable_mosaic.version = 11 : i64} {
  func.func @_resblock_kernel(%arg0: i32, %arg1: memref<1x256x128xf32, #tpu.memory_space<vmem>>, %arg2: memref<256x1xi32, #tpu.memory_space<vmem>>, %arg3: memref<1x128xf32, #tpu.memory_space<vmem>>, %arg4: memref<1x128xf32, #tpu.memory_space<vmem>>, %arg5: memref<1x128xf32, #tpu.memory_space<vmem>>, %arg6: memref<1x128xf32, #tpu.memory_space<vmem>>, %arg7: memref<128x128xf32, #tpu.memory_space<vmem>>, %arg8: memref<9x128x128xbf16, #tpu.memory_space<vmem>>, %arg9: memref<9x128x128xbf16, #tpu.memory_space<vmem>>, %arg10: memref<1x256x128xf32, #tpu.memory_space<vmem>>, %arg11: memref<304x128xbf16, #tpu.memory_space<vmem>>, %arg12: memref<256x128xf32, #tpu.memory_space<vmem>>) attributes {dimension_semantics = [#tpu.dimension_semantics<parallel>], iteration_bounds = array<i64: 2>, scalar_prefetch = 0 : i64, scratch_operands = 2 : i64, tpu.core_type = #tpu.core_type<tc>, window_params = [{transform_indices = @transform_0, window_bounds = array<i64: 1, 256, 128>}, {pipeline_mode = #tpu.pipeline_mode<synchronous>, transform_indices = @transform_1, window_bounds = array<i64: 256, 1>}, {pipeline_mode = #tpu.pipeline_mode<synchronous>, transform_indices = @transform_2, window_bounds = array<i64: 1, 128>}, {pipeline_mode = #tpu.pipeline_mode<synchronous>, transform_indices = @transform_3, window_bounds = array<i64: 1, 128>}, {pipeline_mode = #tpu.pipeline_mode<synchronous>, transform_indices = @transform_4, window_bounds = array<i64: 1, 128>}, {pipeline_mode = #tpu.pipeline_mode<synchronous>, transform_indices = @transform_5, window_bounds = array<i64: 1, 128>}, {pipeline_mode = #tpu.pipeline_mode<synchronous>, transform_indices = @transform_6, window_bounds = array<i64: 128, 128>}, {pipeline_mode = #tpu.pipeline_mode<synchronous>, transform_indices = @transform_7, window_bounds = array<i64: 9, 128, 128>}, {pipeline_mode = #tpu.pipeline_mode<synchronous>, transform_indices = @transform_8, window_bounds = array<i64: 9, 128, 128>}, {transform_indices = @transform_9, window_bounds = array<i64: 1, 256, 128>}]} {
    %c0 = arith.constant 0 : index
    %c0_0 = arith.constant 0 : index
    %0 = vector.load %arg2[%c0, %c0_0] : memref<256x1xi32, #tpu.memory_space<vmem>>, vector<256x1xi32>
    %c1_i32 = arith.constant 1 : i32
    %1 = vector.broadcast %c1_i32 : i32 to vector<256x1xi32>
    %2 = arith.cmpi sge, %0, %1 : vector<256x1xi32>
    %c14_i32 = arith.constant 14 : i32
    %3 = vector.broadcast %c14_i32 : i32 to vector<256x1xi32>
    %4 = arith.cmpi sle, %0, %3 : vector<256x1xi32>
    %cst = arith.constant 0.000000e+00 : bf16
    %5 = vector.broadcast %cst : bf16 to vector<17x128xbf16>
    %c0_1 = arith.constant 0 : index
    %c0_2 = arith.constant 0 : index
    %6 = vector.load %arg11[%c0_1, %c0_2] : memref<304x128xbf16, #tpu.memory_space<vmem>>, vector<17x128xbf16>
    tpu.vector_store %arg11[%c0_1, %c0_2], %5 {strides = array<i32>} : memref<304x128xbf16, #tpu.memory_space<vmem>>, vector<17x128xbf16>,
    %cst_3 = arith.constant 0.000000e+00 : bf16
    %7 = vector.broadcast %cst_3 : bf16 to vector<31x128xbf16>
    %c273 = arith.constant 273 : index
    %c0_4 = arith.constant 0 : index
    %8 = vector.load %arg11[%c273, %c0_4] : memref<304x128xbf16, #tpu.memory_space<vmem>>, vector<31x128xbf16>
    tpu.vector_store %arg11[%c273, %c0_4], %7 {strides = array<i32>} : memref<304x128xbf16, #tpu.memory_space<vmem>>, vector<31x128xbf16>,
    %c0_5 = arith.constant 0 : index
    %c0_6 = arith.constant 0 : index
    %c0_7 = arith.constant 0 : index
    %9 = vector.load %arg1[%c0_5, %c0_6, %c0_7] : memref<1x256x128xf32, #tpu.memory_space<vmem>>, vector<1x256x128xf32>
    %10 = vector.shape_cast %9 : vector<1x256x128xf32> to vector<256x128xf32>
    %c0_8 = arith.constant 0 : index
    %c0_9 = arith.constant 0 : index
    %11 = vector.load %arg3[%c0_8, %c0_9] : memref<1x128xf32, #tpu.memory_space<vmem>>, vector<1x128xf32>
    %c0_10 = arith.constant 0 : index
    %c0_11 = arith.constant 0 : index
    %12 = vector.load %arg4[%c0_10, %c0_11] : memref<1x128xf32, #tpu.memory_space<vmem>>, vector<1x128xf32>
    %cst_12 = arith.constant dense<0.000000e+00> : vector<128xf32>
    %13 = vector.multi_reduction <add>, %10, %cst_12 [0] : vector<256x128xf32> to vector<128xf32>
    %14 = vector.shape_cast %13 : vector<128xf32> to vector<1x128xf32>
    %c0_13 = arith.constant 0 : index
    %c0_14 = arith.constant 0 : index
    %15 = vector.load %arg7[%c0_13, %c0_14] : memref<128x128xf32, #tpu.memory_space<vmem>>, vector<128x128xf32>
    %cst_15 = arith.constant dense<0.000000e+00> : vector<1x128xf32>
    %16 = tpu.matmul %14, %15, %cst_15 {dimension_numbers = #tpu.dot_dimension_numbers<[1], [0], [0], [1], [0, 0, 1, 1], [], []>} : vector<1x128xf32>, vector<128x128xf32>, vector<1x128xf32> -> vector<1x128xf32>
    %cst_16 = arith.constant 3.906250e-03 : f32
    %17 = vector.broadcast %cst_16 : f32 to vector<1x128xf32>
    %18 = arith.mulf %16, %17 : vector<1x128xf32>
    %19 = vector.broadcast %18 : vector<1x128xf32> to vector<256x128xf32>
    %20 = arith.subf %10, %19 : vector<256x128xf32>
    %21 = arith.mulf %20, %20 : vector<256x128xf32>
    %cst_17 = arith.constant dense<0.000000e+00> : vector<128xf32>
    %22 = vector.multi_reduction <add>, %21, %cst_17 [0] : vector<256x128xf32> to vector<128xf32>
    %23 = vector.shape_cast %22 : vector<128xf32> to vector<1x128xf32>
    %c0_18 = arith.constant 0 : index
    %c0_19 = arith.constant 0 : index
    %24 = vector.load %arg7[%c0_18, %c0_19] : memref<128x128xf32, #tpu.memory_space<vmem>>, vector<128x128xf32>
    %cst_20 = arith.constant dense<0.000000e+00> : vector<1x128xf32>
    %25 = tpu.matmul %23, %24, %cst_20 {dimension_numbers = #tpu.dot_dimension_numbers<[1], [0], [0], [1], [0, 0, 1, 1], [], []>} : vector<1x128xf32>, vector<128x128xf32>, vector<1x128xf32> -> vector<1x128xf32>
    %cst_21 = arith.constant 3.906250e-03 : f32
    %26 = vector.broadcast %cst_21 : f32 to vector<1x128xf32>
    %27 = arith.mulf %25, %26 : vector<1x128xf32>
    %cst_22 = arith.constant 9.99999974E-6 : f32
    %28 = vector.broadcast %cst_22 : f32 to vector<1x128xf32>
    %29 = arith.addf %27, %28 : vector<1x128xf32>
    %30 = math.rsqrt %29 : vector<1x128xf32>
    %31 = arith.mulf %30, %11 : vector<1x128xf32>
    %32 = arith.mulf %18, %31 : vector<1x128xf32>
    %33 = arith.subf %12, %32 : vector<1x128xf32>
    %34 = vector.broadcast %31 : vector<1x128xf32> to vector<256x128xf32>
    %35 = arith.mulf %10, %34 : vector<256x128xf32>
    %36 = vector.broadcast %33 : vector<1x128xf32> to vector<256x128xf32>
    %37 = arith.addf %35, %36 : vector<256x128xf32>
    %cst_23 = arith.constant 0.000000e+00 : f32
    %38 = vector.broadcast %cst_23 : f32 to vector<256x128xf32>
    %39 = arith.maximumf %37, %38 : vector<256x128xf32>
    %40 = arith.truncf %39 : vector<256x128xf32> to vector<256x128xbf16>
    %c17 = arith.constant 17 : index
    %c0_24 = arith.constant 0 : index
    %41 = vector.load %arg11[%c17, %c0_24] : memref<304x128xbf16, #tpu.memory_space<vmem>>, vector<256x128xbf16>
    tpu.vector_store %arg11[%c17, %c0_24], %40 {strides = array<i32>} : memref<304x128xbf16, #tpu.memory_space<vmem>>, vector<256x128xbf16>,
    %cst_25 = arith.constant 0.000000e+00 : f32
    %42 = vector.broadcast %cst_25 : f32 to vector<256x128xf32>
    %c0_26 = arith.constant 0 : index
    %c0_27 = arith.constant 0 : index
    %43 = vector.load %arg12[%c0_26, %c0_27] : memref<256x128xf32, #tpu.memory_space<vmem>>, vector<256x128xf32>
    tpu.vector_store %arg12[%c0_26, %c0_27], %42 {strides = array<i32>} : memref<256x128xf32, #tpu.memory_space<vmem>>, vector<256x128xf32>,
    %c0_28 = arith.constant 0 : index
    %c0_29 = arith.constant 0 : index
    %44 = vector.load %arg11[%c0_28, %c0_29] : memref<304x128xbf16, #tpu.memory_space<vmem>>, vector<256x128xbf16>
    %cst_30 = arith.constant 0.000000e+00 : bf16
    %45 = vector.broadcast %cst_30 : bf16 to vector<256x128xbf16>
    %46 = vector.shape_cast %2 : vector<256x1xi1> to vector<256x1xi1>
    %47 = vector.broadcast %46 : vector<256x1xi1> to vector<256x128xi1>
    %48 = arith.select %47, %44, %45 : vector<256x128xi1>, vector<256x128xbf16>
    %c0_31 = arith.constant 0 : index
    %c0_32 = arith.constant 0 : index
    %49 = vector.load %arg12[%c0_31, %c0_32] : memref<256x128xf32, #tpu.memory_space<vmem>>, vector<256x128xf32>
    %c0_33 = arith.constant 0 : index
    %c0_34 = arith.constant 0 : index
    %c0_35 = arith.constant 0 : index
    %50 = vector.load %arg8[%c0_33, %c0_34, %c0_35] : memref<9x128x128xbf16, #tpu.memory_space<vmem>>, vector<1x128x128xbf16>
    %51 = vector.shape_cast %50 : vector<1x128x128xbf16> to vector<128x128xbf16>
    %cst_36 = arith.constant dense<0.000000e+00> : vector<256x128xf32>
    %52 = tpu.matmul %48, %51, %cst_36 {dimension_numbers = #tpu.dot_dimension_numbers<[1], [0], [0], [1], [0, 0, 1, 1], [], []>} : vector<256x128xbf16>, vector<128x128xbf16>, vector<256x128xf32> -> vector<256x128xf32>
    %53 = arith.addf %49, %52 : vector<256x128xf32>
    %c0_37 = arith.constant 0 : index
    %c0_38 = arith.constant 0 : index
    %54 = vector.load %arg12[%c0_37, %c0_38] : memref<256x128xf32, #tpu.memory_space<vmem>>, vector<256x128xf32>
    tpu.vector_store %arg12[%c0_37, %c0_38], %53 {strides = array<i32>} : memref<256x128xf32, #tpu.memory_space<vmem>>, vector<256x128xf32>,
    %c1 = arith.constant 1 : index
    %c0_39 = arith.constant 0 : index
    %55 = vector.load %arg11[%c1, %c0_39] : memref<304x128xbf16, #tpu.memory_space<vmem>>, vector<256x128xbf16>
    %c0_40 = arith.constant 0 : index
    %c0_41 = arith.constant 0 : index
    %56 = vector.load %arg12[%c0_40, %c0_41] : memref<256x128xf32, #tpu.memory_space<vmem>>, vector<256x128xf32>
    %c1_42 = arith.constant 1 : index
    %c0_43 = arith.constant 0 : index
    %c0_44 = arith.constant 0 : index
    %57 = vector.load %arg8[%c1_42, %c0_43, %c0_44] : memref<9x128x128xbf16, #tpu.memory_space<vmem>>, vector<1x128x128xbf16>
    %58 = vector.shape_cast %57 : vector<1x128x128xbf16> to vector<128x128xbf16>
    %cst_45 = arith.constant dense<0.000000e+00> : vector<256x128xf32>
    %59 = tpu.matmul %55, %58, %cst_45 {dimension_numbers = #tpu.dot_dimension_numbers<[1], [0], [0], [1], [0, 0, 1, 1], [], []>} : vector<256x128xbf16>, vector<128x128xbf16>, vector<256x128xf32> -> vector<256x128xf32>
    %60 = arith.addf %56, %59 : vector<256x128xf32>
    %c0_46 = arith.constant 0 : index
    %c0_47 = arith.constant 0 : index
    %61 = vector.load %arg12[%c0_46, %c0_47] : memref<256x128xf32, #tpu.memory_space<vmem>>, vector<256x128xf32>
    tpu.vector_store %arg12[%c0_46, %c0_47], %60 {strides = array<i32>} : memref<256x128xf32, #tpu.memory_space<vmem>>, vector<256x128xf32>,
    %c2 = arith.constant 2 : index
    %c0_48 = arith.constant 0 : index
    %62 = vector.load %arg11[%c2, %c0_48] : memref<304x128xbf16, #tpu.memory_space<vmem>>, vector<256x128xbf16>
    %cst_49 = arith.constant 0.000000e+00 : bf16
    %63 = vector.broadcast %cst_49 : bf16 to vector<256x128xbf16>
    %64 = vector.shape_cast %4 : vector<256x1xi1> to vector<256x1xi1>
    %65 = vector.broadcast %64 : vector<256x1xi1> to vector<256x128xi1>
    %66 = arith.select %65, %62, %63 : vector<256x128xi1>, vector<256x128xbf16>
    %c0_50 = arith.constant 0 : index
    %c0_51 = arith.constant 0 : index
    %67 = vector.load %arg12[%c0_50, %c0_51] : memref<256x128xf32, #tpu.memory_space<vmem>>, vector<256x128xf32>
    %c2_52 = arith.constant 2 : index
    %c0_53 = arith.constant 0 : index
    %c0_54 = arith.constant 0 : index
    %68 = vector.load %arg8[%c2_52, %c0_53, %c0_54] : memref<9x128x128xbf16, #tpu.memory_space<vmem>>, vector<1x128x128xbf16>
    %69 = vector.shape_cast %68 : vector<1x128x128xbf16> to vector<128x128xbf16>
    %cst_55 = arith.constant dense<0.000000e+00> : vector<256x128xf32>
    %70 = tpu.matmul %66, %69, %cst_55 {dimension_numbers = #tpu.dot_dimension_numbers<[1], [0], [0], [1], [0, 0, 1, 1], [], []>} : vector<256x128xbf16>, vector<128x128xbf16>, vector<256x128xf32> -> vector<256x128xf32>
    %71 = arith.addf %67, %70 : vector<256x128xf32>
    %c0_56 = arith.constant 0 : index
    %c0_57 = arith.constant 0 : index
    %72 = vector.load %arg12[%c0_56, %c0_57] : memref<256x128xf32, #tpu.memory_space<vmem>>, vector<256x128xf32>
    tpu.vector_store %arg12[%c0_56, %c0_57], %71 {strides = array<i32>} : memref<256x128xf32, #tpu.memory_space<vmem>>, vector<256x128xf32>,
    %c16 = arith.constant 16 : index
    %c0_58 = arith.constant 0 : index
    %73 = vector.load %arg11[%c16, %c0_58] : memref<304x128xbf16, #tpu.memory_space<vmem>>, vector<256x128xbf16>
    %cst_59 = arith.constant 0.000000e+00 : bf16
    %74 = vector.broadcast %cst_59 : bf16 to vector<256x128xbf16>
    %75 = vector.shape_cast %2 : vector<256x1xi1> to vector<256x1xi1>
    %76 = vector.broadcast %75 : vector<256x1xi1> to vector<256x128xi1>
    %77 = arith.select %76, %73, %74 : vector<256x128xi1>, vector<256x128xbf16>
    %c0_60 = arith.constant 0 : index
    %c0_61 = arith.constant 0 : index
    %78 = vector.load %arg12[%c0_60, %c0_61] : memref<256x128xf32, #tpu.memory_space<vmem>>, vector<256x128xf32>
    %c3 = arith.constant 3 : index
    %c0_62 = arith.constant 0 : index
    %c0_63 = arith.constant 0 : index
    %79 = vector.load %arg8[%c3, %c0_62, %c0_63] : memref<9x128x128xbf16, #tpu.memory_space<vmem>>, vector<1x128x128xbf16>
    %80 = vector.shape_cast %79 : vector<1x128x128xbf16> to vector<128x128xbf16>
    %cst_64 = arith.constant dense<0.000000e+00> : vector<256x128xf32>
    %81 = tpu.matmul %77, %80, %cst_64 {dimension_numbers = #tpu.dot_dimension_numbers<[1], [0], [0], [1], [0, 0, 1, 1], [], []>} : vector<256x128xbf16>, vector<128x128xbf16>, vector<256x128xf32> -> vector<256x128xf32>
    %82 = arith.addf %78, %81 : vector<256x128xf32>
    %c0_65 = arith.constant 0 : index
    %c0_66 = arith.constant 0 : index
    %83 = vector.load %arg12[%c0_65, %c0_66] : memref<256x128xf32, #tpu.memory_space<vmem>>, vector<256x128xf32>
    tpu.vector_store %arg12[%c0_65, %c0_66], %82 {strides = array<i32>} : memref<256x128xf32, #tpu.memory_space<vmem>>, vector<256x128xf32>,
    %c17_67 = arith.constant 17 : index
    %c0_68 = arith.constant 0 : index
    %84 = vector.load %arg11[%c17_67, %c0_68] : memref<304x128xbf16, #tpu.memory_space<vmem>>, vector<256x128xbf16>
    %c0_69 = arith.constant 0 : index
    %c0_70 = arith.constant 0 : index
    %85 = vector.load %arg12[%c0_69, %c0_70] : memref<256x128xf32, #tpu.memory_space<vmem>>, vector<256x128xf32>
    %c4 = arith.constant 4 : index
    %c0_71 = arith.constant 0 : index
    %c0_72 = arith.constant 0 : index
    %86 = vector.load %arg8[%c4, %c0_71, %c0_72] : memref<9x128x128xbf16, #tpu.memory_space<vmem>>, vector<1x128x128xbf16>
    %87 = vector.shape_cast %86 : vector<1x128x128xbf16> to vector<128x128xbf16>
    %cst_73 = arith.constant dense<0.000000e+00> : vector<256x128xf32>
    %88 = tpu.matmul %84, %87, %cst_73 {dimension_numbers = #tpu.dot_dimension_numbers<[1], [0], [0], [1], [0, 0, 1, 1], [], []>} : vector<256x128xbf16>, vector<128x128xbf16>, vector<256x128xf32> -> vector<256x128xf32>
    %89 = arith.addf %85, %88 : vector<256x128xf32>
    %c0_74 = arith.constant 0 : index
    %c0_75 = arith.constant 0 : index
    %90 = vector.load %arg12[%c0_74, %c0_75] : memref<256x128xf32, #tpu.memory_space<vmem>>, vector<256x128xf32>
    tpu.vector_store %arg12[%c0_74, %c0_75], %89 {strides = array<i32>} : memref<256x128xf32, #tpu.memory_space<vmem>>, vector<256x128xf32>,
    %c18 = arith.constant 18 : index
    %c0_76 = arith.constant 0 : index
    %91 = vector.load %arg11[%c18, %c0_76] : memref<304x128xbf16, #tpu.memory_space<vmem>>, vector<256x128xbf16>
    %cst_77 = arith.constant 0.000000e+00 : bf16
    %92 = vector.broadcast %cst_77 : bf16 to vector<256x128xbf16>
    %93 = vector.shape_cast %4 : vector<256x1xi1> to vector<256x1xi1>
    %94 = vector.broadcast %93 : vector<256x1xi1> to vector<256x128xi1>
    %95 = arith.select %94, %91, %92 : vector<256x128xi1>, vector<256x128xbf16>
    %c0_78 = arith.constant 0 : index
    %c0_79 = arith.constant 0 : index
    %96 = vector.load %arg12[%c0_78, %c0_79] : memref<256x128xf32, #tpu.memory_space<vmem>>, vector<256x128xf32>
    %c5 = arith.constant 5 : index
    %c0_80 = arith.constant 0 : index
    %c0_81 = arith.constant 0 : index
    %97 = vector.load %arg8[%c5, %c0_80, %c0_81] : memref<9x128x128xbf16, #tpu.memory_space<vmem>>, vector<1x128x128xbf16>
    %98 = vector.shape_cast %97 : vector<1x128x128xbf16> to vector<128x128xbf16>
    %cst_82 = arith.constant dense<0.000000e+00> : vector<256x128xf32>
    %99 = tpu.matmul %95, %98, %cst_82 {dimension_numbers = #tpu.dot_dimension_numbers<[1], [0], [0], [1], [0, 0, 1, 1], [], []>} : vector<256x128xbf16>, vector<128x128xbf16>, vector<256x128xf32> -> vector<256x128xf32>
    %100 = arith.addf %96, %99 : vector<256x128xf32>
    %c0_83 = arith.constant 0 : index
    %c0_84 = arith.constant 0 : index
    %101 = vector.load %arg12[%c0_83, %c0_84] : memref<256x128xf32, #tpu.memory_space<vmem>>, vector<256x128xf32>
    tpu.vector_store %arg12[%c0_83, %c0_84], %100 {strides = array<i32>} : memref<256x128xf32, #tpu.memory_space<vmem>>, vector<256x128xf32>,
    %c32 = arith.constant 32 : index
    %c0_85 = arith.constant 0 : index
    %102 = vector.load %arg11[%c32, %c0_85] : memref<304x128xbf16, #tpu.memory_space<vmem>>, vector<256x128xbf16>
    %cst_86 = arith.constant 0.000000e+00 : bf16
    %103 = vector.broadcast %cst_86 : bf16 to vector<256x128xbf16>
    %104 = vector.shape_cast %2 : vector<256x1xi1> to vector<256x1xi1>
    %105 = vector.broadcast %104 : vector<256x1xi1> to vector<256x128xi1>
    %106 = arith.select %105, %102, %103 : vector<256x128xi1>, vector<256x128xbf16>
    %c0_87 = arith.constant 0 : index
    %c0_88 = arith.constant 0 : index
    %107 = vector.load %arg12[%c0_87, %c0_88] : memref<256x128xf32, #tpu.memory_space<vmem>>, vector<256x128xf32>
    %c6 = arith.constant 6 : index
    %c0_89 = arith.constant 0 : index
    %c0_90 = arith.constant 0 : index
    %108 = vector.load %arg8[%c6, %c0_89, %c0_90] : memref<9x128x128xbf16, #tpu.memory_space<vmem>>, vector<1x128x128xbf16>
    %109 = vector.shape_cast %108 : vector<1x128x128xbf16> to vector<128x128xbf16>
    %cst_91 = arith.constant dense<0.000000e+00> : vector<256x128xf32>
    %110 = tpu.matmul %106, %109, %cst_91 {dimension_numbers = #tpu.dot_dimension_numbers<[1], [0], [0], [1], [0, 0, 1, 1], [], []>} : vector<256x128xbf16>, vector<128x128xbf16>, vector<256x128xf32> -> vector<256x128xf32>
    %111 = arith.addf %107, %110 : vector<256x128xf32>
    %c0_92 = arith.constant 0 : index
    %c0_93 = arith.constant 0 : index
    %112 = vector.load %arg12[%c0_92, %c0_93] : memref<256x128xf32, #tpu.memory_space<vmem>>, vector<256x128xf32>
    tpu.vector_store %arg12[%c0_92, %c0_93], %111 {strides = array<i32>} : memref<256x128xf32, #tpu.memory_space<vmem>>, vector<256x128xf32>,
    %c33 = arith.constant 33 : index
    %c0_94 = arith.constant 0 : index
    %113 = vector.load %arg11[%c33, %c0_94] : memref<304x128xbf16, #tpu.memory_space<vmem>>, vector<256x128xbf16>
    %c0_95 = arith.constant 0 : index
    %c0_96 = arith.constant 0 : index
    %114 = vector.load %arg12[%c0_95, %c0_96] : memref<256x128xf32, #tpu.memory_space<vmem>>, vector<256x128xf32>
    %c7 = arith.constant 7 : index
    %c0_97 = arith.constant 0 : index
    %c0_98 = arith.constant 0 : index
    %115 = vector.load %arg8[%c7, %c0_97, %c0_98] : memref<9x128x128xbf16, #tpu.memory_space<vmem>>, vector<1x128x128xbf16>
    %116 = vector.shape_cast %115 : vector<1x128x128xbf16> to vector<128x128xbf16>
    %cst_99 = arith.constant dense<0.000000e+00> : vector<256x128xf32>
    %117 = tpu.matmul %113, %116, %cst_99 {dimension_numbers = #tpu.dot_dimension_numbers<[1], [0], [0], [1], [0, 0, 1, 1], [], []>} : vector<256x128xbf16>, vector<128x128xbf16>, vector<256x128xf32> -> vector<256x128xf32>
    %118 = arith.addf %114, %117 : vector<256x128xf32>
    %c0_100 = arith.constant 0 : index
    %c0_101 = arith.constant 0 : index
    %119 = vector.load %arg12[%c0_100, %c0_101] : memref<256x128xf32, #tpu.memory_space<vmem>>, vector<256x128xf32>
    tpu.vector_store %arg12[%c0_100, %c0_101], %118 {strides = array<i32>} : memref<256x128xf32, #tpu.memory_space<vmem>>, vector<256x128xf32>,
    %c34 = arith.constant 34 : index
    %c0_102 = arith.constant 0 : index
    %120 = vector.load %arg11[%c34, %c0_102] : memref<304x128xbf16, #tpu.memory_space<vmem>>, vector<256x128xbf16>
    %cst_103 = arith.constant 0.000000e+00 : bf16
    %121 = vector.broadcast %cst_103 : bf16 to vector<256x128xbf16>
    %122 = vector.shape_cast %4 : vector<256x1xi1> to vector<256x1xi1>
    %123 = vector.broadcast %122 : vector<256x1xi1> to vector<256x128xi1>
    %124 = arith.select %123, %120, %121 : vector<256x128xi1>, vector<256x128xbf16>
    %c0_104 = arith.constant 0 : index
    %c0_105 = arith.constant 0 : index
    %125 = vector.load %arg12[%c0_104, %c0_105] : memref<256x128xf32, #tpu.memory_space<vmem>>, vector<256x128xf32>
    %c8 = arith.constant 8 : index
    %c0_106 = arith.constant 0 : index
    %c0_107 = arith.constant 0 : index
    %126 = vector.load %arg8[%c8, %c0_106, %c0_107] : memref<9x128x128xbf16, #tpu.memory_space<vmem>>, vector<1x128x128xbf16>
    %127 = vector.shape_cast %126 : vector<1x128x128xbf16> to vector<128x128xbf16>
    %cst_108 = arith.constant dense<0.000000e+00> : vector<256x128xf32>
    %128 = tpu.matmul %124, %127, %cst_108 {dimension_numbers = #tpu.dot_dimension_numbers<[1], [0], [0], [1], [0, 0, 1, 1], [], []>} : vector<256x128xbf16>, vector<128x128xbf16>, vector<256x128xf32> -> vector<256x128xf32>
    %129 = arith.addf %125, %128 : vector<256x128xf32>
    %c0_109 = arith.constant 0 : index
    %c0_110 = arith.constant 0 : index
    %130 = vector.load %arg12[%c0_109, %c0_110] : memref<256x128xf32, #tpu.memory_space<vmem>>, vector<256x128xf32>
    tpu.vector_store %arg12[%c0_109, %c0_110], %129 {strides = array<i32>} : memref<256x128xf32, #tpu.memory_space<vmem>>, vector<256x128xf32>,
    %c0_111 = arith.constant 0 : index
    %c0_112 = arith.constant 0 : index
    %131 = vector.load %arg12[%c0_111, %c0_112] : memref<256x128xf32, #tpu.memory_space<vmem>>, vector<256x128xf32>
    %c0_113 = arith.constant 0 : index
    %c0_114 = arith.constant 0 : index
    %132 = vector.load %arg5[%c0_113, %c0_114] : memref<1x128xf32, #tpu.memory_space<vmem>>, vector<1x128xf32>
    %c0_115 = arith.constant 0 : index
    %c0_116 = arith.constant 0 : index
    %133 = vector.load %arg6[%c0_115, %c0_116] : memref<1x128xf32, #tpu.memory_space<vmem>>, vector<1x128xf32>
    %cst_117 = arith.constant dense<0.000000e+00> : vector<128xf32>
    %134 = vector.multi_reduction <add>, %131, %cst_117 [0] : vector<256x128xf32> to vector<128xf32>
    %135 = vector.shape_cast %134 : vector<128xf32> to vector<1x128xf32>
    %c0_118 = arith.constant 0 : index
    %c0_119 = arith.constant 0 : index
    %136 = vector.load %arg7[%c0_118, %c0_119] : memref<128x128xf32, #tpu.memory_space<vmem>>, vector<128x128xf32>
    %cst_120 = arith.constant dense<0.000000e+00> : vector<1x128xf32>
    %137 = tpu.matmul %135, %136, %cst_120 {dimension_numbers = #tpu.dot_dimension_numbers<[1], [0], [0], [1], [0, 0, 1, 1], [], []>} : vector<1x128xf32>, vector<128x128xf32>, vector<1x128xf32> -> vector<1x128xf32>
    %cst_121 = arith.constant 3.906250e-03 : f32
    %138 = vector.broadcast %cst_121 : f32 to vector<1x128xf32>
    %139 = arith.mulf %137, %138 : vector<1x128xf32>
    %140 = vector.broadcast %139 : vector<1x128xf32> to vector<256x128xf32>
    %141 = arith.subf %131, %140 : vector<256x128xf32>
    %142 = arith.mulf %141, %141 : vector<256x128xf32>
    %cst_122 = arith.constant dense<0.000000e+00> : vector<128xf32>
    %143 = vector.multi_reduction <add>, %142, %cst_122 [0] : vector<256x128xf32> to vector<128xf32>
    %144 = vector.shape_cast %143 : vector<128xf32> to vector<1x128xf32>
    %c0_123 = arith.constant 0 : index
    %c0_124 = arith.constant 0 : index
    %145 = vector.load %arg7[%c0_123, %c0_124] : memref<128x128xf32, #tpu.memory_space<vmem>>, vector<128x128xf32>
    %cst_125 = arith.constant dense<0.000000e+00> : vector<1x128xf32>
    %146 = tpu.matmul %144, %145, %cst_125 {dimension_numbers = #tpu.dot_dimension_numbers<[1], [0], [0], [1], [0, 0, 1, 1], [], []>} : vector<1x128xf32>, vector<128x128xf32>, vector<1x128xf32> -> vector<1x128xf32>
    %cst_126 = arith.constant 3.906250e-03 : f32
    %147 = vector.broadcast %cst_126 : f32 to vector<1x128xf32>
    %148 = arith.mulf %146, %147 : vector<1x128xf32>
    %cst_127 = arith.constant 9.99999974E-6 : f32
    %149 = vector.broadcast %cst_127 : f32 to vector<1x128xf32>
    %150 = arith.addf %148, %149 : vector<1x128xf32>
    %151 = math.rsqrt %150 : vector<1x128xf32>
    %152 = arith.mulf %151, %132 : vector<1x128xf32>
    %153 = arith.mulf %139, %152 : vector<1x128xf32>
    %154 = arith.subf %133, %153 : vector<1x128xf32>
    %155 = vector.broadcast %152 : vector<1x128xf32> to vector<256x128xf32>
    %156 = arith.mulf %131, %155 : vector<256x128xf32>
    %157 = vector.broadcast %154 : vector<1x128xf32> to vector<256x128xf32>
    %158 = arith.addf %156, %157 : vector<256x128xf32>
    %cst_128 = arith.constant 0.000000e+00 : f32
    %159 = vector.broadcast %cst_128 : f32 to vector<256x128xf32>
    %160 = arith.maximumf %158, %159 : vector<256x128xf32>
    %161 = arith.truncf %160 : vector<256x128xf32> to vector<256x128xbf16>
    %c17_129 = arith.constant 17 : index
    %c0_130 = arith.constant 0 : index
    %162 = vector.load %arg11[%c17_129, %c0_130] : memref<304x128xbf16, #tpu.memory_space<vmem>>, vector<256x128xbf16>
    tpu.vector_store %arg11[%c17_129, %c0_130], %161 {strides = array<i32>} : memref<304x128xbf16, #tpu.memory_space<vmem>>, vector<256x128xbf16>,
    %c0_131 = arith.constant 0 : index
    %c0_132 = arith.constant 0 : index
    %c0_133 = arith.constant 0 : index
    %163 = vector.load %arg1[%c0_131, %c0_132, %c0_133] : memref<1x256x128xf32, #tpu.memory_space<vmem>>, vector<1x256x128xf32>
    %164 = vector.shape_cast %163 : vector<1x256x128xf32> to vector<256x128xf32>
    %c0_134 = arith.constant 0 : index
    %c0_135 = arith.constant 0 : index
    %165 = vector.load %arg12[%c0_134, %c0_135] : memref<256x128xf32, #tpu.memory_space<vmem>>, vector<256x128xf32>
    tpu.vector_store %arg12[%c0_134, %c0_135], %164 {strides = array<i32>} : memref<256x128xf32, #tpu.memory_space<vmem>>, vector<256x128xf32>,
    %c0_136 = arith.constant 0 : index
    %c0_137 = arith.constant 0 : index
    %166 = vector.load %arg11[%c0_136, %c0_137] : memref<304x128xbf16, #tpu.memory_space<vmem>>, vector<256x128xbf16>
    %cst_138 = arith.constant 0.000000e+00 : bf16
    %167 = vector.broadcast %cst_138 : bf16 to vector<256x128xbf16>
    %168 = vector.shape_cast %2 : vector<256x1xi1> to vector<256x1xi1>
    %169 = vector.broadcast %168 : vector<256x1xi1> to vector<256x128xi1>
    %170 = arith.select %169, %166, %167 : vector<256x128xi1>, vector<256x128xbf16>
    %c0_139 = arith.constant 0 : index
    %c0_140 = arith.constant 0 : index
    %171 = vector.load %arg12[%c0_139, %c0_140] : memref<256x128xf32, #tpu.memory_space<vmem>>, vector<256x128xf32>
    %c0_141 = arith.constant 0 : index
    %c0_142 = arith.constant 0 : index
    %c0_143 = arith.constant 0 : index
    %172 = vector.load %arg9[%c0_141, %c0_142, %c0_143] : memref<9x128x128xbf16, #tpu.memory_space<vmem>>, vector<1x128x128xbf16>
    %173 = vector.shape_cast %172 : vector<1x128x128xbf16> to vector<128x128xbf16>
    %cst_144 = arith.constant dense<0.000000e+00> : vector<256x128xf32>
    %174 = tpu.matmul %170, %173, %cst_144 {dimension_numbers = #tpu.dot_dimension_numbers<[1], [0], [0], [1], [0, 0, 1, 1], [], []>} : vector<256x128xbf16>, vector<128x128xbf16>, vector<256x128xf32> -> vector<256x128xf32>
    %175 = arith.addf %171, %174 : vector<256x128xf32>
    %c0_145 = arith.constant 0 : index
    %c0_146 = arith.constant 0 : index
    %176 = vector.load %arg12[%c0_145, %c0_146] : memref<256x128xf32, #tpu.memory_space<vmem>>, vector<256x128xf32>
    tpu.vector_store %arg12[%c0_145, %c0_146], %175 {strides = array<i32>} : memref<256x128xf32, #tpu.memory_space<vmem>>, vector<256x128xf32>,
    %c1_147 = arith.constant 1 : index
    %c0_148 = arith.constant 0 : index
    %177 = vector.load %arg11[%c1_147, %c0_148] : memref<304x128xbf16, #tpu.memory_space<vmem>>, vector<256x128xbf16>
    %c0_149 = arith.constant 0 : index
    %c0_150 = arith.constant 0 : index
    %178 = vector.load %arg12[%c0_149, %c0_150] : memref<256x128xf32, #tpu.memory_space<vmem>>, vector<256x128xf32>
    %c1_151 = arith.constant 1 : index
    %c0_152 = arith.constant 0 : index
    %c0_153 = arith.constant 0 : index
    %179 = vector.load %arg9[%c1_151, %c0_152, %c0_153] : memref<9x128x128xbf16, #tpu.memory_space<vmem>>, vector<1x128x128xbf16>
    %180 = vector.shape_cast %179 : vector<1x128x128xbf16> to vector<128x128xbf16>
    %cst_154 = arith.constant dense<0.000000e+00> : vector<256x128xf32>
    %181 = tpu.matmul %177, %180, %cst_154 {dimension_numbers = #tpu.dot_dimension_numbers<[1], [0], [0], [1], [0, 0, 1, 1], [], []>} : vector<256x128xbf16>, vector<128x128xbf16>, vector<256x128xf32> -> vector<256x128xf32>
    %182 = arith.addf %178, %181 : vector<256x128xf32>
    %c0_155 = arith.constant 0 : index
    %c0_156 = arith.constant 0 : index
    %183 = vector.load %arg12[%c0_155, %c0_156] : memref<256x128xf32, #tpu.memory_space<vmem>>, vector<256x128xf32>
    tpu.vector_store %arg12[%c0_155, %c0_156], %182 {strides = array<i32>} : memref<256x128xf32, #tpu.memory_space<vmem>>, vector<256x128xf32>,
    %c2_157 = arith.constant 2 : index
    %c0_158 = arith.constant 0 : index
    %184 = vector.load %arg11[%c2_157, %c0_158] : memref<304x128xbf16, #tpu.memory_space<vmem>>, vector<256x128xbf16>
    %cst_159 = arith.constant 0.000000e+00 : bf16
    %185 = vector.broadcast %cst_159 : bf16 to vector<256x128xbf16>
    %186 = vector.shape_cast %4 : vector<256x1xi1> to vector<256x1xi1>
    %187 = vector.broadcast %186 : vector<256x1xi1> to vector<256x128xi1>
    %188 = arith.select %187, %184, %185 : vector<256x128xi1>, vector<256x128xbf16>
    %c0_160 = arith.constant 0 : index
    %c0_161 = arith.constant 0 : index
    %189 = vector.load %arg12[%c0_160, %c0_161] : memref<256x128xf32, #tpu.memory_space<vmem>>, vector<256x128xf32>
    %c2_162 = arith.constant 2 : index
    %c0_163 = arith.constant 0 : index
    %c0_164 = arith.constant 0 : index
    %190 = vector.load %arg9[%c2_162, %c0_163, %c0_164] : memref<9x128x128xbf16, #tpu.memory_space<vmem>>, vector<1x128x128xbf16>
    %191 = vector.shape_cast %190 : vector<1x128x128xbf16> to vector<128x128xbf16>
    %cst_165 = arith.constant dense<0.000000e+00> : vector<256x128xf32>
    %192 = tpu.matmul %188, %191, %cst_165 {dimension_numbers = #tpu.dot_dimension_numbers<[1], [0], [0], [1], [0, 0, 1, 1], [], []>} : vector<256x128xbf16>, vector<128x128xbf16>, vector<256x128xf32> -> vector<256x128xf32>
    %193 = arith.addf %189, %192 : vector<256x128xf32>
    %c0_166 = arith.constant 0 : index
    %c0_167 = arith.constant 0 : index
    %194 = vector.load %arg12[%c0_166, %c0_167] : memref<256x128xf32, #tpu.memory_space<vmem>>, vector<256x128xf32>
    tpu.vector_store %arg12[%c0_166, %c0_167], %193 {strides = array<i32>} : memref<256x128xf32, #tpu.memory_space<vmem>>, vector<256x128xf32>,
    %c16_168 = arith.constant 16 : index
    %c0_169 = arith.constant 0 : index
    %195 = vector.load %arg11[%c16_168, %c0_169] : memref<304x128xbf16, #tpu.memory_space<vmem>>, vector<256x128xbf16>
    %cst_170 = arith.constant 0.000000e+00 : bf16
    %196 = vector.broadcast %cst_170 : bf16 to vector<256x128xbf16>
    %197 = vector.shape_cast %2 : vector<256x1xi1> to vector<256x1xi1>
    %198 = vector.broadcast %197 : vector<256x1xi1> to vector<256x128xi1>
    %199 = arith.select %198, %195, %196 : vector<256x128xi1>, vector<256x128xbf16>
    %c0_171 = arith.constant 0 : index
    %c0_172 = arith.constant 0 : index
    %200 = vector.load %arg12[%c0_171, %c0_172] : memref<256x128xf32, #tpu.memory_space<vmem>>, vector<256x128xf32>
    %c3_173 = arith.constant 3 : index
    %c0_174 = arith.constant 0 : index
    %c0_175 = arith.constant 0 : index
    %201 = vector.load %arg9[%c3_173, %c0_174, %c0_175] : memref<9x128x128xbf16, #tpu.memory_space<vmem>>, vector<1x128x128xbf16>
    %202 = vector.shape_cast %201 : vector<1x128x128xbf16> to vector<128x128xbf16>
    %cst_176 = arith.constant dense<0.000000e+00> : vector<256x128xf32>
    %203 = tpu.matmul %199, %202, %cst_176 {dimension_numbers = #tpu.dot_dimension_numbers<[1], [0], [0], [1], [0, 0, 1, 1], [], []>} : vector<256x128xbf16>, vector<128x128xbf16>, vector<256x128xf32> -> vector<256x128xf32>
    %204 = arith.addf %200, %203 : vector<256x128xf32>
    %c0_177 = arith.constant 0 : index
    %c0_178 = arith.constant 0 : index
    %205 = vector.load %arg12[%c0_177, %c0_178] : memref<256x128xf32, #tpu.memory_space<vmem>>, vector<256x128xf32>
    tpu.vector_store %arg12[%c0_177, %c0_178], %204 {strides = array<i32>} : memref<256x128xf32, #tpu.memory_space<vmem>>, vector<256x128xf32>,
    %c17_179 = arith.constant 17 : index
    %c0_180 = arith.constant 0 : index
    %206 = vector.load %arg11[%c17_179, %c0_180] : memref<304x128xbf16, #tpu.memory_space<vmem>>, vector<256x128xbf16>
    %c0_181 = arith.constant 0 : index
    %c0_182 = arith.constant 0 : index
    %207 = vector.load %arg12[%c0_181, %c0_182] : memref<256x128xf32, #tpu.memory_space<vmem>>, vector<256x128xf32>
    %c4_183 = arith.constant 4 : index
    %c0_184 = arith.constant 0 : index
    %c0_185 = arith.constant 0 : index
    %208 = vector.load %arg9[%c4_183, %c0_184, %c0_185] : memref<9x128x128xbf16, #tpu.memory_space<vmem>>, vector<1x128x128xbf16>
    %209 = vector.shape_cast %208 : vector<1x128x128xbf16> to vector<128x128xbf16>
    %cst_186 = arith.constant dense<0.000000e+00> : vector<256x128xf32>
    %210 = tpu.matmul %206, %209, %cst_186 {dimension_numbers = #tpu.dot_dimension_numbers<[1], [0], [0], [1], [0, 0, 1, 1], [], []>} : vector<256x128xbf16>, vector<128x128xbf16>, vector<256x128xf32> -> vector<256x128xf32>
    %211 = arith.addf %207, %210 : vector<256x128xf32>
    %c0_187 = arith.constant 0 : index
    %c0_188 = arith.constant 0 : index
    %212 = vector.load %arg12[%c0_187, %c0_188] : memref<256x128xf32, #tpu.memory_space<vmem>>, vector<256x128xf32>
    tpu.vector_store %arg12[%c0_187, %c0_188], %211 {strides = array<i32>} : memref<256x128xf32, #tpu.memory_space<vmem>>, vector<256x128xf32>,
    %c18_189 = arith.constant 18 : index
    %c0_190 = arith.constant 0 : index
    %213 = vector.load %arg11[%c18_189, %c0_190] : memref<304x128xbf16, #tpu.memory_space<vmem>>, vector<256x128xbf16>
    %cst_191 = arith.constant 0.000000e+00 : bf16
    %214 = vector.broadcast %cst_191 : bf16 to vector<256x128xbf16>
    %215 = vector.shape_cast %4 : vector<256x1xi1> to vector<256x1xi1>
    %216 = vector.broadcast %215 : vector<256x1xi1> to vector<256x128xi1>
    %217 = arith.select %216, %213, %214 : vector<256x128xi1>, vector<256x128xbf16>
    %c0_192 = arith.constant 0 : index
    %c0_193 = arith.constant 0 : index
    %218 = vector.load %arg12[%c0_192, %c0_193] : memref<256x128xf32, #tpu.memory_space<vmem>>, vector<256x128xf32>
    %c5_194 = arith.constant 5 : index
    %c0_195 = arith.constant 0 : index
    %c0_196 = arith.constant 0 : index
    %219 = vector.load %arg9[%c5_194, %c0_195, %c0_196] : memref<9x128x128xbf16, #tpu.memory_space<vmem>>, vector<1x128x128xbf16>
    %220 = vector.shape_cast %219 : vector<1x128x128xbf16> to vector<128x128xbf16>
    %cst_197 = arith.constant dense<0.000000e+00> : vector<256x128xf32>
    %221 = tpu.matmul %217, %220, %cst_197 {dimension_numbers = #tpu.dot_dimension_numbers<[1], [0], [0], [1], [0, 0, 1, 1], [], []>} : vector<256x128xbf16>, vector<128x128xbf16>, vector<256x128xf32> -> vector<256x128xf32>
    %222 = arith.addf %218, %221 : vector<256x128xf32>
    %c0_198 = arith.constant 0 : index
    %c0_199 = arith.constant 0 : index
    %223 = vector.load %arg12[%c0_198, %c0_199] : memref<256x128xf32, #tpu.memory_space<vmem>>, vector<256x128xf32>
    tpu.vector_store %arg12[%c0_198, %c0_199], %222 {strides = array<i32>} : memref<256x128xf32, #tpu.memory_space<vmem>>, vector<256x128xf32>,
    %c32_200 = arith.constant 32 : index
    %c0_201 = arith.constant 0 : index
    %224 = vector.load %arg11[%c32_200, %c0_201] : memref<304x128xbf16, #tpu.memory_space<vmem>>, vector<256x128xbf16>
    %cst_202 = arith.constant 0.000000e+00 : bf16
    %225 = vector.broadcast %cst_202 : bf16 to vector<256x128xbf16>
    %226 = vector.shape_cast %2 : vector<256x1xi1> to vector<256x1xi1>
    %227 = vector.broadcast %226 : vector<256x1xi1> to vector<256x128xi1>
    %228 = arith.select %227, %224, %225 : vector<256x128xi1>, vector<256x128xbf16>
    %c0_203 = arith.constant 0 : index
    %c0_204 = arith.constant 0 : index
    %229 = vector.load %arg12[%c0_203, %c0_204] : memref<256x128xf32, #tpu.memory_space<vmem>>, vector<256x128xf32>
    %c6_205 = arith.constant 6 : index
    %c0_206 = arith.constant 0 : index
    %c0_207 = arith.constant 0 : index
    %230 = vector.load %arg9[%c6_205, %c0_206, %c0_207] : memref<9x128x128xbf16, #tpu.memory_space<vmem>>, vector<1x128x128xbf16>
    %231 = vector.shape_cast %230 : vector<1x128x128xbf16> to vector<128x128xbf16>
    %cst_208 = arith.constant dense<0.000000e+00> : vector<256x128xf32>
    %232 = tpu.matmul %228, %231, %cst_208 {dimension_numbers = #tpu.dot_dimension_numbers<[1], [0], [0], [1], [0, 0, 1, 1], [], []>} : vector<256x128xbf16>, vector<128x128xbf16>, vector<256x128xf32> -> vector<256x128xf32>
    %233 = arith.addf %229, %232 : vector<256x128xf32>
    %c0_209 = arith.constant 0 : index
    %c0_210 = arith.constant 0 : index
    %234 = vector.load %arg12[%c0_209, %c0_210] : memref<256x128xf32, #tpu.memory_space<vmem>>, vector<256x128xf32>
    tpu.vector_store %arg12[%c0_209, %c0_210], %233 {strides = array<i32>} : memref<256x128xf32, #tpu.memory_space<vmem>>, vector<256x128xf32>,
    %c33_211 = arith.constant 33 : index
    %c0_212 = arith.constant 0 : index
    %235 = vector.load %arg11[%c33_211, %c0_212] : memref<304x128xbf16, #tpu.memory_space<vmem>>, vector<256x128xbf16>
    %c0_213 = arith.constant 0 : index
    %c0_214 = arith.constant 0 : index
    %236 = vector.load %arg12[%c0_213, %c0_214] : memref<256x128xf32, #tpu.memory_space<vmem>>, vector<256x128xf32>
    %c7_215 = arith.constant 7 : index
    %c0_216 = arith.constant 0 : index
    %c0_217 = arith.constant 0 : index
    %237 = vector.load %arg9[%c7_215, %c0_216, %c0_217] : memref<9x128x128xbf16, #tpu.memory_space<vmem>>, vector<1x128x128xbf16>
    %238 = vector.shape_cast %237 : vector<1x128x128xbf16> to vector<128x128xbf16>
    %cst_218 = arith.constant dense<0.000000e+00> : vector<256x128xf32>
    %239 = tpu.matmul %235, %238, %cst_218 {dimension_numbers = #tpu.dot_dimension_numbers<[1], [0], [0], [1], [0, 0, 1, 1], [], []>} : vector<256x128xbf16>, vector<128x128xbf16>, vector<256x128xf32> -> vector<256x128xf32>
    %240 = arith.addf %236, %239 : vector<256x128xf32>
    %c0_219 = arith.constant 0 : index
    %c0_220 = arith.constant 0 : index
    %241 = vector.load %arg12[%c0_219, %c0_220] : memref<256x128xf32, #tpu.memory_space<vmem>>, vector<256x128xf32>
    tpu.vector_store %arg12[%c0_219, %c0_220], %240 {strides = array<i32>} : memref<256x128xf32, #tpu.memory_space<vmem>>, vector<256x128xf32>,
    %c34_221 = arith.constant 34 : index
    %c0_222 = arith.constant 0 : index
    %242 = vector.load %arg11[%c34_221, %c0_222] : memref<304x128xbf16, #tpu.memory_space<vmem>>, vector<256x128xbf16>
    %cst_223 = arith.constant 0.000000e+00 : bf16
    %243 = vector.broadcast %cst_223 : bf16 to vector<256x128xbf16>
    %244 = vector.shape_cast %4 : vector<256x1xi1> to vector<256x1xi1>
    %245 = vector.broadcast %244 : vector<256x1xi1> to vector<256x128xi1>
    %246 = arith.select %245, %242, %243 : vector<256x128xi1>, vector<256x128xbf16>
    %c0_224 = arith.constant 0 : index
    %c0_225 = arith.constant 0 : index
    %247 = vector.load %arg12[%c0_224, %c0_225] : memref<256x128xf32, #tpu.memory_space<vmem>>, vector<256x128xf32>
    %c8_226 = arith.constant 8 : index
    %c0_227 = arith.constant 0 : index
    %c0_228 = arith.constant 0 : index
    %248 = vector.load %arg9[%c8_226, %c0_227, %c0_228] : memref<9x128x128xbf16, #tpu.memory_space<vmem>>, vector<1x128x128xbf16>
    %249 = vector.shape_cast %248 : vector<1x128x128xbf16> to vector<128x128xbf16>
    %cst_229 = arith.constant dense<0.000000e+00> : vector<256x128xf32>
    %250 = tpu.matmul %246, %249, %cst_229 {dimension_numbers = #tpu.dot_dimension_numbers<[1], [0], [0], [1], [0, 0, 1, 1], [], []>} : vector<256x128xbf16>, vector<128x128xbf16>, vector<256x128xf32> -> vector<256x128xf32>
    %251 = arith.addf %247, %250 : vector<256x128xf32>
    %c0_230 = arith.constant 0 : index
    %c0_231 = arith.constant 0 : index
    %252 = vector.load %arg12[%c0_230, %c0_231] : memref<256x128xf32, #tpu.memory_space<vmem>>, vector<256x128xf32>
    tpu.vector_store %arg12[%c0_230, %c0_231], %251 {strides = array<i32>} : memref<256x128xf32, #tpu.memory_space<vmem>>, vector<256x128xf32>,
    %c0_232 = arith.constant 0 : index
    %c0_233 = arith.constant 0 : index
    %253 = vector.load %arg12[%c0_232, %c0_233] : memref<256x128xf32, #tpu.memory_space<vmem>>, vector<256x128xf32>
    %c0_234 = arith.constant 0 : index
    %c0_235 = arith.constant 0 : index
    %c0_236 = arith.constant 0 : index
    %254 = vector.load %arg10[%c0_234, %c0_235, %c0_236] : memref<1x256x128xf32, #tpu.memory_space<vmem>>, vector<1x256x128xf32>
    %255 = vector.shape_cast %254 : vector<1x256x128xf32> to vector<256x128xf32>
    %256 = vector.shape_cast %253 : vector<256x128xf32> to vector<1x256x128xf32>
    tpu.vector_store %arg10[%c0_234, %c0_235, %c0_236], %256 {strides = array<i32>} : memref<1x256x128xf32, #tpu.memory_space<vmem>>, vector<1x256x128xf32>,
    return
  }
  func.func @transform_0(%arg0: i32) -> (i32, i32, i32) {
    %c0_i32 = arith.constant 0 : i32
    %c0_i32_0 = arith.constant 0 : i32
    %c0_i32_1 = arith.constant 0 : i32
    return %arg0, %c0_i32, %c0_i32_0 : i32, i32, i32
  }
  func.func @transform_1(%arg0: i32) -> (i32, i32) {
    %c0_i32 = arith.constant 0 : i32
    %c0_i32_0 = arith.constant 0 : i32
    %c0_i32_1 = arith.constant 0 : i32
    return %c0_i32, %c0_i32_0 : i32, i32
  }
  func.func @transform_2(%arg0: i32) -> (i32, i32) {
    %c0_i32 = arith.constant 0 : i32
    %c0_i32_0 = arith.constant 0 : i32
    %c0_i32_1 = arith.constant 0 : i32
    return %c0_i32, %c0_i32_0 : i32, i32
  }
  func.func @transform_3(%arg0: i32) -> (i32, i32) {
    %c0_i32 = arith.constant 0 : i32
    %c0_i32_0 = arith.constant 0 : i32
    %c0_i32_1 = arith.constant 0 : i32
    return %c0_i32, %c0_i32_0 : i32, i32
  }
  func.func @transform_4(%arg0: i32) -> (i32, i32) {
    %c0_i32 = arith.constant 0 : i32
    %c0_i32_0 = arith.constant 0 : i32
    %c0_i32_1 = arith.constant 0 : i32
    return %c0_i32, %c0_i32_0 : i32, i32
  }
  func.func @transform_5(%arg0: i32) -> (i32, i32) {
    %c0_i32 = arith.constant 0 : i32
    %c0_i32_0 = arith.constant 0 : i32
    %c0_i32_1 = arith.constant 0 : i32
    return %c0_i32, %c0_i32_0 : i32, i32
  }
  func.func @transform_6(%arg0: i32) -> (i32, i32) {
    %c0_i32 = arith.constant 0 : i32
    %c0_i32_0 = arith.constant 0 : i32
    %c0_i32_1 = arith.constant 0 : i32
    return %c0_i32, %c0_i32_0 : i32, i32
  }
  func.func @transform_7(%arg0: i32) -> (i32, i32, i32) {
    %c0_i32 = arith.constant 0 : i32
    %c0_i32_0 = arith.constant 0 : i32
    %c0_i32_1 = arith.constant 0 : i32
    %c0_i32_2 = arith.constant 0 : i32
    return %c0_i32, %c0_i32_0, %c0_i32_1 : i32, i32, i32
  }
  func.func @transform_8(%arg0: i32) -> (i32, i32, i32) {
    %c0_i32 = arith.constant 0 : i32
    %c0_i32_0 = arith.constant 0 : i32
    %c0_i32_1 = arith.constant 0 : i32
    %c0_i32_2 = arith.constant 0 : i32
    return %c0_i32, %c0_i32_0, %c0_i32_1 : i32, i32, i32
  }
  func.func @transform_9(%arg0: i32) -> (i32, i32, i32) {
    %c0_i32 = arith.constant 0 : i32
    %c0_i32_0 = arith.constant 0 : i32
    %c0_i32_1 = arith.constant 0 : i32
    return %arg0, %c0_i32, %c0_i32_0 : i32, i32, i32
  }
}

</mosaic_0001>

<llo_original>
// kernel: resblock_forward.1
$region0: #{resblock_forward.1}
  #allocation0 [shape = 'u32[]', space=smem, size = 0x4, offset = 0x4, fixed_abs, tag = 'smem constant byte address 0x4 - core index']
  #allocation1 [shape = 'u32[72,128]{1,0:T(1,128)}', space=vmem, size = 0x9000, scoped, tag = 'internal scratch']
  #allocation2 [shape = 'bf16[304,128]{1,0:T(8,128)(2,1)}', space=vmem, size = 0x13000, scoped, tag = 'scratch operand']
  #allocation3 [shape = 'f32[256,128]{1,0:T(8,128)}', space=vmem, size = 0x20000, scoped, tag = 'scratch operand']
  %s0 = inlined_call_operand.vmem [shape: f32[2,256,128], index: 0, kind: input, shape index: {}]
  %s1 = inlined_call_operand.vmem [shape: s32[256,1], index: 1, kind: input, shape index: {}]
  %s2 = inlined_call_operand.vmem [shape: f32[1,128], index: 2, kind: input, shape index: {}]
  %s3 = inlined_call_operand.vmem [shape: f32[1,128], index: 3, kind: input, shape index: {}]
  %s4 = inlined_call_operand.vmem [shape: f32[1,128], index: 4, kind: input, shape index: {}]
  %s5 = inlined_call_operand.vmem [shape: f32[1,128], index: 5, kind: input, shape index: {}]
  %s6 = inlined_call_operand.vmem [shape: f32[128,128], index: 6, kind: input, shape index: {}]
  %s7 = inlined_call_operand.vmem [shape: bf16[9,128,128], index: 7, kind: input, shape index: {}]
  %s8 = inlined_call_operand.vmem [shape: bf16[9,128,128], index: 8, kind: input, shape index: {}]
  %s9 = inlined_call_operand.vmem [shape: f32[2,256,128], index: 9, kind: output, shape index: {}]
  %s10 = sld [smem:[#allocation0]]
  $region69: #{resblock_forward.1} parent=0
    _
  %s12 = ssub.s32 1, %s10
  %s13 = scalar_select 0, %s12, %s10
  loop: start=0, step=1, limit=4
  $region2: #{resblock_forward.1} parent=0 // loop_pre_header
    _
  $region3: #{resblock_forward.1} parent=0 // loop_header
    %s15 = sphi 0, %s19
    %p16 = scmp.ge.s32.totalorder %s15, 4
    %s25 = sphi 0, %s27
    %s28 = sphi 0, %s25
    %s29 = sphi 0, %s28
    %s45 = sphi 0, %s29
    %s49 = sphi 0, %s49
    %s51 = sphi 0, %s49
    %s52 = sphi 0, %s51
    %s66 = sphi 0, %s52
    %s70 = sphi 0, %s70
    %s72 = sphi 0, %s70
    %s73 = sphi 0, %s72
    %s87 = sphi 0, %s73
    %s91 = sphi 0, %s91
    %s93 = sphi 0, %s91
    %s94 = sphi 0, %s93
    %s108 = sphi 0, %s94
    %s112 = sphi 0, %s112
    %s114 = sphi 0, %s112
    %s115 = sphi 0, %s114
    %s129 = sphi 0, %s115
    %s133 = sphi 0, %s133
    %s135 = sphi 0, %s133
    %s136 = sphi 0, %s135
    %s150 = sphi 0, %s136
    %s154 = sphi 0, %s154
    %s156 = sphi 0, %s154
    %s157 = sphi 0, %s156
    %s171 = sphi 0, %s157
    %s175 = sphi 0, %s175
    %s177 = sphi 0, %s175
    %s178 = sphi 0, %s177
    %s192 = sphi 0, %s178
    %s196 = sphi 0, %s196
    %s198 = sphi 0, %s196
    %s199 = sphi 0, %s198
    %s213 = sphi 0, %s199
    %s219 = sphi 0, %s221
    %s222 = sphi 0, %s219
    %s223 = sphi 0, %s222
    %s239 = sphi 0, %s223
  $region4: #{resblock_forward.1} parent=0 // loop_header_branch
    %18 = sbr.rel (%p16) target = $region8
  $region5: #{resblock_forward.1} parent=0 // loop_body
    %s20 = ssub.s32 %s15, 1
    %s21 = ssub.s32 %s15, 2
    %s22 = sadd.s32 %s15, 1
    %s23 = ssub.s32 %s15, %s22
    %p24 = scmp.eq.s32.totalorder %s23, 0
    %s26 = sadd.s32 %s25, 1
    %s27 = scalar_select %p24, %s25, %s26
    %p30 = pneg %p24
    %p31 = scmp.eq.s32.totalorder %s15, 1
    %p32 = por %p30, %p31
    %p33 = scmp.ne.s32.totalorder %s25, %s28
    %p34 = scmp.eq.s32.totalorder %s15, 0
    %p35 = por %p33, %p34
    %p36 = scmp.ne.s32.totalorder %s25, %s28
    %p37 = scmp.eq.s32.totalorder %s20, 1
    %p38 = por %p36, %p37
    %p39 = scmp.ne.s32.totalorder %s28, %s29
    %p40 = scmp.eq.s32.totalorder %s20, 0
    %p41 = por %p39, %p40
    %p42 = scmp.ne.s32.totalorder %s28, %s29
    %p43 = scmp.eq.s32.totalorder %s21, 1
    %p44 = por %p42, %p43
    %p46 = scmp.ne.s32.totalorder %s29, %s45
    %p47 = scmp.eq.s32.totalorder %s21, 0
    %p48 = por %p46, %p47
    %s50 = sadd.s32 %s49, 1
    %p53 = scmp.eq.s32.totalorder %s15, 1
    %p54 = scmp.ne.s32.totalorder %s49, %s51
    %p55 = scmp.eq.s32.totalorder %s15, 0
    %p56 = por %p54, %p55
    %p57 = scmp.ne.s32.totalorder %s49, %s51
    %p58 = scmp.eq.s32.totalorder %s20, 1
    %p59 = por %p57, %p58
    %p60 = scmp.ne.s32.totalorder %s51, %s52
    %p61 = scmp.eq.s32.totalorder %s20, 0
    %p62 = por %p60, %p61
    %p63 = scmp.ne.s32.totalorder %s51, %s52
    %p64 = scmp.eq.s32.totalorder %s21, 1
    %p65 = por %p63, %p64
    %p67 = scmp.ne.s32.totalorder %s52, %s66
    %p68 = scmp.eq.s32.totalorder %s21, 0
    %p69 = por %p67, %p68
    %s71 = sadd.s32 %s70, 1
    %p74 = scmp.eq.s32.totalorder %s15, 1
    %p75 = scmp.ne.s32.totalorder %s70, %s72
    %p76 = scmp.eq.s32.totalorder %s15, 0
    %p77 = por %p75, %p76
    %p78 = scmp.ne.s32.totalorder %s70, %s72
    %p79 = scmp.eq.s32.totalorder %s20, 1
    %p80 = por %p78, %p79
    %p81 = scmp.ne.s32.totalorder %s72, %s73
    %p82 = scmp.eq.s32.totalorder %s20, 0
    %p83 = por %p81, %p82
    %p84 = scmp.ne.s32.totalorder %s72, %s73
    %p85 = scmp.eq.s32.totalorder %s21, 1
    %p86 = por %p84, %p85
    %p88 = scmp.ne.s32.totalorder %s73, %s87
    %p89 = scmp.eq.s32.totalorder %s21, 0
    %p90 = por %p88, %p89
    %s92 = sadd.s32 %s91, 1
    %p95 = scmp.eq.s32.totalorder %s15, 1
    %p96 = scmp.ne.s32.totalorder %s91, %s93
    %p97 = scmp.eq.s32.totalorder %s15, 0
    %p98 = por %p96, %p97
    %p99 = scmp.ne.s32.totalorder %s91, %s93
    %p100 = scmp.eq.s32.totalorder %s20, 1
    %p101 = por %p99, %p100
    %p102 = scmp.ne.s32.totalorder %s93, %s94
    %p103 = scmp.eq.s32.totalorder %s20, 0
    %p104 = por %p102, %p103
    %p105 = scmp.ne.s32.totalorder %s93, %s94
    %p106 = scmp.eq.s32.totalorder %s21, 1
    %p107 = por %p105, %p106
    %p109 = scmp.ne.s32.totalorder %s94, %s108
    %p110 = scmp.eq.s32.totalorder %s21, 0
    %p111 = por %p109, %p110
    %s113 = sadd.s32 %s112, 1
    %p116 = scmp.eq.s32.totalorder %s15, 1
    %p117 = scmp.ne.s32.totalorder %s112, %s114
    %p118 = scmp.eq.s32.totalorder %s15, 0
    %p119 = por %p117, %p118
    %p120 = scmp.ne.s32.totalorder %s112, %s114
    %p121 = scmp.eq.s32.totalorder %s20, 1
    %p122 = por %p120, %p121
    %p123 = scmp.ne.s32.totalorder %s114, %s115
    %p124 = scmp.eq.s32.totalorder %s20, 0
    %p125 = por %p123, %p124
    %p126 = scmp.ne.s32.totalorder %s114, %s115
    %p127 = scmp.eq.s32.totalorder %s21, 1
    %p128 = por %p126, %p127
    %p130 = scmp.ne.s32.totalorder %s115, %s129
    %p131 = scmp.eq.s32.totalorder %s21, 0
    %p132 = por %p130, %p131
    %s134 = sadd.s32 %s133, 1
    %p137 = scmp.eq.s32.totalorder %s15, 1
    %p138 = scmp.ne.s32.totalorder %s133, %s135
    %p139 = scmp.eq.s32.totalorder %s15, 0
    %p140 = por %p138, %p139
    %p141 = scmp.ne.s32.totalorder %s133, %s135
    %p142 = scmp.eq.s32.totalorder %s20, 1
    %p143 = por %p141, %p142
    %p144 = scmp.ne.s32.totalorder %s135, %s136
    %p145 = scmp.eq.s32.totalorder %s20, 0
    %p146 = por %p144, %p145
    %p147 = scmp.ne.s32.totalorder %s135, %s136
    %p148 = scmp.eq.s32.totalorder %s21, 1
    %p149 = por %p147, %p148
    %p151 = scmp.ne.s32.totalorder %s136, %s150
    %p152 = scmp.eq.s32.totalorder %s21, 0
    %p153 = por %p151, %p152
    %s155 = sadd.s32 %s154, 1
    %p158 = scmp.eq.s32.totalorder %s15, 1
    %p159 = scmp.ne.s32.totalorder %s154, %s156
    %p160 = scmp.eq.s32.totalorder %s15, 0
    %p161 = por %p159, %p160
    %p162 = scmp.ne.s32.totalorder %s154, %s156
    %p163 = scmp.eq.s32.totalorder %s20, 1
    %p164 = por %p162, %p163
    %p165 = scmp.ne.s32.totalorder %s156, %s157
    %p166 = scmp.eq.s32.totalorder %s20, 0
    %p167 = por %p165, %p166
    %p168 = scmp.ne.s32.totalorder %s156, %s157
    %p169 = scmp.eq.s32.totalorder %s21, 1
    %p170 = por %p168, %p169
    %p172 = scmp.ne.s32.totalorder %s157, %s171
    %p173 = scmp.eq.s32.totalorder %s21, 0
    %p174 = por %p172, %p173
    %s176 = sadd.s32 %s175, 1
    %p179 = scmp.eq.s32.totalorder %s15, 1
    %p180 = scmp.ne.s32.totalorder %s175, %s177
    %p181 = scmp.eq.s32.totalorder %s15, 0
    %p182 = por %p180, %p181
    %p183 = scmp.ne.s32.totalorder %s175, %s177
    %p184 = scmp.eq.s32.totalorder %s20, 1
    %p185 = por %p183, %p184
    %p186 = scmp.ne.s32.totalorder %s177, %s178
    %p187 = scmp.eq.s32.totalorder %s20, 0
    %p188 = por %p186, %p187
    %p189 = scmp.ne.s32.totalorder %s177, %s178
    %p190 = scmp.eq.s32.totalorder %s21, 1
    %p191 = por %p189, %p190
    %p193 = scmp.ne.s32.totalorder %s178, %s192
    %p194 = scmp.eq.s32.totalorder %s21, 0
    %p195 = por %p193, %p194
    %s197 = sadd.s32 %s196, 1
    %p200 = scmp.eq.s32.totalorder %s15, 1
    %p201 = scmp.ne.s32.totalorder %s196, %s198
    %p202 = scmp.eq.s32.totalorder %s15, 0
    %p203 = por %p201, %p202
    %p204 = scmp.ne.s32.totalorder %s196, %s198
    %p205 = scmp.eq.s32.totalorder %s20, 1
    %p206 = por %p204, %p205
    %p207 = scmp.ne.s32.totalorder %s198, %s199
    %p208 = scmp.eq.s32.totalorder %s20, 0
    %p209 = por %p207, %p208
    %p210 = scmp.ne.s32.totalorder %s198, %s199
    %p211 = scmp.eq.s32.totalorder %s21, 1
    %p212 = por %p210, %p211
    %p214 = scmp.ne.s32.totalorder %s199, %s213
    %p215 = scmp.eq.s32.totalorder %s21, 0
    %p216 = por %p214, %p215
    %s217 = ssub.s32 %s15, %s22
    %p218 = scmp.eq.s32.totalorder %s217, 0
    %s220 = sadd.s32 %s219, 1
    %s221 = scalar_select %p218, %s219, %s220
    %p224 = pneg %p218
    %p225 = scmp.eq.s32.totalorder %s15, 1
    %p226 = por %p224, %p225
    %p227 = scmp.ne.s32.totalorder %s219, %s222
    %p228 = scmp.eq.s32.totalorder %s15, 0
    %p229 = por %p227, %p228
    %p230 = scmp.ne.s32.totalorder %s219, %s222
    %p231 = scmp.eq.s32.totalorder %s20, 1
    %p232 = por %p230, %p231
    %p233 = scmp.ne.s32.totalorder %s222, %s223
    %p234 = scmp.eq.s32.totalorder %s20, 0
    %p235 = por %p233, %p234
    %p236 = scmp.ne.s32.totalorder %s222, %s223
    %p237 = scmp.eq.s32.totalorder %s21, 1
    %p238 = por %p236, %p237
    %p240 = scmp.ne.s32.totalorder %s223, %s239
    %p241 = scmp.eq.s32.totalorder %s21, 0
    %p242 = por %p240, %p241
    %p243 = scmp.le.s32.totalorder 1, %s15
    %p244 = scmp.lt.s32.totalorder %s15, 3
    %p245 = pnand %p243, %p244
    %p246 = pneg %p245
    // Predicated region
    $region9: #{resblock_forward.1} parent=5 // pred_check
      _
    $region10: #{resblock_forward.1} parent=5 // pred_check_branch
      %248 = sbr.rel (%p245) target = $region12
    $region11: #{resblock_forward.1} parent=5 // pred_region
      %s249 = ssub.s32 %s15, 1
      // Predicated region
      $region13: #{resblock_forward.1} parent=11 // pred_check
        %p250 = pneg %p62
      $region14: #{resblock_forward.1} parent=11 // pred_check_branch
        %252 = sbr.rel (%p250) target = $region16
      $region15: #{resblock_forward.1} parent=11 // pred_region
        _
      $region16: #{resblock_forward.1} parent=11 // pred_fallthru
        _
      // Predicated region
      $region17: #{resblock_forward.1} parent=11 // pred_check
        %p253 = pneg %p83
      $region18: #{resblock_forward.1} parent=11 // pred_check_branch
        %255 = sbr.rel (%p253) target = $region20
      $region19: #{resblock_forward.1} parent=11 // pred_region
        _
      $region20: #{resblock_forward.1} parent=11 // pred_fallthru
        _
      // Predicated region
      $region21: #{resblock_forward.1} parent=11 // pred_check
        %p256 = pneg %p104
      $region22: #{resblock_forward.1} parent=11 // pred_check_branch
        %258 = sbr.rel (%p256) target = $region24
      $region23: #{resblock_forward.1} parent=11 // pred_region
        _
      $region24: #{resblock_forward.1} parent=11 // pred_fallthru
        _
      // Predicated region
      $region25: #{resblock_forward.1} parent=11 // pred_check
        %p259 = pneg %p125
      $region26: #{resblock_forward.1} parent=11 // pred_check_branch
        %261 = sbr.rel (%p259) target = $region28
      $region27: #{resblock_forward.1} parent=11 // pred_region
        _
      $region28: #{resblock_forward.1} parent=11 // pred_fallthru
        _
      // Predicated region
      $region29: #{resblock_forward.1} parent=11 // pred_check
        %p262 = pneg %p146
      $region30: #{resblock_forward.1} parent=11 // pred_check_branch
        %264 = sbr.rel (%p262) target = $region32
      $region31: #{resblock_forward.1} parent=11 // pred_region
        _
      $region32: #{resblock_forward.1} parent=11 // pred_fallthru
        _
      // Predicated region
      $region33: #{resblock_forward.1} parent=11 // pred_check
        %p265 = pneg %p167
      $region34: #{resblock_forward.1} parent=11 // pred_check_branch
        %267 = sbr.rel (%p265) target = $region36
      $region35: #{resblock_forward.1} parent=11 // pred_region
        _
      $region36: #{resblock_forward.1} parent=11 // pred_fallthru
        _
      // Predicated region
      $region37: #{resblock_forward.1} parent=11 // pred_check
        %p268 = pneg %p188
      $region38: #{resblock_forward.1} parent=11 // pred_check_branch
        %270 = sbr.rel (%p268) target = $region40
      $region39: #{resblock_forward.1} parent=11 // pred_region
        _
      $region40: #{resblock_forward.1} parent=11 // pred_fallthru
        _
      // Predicated region
      $region41: #{resblock_forward.1} parent=11 // pred_check
        %p271 = pneg %p209
      $region42: #{resblock_forward.1} parent=11 // pred_check_branch
        %273 = sbr.rel (%p271) target = $region44
      $region43: #{resblock_forward.1} parent=11 // pred_region
        _
      $region44: #{resblock_forward.1} parent=11 // pred_fallthru
        _
    $region12: #{resblock_forward.1} parent=5 // pred_fallthru
      _
    %p274 = scmp.lt.s32.totalorder %s15, 2
    // Predicated region
    $region45: #{resblock_forward.1} parent=5 // pred_check
      %p275 = pneg %p274
    $region46: #{resblock_forward.1} parent=5 // pred_check_branch
      %277 = sbr.rel (%p275) target = $region48
    $region47: #{resblock_forward.1} parent=5 // pred_region
      // Predicated region
      $region49: #{resblock_forward.1} parent=47 // pred_check
        %p278 = pneg %p35
      $region50: #{resblock_forward.1} parent=47 // pred_check_branch
        %280 = sbr.rel (%p278) target = $region52
      $region51: #{resblock_forward.1} parent=47 // pred_region
        %p281 = scmp.lt.s32.totalorder %s15, 1
        %s282 = scalar_select %p281, %s15, 1
        %s283 = smul.addr %s282, 32
        %s284 = smul.addr %s283, 8
        %s285 = scalar_lea.vmem %s0, %s284
      $region52: #{resblock_forward.1} parent=47 // pred_fallthru
        _
    $region48: #{resblock_forward.1} parent=5 // pred_fallthru
      _
    %p286 = scmp.le.s32.totalorder 1, %s15
    %p287 = scmp.lt.s32.totalorder %s15, 3
    %p288 = pnand %p286, %p287
    %p289 = pneg %p288
    // Predicated region
    $region53: #{resblock_forward.1} parent=5 // pred_check
      _
    $region54: #{resblock_forward.1} parent=5 // pred_check_branch
      %291 = sbr.rel (%p288) target = $region56
    $region55: #{resblock_forward.1} parent=5 // pred_region
      %s292 = ssub.s32 %s15, 1
      %p293 = scmp.lt.s32.totalorder %s20, 1
      %s294 = scalar_select %p293, %s20, 1
      %s295 = smul.addr %s294, 32
      %s296 = smul.addr %s295, 8
      %s297 = scalar_lea.vmem %s0, %s296
      %p298 = pneg %p41
      %p299 = pneg %p38
      %p300 = pneg %p62
      %p301 = pneg %p59
      %p302 = pneg %p83
      %p303 = pneg %p80
      %p304 = pneg %p104
      %p305 = pneg %p101
      %p306 = pneg %p125
      %p307 = pneg %p122
      %p308 = pneg %p146
      %p309 = pneg %p143
      %p310 = pneg %p167
      %p311 = pneg %p164
      %p312 = pneg %p188
      %p313 = pneg %p185
      %p314 = pneg %p209
      %p315 = pneg %p206
      %p316 = pneg %p235
      %p317 = pneg %p232
      %p318 = scmp.lt.s32.totalorder %s20, 1
      %s319 = scalar_select %p318, %s20, 1
      %s320 = smul.addr %s319, 32
      %s321 = smul.addr %s320, 8
      %s322 = scalar_lea.vmem %s9, %s321
      %p323 = scmp.lt.s32.totalorder %s20, 1
      %s324 = scalar_select %p323, %s20, 1
      %s325 = smul.addr %s324, 32
      %s326 = smul.addr %s325, 8
      %s327 = scalar_lea.vmem %s0, %s326
      %p328 = scmp.lt.s32.totalorder %s20, 1
      %s329 = scalar_select %p328, %s20, 1
      %s330 = smul.addr %s329, 32
      %s331 = smul.addr %s330, 8
      %s332 = scalar_lea.vmem %s9, %s331
      %v336 = vld [vmem:[%s1] sm:$0xff]
      %v337 = vld [vmem:[%s1 + $0x8] sm:$0xff]
      %v338 = vld [vmem:[%s1 + $0x10] sm:$0xff]
      %v339 = vld [vmem:[%s1 + $0x18] sm:$0xff]
      %v340 = vld [vmem:[%s1 + $0x20] sm:$0xff]
      %v341 = vld [vmem:[%s1 + $0x28] sm:$0xff]
      %v342 = vld [vmem:[%s1 + $0x30] sm:$0xff]
      %v343 = vld [vmem:[%s1 + $0x38] sm:$0xff]
      %v344 = vld [vmem:[%s1 + $0x40] sm:$0xff]
      %v345 = vld [vmem:[%s1 + $0x48] sm:$0xff]
      %v346 = vld [vmem:[%s1 + $0x50] sm:$0xff]
      %v347 = vld [vmem:[%s1 + $0x58] sm:$0xff]
      %v348 = vld [vmem:[%s1 + $0x60] sm:$0xff]
      %v349 = vld [vmem:[%s1 + $0x68] sm:$0xff]
      %v350 = vld [vmem:[%s1 + $0x70] sm:$0xff]
      %v351 = vld [vmem:[%s1 + $0x78] sm:$0xff]
      %v352 = vld [vmem:[%s1 + $0x80] sm:$0xff]
      %v353 = vld [vmem:[%s1 + $0x88] sm:$0xff]
      %v354 = vld [vmem:[%s1 + $0x90] sm:$0xff]
      %v355 = vld [vmem:[%s1 + $0x98] sm:$0xff]
      %v356 = vld [vmem:[%s1 + $0xa0] sm:$0xff]
      %v357 = vld [vmem:[%s1 + $0xa8] sm:$0xff]
      %v358 = vld [vmem:[%s1 + $0xb0] sm:$0xff]
      %v359 = vld [vmem:[%s1 + $0xb8] sm:$0xff]
      %v360 = vld [vmem:[%s1 + $0xc0] sm:$0xff]
      %v361 = vld [vmem:[%s1 + $0xc8] sm:$0xff]
      %v362 = vld [vmem:[%s1 + $0xd0] sm:$0xff]
      %v363 = vld [vmem:[%s1 + $0xd8] sm:$0xff]
      %v364 = vld [vmem:[%s1 + $0xe0] sm:$0xff]
      %v365 = vld [vmem:[%s1 + $0xe8] sm:$0xff]
      %v366 = vld [vmem:[%s1 + $0xf0] sm:$0xff]
      %v367 = vld [vmem:[%s1 + $0xf8] sm:$0xff]
      %vm368 = vcmp.ge.s32.totalorder %v336, 1
      %vm369 = vcmp.ge.s32.totalorder %v337, 1
      %vm370 = vcmp.ge.s32.totalorder %v338, 1
      %vm371 = vcmp.ge.s32.totalorder %v339, 1
      %vm372 = vcmp.ge.s32.totalorder %v340, 1
      %vm373 = vcmp.ge.s32.totalorder %v341, 1
      %vm374 = vcmp.ge.s32.totalorder %v342, 1
      %vm375 = vcmp.ge.s32.totalorder %v343, 1
      %vm376 = vcmp.ge.s32.totalorder %v344, 1
      %vm377 = vcmp.ge.s32.totalorder %v345, 1
      %vm378 = vcmp.ge.s32.totalorder %v346, 1
      %vm379 = vcmp.ge.s32.totalorder %v347, 1
      %vm380 = vcmp.ge.s32.totalorder %v348, 1
      %vm381 = vcmp.ge.s32.totalorder %v349, 1
      %vm382 = vcmp.ge.s32.totalorder %v350, 1
      %vm383 = vcmp.ge.s32.totalorder %v351, 1
      %vm384 = vcmp.ge.s32.totalorder %v352, 1
      %vm385 = vcmp.ge.s32.totalorder %v353, 1
      %vm386 = vcmp.ge.s32.totalorder %v354, 1
      %vm387 = vcmp.ge.s32.totalorder %v355, 1
      %vm388 = vcmp.ge.s32.totalorder %v356, 1
      %vm389 = vcmp.ge.s32.totalorder %v357, 1
      %vm390 = vcmp.ge.s32.totalorder %v358, 1
      %vm391 = vcmp.ge.s32.totalorder %v359, 1
      %vm392 = vcmp.ge.s32.totalorder %v360, 1
      %vm393 = vcmp.ge.s32.totalorder %v361, 1
      %vm394 = vcmp.ge.s32.totalorder %v362, 1
      %vm395 = vcmp.ge.s32.totalorder %v363, 1
      %vm396 = vcmp.ge.s32.totalorder %v364, 1
      %vm397 = vcmp.ge.s32.totalorder %v365, 1
      %vm398 = vcmp.ge.s32.totalorder %v366, 1
      %vm399 = vcmp.ge.s32.totalorder %v367, 1
      %vm400 = vcmp.le.s32.totalorder %v336, 14
      %vm401 = vcmp.le.s32.totalorder %v337, 14
      %vm402 = vcmp.le.s32.totalorder %v338, 14
      %vm403 = vcmp.le.s32.totalorder %v339, 14
      %vm404 = vcmp.le.s32.totalorder %v340, 14
      %vm405 = vcmp.le.s32.totalorder %v341, 14
      %vm406 = vcmp.le.s32.totalorder %v342, 14
      %vm407 = vcmp.le.s32.totalorder %v343, 14
      %vm408 = vcmp.le.s32.totalorder %v344, 14
      %vm409 = vcmp.le.s32.totalorder %v345, 14
      %vm410 = vcmp.le.s32.totalorder %v346, 14
      %vm411 = vcmp.le.s32.totalorder %v347, 14
      %vm412 = vcmp.le.s32.totalorder %v348, 14
      %vm413 = vcmp.le.s32.totalorder %v349, 14
      %vm414 = vcmp.le.s32.totalorder %v350, 14
      %vm415 = vcmp.le.s32.totalorder %v351, 14
      %vm416 = vcmp.le.s32.totalorder %v352, 14
      %vm417 = vcmp.le.s32.totalorder %v353, 14
      %vm418 = vcmp.le.s32.totalorder %v354, 14
      %vm419 = vcmp.le.s32.totalorder %v355, 14
      %vm420 = vcmp.le.s32.totalorder %v356, 14
      %vm421 = vcmp.le.s32.totalorder %v357, 14
      %vm422 = vcmp.le.s32.totalorder %v358, 14
      %vm423 = vcmp.le.s32.totalorder %v359, 14
      %vm424 = vcmp.le.s32.totalorder %v360, 14
      %vm425 = vcmp.le.s32.totalorder %v361, 14
      %vm426 = vcmp.le.s32.totalorder %v362, 14
      %vm427 = vcmp.le.s32.totalorder %v363, 14
      %vm428 = vcmp.le.s32.totalorder %v364, 14
      %vm429 = vcmp.le.s32.totalorder %v365, 14
      %vm430 = vcmp.le.s32.totalorder %v366, 14
      %vm431 = vcmp.le.s32.totalorder %v367, 14
      %432 = vst [vmem:[#allocation2] sm:$0xf] 0
      %433 = vst [vmem:[#allocation2 + $0x4] sm:$0xf] 0
      %vm434 = vcmask 1040384
      %vm435 = vsmask.f32 256
      %vm436 = vmand %vm434, %vm435
      %v437 = vld [vmem:[#allocation2 + $0x8] sm:$0x1]
      %v438 = vsel %vm436, 0, %v437
      %439 = vst [vmem:[#allocation2 + $0x8] sm:$0x1] %v438
      %vm440 = vcmask 1043456
      %vm441 = vsmask.f32 7938
      %vm442 = vmand %vm440, %vm441
      %v443 = vld [vmem:[#allocation2 + $0x88] sm:$0xf]
      %v444 = vsel %vm442, 0, %v443
      %445 = vst [vmem:[#allocation2 + $0x88] sm:$0xf] %v444
      %446 = vst [vmem:[#allocation2 + $0x8c] sm:$0xf] 0
      %447 = vst [vmem:[#allocation2 + $0x90] sm:$0xf] 0
      %448 = vst [vmem:[#allocation2 + $0x94] sm:$0xf] 0
      %v449 = vld [vmem:[%s327] sm:$0xff]
      %v450 = vld [vmem:[%s327 + $0x8] sm:$0xff]
      %v451 = vld [vmem:[%s327 + $0x10] sm:$0xff]
      %v452 = vld [vmem:[%s327 + $0x18] sm:$0xff]
      %v453 = vld [vmem:[%s327 + $0x20] sm:$0xff]
      %v454 = vld [vmem:[%s327 + $0x28] sm:$0xff]
      %v455 = vld [vmem:[%s327 + $0x30] sm:$0xff]
      %v456 = vld [vmem:[%s327 + $0x38] sm:$0xff]
      %v457 = vld [vmem:[%s327 + $0x40] sm:$0xff]
      %v458 = vld [vmem:[%s327 + $0x48] sm:$0xff]
      %v459 = vld [vmem:[%s327 + $0x50] sm:$0xff]
      %v460 = vld [vmem:[%s327 + $0x58] sm:$0xff]
      %v461 = vld [vmem:[%s327 + $0x60] sm:$0xff]
      %v462 = vld [vmem:[%s327 + $0x68] sm:$0xff]
      %v463 = vld [vmem:[%s327 + $0x70] sm:$0xff]
      %v464 = vld [vmem:[%s327 + $0x78] sm:$0xff]
      %v465 = vld [vmem:[%s327 + $0x80] sm:$0xff]
      %v466 = vld [vmem:[%s327 + $0x88] sm:$0xff]
      %v467 = vld [vmem:[%s327 + $0x90] sm:$0xff]
      %v468 = vld [vmem:[%s327 + $0x98] sm:$0xff]
      %v469 = vld [vmem:[%s327 + $0xa0] sm:$0xff]
      %v470 = vld [vmem:[%s327 + $0xa8] sm:$0xff]
      %v471 = vld [vmem:[%s327 + $0xb0] sm:$0xff]
      %v472 = vld [vmem:[%s327 + $0xb8] sm:$0xff]
      %v473 = vld [vmem:[%s327 + $0xc0] sm:$0xff]
      %v474 = vld [vmem:[%s327 + $0xc8] sm:$0xff]
      %v475 = vld [vmem:[%s327 + $0xd0] sm:$0xff]
      %v476 = vld [vmem:[%s327 + $0xd8] sm:$0xff]
      %v477 = vld [vmem:[%s327 + $0xe0] sm:$0xff]
      %v478 = vld [vmem:[%s327 + $0xe8] sm:$0xff]
      %v479 = vld [vmem:[%s327 + $0xf0] sm:$0xff]
      %v480 = vld [vmem:[%s327 + $0xf8] sm:$0xff]
      %v481 = vld [vmem:[%s2] sm:$0x1]
      %v482 = vld [vmem:[%s3] sm:$0x1]
      %v483 = vadd.f32 %v449, %v450
      %v484 = vadd.f32 %v483, %v451
      %v485 = vadd.f32 %v484, %v452
      %v486 = vadd.f32 %v485, %v453
      %v487 = vadd.f32 %v486, %v454
      %v488 = vadd.f32 %v487, %v455
      %v489 = vadd.f32 %v488, %v456
      %v490 = vadd.f32 %v489, %v457
      %v491 = vadd.f32 %v490, %v458
      %v492 = vadd.f32 %v491, %v459
      %v493 = vadd.f32 %v492, %v460
      %v494 = vadd.f32 %v493, %v461
      %v495 = vadd.f32 %v494, %v462
      %v496 = vadd.f32 %v495, %v463
      %v497 = vadd.f32 %v496, %v464
      %v498 = vadd.f32 %v497, %v465
      %v499 = vadd.f32 %v498, %v466
      %v500 = vadd.f32 %v499, %v467
      %v501 = vadd.f32 %v500, %v468
      %v502 = vadd.f32 %v501, %v469
      %v503 = vadd.f32 %v502, %v470
      %v504 = vadd.f32 %v503, %v471
      %v505 = vadd.f32 %v504, %v472
      %v506 = vadd.f32 %v505, %v473
      %v507 = vadd.f32 %v506, %v474
      %v508 = vadd.f32 %v507, %v475
      %v509 = vadd.f32 %v508, %v476
      %v510 = vadd.f32 %v509, %v477
      %v511 = vadd.f32 %v510, %v478
      %v512 = vadd.f32 %v511, %v479
      %v513 = vadd.f32 %v512, %v480
      %v514 = vrot.slane %v513, 4
      %v515 = vadd.f32 %v513, %v514
      %v516 = vrot.slane %v515, 2
      %v517 = vadd.f32 %v515, %v516
      %v518 = vrot.slane %v517, 1
      %v519 = vadd.f32 %v517, %v518
      %v520 = vld [vmem:[%s6] sm:$0xff]
      %v521 = vld [vmem:[%s6 + $0x8] sm:$0xff]
      %v522 = vld [vmem:[%s6 + $0x10] sm:$0xff]
      %v523 = vld [vmem:[%s6 + $0x18] sm:$0xff]
      %v524 = vld [vmem:[%s6 + $0x20] sm:$0xff]
      %v525 = vld [vmem:[%s6 + $0x28] sm:$0xff]
      %v526 = vld [vmem:[%s6 + $0x30] sm:$0xff]
      %v527 = vld [vmem:[%s6 + $0x38] sm:$0xff]
      %v528 = vld [vmem:[%s6 + $0x40] sm:$0xff]
      %v529 = vld [vmem:[%s6 + $0x48] sm:$0xff]
      %v530 = vld [vmem:[%s6 + $0x50] sm:$0xff]
      %v531 = vld [vmem:[%s6 + $0x58] sm:$0xff]
      %v532 = vld [vmem:[%s6 + $0x60] sm:$0xff]
      %v533 = vld [vmem:[%s6 + $0x68] sm:$0xff]
      %v534 = vld [vmem:[%s6 + $0x70] sm:$0xff]
      %v535 = vld [vmem:[%s6 + $0x78] sm:$0xff]
      %536 = vmatpush.msra.mxu0 %v535
      %537 = vmatpush.msra.mxu0 %v534
      %538 = vmatpush.msra.mxu0 %v533
      %539 = vmatpush.msra.mxu0 %v532
      %540 = vmatpush.msra.mxu0 %v531
      %541 = vmatpush.msra.mxu0 %v530
      %542 = vmatpush.msra.mxu0 %v529
      %543 = vmatpush.msra.mxu0 %v528
      %544 = vmatpush.msra.mxu0 %v527
      %545 = vmatpush.msra.mxu0 %v526
      %546 = vmatpush.msra.mxu0 %v525
      %547 = vmatpush.msra.mxu0 %v524
      %548 = vmatpush.msra.mxu0 %v523
      %549 = vmatpush.msra.mxu0 %v522
      %550 = vmatpush.msra.mxu0 %v521
      %551 = vmatpush.msra.mxu0 %v520
      %552 = vmatmul.f32.gmra.mxu0 %v519
      %v553 = vpop.f32.mrf.mxu0
      %v554 = vadd.f32 0.0, %v553
      %555 = vdwg.mxu0
      %v556 = vmul.f32 %v554, 0.00390625
      %v557 = vperm.slane %v556, 0
      %v558 = vsub.f32 %v449, %v557
      %v559 = vsub.f32 %v450, %v557
      %v560 = vsub.f32 %v451, %v557
      %v561 = vsub.f32 %v452, %v557
      %v562 = vsub.f32 %v453, %v557
      %v563 = vsub.f32 %v454, %v557
      %v564 = vsub.f32 %v455, %v557
      %v565 = vsub.f32 %v456, %v557
      %v566 = vsub.f32 %v457, %v557
      %v567 = vsub.f32 %v458, %v557
      %v568 = vsub.f32 %v459, %v557
      %v569 = vsub.f32 %v460, %v557
      %v570 = vsub.f32 %v461, %v557
      %v571 = vsub.f32 %v462, %v557
      %v572 = vsub.f32 %v463, %v557
      %v573 = vsub.f32 %v464, %v557
      %v574 = vsub.f32 %v465, %v557
      %v575 = vsub.f32 %v466, %v557
      %v576 = vsub.f32 %v467, %v557
      %v577 = vsub.f32 %v468, %v557
      %v578 = vsub.f32 %v469, %v557
      %v579 = vsub.f32 %v470, %v557
      %v580 = vsub.f32 %v471, %v557
      %v581 = vsub.f32 %v472, %v557
      %v582 = vsub.f32 %v473, %v557
      %v583 = vsub.f32 %v474, %v557
      %v584 = vsub.f32 %v475, %v557
      %v585 = vsub.f32 %v476, %v557
      %v586 = vsub.f32 %v477, %v557
      %v587 = vsub.f32 %v478, %v557
      %v588 = vsub.f32 %v479, %v557
      %v589 = vsub.f32 %v480, %v557
      %v590 = vmul.f32 %v558, %v558
      %v591 = vmul.f32 %v559, %v559
      %v592 = vmul.f32 %v560, %v560
      %v593 = vmul.f32 %v561, %v561
      %v594 = vmul.f32 %v562, %v562
      %v595 = vmul.f32 %v563, %v563
      %v596 = vmul.f32 %v564, %v564
      %v597 = vmul.f32 %v565, %v565
      %v598 = vmul.f32 %v566, %v566
      %v599 = vmul.f32 %v567, %v567
      %v600 = vmul.f32 %v568, %v568
      %v601 = vmul.f32 %v569, %v569
      %v602 = vmul.f32 %v570, %v570
      %v603 = vmul.f32 %v571, %v571
      %v604 = vmul.f32 %v572, %v572
      %v605 = vmul.f32 %v573, %v573
      %v606 = vmul.f32 %v574, %v574
      %v607 = vmul.f32 %v575, %v575
      %v608 = vmul.f32 %v576, %v576
      %v609 = vmul.f32 %v577, %v577
      %v610 = vmul.f32 %v578, %v578
      %v611 = vmul.f32 %v579, %v579
      %v612 = vmul.f32 %v580, %v580
      %v613 = vmul.f32 %v581, %v581
      %v614 = vmul.f32 %v582, %v582
      %v615 = vmul.f32 %v583, %v583
      %v616 = vmul.f32 %v584, %v584
      %v617 = vmul.f32 %v585, %v585
      %v618 = vmul.f32 %v586, %v586
      %v619 = vmul.f32 %v587, %v587
      %v620 = vmul.f32 %v588, %v588
      %v621 = vmul.f32 %v589, %v589
      %v622 = vadd.f32 %v590, %v591
      %v623 = vadd.f32 %v622, %v592
      %v624 = vadd.f32 %v623, %v593
      %v625 = vadd.f32 %v624, %v594
      %v626 = vadd.f32 %v625, %v595
      %v627 = vadd.f32 %v626, %v596
      %v628 = vadd.f32 %v627, %v597
      %v629 = vadd.f32 %v628, %v598
      %v630 = vadd.f32 %v629, %v599
      %v631 = vadd.f32 %v630, %v600
      %v632 = vadd.f32 %v631, %v601
      %v633 = vadd.f32 %v632, %v602
      %v634 = vadd.f32 %v633, %v603
      %v635 = vadd.f32 %v634, %v604
      %v636 = vadd.f32 %v635, %v605
      %v637 = vadd.f32 %v636, %v606
      %v638 = vadd.f32 %v637, %v607
      %v639 = vadd.f32 %v638, %v608
      %v640 = vadd.f32 %v639, %v609
      %v641 = vadd.f32 %v640, %v610
      %v642 = vadd.f32 %v641, %v611
      %v643 = vadd.f32 %v642, %v612
      %v644 = vadd.f32 %v643, %v613
      %v645 = vadd.f32 %v644, %v614
      %v646 = vadd.f32 %v645, %v615
      %v647 = vadd.f32 %v646, %v616
      %v648 = vadd.f32 %v647, %v617
      %v649 = vadd.f32 %v648, %v618
      %v650 = vadd.f32 %v649, %v619
      %v651 = vadd.f32 %v650, %v620
      %v652 = vadd.f32 %v651, %v621
      %v653 = vrot.slane %v652, 4
      %v654 = vadd.f32 %v652, %v653
      %v655 = vrot.slane %v654, 2
      %v656 = vadd.f32 %v654, %v655
      %v657 = vrot.slane %v656, 1
      %v658 = vadd.f32 %v656, %v657
      %659 = vmatpush.msra.mxu0 %v535
      %660 = vmatpush.msra.mxu0 %v534
      %661 = vmatpush.msra.mxu0 %v533
      %662 = vmatpush.msra.mxu0 %v532
      %663 = vmatpush.msra.mxu0 %v531
      %664 = vmatpush.msra.mxu0 %v530
      %665 = vmatpush.msra.mxu0 %v529
      %666 = vmatpush.msra.mxu0 %v528
      %667 = vmatpush.msra.mxu0 %v527
      %668 = vmatpush.msra.mxu0 %v526
      %669 = vmatpush.msra.mxu0 %v525
      %670 = vmatpush.msra.mxu0 %v524
      %671 = vmatpush.msra.mxu0 %v523
      %672 = vmatpush.msra.mxu0 %v522
      %673 = vmatpush.msra.mxu0 %v521
      %674 = vmatpush.msra.mxu0 %v520
      %675 = vmatmul.f32.gmra.mxu0 %v658
      %v676 = vpop.f32.mrf.mxu0
      %v677 = vadd.f32 0.0, %v676
      %678 = vdwg.mxu0
      %v679 = vmul.f32 %v677, 0.00390625
      %v680 = vadd.f32 %v679, 1e-05
      %v681 = vrsqrt.pop %v680
      %v682 = vmul.f32 %v681, %v680
      %v683 = vmul.f32 %v682, %v681
      %v684 = vmul.f32 0.5, %v683
      %v685 = vsub.f32 1.5, %v684
      %v686 = vmul.f32 %v681, %v685
      %vm687 = vweird.f32 %v680
      %vm688 = vweird.f32 %v681
      %vm689 = vmor %vm687, %vm688
      %v690 = vsel %vm689, %v681, %v686
      %v691 = vmul.f32 %v690, %v481
      %v692 = vmul.f32 %v556, %v691
      %v693 = vsub.f32 %v482, %v692
      %v694 = vperm.slane %v691, 0
      %v695 = vmul.f32 %v449, %v694
      %v696 = vmul.f32 %v450, %v694
      %v697 = vmul.f32 %v451, %v694
      %v698 = vmul.f32 %v452, %v694
      %v699 = vmul.f32 %v453, %v694
      %v700 = vmul.f32 %v454, %v694
      %v701 = vmul.f32 %v455, %v694
      %v702 = vmul.f32 %v456, %v694
      %v703 = vmul.f32 %v457, %v694
      %v704 = vmul.f32 %v458, %v694
      %v705 = vmul.f32 %v459, %v694
      %v706 = vmul.f32 %v460, %v694
      %v707 = vmul.f32 %v461, %v694
      %v708 = vmul.f32 %v462, %v694
      %v709 = vmul.f32 %v463, %v694
      %v710 = vmul.f32 %v464, %v694
      %v711 = vmul.f32 %v465, %v694
      %v712 = vmul.f32 %v466, %v694
      %v713 = vmul.f32 %v467, %v694
      %v714 = vmul.f32 %v468, %v694
      %v715 = vmul.f32 %v469, %v694
      %v716 = vmul.f32 %v470, %v694
      %v717 = vmul.f32 %v471, %v694
      %v718 = vmul.f32 %v472, %v694
      %v719 = vmul.f32 %v473, %v694
      %v720 = vmul.f32 %v474, %v694
      %v721 = vmul.f32 %v475, %v694
      %v722 = vmul.f32 %v476, %v694
      %v723 = vmul.f32 %v477, %v694
      %v724 = vmul.f32 %v478, %v694
      %v725 = vmul.f32 %v479, %v694
      %v726 = vmul.f32 %v480, %v694
      %v728 = vperm.slane %v693, 0
      %v730 = vadd.f32 %v695, %v728
      %v731 = vadd.f32 %v696, %v728
      %v732 = vadd.f32 %v697, %v728
      %v733 = vadd.f32 %v698, %v728
      %v734 = vadd.f32 %v699, %v728
      %v735 = vadd.f32 %v700, %v728
      %v736 = vadd.f32 %v701, %v728
      %v737 = vadd.f32 %v702, %v728
      %v738 = vadd.f32 %v703, %v728
      %v739 = vadd.f32 %v704, %v728
      %v740 = vadd.f32 %v705, %v728
      %v741 = vadd.f32 %v706, %v728
      %v742 = vadd.f32 %v707, %v728
      %v743 = vadd.f32 %v708, %v728
      %v744 = vadd.f32 %v709, %v728
      %v745 = vadd.f32 %v710, %v728
      %v746 = vadd.f32 %v711, %v728
      %v747 = vadd.f32 %v712, %v728
      %v748 = vadd.f32 %v713, %v728
      %v749 = vadd.f32 %v714, %v728
      %v750 = vadd.f32 %v715, %v728
      %v751 = vadd.f32 %v716, %v728
      %v752 = vadd.f32 %v717, %v728
      %v753 = vadd.f32 %v718, %v728
      %v754 = vadd.f32 %v719, %v728
      %v755 = vadd.f32 %v720, %v728
      %v756 = vadd.f32 %v721, %v728
      %v757 = vadd.f32 %v722, %v728
      %v758 = vadd.f32 %v723, %v728
      %v759 = vadd.f32 %v724, %v728
      %v760 = vadd.f32 %v725, %v728
      %v761 = vadd.f32 %v726, %v728
      %v762 = vmax.f32 %v730, 0.0
      %v763 = vmax.f32 %v731, 0.0
      %v764 = vmax.f32 %v732, 0.0
      %v765 = vmax.f32 %v733, 0.0
      %v766 = vmax.f32 %v734, 0.0
      %v767 = vmax.f32 %v735, 0.0
      %v768 = vmax.f32 %v736, 0.0
      %v769 = vmax.f32 %v737, 0.0
      %v770 = vmax.f32 %v738, 0.0
      %v771 = vmax.f32 %v739, 0.0
      %v772 = vmax.f32 %v740, 0.0
      %v773 = vmax.f32 %v741, 0.0
      %v774 = vmax.f32 %v742, 0.0
      %v775 = vmax.f32 %v743, 0.0
      %v776 = vmax.f32 %v744, 0.0
      %v777 = vmax.f32 %v745, 0.0
      %v778 = vmax.f32 %v746, 0.0
      %v779 = vmax.f32 %v747, 0.0
      %v780 = vmax.f32 %v748, 0.0
      %v781 = vmax.f32 %v749, 0.0
      %v782 = vmax.f32 %v750, 0.0
      %v783 = vmax.f32 %v751, 0.0
      %v784 = vmax.f32 %v752, 0.0
      %v785 = vmax.f32 %v753, 0.0
      %v786 = vmax.f32 %v754, 0.0
      %v787 = vmax.f32 %v755, 0.0
      %v788 = vmax.f32 %v756, 0.0
      %v789 = vmax.f32 %v757, 0.0
      %v790 = vmax.f32 %v758, 0.0
      %v791 = vmax.f32 %v759, 0.0
      %v792 = vmax.f32 %v760, 0.0
      %v793 = vmax.f32 %v761, 0.0
      %v794 = vpack.c.bf16 %v762, %v762
      %v795 = vpack.c.bf16 %v763, %v763
      %v796 = vpack.c.bf16 %v764, %v764
      %v797 = vpack.c.bf16 %v765, %v765
      %v798 = vpack.c.bf16 %v766, %v766
      %v799 = vpack.c.bf16 %v767, %v767
      %v800 = vpack.c.bf16 %v768, %v768
      %v801 = vpack.c.bf16 %v769, %v769
      %v802 = vpack.c.bf16 %v770, %v770
      %v803 = vpack.c.bf16 %v771, %v771
      %v804 = vpack.c.bf16 %v772, %v772
      %v805 = vpack.c.bf16 %v773, %v773
      %v806 = vpack.c.bf16 %v774, %v774
      %v807 = vpack.c.bf16 %v775, %v775
      %v808 = vpack.c.bf16 %v776, %v776
      %v809 = vpack.c.bf16 %v777, %v777
      %v810 = vpack.c.bf16 %v778, %v778
      %v811 = vpack.c.bf16 %v779, %v779
      %v812 = vpack.c.bf16 %v780, %v780
      %v813 = vpack.c.bf16 %v781, %v781
      %v814 = vpack.c.bf16 %v782, %v782
      %v815 = vpack.c.bf16 %v783, %v783
      %v816 = vpack.c.bf16 %v784, %v784
      %v817 = vpack.c.bf16 %v785, %v785
      %v818 = vpack.c.bf16 %v786, %v786
      %v819 = vpack.c.bf16 %v787, %v787
      %v820 = vpack.c.bf16 %v788, %v788
      %v821 = vpack.c.bf16 %v789, %v789
      %v822 = vpack.c.bf16 %v790, %v790
      %v823 = vpack.c.bf16 %v791, %v791
      %v824 = vpack.c.bf16 %v792, %v792
      %v825 = vpack.c.bf16 %v793, %v793
      %vm826 = vsmask.f32 4368
      %vm827 = vmor %vm435, %vm826
      %v829 = vshrl.u32 %v794, 16
      %v831 = vrot.slane %v829, 7
      %v832 = vshll.u32 %v794, 16
      %v834 = vor.u32 %v831, %v832
      %v835 = vrot.slane %v831, 4
      %v837 = vshrl.u32 %v795, 16
      %v839 = vrot.slane %v837, 7
      %v840 = vshll.u32 %v795, 16
      %v842 = vor.u32 %v839, %v840
      %v843 = vsel %vm827, %v835, %v842
      %v844 = vrot.slane %v839, 4
      %v846 = vshrl.u32 %v796, 16
      %v848 = vrot.slane %v846, 7
      %v849 = vshll.u32 %v796, 16
      %v851 = vor.u32 %v848, %v849
      %v852 = vsel %vm827, %v844, %v851
      %v853 = vrot.slane %v848, 4
      %v855 = vshrl.u32 %v797, 16
      %v857 = vrot.slane %v855, 7
      %v858 = vshll.u32 %v797, 16
      %v860 = vor.u32 %v857, %v858
      %v861 = vsel %vm827, %v853, %v860
      %v862 = vrot.slane %v857, 4
      %v864 = vshrl.u32 %v798, 16
      %v866 = vrot.slane %v864, 7
      %v867 = vshll.u32 %v798, 16
      %v869 = vor.u32 %v866, %v867
      %v870 = vsel %vm827, %v862, %v869
      %v871 = vrot.slane %v866, 4
      %v873 = vshrl.u32 %v799, 16
      %v875 = vrot.slane %v873, 7
      %v876 = vshll.u32 %v799, 16
      %v878 = vor.u32 %v875, %v876
      %v879 = vsel %vm827, %v871, %v878
      %v880 = vrot.slane %v875, 4
      %v882 = vshrl.u32 %v800, 16
      %v884 = vrot.slane %v882, 7
      %v885 = vshll.u32 %v800, 16
      %v887 = vor.u32 %v884, %v885
      %v888 = vsel %vm827, %v880, %v887
      %v889 = vrot.slane %v884, 4
      %v891 = vshrl.u32 %v801, 16
      %v893 = vrot.slane %v891, 7
      %v894 = vshll.u32 %v801, 16
      %v896 = vor.u32 %v893, %v894
      %v897 = vsel %vm827, %v889, %v896
      %v898 = vrot.slane %v893, 4
      %v900 = vshrl.u32 %v802, 16
      %v902 = vrot.slane %v900, 7
      %v903 = vshll.u32 %v802, 16
      %v905 = vor.u32 %v902, %v903
      %v906 = vsel %vm827, %v898, %v905
      %v907 = vrot.slane %v902, 4
      %v909 = vshrl.u32 %v803, 16
      %v911 = vrot.slane %v909, 7
      %v912 = vshll.u32 %v803, 16
      %v914 = vor.u32 %v911, %v912
      %v915 = vsel %vm827, %v907, %v914
      %v916 = vrot.slane %v911, 4
      %v918 = vshrl.u32 %v804, 16
      %v920 = vrot.slane %v918, 7
      %v921 = vshll.u32 %v804, 16
      %v923 = vor.u32 %v920, %v921
      %v924 = vsel %vm827, %v916, %v923
      %v925 = vrot.slane %v920, 4
      %v927 = vshrl.u32 %v805, 16
      %v929 = vrot.slane %v927, 7
      %v930 = vshll.u32 %v805, 16
      %v932 = vor.u32 %v929, %v930
      %v933 = vsel %vm827, %v925, %v932
      %v934 = vrot.slane %v929, 4
      %v936 = vshrl.u32 %v806, 16
      %v938 = vrot.slane %v936, 7
      %v939 = vshll.u32 %v806, 16
      %v941 = vor.u32 %v938, %v939
      %v942 = vsel %vm827, %v934, %v941
      %v943 = vrot.slane %v938, 4
      %v945 = vshrl.u32 %v807, 16
      %v947 = vrot.slane %v945, 7
      %v948 = vshll.u32 %v807, 16
      %v950 = vor.u32 %v947, %v948
      %v951 = vsel %vm827, %v943, %v950
      %v952 = vrot.slane %v947, 4
      %v954 = vshrl.u32 %v808, 16
      %v956 = vrot.slane %v954, 7
      %v957 = vshll.u32 %v808, 16
      %v959 = vor.u32 %v956, %v957
      %v960 = vsel %vm827, %v952, %v959
      %v961 = vrot.slane %v956, 4
      %v963 = vshrl.u32 %v809, 16
      %v965 = vrot.slane %v963, 7
      %v966 = vshll.u32 %v809, 16
      %v968 = vor.u32 %v965, %v966
      %v969 = vsel %vm827, %v961, %v968
      %v970 = vrot.slane %v965, 4
      %v972 = vshrl.u32 %v810, 16
      %v974 = vrot.slane %v972, 7
      %v975 = vshll.u32 %v810, 16
      %v977 = vor.u32 %v974, %v975
      %v978 = vsel %vm827, %v970, %v977
      %v979 = vrot.slane %v974, 4
      %v981 = vshrl.u32 %v811, 16
      %v983 = vrot.slane %v981, 7
      %v984 = vshll.u32 %v811, 16
      %v986 = vor.u32 %v983, %v984
      %v987 = vsel %vm827, %v979, %v986
      %v988 = vrot.slane %v983, 4
      %v990 = vshrl.u32 %v812, 16
      %v992 = vrot.slane %v990, 7
      %v993 = vshll.u32 %v812, 16
      %v995 = vor.u32 %v992, %v993
      %v996 = vsel %vm827, %v988, %v995
      %v997 = vrot.slane %v992, 4
      %v999 = vshrl.u32 %v813, 16
      %v1001 = vrot.slane %v999, 7
      %v1002 = vshll.u32 %v813, 16
      %v1004 = vor.u32 %v1001, %v1002
      %v1005 = vsel %vm827, %v997, %v1004
      %v1006 = vrot.slane %v1001, 4
      %v1008 = vshrl.u32 %v814, 16
      %v1010 = vrot.slane %v1008, 7
      %v1011 = vshll.u32 %v814, 16
      %v1013 = vor.u32 %v1010, %v1011
      %v1014 = vsel %vm827, %v1006, %v1013
      %v1015 = vrot.slane %v1010, 4
      %v1017 = vshrl.u32 %v815, 16
      %v1019 = vrot.slane %v1017, 7
      %v1020 = vshll.u32 %v815, 16
      %v1022 = vor.u32 %v1019, %v1020
      %v1023 = vsel %vm827, %v1015, %v1022
      %v1024 = vrot.slane %v1019, 4
      %v1026 = vshrl.u32 %v816, 16
      %v1028 = vrot.slane %v1026, 7
      %v1029 = vshll.u32 %v816, 16
      %v1031 = vor.u32 %v1028, %v1029
      %v1032 = vsel %vm827, %v1024, %v1031
      %v1033 = vrot.slane %v1028, 4
      %v1035 = vshrl.u32 %v817, 16
      %v1037 = vrot.slane %v1035, 7
      %v1038 = vshll.u32 %v817, 16
      %v1040 = vor.u32 %v1037, %v1038
      %v1041 = vsel %vm827, %v1033, %v1040
      %v1042 = vrot.slane %v1037, 4
      %v1044 = vshrl.u32 %v818, 16
      %v1046 = vrot.slane %v1044, 7
      %v1047 = vshll.u32 %v818, 16
      %v1049 = vor.u32 %v1046, %v1047
      %v1050 = vsel %vm827, %v1042, %v1049
      %v1051 = vrot.slane %v1046, 4
      %v1053 = vshrl.u32 %v819, 16
      %v1055 = vrot.slane %v1053, 7
      %v1056 = vshll.u32 %v819, 16
      %v1058 = vor.u32 %v1055, %v1056
      %v1059 = vsel %vm827, %v1051, %v1058
      %v1060 = vrot.slane %v1055, 4
      %v1062 = vshrl.u32 %v820, 16
      %v1064 = vrot.slane %v1062, 7
      %v1065 = vshll.u32 %v820, 16
      %v1067 = vor.u32 %v1064, %v1065
      %v1068 = vsel %vm827, %v1060, %v1067
      %v1069 = vrot.slane %v1064, 4
      %v1071 = vshrl.u32 %v821, 16
      %v1073 = vrot.slane %v1071, 7
      %v1074 = vshll.u32 %v821, 16
      %v1076 = vor.u32 %v1073, %v1074
      %v1077 = vsel %vm827, %v1069, %v1076
      %v1078 = vrot.slane %v1073, 4
      %v1080 = vshrl.u32 %v822, 16
      %v1082 = vrot.slane %v1080, 7
      %v1083 = vshll.u32 %v822, 16
      %v1085 = vor.u32 %v1082, %v1083
      %v1086 = vsel %vm827, %v1078, %v1085
      %v1087 = vrot.slane %v1082, 4
      %v1089 = vshrl.u32 %v823, 16
      %v1091 = vrot.slane %v1089, 7
      %v1092 = vshll.u32 %v823, 16
      %v1094 = vor.u32 %v1091, %v1092
      %v1095 = vsel %vm827, %v1087, %v1094
      %v1096 = vrot.slane %v1091, 4
      %v1098 = vshrl.u32 %v824, 16
      %v1100 = vrot.slane %v1098, 7
      %v1101 = vshll.u32 %v824, 16
      %v1103 = vor.u32 %v1100, %v1101
      %v1104 = vsel %vm827, %v1096, %v1103
      %v1105 = vrot.slane %v1100, 4
      %v1107 = vshrl.u32 %v825, 16
      %v1109 = vrot.slane %v1107, 7
      %v1110 = vshll.u32 %v825, 16
      %v1112 = vor.u32 %v1109, %v1110
      %v1113 = vsel %vm827, %v1105, %v1112
      %v1114 = vrot.slane %v1109, 4
      %v1148 = vld [vmem:[#allocation2 + $0x8] sm:$0xf]
      %v1149 = vsel %vm442, %v834, %v1148
      %1150 = vst [vmem:[#allocation2 + $0x8] sm:$0xf] %v1149
      %1151 = vst [vmem:[#allocation2 + $0xc] sm:$0xf] %v843
      %1152 = vst [vmem:[#allocation2 + $0x10] sm:$0xf] %v852
      %1153 = vst [vmem:[#allocation2 + $0x14] sm:$0xf] %v861
      %1154 = vst [vmem:[#allocation2 + $0x18] sm:$0xf] %v870
      %1155 = vst [vmem:[#allocation2 + $0x1c] sm:$0xf] %v879
      %1156 = vst [vmem:[#allocation2 + $0x20] sm:$0xf] %v888
      %1157 = vst [vmem:[#allocation2 + $0x24] sm:$0xf] %v897
      %1158 = vst [vmem:[#allocation2 + $0x28] sm:$0xf] %v906
      %1159 = vst [vmem:[#allocation2 + $0x2c] sm:$0xf] %v915
      %1160 = vst [vmem:[#allocation2 + $0x30] sm:$0xf] %v924
      %1161 = vst [vmem:[#allocation2 + $0x34] sm:$0xf] %v933
      %1162 = vst [vmem:[#allocation2 + $0x38] sm:$0xf] %v942
      %1163 = vst [vmem:[#allocation2 + $0x3c] sm:$0xf] %v951
      %1164 = vst [vmem:[#allocation2 + $0x40] sm:$0xf] %v960
      %1165 = vst [vmem:[#allocation2 + $0x44] sm:$0xf] %v969
      %1166 = vst [vmem:[#allocation2 + $0x48] sm:$0xf] %v978
      %1167 = vst [vmem:[#allocation2 + $0x4c] sm:$0xf] %v987
      %1168 = vst [vmem:[#allocation2 + $0x50] sm:$0xf] %v996
      %1169 = vst [vmem:[#allocation2 + $0x54] sm:$0xf] %v1005
      %1170 = vst [vmem:[#allocation2 + $0x58] sm:$0xf] %v1014
      %1171 = vst [vmem:[#allocation2 + $0x5c] sm:$0xf] %v1023
      %1172 = vst [vmem:[#allocation2 + $0x60] sm:$0xf] %v1032
      %1173 = vst [vmem:[#allocation2 + $0x64] sm:$0xf] %v1041
      %1174 = vst [vmem:[#allocation2 + $0x68] sm:$0xf] %v1050
      %1175 = vst [vmem:[#allocation2 + $0x6c] sm:$0xf] %v1059
      %1176 = vst [vmem:[#allocation2 + $0x70] sm:$0xf] %v1068
      %1177 = vst [vmem:[#allocation2 + $0x74] sm:$0xf] %v1077
      %1178 = vst [vmem:[#allocation2 + $0x78] sm:$0xf] %v1086
      %1179 = vst [vmem:[#allocation2 + $0x7c] sm:$0xf] %v1095
      %1180 = vst [vmem:[#allocation2 + $0x80] sm:$0xf] %v1104
      %1181 = vst [vmem:[#allocation2 + $0x84] sm:$0xf] %v1113
      %v1182 = vld [vmem:[#allocation2 + $0x88] sm:$0x1]
      %v1183 = vsel %vm436, %v1114, %v1182
      %1184 = vst [vmem:[#allocation2 + $0x88] sm:$0x1] %v1183
      %1185 = vst [vmem:[#allocation3] sm:$0xff] 0.0
      %1186 = vst [vmem:[#allocation3 + $0x8] sm:$0xff] 0.0
      %1187 = vst [vmem:[#allocation3 + $0x10] sm:$0xff] 0.0
      %1188 = vst [vmem:[#allocation3 + $0x18] sm:$0xff] 0.0
      %1189 = vst [vmem:[#allocation3 + $0x20] sm:$0xff] 0.0
      %1190 = vst [vmem:[#allocation3 + $0x28] sm:$0xff] 0.0
      %1191 = vst [vmem:[#allocation3 + $0x30] sm:$0xff] 0.0
      %1192 = vst [vmem:[#allocation3 + $0x38] sm:$0xff] 0.0
      %1193 = vst [vmem:[#allocation3 + $0x40] sm:$0xff] 0.0
      %1194 = vst [vmem:[#allocation3 + $0x48] sm:$0xff] 0.0
      %1195 = vst [vmem:[#allocation3 + $0x50] sm:$0xff] 0.0
      %1196 = vst [vmem:[#allocation3 + $0x58] sm:$0xff] 0.0
      %1197 = vst [vmem:[#allocation3 + $0x60] sm:$0xff] 0.0
      %1198 = vst [vmem:[#allocation3 + $0x68] sm:$0xff] 0.0
      %1199 = vst [vmem:[#allocation3 + $0x70] sm:$0xff] 0.0
      %1200 = vst [vmem:[#allocation3 + $0x78] sm:$0xff] 0.0
      %1201 = vst [vmem:[#allocation3 + $0x80] sm:$0xff] 0.0
      %1202 = vst [vmem:[#allocation3 + $0x88] sm:$0xff] 0.0
      %1203 = vst [vmem:[#allocation3 + $0x90] sm:$0xff] 0.0
      %1204 = vst [vmem:[#allocation3 + $0x98] sm:$0xff] 0.0
      %1205 = vst [vmem:[#allocation3 + $0xa0] sm:$0xff] 0.0
      %1206 = vst [vmem:[#allocation3 + $0xa8] sm:$0xff] 0.0
      %1207 = vst [vmem:[#allocation3 + $0xb0] sm:$0xff] 0.0
      %1208 = vst [vmem:[#allocation3 + $0xb8] sm:$0xff] 0.0
      %1209 = vst [vmem:[#allocation3 + $0xc0] sm:$0xff] 0.0
      %1210 = vst [vmem:[#allocation3 + $0xc8] sm:$0xff] 0.0
      %1211 = vst [vmem:[#allocation3 + $0xd0] sm:$0xff] 0.0
      %1212 = vst [vmem:[#allocation3 + $0xd8] sm:$0xff] 0.0
      %1213 = vst [vmem:[#allocation3 + $0xe0] sm:$0xff] 0.0
      %1214 = vst [vmem:[#allocation3 + $0xe8] sm:$0xff] 0.0
      %1215 = vst [vmem:[#allocation3 + $0xf0] sm:$0xff] 0.0
      %1216 = vst [vmem:[#allocation3 + $0xf8] sm:$0xff] 0.0
      %v1217 = vld [vmem:[#allocation2] sm:$0xf]
      %v1218 = vld [vmem:[#allocation2 + $0x4] sm:$0xf]
      %v1219 = vld [vmem:[#allocation2 + $0x8] sm:$0xf]
      %v1220 = vld [vmem:[#allocation2 + $0xc] sm:$0xf]
      %v1221 = vld [vmem:[#allocation2 + $0x10] sm:$0xf]
      %v1222 = vld [vmem:[#allocation2 + $0x14] sm:$0xf]
      %v1223 = vld [vmem:[#allocation2 + $0x18] sm:$0xf]
      %v1224 = vld [vmem:[#allocation2 + $0x1c] sm:$0xf]
      %v1225 = vld [vmem:[#allocation2 + $0x20] sm:$0xf]
      %v1226 = vld [vmem:[#allocation2 + $0x24] sm:$0xf]
      %v1227 = vld [vmem:[#allocation2 + $0x28] sm:$0xf]
      %v1228 = vld [vmem:[#allocation2 + $0x2c] sm:$0xf]
      %v1229 = vld [vmem:[#allocation2 + $0x30] sm:$0xf]
      %v1230 = vld [vmem:[#allocation2 + $0x34] sm:$0xf]
      %v1231 = vld [vmem:[#allocation2 + $0x38] sm:$0xf]
      %v1232 = vld [vmem:[#allocation2 + $0x3c] sm:$0xf]
      %v1233 = vld [vmem:[#allocation2 + $0x40] sm:$0xf]
      %v1234 = vld [vmem:[#allocation2 + $0x44] sm:$0xf]
      %v1235 = vld [vmem:[#allocation2 + $0x48] sm:$0xf]
      %v1236 = vld [vmem:[#allocation2 + $0x4c] sm:$0xf]
      %v1237 = vld [vmem:[#allocation2 + $0x50] sm:$0xf]
      %v1238 = vld [vmem:[#allocation2 + $0x54] sm:$0xf]
      %v1239 = vld [vmem:[#allocation2 + $0x58] sm:$0xf]
      %v1240 = vld [vmem:[#allocation2 + $0x5c] sm:$0xf]
      %v1241 = vld [vmem:[#allocation2 + $0x60] sm:$0xf]
      %v1242 = vld [vmem:[#allocation2 + $0x64] sm:$0xf]
      %v1243 = vld [vmem:[#allocation2 + $0x68] sm:$0xf]
      %v1244 = vld [vmem:[#allocation2 + $0x6c] sm:$0xf]
      %v1245 = vld [vmem:[#allocation2 + $0x70] sm:$0xf]
      %v1246 = vld [vmem:[#allocation2 + $0x74] sm:$0xf]
      %v1247 = vld [vmem:[#allocation2 + $0x78] sm:$0xf]
      %v1248 = vld [vmem:[#allocation2 + $0x7c] sm:$0xf]
      %v1249 = vsel %vm368, 1, 0
      %v1250 = vsel %vm369, 1, 0
      %v1251 = vsel %vm370, 1, 0
      %v1252 = vsel %vm371, 1, 0
      %v1253 = vsel %vm372, 1, 0
      %v1254 = vsel %vm373, 1, 0
      %v1255 = vsel %vm374, 1, 0
      %v1256 = vsel %vm375, 1, 0
      %v1257 = vsel %vm376, 1, 0
      %v1258 = vsel %vm377, 1, 0
      %v1259 = vsel %vm378, 1, 0
      %v1260 = vsel %vm379, 1, 0
      %v1261 = vsel %vm380, 1, 0
      %v1262 = vsel %vm381, 1, 0
      %v1263 = vsel %vm382, 1, 0
      %v1264 = vsel %vm383, 1, 0
      %v1265 = vsel %vm384, 1, 0
      %v1266 = vsel %vm385, 1, 0
      %v1267 = vsel %vm386, 1, 0
      %v1268 = vsel %vm387, 1, 0
      %v1269 = vsel %vm388, 1, 0
      %v1270 = vsel %vm389, 1, 0
      %v1271 = vsel %vm390, 1, 0
      %v1272 = vsel %vm391, 1, 0
      %v1273 = vsel %vm392, 1, 0
      %v1274 = vsel %vm393, 1, 0
      %v1275 = vsel %vm394, 1, 0
      %v1276 = vsel %vm395, 1, 0
      %v1277 = vsel %vm396, 1, 0
      %v1278 = vsel %vm397, 1, 0
      %v1279 = vsel %vm398, 1, 0
      %v1280 = vsel %vm399, 1, 0
      %1281 = vset.pattern.permute.xlu0 0
      %1282 = vperm.xlu0 %1281, %v1249
      %v1283 = vpop.permute.xlu0 %1282
      %1284 = vset.pattern.permute.xlu0 0
      %1285 = vperm.xlu0 %1284, %v1250
      %v1286 = vpop.permute.xlu0 %1285
      %1287 = vset.pattern.permute.xlu0 0
      %1288 = vperm.xlu0 %1287, %v1251
      %v1289 = vpop.permute.xlu0 %1288
      %1290 = vset.pattern.permute.xlu0 0
      %1291 = vperm.xlu0 %1290, %v1252
      %v1292 = vpop.permute.xlu0 %1291
      %1293 = vset.pattern.permute.xlu0 0
      %1294 = vperm.xlu0 %1293, %v1253
      %v1295 = vpop.permute.xlu0 %1294
      %1296 = vset.pattern.permute.xlu0 0
      %1297 = vperm.xlu0 %1296, %v1254
      %v1298 = vpop.permute.xlu0 %1297
      %1299 = vset.pattern.permute.xlu0 0
      %1300 = vperm.xlu0 %1299, %v1255
      %v1301 = vpop.permute.xlu0 %1300
      %1302 = vset.pattern.permute.xlu0 0
      %1303 = vperm.xlu0 %1302, %v1256
      %v1304 = vpop.permute.xlu0 %1303
      %1305 = vset.pattern.permute.xlu0 0
      %1306 = vperm.xlu0 %1305, %v1257
      %v1307 = vpop.permute.xlu0 %1306
      %1308 = vset.pattern.permute.xlu0 0
      %1309 = vperm.xlu0 %1308, %v1258
      %v1310 = vpop.permute.xlu0 %1309
      %1311 = vset.pattern.permute.xlu0 0
      %1312 = vperm.xlu0 %1311, %v1259
      %v1313 = vpop.permute.xlu0 %1312
      %1314 = vset.pattern.permute.xlu0 0
      %1315 = vperm.xlu0 %1314, %v1260
      %v1316 = vpop.permute.xlu0 %1315
      %1317 = vset.pattern.permute.xlu0 0
      %1318 = vperm.xlu0 %1317, %v1261
      %v1319 = vpop.permute.xlu0 %1318
      %1320 = vset.pattern.permute.xlu0 0
      %1321 = vperm.xlu0 %1320, %v1262
      %v1322 = vpop.permute.xlu0 %1321
      %1323 = vset.pattern.permute.xlu0 0
      %1324 = vperm.xlu0 %1323, %v1263
      %v1325 = vpop.permute.xlu0 %1324
      %1326 = vset.pattern.permute.xlu0 0
      %1327 = vperm.xlu0 %1326, %v1264
      %v1328 = vpop.permute.xlu0 %1327
      %1329 = vset.pattern.permute.xlu0 0
      %1330 = vperm.xlu0 %1329, %v1265
      %v1331 = vpop.permute.xlu0 %1330
      %1332 = vset.pattern.permute.xlu0 0
      %1333 = vperm.xlu0 %1332, %v1266
      %v1334 = vpop.permute.xlu0 %1333
      %1335 = vset.pattern.permute.xlu0 0
      %1336 = vperm.xlu0 %1335, %v1267
      %v1337 = vpop.permute.xlu0 %1336
      %1338 = vset.pattern.permute.xlu0 0
      %1339 = vperm.xlu0 %1338, %v1268
      %v1340 = vpop.permute.xlu0 %1339
      %1341 = vset.pattern.permute.xlu0 0
      %1342 = vperm.xlu0 %1341, %v1269
      %v1343 = vpop.permute.xlu0 %1342
      %1344 = vset.pattern.permute.xlu0 0
      %1345 = vperm.xlu0 %1344, %v1270
      %v1346 = vpop.permute.xlu0 %1345
      %1347 = vset.pattern.permute.xlu0 0
      %1348 = vperm.xlu0 %1347, %v1271
      %v1349 = vpop.permute.xlu0 %1348
      %1350 = vset.pattern.permute.xlu0 0
      %1351 = vperm.xlu0 %1350, %v1272
      %v1352 = vpop.permute.xlu0 %1351
      %1353 = vset.pattern.permute.xlu0 0
      %1354 = vperm.xlu0 %1353, %v1273
      %v1355 = vpop.permute.xlu0 %1354
      %1356 = vset.pattern.permute.xlu0 0
      %1357 = vperm.xlu0 %1356, %v1274
      %v1358 = vpop.permute.xlu0 %1357
      %1359 = vset.pattern.permute.xlu0 0
      %1360 = vperm.xlu0 %1359, %v1275
      %v1361 = vpop.permute.xlu0 %1360
      %1362 = vset.pattern.permute.xlu0 0
      %1363 = vperm.xlu0 %1362, %v1276
      %v1364 = vpop.permute.xlu0 %1363
      %1365 = vset.pattern.permute.xlu0 0
      %1366 = vperm.xlu0 %1365, %v1277
      %v1367 = vpop.permute.xlu0 %1366
      %1368 = vset.pattern.permute.xlu0 0
      %1369 = vperm.xlu0 %1368, %v1278
      %v1370 = vpop.permute.xlu0 %1369
      %1371 = vset.pattern.permute.xlu0 0
      %1372 = vperm.xlu0 %1371, %v1279
      %v1373 = vpop.permute.xlu0 %1372
      %1374 = vset.pattern.permute.xlu0 0
      %1375 = vperm.xlu0 %1374, %v1280
      %v1376 = vpop.permute.xlu0 %1375
      %vm1377 = vcmp.eq.s32.totalorder %v1283, 1
      %vm1378 = vcmp.eq.s32.totalorder %v1286, 1
      %vm1379 = vcmp.eq.s32.totalorder %v1289, 1
      %vm1380 = vcmp.eq.s32.totalorder %v1292, 1
      %vm1381 = vcmp.eq.s32.totalorder %v1295, 1
      %vm1382 = vcmp.eq.s32.totalorder %v1298, 1
      %vm1383 = vcmp.eq.s32.totalorder %v1301, 1
      %vm1384 = vcmp.eq.s32.totalorder %v1304, 1
      %vm1385 = vcmp.eq.s32.totalorder %v1307, 1
      %vm1386 = vcmp.eq.s32.totalorder %v1310, 1
      %vm1387 = vcmp.eq.s32.totalorder %v1313, 1
      %vm1388 = vcmp.eq.s32.totalorder %v1316, 1
      %vm1389 = vcmp.eq.s32.totalorder %v1319, 1
      %vm1390 = vcmp.eq.s32.totalorder %v1322, 1
      %vm1391 = vcmp.eq.s32.totalorder %v1325, 1
      %vm1392 = vcmp.eq.s32.totalorder %v1328, 1
      %vm1393 = vcmp.eq.s32.totalorder %v1331, 1
      %vm1394 = vcmp.eq.s32.totalorder %v1334, 1
      %vm1395 = vcmp.eq.s32.totalorder %v1337, 1
      %vm1396 = vcmp.eq.s32.totalorder %v1340, 1
      %vm1397 = vcmp.eq.s32.totalorder %v1343, 1
      %vm1398 = vcmp.eq.s32.totalorder %v1346, 1
      %vm1399 = vcmp.eq.s32.totalorder %v1349, 1
      %vm1400 = vcmp.eq.s32.totalorder %v1352, 1
      %vm1401 = vcmp.eq.s32.totalorder %v1355, 1
      %vm1402 = vcmp.eq.s32.totalorder %v1358, 1
      %vm1403 = vcmp.eq.s32.totalorder %v1361, 1
      %vm1404 = vcmp.eq.s32.totalorder %v1364, 1
      %vm1405 = vcmp.eq.s32.totalorder %v1367, 1
      %vm1406 = vcmp.eq.s32.totalorder %v1370, 1
      %vm1407 = vcmp.eq.s32.totalorder %v1373, 1
      %vm1408 = vcmp.eq.s32.totalorder %v1376, 1
      %vm1409 = vmpackc.low %vm1377, %vm1377
      %vm1410 = vmpackc.low %vm1378, %vm1378
      %vm1411 = vmpackc.low %vm1379, %vm1379
      %vm1412 = vmpackc.low %vm1380, %vm1380
      %vm1413 = vmpackc.low %vm1381, %vm1381
      %vm1414 = vmpackc.low %vm1382, %vm1382
      %vm1415 = vmpackc.low %vm1383, %vm1383
      %vm1416 = vmpackc.low %vm1384, %vm1384
      %vm1417 = vmpackc.low %vm1385, %vm1385
      %vm1418 = vmpackc.low %vm1386, %vm1386
      %vm1419 = vmpackc.low %vm1387, %vm1387
      %vm1420 = vmpackc.low %vm1388, %vm1388
      %vm1421 = vmpackc.low %vm1389, %vm1389
      %vm1422 = vmpackc.low %vm1390, %vm1390
      %vm1423 = vmpackc.low %vm1391, %vm1391
      %vm1424 = vmpackc.low %vm1392, %vm1392
      %vm1425 = vmpackc.low %vm1393, %vm1393
      %vm1426 = vmpackc.low %vm1394, %vm1394
      %vm1427 = vmpackc.low %vm1395, %vm1395
      %vm1428 = vmpackc.low %vm1396, %vm1396
      %vm1429 = vmpackc.low %vm1397, %vm1397
      %vm1430 = vmpackc.low %vm1398, %vm1398
      %vm1431 = vmpackc.low %vm1399, %vm1399
      %vm1432 = vmpackc.low %vm1400, %vm1400
      %vm1433 = vmpackc.low %vm1401, %vm1401
      %vm1434 = vmpackc.low %vm1402, %vm1402
      %vm1435 = vmpackc.low %vm1403, %vm1403
      %vm1436 = vmpackc.low %vm1404, %vm1404
      %vm1437 = vmpackc.low %vm1405, %vm1405
      %vm1438 = vmpackc.low %vm1406, %vm1406
      %vm1439 = vmpackc.low %vm1407, %vm1407
      %vm1440 = vmpackc.low %vm1408, %vm1408
      %v1441 = vsel %vm1409, %v1217, 0
      %v1442 = vsel %vm1410, %v1218, 0
      %v1443 = vsel %vm1411, %v1219, 0
      %v1444 = vsel %vm1412, %v1220, 0
      %v1445 = vsel %vm1413, %v1221, 0
      %v1446 = vsel %vm1414, %v1222, 0
      %v1447 = vsel %vm1415, %v1223, 0
      %v1448 = vsel %vm1416, %v1224, 0
      %v1449 = vsel %vm1417, %v1225, 0
      %v1450 = vsel %vm1418, %v1226, 0
      %v1451 = vsel %vm1419, %v1227, 0
      %v1452 = vsel %vm1420, %v1228, 0
      %v1453 = vsel %vm1421, %v1229, 0
      %v1454 = vsel %vm1422, %v1230, 0
      %v1455 = vsel %vm1423, %v1231, 0
      %v1456 = vsel %vm1424, %v1232, 0
      %v1457 = vsel %vm1425, %v1233, 0
      %v1458 = vsel %vm1426, %v1234, 0
      %v1459 = vsel %vm1427, %v1235, 0
      %v1460 = vsel %vm1428, %v1236, 0
      %v1461 = vsel %vm1429, %v1237, 0
      %v1462 = vsel %vm1430, %v1238, 0
      %v1463 = vsel %vm1431, %v1239, 0
      %v1464 = vsel %vm1432, %v1240, 0
      %v1465 = vsel %vm1433, %v1241, 0
      %v1466 = vsel %vm1434, %v1242, 0
      %v1467 = vsel %vm1435, %v1243, 0
      %v1468 = vsel %vm1436, %v1244, 0
      %v1469 = vsel %vm1437, %v1245, 0
      %v1470 = vsel %vm1438, %v1246, 0
      %v1471 = vsel %vm1439, %v1247, 0
      %v1472 = vsel %vm1440, %v1248, 0
      %v1473 = vld [vmem:[#allocation3] sm:$0xff]
      %v1474 = vld [vmem:[#allocation3 + $0x8] sm:$0xff]
      %v1475 = vld [vmem:[#allocation3 + $0x10] sm:$0xff]
      %v1476 = vld [vmem:[#allocation3 + $0x18] sm:$0xff]
      %v1477 = vld [vmem:[#allocation3 + $0x20] sm:$0xff]
      %v1478 = vld [vmem:[#allocation3 + $0x28] sm:$0xff]
      %v1479 = vld [vmem:[#allocation3 + $0x30] sm:$0xff]
      %v1480 = vld [vmem:[#allocation3 + $0x38] sm:$0xff]
      %v1481 = vld [vmem:[#allocation3 + $0x40] sm:$0xff]
      %v1482 = vld [vmem:[#allocation3 + $0x48] sm:$0xff]
      %v1483 = vld [vmem:[#allocation3 + $0x50] sm:$0xff]
      %v1484 = vld [vmem:[#allocation3 + $0x58] sm:$0xff]
      %v1485 = vld [vmem:[#allocation3 + $0x60] sm:$0xff]
      %v1486 = vld [vmem:[#allocation3 + $0x68] sm:$0xff]
      %v1487 = vld [vmem:[#allocation3 + $0x70] sm:$0xff]
      %v1488 = vld [vmem:[#allocation3 + $0x78] sm:$0xff]
      %v1489 = vld [vmem:[#allocation3 + $0x80] sm:$0xff]
      %v1490 = vld [vmem:[#allocation3 + $0x88] sm:$0xff]
      %v1491 = vld [vmem:[#allocation3 + $0x90] sm:$0xff]
      %v1492 = vld [vmem:[#allocation3 + $0x98] sm:$0xff]
      %v1493 = vld [vmem:[#allocation3 + $0xa0] sm:$0xff]
      %v1494 = vld [vmem:[#allocation3 + $0xa8] sm:$0xff]
      %v1495 = vld [vmem:[#allocation3 + $0xb0] sm:$0xff]
      %v1496 = vld [vmem:[#allocation3 + $0xb8] sm:$0xff]
      %v1497 = vld [vmem:[#allocation3 + $0xc0] sm:$0xff]
      %v1498 = vld [vmem:[#allocation3 + $0xc8] sm:$0xff]
      %v1499 = vld [vmem:[#allocation3 + $0xd0] sm:$0xff]
      %v1500 = vld [vmem:[#allocation3 + $0xd8] sm:$0xff]
      %v1501 = vld [vmem:[#allocation3 + $0xe0] sm:$0xff]
      %v1502 = vld [vmem:[#allocation3 + $0xe8] sm:$0xff]
      %v1503 = vld [vmem:[#allocation3 + $0xf0] sm:$0xff]
      %v1504 = vld [vmem:[#allocation3 + $0xf8] sm:$0xff]
      %v1505 = vld [vmem:[%s7] sm:$0xf]
      %v1506 = vld [vmem:[%s7 + $0x4] sm:$0xf]
      %v1507 = vld [vmem:[%s7 + $0x8] sm:$0xf]
      %v1508 = vld [vmem:[%s7 + $0xc] sm:$0xf]
      %v1509 = vld [vmem:[%s7 + $0x10] sm:$0xf]
      %v1510 = vld [vmem:[%s7 + $0x14] sm:$0xf]
      %v1511 = vld [vmem:[%s7 + $0x18] sm:$0xf]
      %v1512 = vld [vmem:[%s7 + $0x1c] sm:$0xf]
      %v1513 = vld [vmem:[%s7 + $0x20] sm:$0xf]
      %v1514 = vld [vmem:[%s7 + $0x24] sm:$0xf]
      %v1515 = vld [vmem:[%s7 + $0x28] sm:$0xf]
      %v1516 = vld [vmem:[%s7 + $0x2c] sm:$0xf]
      %v1517 = vld [vmem:[%s7 + $0x30] sm:$0xf]
      %v1518 = vld [vmem:[%s7 + $0x34] sm:$0xf]
      %v1519 = vld [vmem:[%s7 + $0x38] sm:$0xf]
      %v1520 = vld [vmem:[%s7 + $0x3c] sm:$0xf]
      %v1553 = vunpack.c.l.b16 %v1441
      %v1554 = vunpack.c.l.b16 %v1442
      %v1555 = vunpack.c.l.b16 %v1443
      %v1556 = vunpack.c.l.b16 %v1444
      %v1557 = vunpack.c.l.b16 %v1445
      %v1558 = vunpack.c.l.b16 %v1446
      %v1559 = vunpack.c.l.b16 %v1447
      %v1560 = vunpack.c.l.b16 %v1448
      %v1561 = vunpack.c.l.b16 %v1449
      %v1562 = vunpack.c.l.b16 %v1450
      %v1563 = vunpack.c.l.b16 %v1451
      %v1564 = vunpack.c.l.b16 %v1452
      %v1565 = vunpack.c.l.b16 %v1453
      %v1566 = vunpack.c.l.b16 %v1454
      %v1567 = vunpack.c.l.b16 %v1455
      %v1568 = vunpack.c.l.b16 %v1456
      %v1569 = vunpack.c.l.b16 %v1457
      %v1570 = vunpack.c.l.b16 %v1458
      %v1571 = vunpack.c.l.b16 %v1459
      %v1572 = vunpack.c.l.b16 %v1460
      %v1573 = vunpack.c.l.b16 %v1461
      %v1574 = vunpack.c.l.b16 %v1462
      %v1575 = vunpack.c.l.b16 %v1463
      %v1576 = vunpack.c.l.b16 %v1464
      %v1577 = vunpack.c.l.b16 %v1465
      %v1578 = vunpack.c.l.b16 %v1466
      %v1579 = vunpack.c.l.b16 %v1467
      %v1580 = vunpack.c.l.b16 %v1468
      %v1581 = vunpack.c.l.b16 %v1469
      %v1582 = vunpack.c.l.b16 %v1470
      %v1583 = vunpack.c.l.b16 %v1471
      %v1584 = vunpack.c.l.b16 %v1472
      %v1585 = vpack.c.b16 %v1554, %v1553
      %v1586 = vpack.c.b16 %v1556, %v1555
      %v1587 = vpack.c.b16 %v1558, %v1557
      %v1588 = vpack.c.b16 %v1560, %v1559
      %v1589 = vpack.c.b16 %v1562, %v1561
      %v1590 = vpack.c.b16 %v1564, %v1563
      %v1591 = vpack.c.b16 %v1566, %v1565
      %v1592 = vpack.c.b16 %v1568, %v1567
      %v1593 = vpack.c.b16 %v1570, %v1569
      %v1594 = vpack.c.b16 %v1572, %v1571
      %v1595 = vpack.c.b16 %v1574, %v1573
      %v1596 = vpack.c.b16 %v1576, %v1575
      %v1597 = vpack.c.b16 %v1578, %v1577
      %v1598 = vpack.c.b16 %v1580, %v1579
      %v1599 = vpack.c.b16 %v1582, %v1581
      %v1600 = vpack.c.b16 %v1584, %v1583
      %v1633 = vunpack.c.l.b16 %v1505
      %v1634 = vunpack.c.l.b16 %v1506
      %v1635 = vunpack.c.l.b16 %v1507
      %v1636 = vunpack.c.l.b16 %v1508
      %v1637 = vunpack.c.l.b16 %v1509
      %v1638 = vunpack.c.l.b16 %v1510
      %v1639 = vunpack.c.l.b16 %v1511
      %v1640 = vunpack.c.l.b16 %v1512
      %v1641 = vunpack.c.l.b16 %v1513
      %v1642 = vunpack.c.l.b16 %v1514
      %v1643 = vunpack.c.l.b16 %v1515
      %v1644 = vunpack.c.l.b16 %v1516
      %v1645 = vunpack.c.l.b16 %v1517
      %v1646 = vunpack.c.l.b16 %v1518
      %v1647 = vunpack.c.l.b16 %v1519
      %v1648 = vunpack.c.l.b16 %v1520
      %v1649 = vpack.c.b16 %v1634, %v1633
      %v1650 = vpack.c.b16 %v1636, %v1635
      %v1651 = vpack.c.b16 %v1638, %v1637
      %v1652 = vpack.c.b16 %v1640, %v1639
      %v1653 = vpack.c.b16 %v1642, %v1641
      %v1654 = vpack.c.b16 %v1644, %v1643
      %v1655 = vpack.c.b16 %v1646, %v1645
      %v1656 = vpack.c.b16 %v1648, %v1647
      %1665 = vmatpush.bf16.msra.mxu0 %v1656
      %1666 = vmatpush.bf16.msra.mxu0 %v1655
      %1667 = vmatpush.bf16.msra.mxu0 %v1654
      %1668 = vmatpush.bf16.msra.mxu0 %v1653
      %1669 = vmatpush.bf16.msra.mxu0 %v1652
      %1670 = vmatpush.bf16.msra.mxu0 %v1651
      %1671 = vmatpush.bf16.msra.mxu0 %v1650
      %1672 = vmatpush.bf16.msra.mxu0 %v1649
      %1673 = vmatmul.bf16.gmra.mxu0 %v1585
      %v1674 = vpop.f32.mrf.mxu0
      %v1675 = vadd.f32 0.0, %v1674
      %v1676 = vpop.f32.mrf.mxu0
      %v1677 = vadd.f32 0.0, %v1676
      %1678 = vmatmul.bf16.gmra.mxu0 %v1586
      %v1679 = vpop.f32.mrf.mxu0
      %v1680 = vadd.f32 0.0, %v1679
      %v1681 = vpop.f32.mrf.mxu0
      %v1682 = vadd.f32 0.0, %v1681
      %1683 = vmatmul.bf16.gmra.mxu0 %v1587
      %v1684 = vpop.f32.mrf.mxu0
      %v1685 = vadd.f32 0.0, %v1684
      %v1686 = vpop.f32.mrf.mxu0
      %v1687 = vadd.f32 0.0, %v1686
      %1688 = vmatmul.bf16.gmra.mxu0 %v1588
      %v1689 = vpop.f32.mrf.mxu0
      %v1690 = vadd.f32 0.0, %v1689
      %v1691 = vpop.f32.mrf.mxu0
      %v1692 = vadd.f32 0.0, %v1691
      %1693 = vmatmul.bf16.gmra.mxu0 %v1589
      %v1694 = vpop.f32.mrf.mxu0
      %v1695 = vadd.f32 0.0, %v1694
      %v1696 = vpop.f32.mrf.mxu0
      %v1697 = vadd.f32 0.0, %v1696
      %1698 = vmatmul.bf16.gmra.mxu0 %v1590
      %v1699 = vpop.f32.mrf.mxu0
      %v1700 = vadd.f32 0.0, %v1699
      %v1701 = vpop.f32.mrf.mxu0
      %v1702 = vadd.f32 0.0, %v1701
      %1703 = vmatmul.bf16.gmra.mxu0 %v1591
      %v1704 = vpop.f32.mrf.mxu0
      %v1705 = vadd.f32 0.0, %v1704
      %v1706 = vpop.f32.mrf.mxu0
      %v1707 = vadd.f32 0.0, %v1706
      %1708 = vmatmul.bf16.gmra.mxu0 %v1592
      %v1709 = vpop.f32.mrf.mxu0
      %v1710 = vadd.f32 0.0, %v1709
      %v1711 = vpop.f32.mrf.mxu0
      %v1712 = vadd.f32 0.0, %v1711
      %1713 = vmatmul.bf16.gmra.mxu0 %v1593
      %v1714 = vpop.f32.mrf.mxu0
      %v1715 = vadd.f32 0.0, %v1714
      %v1716 = vpop.f32.mrf.mxu0
      %v1717 = vadd.f32 0.0, %v1716
      %1718 = vmatmul.bf16.gmra.mxu0 %v1594
      %v1719 = vpop.f32.mrf.mxu0
      %v1720 = vadd.f32 0.0, %v1719
      %v1721 = vpop.f32.mrf.mxu0
      %v1722 = vadd.f32 0.0, %v1721
      %1723 = vmatmul.bf16.gmra.mxu0 %v1595
      %v1724 = vpop.f32.mrf.mxu0
      %v1725 = vadd.f32 0.0, %v1724
      %v1726 = vpop.f32.mrf.mxu0
      %v1727 = vadd.f32 0.0, %v1726
      %1728 = vmatmul.bf16.gmra.mxu0 %v1596
      %v1729 = vpop.f32.mrf.mxu0
      %v1730 = vadd.f32 0.0, %v1729
      %v1731 = vpop.f32.mrf.mxu0
      %v1732 = vadd.f32 0.0, %v1731
      %1733 = vmatmul.bf16.gmra.mxu0 %v1597
      %v1734 = vpop.f32.mrf.mxu0
      %v1735 = vadd.f32 0.0, %v1734
      %v1736 = vpop.f32.mrf.mxu0
      %v1737 = vadd.f32 0.0, %v1736
      %1738 = vmatmul.bf16.gmra.mxu0 %v1598
      %v1739 = vpop.f32.mrf.mxu0
      %v1740 = vadd.f32 0.0, %v1739
      %v1741 = vpop.f32.mrf.mxu0
      %v1742 = vadd.f32 0.0, %v1741
      %1743 = vmatmul.bf16.gmra.mxu0 %v1599
      %v1744 = vpop.f32.mrf.mxu0
      %v1745 = vadd.f32 0.0, %v1744
      %v1746 = vpop.f32.mrf.mxu0
      %v1747 = vadd.f32 0.0, %v1746
      %1748 = vmatmul.bf16.gmra.mxu0 %v1600
      %v1749 = vpop.f32.mrf.mxu0
      %v1750 = vadd.f32 0.0, %v1749
      %v1751 = vpop.f32.mrf.mxu0
      %v1752 = vadd.f32 0.0, %v1751
      %1753 = vdwg.mxu0
      %v1754 = vadd.f32 %v1473, %v1675
      %v1755 = vadd.f32 %v1474, %v1677
      %v1756 = vadd.f32 %v1475, %v1680
      %v1757 = vadd.f32 %v1476, %v1682
      %v1758 = vadd.f32 %v1477, %v1685
      %v1759 = vadd.f32 %v1478, %v1687
      %v1760 = vadd.f32 %v1479, %v1690
      %v1761 = vadd.f32 %v1480, %v1692
      %v1762 = vadd.f32 %v1481, %v1695
      %v1763 = vadd.f32 %v1482, %v1697
      %v1764 = vadd.f32 %v1483, %v1700
      %v1765 = vadd.f32 %v1484, %v1702
      %v1766 = vadd.f32 %v1485, %v1705
      %v1767 = vadd.f32 %v1486, %v1707
      %v1768 = vadd.f32 %v1487, %v1710
      %v1769 = vadd.f32 %v1488, %v1712
      %v1770 = vadd.f32 %v1489, %v1715
      %v1771 = vadd.f32 %v1490, %v1717
      %v1772 = vadd.f32 %v1491, %v1720
      %v1773 = vadd.f32 %v1492, %v1722
      %v1774 = vadd.f32 %v1493, %v1725
      %v1775 = vadd.f32 %v1494, %v1727
      %v1776 = vadd.f32 %v1495, %v1730
      %v1777 = vadd.f32 %v1496, %v1732
      %v1778 = vadd.f32 %v1497, %v1735
      %v1779 = vadd.f32 %v1498, %v1737
      %v1780 = vadd.f32 %v1499, %v1740
      %v1781 = vadd.f32 %v1500, %v1742
      %v1782 = vadd.f32 %v1501, %v1745
      %v1783 = vadd.f32 %v1502, %v1747
      %v1784 = vadd.f32 %v1503, %v1750
      %v1785 = vadd.f32 %v1504, %v1752
      %1786 = vst [vmem:[#allocation3] sm:$0xff] %v1754
      %1787 = vst [vmem:[#allocation3 + $0x8] sm:$0xff] %v1755
      %1788 = vst [vmem:[#allocation3 + $0x10] sm:$0xff] %v1756
      %1789 = vst [vmem:[#allocation3 + $0x18] sm:$0xff] %v1757
      %1790 = vst [vmem:[#allocation3 + $0x20] sm:$0xff] %v1758
      %1791 = vst [vmem:[#allocation3 + $0x28] sm:$0xff] %v1759
      %1792 = vst [vmem:[#allocation3 + $0x30] sm:$0xff] %v1760
      %1793 = vst [vmem:[#allocation3 + $0x38] sm:$0xff] %v1761
      %1794 = vst [vmem:[#allocation3 + $0x40] sm:$0xff] %v1762
      %1795 = vst [vmem:[#allocation3 + $0x48] sm:$0xff] %v1763
      %1796 = vst [vmem:[#allocation3 + $0x50] sm:$0xff] %v1764
      %1797 = vst [vmem:[#allocation3 + $0x58] sm:$0xff] %v1765
      %1798 = vst [vmem:[#allocation3 + $0x60] sm:$0xff] %v1766
      %1799 = vst [vmem:[#allocation3 + $0x68] sm:$0xff] %v1767
      %1800 = vst [vmem:[#allocation3 + $0x70] sm:$0xff] %v1768
      %1801 = vst [vmem:[#allocation3 + $0x78] sm:$0xff] %v1769
      %1802 = vst [vmem:[#allocation3 + $0x80] sm:$0xff] %v1770
      %1803 = vst [vmem:[#allocation3 + $0x88] sm:$0xff] %v1771
      %1804 = vst [vmem:[#allocation3 + $0x90] sm:$0xff] %v1772
      %1805 = vst [vmem:[#allocation3 + $0x98] sm:$0xff] %v1773
      %1806 = vst [vmem:[#allocation3 + $0xa0] sm:$0xff] %v1774
      %1807 = vst [vmem:[#allocation3 + $0xa8] sm:$0xff] %v1775
      %1808 = vst [vmem:[#allocation3 + $0xb0] sm:$0xff] %v1776
      %1809 = vst [vmem:[#allocation3 + $0xb8] sm:$0xff] %v1777
      %1810 = vst [vmem:[#allocation3 + $0xc0] sm:$0xff] %v1778
      %1811 = vst [vmem:[#allocation3 + $0xc8] sm:$0xff] %v1779
      %1812 = vst [vmem:[#allocation3 + $0xd0] sm:$0xff] %v1780
      %1813 = vst [vmem:[#allocation3 + $0xd8] sm:$0xff] %v1781
      %1814 = vst [vmem:[#allocation3 + $0xe0] sm:$0xff] %v1782
      %1815 = vst [vmem:[#allocation3 + $0xe8] sm:$0xff] %v1783
      %1816 = vst [vmem:[#allocation3 + $0xf0] sm:$0xff] %v1784
      %1817 = vst [vmem:[#allocation3 + $0xf8] sm:$0xff] %v1785
      %v1818 = vld [vmem:[#allocation2] sm:$0xf]
      %v1819 = vld [vmem:[#allocation2 + $0x4] sm:$0xf]
      %v1820 = vld [vmem:[#allocation2 + $0x8] sm:$0xf]
      %v1821 = vld [vmem:[#allocation2 + $0xc] sm:$0xf]
      %v1822 = vld [vmem:[#allocation2 + $0x10] sm:$0xf]
      %v1823 = vld [vmem:[#allocation2 + $0x14] sm:$0xf]
      %v1824 = vld [vmem:[#allocation2 + $0x18] sm:$0xf]
      %v1825 = vld [vmem:[#allocation2 + $0x1c] sm:$0xf]
      %v1826 = vld [vmem:[#allocation2 + $0x20] sm:$0xf]
      %v1827 = vld [vmem:[#allocation2 + $0x24] sm:$0xf]
      %v1828 = vld [vmem:[#allocation2 + $0x28] sm:$0xf]
      %v1829 = vld [vmem:[#allocation2 + $0x2c] sm:$0xf]
      %v1830 = vld [vmem:[#allocation2 + $0x30] sm:$0xf]
      %v1831 = vld [vmem:[#allocation2 + $0x34] sm:$0xf]
      %v1832 = vld [vmem:[#allocation2 + $0x38] sm:$0xf]
      %v1833 = vld [vmem:[#allocation2 + $0x3c] sm:$0xf]
      %v1834 = vld [vmem:[#allocation2 + $0x40] sm:$0xf]
      %v1835 = vld [vmem:[#allocation2 + $0x44] sm:$0xf]
      %v1836 = vld [vmem:[#allocation2 + $0x48] sm:$0xf]
      %v1837 = vld [vmem:[#allocation2 + $0x4c] sm:$0xf]
      %v1838 = vld [vmem:[#allocation2 + $0x50] sm:$0xf]
      %v1839 = vld [vmem:[#allocation2 + $0x54] sm:$0xf]
      %v1840 = vld [vmem:[#allocation2 + $0x58] sm:$0xf]
      %v1841 = vld [vmem:[#allocation2 + $0x5c] sm:$0xf]
      %v1842 = vld [vmem:[#allocation2 + $0x60] sm:$0xf]
      %v1843 = vld [vmem:[#allocation2 + $0x64] sm:$0xf]
      %v1844 = vld [vmem:[#allocation2 + $0x68] sm:$0xf]
      %v1845 = vld [vmem:[#allocation2 + $0x6c] sm:$0xf]
      %v1846 = vld [vmem:[#allocation2 + $0x70] sm:$0xf]
      %v1847 = vld [vmem:[#allocation2 + $0x74] sm:$0xf]
      %v1848 = vld [vmem:[#allocation2 + $0x78] sm:$0xf]
      %v1849 = vld [vmem:[#allocation2 + $0x7c] sm:$0xf]
      %v1850 = vld [vmem:[#allocation2 + $0x80] sm:$0x1]
      %v1851 = vld [vmem:[#allocation3] sm:$0xff]
      %v1852 = vld [vmem:[#allocation3 + $0x8] sm:$0xff]
      %v1853 = vld [vmem:[#allocation3 + $0x10] sm:$0xff]
      %v1854 = vld [vmem:[#allocation3 + $0x18] sm:$0xff]
      %v1855 = vld [vmem:[#allocation3 + $0x20] sm:$0xff]
      %v1856 = vld [vmem:[#allocation3 + $0x28] sm:$0xff]
      %v1857 = vld [vmem:[#allocation3 + $0x30] sm:$0xff]
      %v1858 = vld [vmem:[#allocation3 + $0x38] sm:$0xff]
      %v1859 = vld [vmem:[#allocation3 + $0x40] sm:$0xff]
      %v1860 = vld [vmem:[#allocation3 + $0x48] sm:$0xff]
      %v1861 = vld [vmem:[#allocation3 + $0x50] sm:$0xff]
      %v1862 = vld [vmem:[#allocation3 + $0x58] sm:$0xff]
      %v1863 = vld [vmem:[#allocation3 + $0x60] sm:$0xff]
      %v1864 = vld [vmem:[#allocation3 + $0x68] sm:$0xff]
      %v1865 = vld [vmem:[#allocation3 + $0x70] sm:$0xff]
      %v1866 = vld [vmem:[#allocation3 + $0x78] sm:$0xff]
      %v1867 = vld [vmem:[#allocation3 + $0x80] sm:$0xff]
      %v1868 = vld [vmem:[#allocation3 + $0x88] sm:$0xff]
      %v1869 = vld [vmem:[#allocation3 + $0x90] sm:$0xff]
      %v1870 = vld [vmem:[#allocation3 + $0x98] sm:$0xff]
      %v1871 = vld [vmem:[#allocation3 + $0xa0] sm:$0xff]
      %v1872 = vld [vmem:[#allocation3 + $0xa8] sm:$0xff]
      %v1873 = vld [vmem:[#allocation3 + $0xb0] sm:$0xff]
      %v1874 = vld [vmem:[#allocation3 + $0xb8] sm:$0xff]
      %v1875 = vld [vmem:[#allocation3 + $0xc0] sm:$0xff]
      %v1876 = vld [vmem:[#allocation3 + $0xc8] sm:$0xff]
      %v1877 = vld [vmem:[#allocation3 + $0xd0] sm:$0xff]
      %v1878 = vld [vmem:[#allocation3 + $0xd8] sm:$0xff]
      %v1879 = vld [vmem:[#allocation3 + $0xe0] sm:$0xff]
      %v1880 = vld [vmem:[#allocation3 + $0xe8] sm:$0xff]
      %v1881 = vld [vmem:[#allocation3 + $0xf0] sm:$0xff]
      %v1882 = vld [vmem:[#allocation3 + $0xf8] sm:$0xff]
      %s1883 = scalar_lea.vmem %s7, 64
      %v1884 = vld [vmem:[%s1883] sm:$0xf]
      %v1885 = vld [vmem:[%s1883 + $0x4] sm:$0xf]
      %v1886 = vld [vmem:[%s1883 + $0x8] sm:$0xf]
      %v1887 = vld [vmem:[%s1883 + $0xc] sm:$0xf]
      %v1888 = vld [vmem:[%s1883 + $0x10] sm:$0xf]
      %v1889 = vld [vmem:[%s1883 + $0x14] sm:$0xf]
      %v1890 = vld [vmem:[%s1883 + $0x18] sm:$0xf]
      %v1891 = vld [vmem:[%s1883 + $0x1c] sm:$0xf]
      %v1892 = vld [vmem:[%s1883 + $0x20] sm:$0xf]
      %v1893 = vld [vmem:[%s1883 + $0x24] sm:$0xf]
      %v1894 = vld [vmem:[%s1883 + $0x28] sm:$0xf]
      %v1895 = vld [vmem:[%s1883 + $0x2c] sm:$0xf]
      %v1896 = vld [vmem:[%s1883 + $0x30] sm:$0xf]
      %v1897 = vld [vmem:[%s1883 + $0x34] sm:$0xf]
      %v1898 = vld [vmem:[%s1883 + $0x38] sm:$0xf]
      %v1899 = vld [vmem:[%s1883 + $0x3c] sm:$0xf]
      %v1933 = vunpack.c.l.b16 %v1818
      %v1934 = vunpack.c.l.b16 %v1819
      %v1935 = vunpack.c.l.b16 %v1820
      %v1936 = vunpack.c.l.b16 %v1821
      %v1937 = vunpack.c.l.b16 %v1822
      %v1938 = vunpack.c.l.b16 %v1823
      %v1939 = vunpack.c.l.b16 %v1824
      %v1940 = vunpack.c.l.b16 %v1825
      %v1941 = vunpack.c.l.b16 %v1826
      %v1942 = vunpack.c.l.b16 %v1827
      %v1943 = vunpack.c.l.b16 %v1828
      %v1944 = vunpack.c.l.b16 %v1829
      %v1945 = vunpack.c.l.b16 %v1830
      %v1946 = vunpack.c.l.b16 %v1831
      %v1947 = vunpack.c.l.b16 %v1832
      %v1948 = vunpack.c.l.b16 %v1833
      %v1949 = vunpack.c.l.b16 %v1834
      %v1950 = vunpack.c.l.b16 %v1835
      %v1951 = vunpack.c.l.b16 %v1836
      %v1952 = vunpack.c.l.b16 %v1837
      %v1953 = vunpack.c.l.b16 %v1838
      %v1954 = vunpack.c.l.b16 %v1839
      %v1955 = vunpack.c.l.b16 %v1840
      %v1956 = vunpack.c.l.b16 %v1841
      %v1957 = vunpack.c.l.b16 %v1842
      %v1958 = vunpack.c.l.b16 %v1843
      %v1959 = vunpack.c.l.b16 %v1844
      %v1960 = vunpack.c.l.b16 %v1845
      %v1961 = vunpack.c.l.b16 %v1846
      %v1962 = vunpack.c.l.b16 %v1847
      %v1963 = vunpack.c.l.b16 %v1848
      %v1964 = vunpack.c.l.b16 %v1849
      %v1965 = vunpack.c.l.b16 %v1850
      %v1966 = vpack.c.b16 %v1934, %v1933
      %v1967 = vpack.c.b16 %v1936, %v1935
      %v1968 = vpack.c.b16 %v1938, %v1937
      %v1969 = vpack.c.b16 %v1940, %v1939
      %v1970 = vpack.c.b16 %v1942, %v1941
      %v1971 = vpack.c.b16 %v1944, %v1943
      %v1972 = vpack.c.b16 %v1946, %v1945
      %v1973 = vpack.c.b16 %v1948, %v1947
      %v1974 = vpack.c.b16 %v1950, %v1949
      %v1975 = vpack.c.b16 %v1952, %v1951
      %v1976 = vpack.c.b16 %v1954, %v1953
      %v1977 = vpack.c.b16 %v1956, %v1955
      %v1978 = vpack.c.b16 %v1958, %v1957
      %v1979 = vpack.c.b16 %v1960, %v1959
      %v1980 = vpack.c.b16 %v1962, %v1961
      %v1981 = vpack.c.b16 %v1964, %v1963
      %v1982 = vpack.c.b16 %v1965, %v1965
      %vm1983 = vsmask.f32 7424
      %v1985 = vshrl.u32 %v1966, 16
      %v1987 = vshll.u32 %v1966, 16
      %v1989 = vrot.slane %v1987, 1
      %v1990 = vor.u32 %v1985, %v1989
      %v1992 = vshll.u32 %v1967, 16
      %v1994 = vrot.slane %v1992, 1
      %v1995 = vsel %vm1983, %v1990, %v1994
      %v1996 = vshrl.u32 %v1967, 16
      %v1998 = vor.u32 %v1996, %v1994
      %v2000 = vshll.u32 %v1968, 16
      %v2002 = vrot.slane %v2000, 1
      %v2003 = vsel %vm1983, %v1998, %v2002
      %v2004 = vshrl.u32 %v1968, 16
      %v2006 = vor.u32 %v2004, %v2002
      %v2008 = vshll.u32 %v1969, 16
      %v2010 = vrot.slane %v2008, 1
      %v2011 = vsel %vm1983, %v2006, %v2010
      %v2012 = vshrl.u32 %v1969, 16
      %v2014 = vor.u32 %v2012, %v2010
      %v2016 = vshll.u32 %v1970, 16
      %v2018 = vrot.slane %v2016, 1
      %v2019 = vsel %vm1983, %v2014, %v2018
      %v2020 = vshrl.u32 %v1970, 16
      %v2022 = vor.u32 %v2020, %v2018
      %v2024 = vshll.u32 %v1971, 16
      %v2026 = vrot.slane %v2024, 1
      %v2027 = vsel %vm1983, %v2022, %v2026
      %v2028 = vshrl.u32 %v1971, 16
      %v2030 = vor.u32 %v2028, %v2026
      %v2032 = vshll.u32 %v1972, 16
      %v2034 = vrot.slane %v2032, 1
      %v2035 = vsel %vm1983, %v2030, %v2034
      %v2036 = vshrl.u32 %v1972, 16
      %v2038 = vor.u32 %v2036, %v2034
      %v2040 = vshll.u32 %v1973, 16
      %v2042 = vrot.slane %v2040, 1
      %v2043 = vsel %vm1983, %v2038, %v2042
      %v2044 = vshrl.u32 %v1973, 16
      %v2046 = vor.u32 %v2044, %v2042
      %v2048 = vshll.u32 %v1974, 16
      %v2050 = vrot.slane %v2048, 1
      %v2051 = vsel %vm1983, %v2046, %v2050
      %v2052 = vshrl.u32 %v1974, 16
      %v2054 = vor.u32 %v2052, %v2050
      %v2056 = vshll.u32 %v1975, 16
      %v2058 = vrot.slane %v2056, 1
      %v2059 = vsel %vm1983, %v2054, %v2058
      %v2060 = vshrl.u32 %v1975, 16
      %v2062 = vor.u32 %v2060, %v2058
      %v2064 = vshll.u32 %v1976, 16
      %v2066 = vrot.slane %v2064, 1
      %v2067 = vsel %vm1983, %v2062, %v2066
      %v2068 = vshrl.u32 %v1976, 16
      %v2070 = vor.u32 %v2068, %v2066
      %v2072 = vshll.u32 %v1977, 16
      %v2074 = vrot.slane %v2072, 1
      %v2075 = vsel %vm1983, %v2070, %v2074
      %v2076 = vshrl.u32 %v1977, 16
      %v2078 = vor.u32 %v2076, %v2074
      %v2080 = vshll.u32 %v1978, 16
      %v2082 = vrot.slane %v2080, 1
      %v2083 = vsel %vm1983, %v2078, %v2082
      %v2084 = vshrl.u32 %v1978, 16
      %v2086 = vor.u32 %v2084, %v2082
      %v2088 = vshll.u32 %v1979, 16
      %v2090 = vrot.slane %v2088, 1
      %v2091 = vsel %vm1983, %v2086, %v2090
      %v2092 = vshrl.u32 %v1979, 16
      %v2094 = vor.u32 %v2092, %v2090
      %v2096 = vshll.u32 %v1980, 16
      %v2098 = vrot.slane %v2096, 1
      %v2099 = vsel %vm1983, %v2094, %v2098
      %v2100 = vshrl.u32 %v1980, 16
      %v2102 = vor.u32 %v2100, %v2098
      %v2104 = vshll.u32 %v1981, 16
      %v2106 = vrot.slane %v2104, 1
      %v2107 = vsel %vm1983, %v2102, %v2106
      %v2108 = vshrl.u32 %v1981, 16
      %v2110 = vor.u32 %v2108, %v2106
      %v2112 = vshll.u32 %v1982, 16
      %v2114 = vrot.slane %v2112, 1
      %v2115 = vsel %vm1983, %v2110, %v2114
      %v2148 = vunpack.c.l.b16 %v1884
      %v2149 = vunpack.c.l.b16 %v1885
      %v2150 = vunpack.c.l.b16 %v1886
      %v2151 = vunpack.c.l.b16 %v1887
      %v2152 = vunpack.c.l.b16 %v1888
      %v2153 = vunpack.c.l.b16 %v1889
      %v2154 = vunpack.c.l.b16 %v1890
      %v2155 = vunpack.c.l.b16 %v1891
      %v2156 = vunpack.c.l.b16 %v1892
      %v2157 = vunpack.c.l.b16 %v1893
      %v2158 = vunpack.c.l.b16 %v1894
      %v2159 = vunpack.c.l.b16 %v1895
      %v2160 = vunpack.c.l.b16 %v1896
      %v2161 = vunpack.c.l.b16 %v1897
      %v2162 = vunpack.c.l.b16 %v1898
      %v2163 = vunpack.c.l.b16 %v1899
      %v2164 = vpack.c.b16 %v2149, %v2148
      %v2165 = vpack.c.b16 %v2151, %v2150
      %v2166 = vpack.c.b16 %v2153, %v2152
      %v2167 = vpack.c.b16 %v2155, %v2154
      %v2168 = vpack.c.b16 %v2157, %v2156
      %v2169 = vpack.c.b16 %v2159, %v2158
      %v2170 = vpack.c.b16 %v2161, %v2160
      %v2171 = vpack.c.b16 %v2163, %v2162
      %2180 = vmatpush.bf16.msra.mxu0 %v2171
      %2181 = vmatpush.bf16.msra.mxu0 %v2170
      %2182 = vmatpush.bf16.msra.mxu0 %v2169
      %2183 = vmatpush.bf16.msra.mxu0 %v2168
      %2184 = vmatpush.bf16.msra.mxu0 %v2167
      %2185 = vmatpush.bf16.msra.mxu0 %v2166
      %2186 = vmatpush.bf16.msra.mxu0 %v2165
      %2187 = vmatpush.bf16.msra.mxu0 %v2164
      %2188 = vmatmul.bf16.gmra.mxu0 %v1995
      %v2189 = vpop.f32.mrf.mxu0
      %v2190 = vadd.f32 0.0, %v2189
      %v2191 = vpop.f32.mrf.mxu0
      %v2192 = vadd.f32 0.0, %v2191
      %2193 = vmatmul.bf16.gmra.mxu0 %v2003
      %v2194 = vpop.f32.mrf.mxu0
      %v2195 = vadd.f32 0.0, %v2194
      %v2196 = vpop.f32.mrf.mxu0
      %v2197 = vadd.f32 0.0, %v2196
      %2198 = vmatmul.bf16.gmra.mxu0 %v2011
      %v2199 = vpop.f32.mrf.mxu0
      %v2200 = vadd.f32 0.0, %v2199
      %v2201 = vpop.f32.mrf.mxu0
      %v2202 = vadd.f32 0.0, %v2201
      %2203 = vmatmul.bf16.gmra.mxu0 %v2019
      %v2204 = vpop.f32.mrf.mxu0
      %v2205 = vadd.f32 0.0, %v2204
      %v2206 = vpop.f32.mrf.mxu0
      %v2207 = vadd.f32 0.0, %v2206
      %2208 = vmatmul.bf16.gmra.mxu0 %v2027
      %v2209 = vpop.f32.mrf.mxu0
      %v2210 = vadd.f32 0.0, %v2209
      %v2211 = vpop.f32.mrf.mxu0
      %v2212 = vadd.f32 0.0, %v2211
      %2213 = vmatmul.bf16.gmra.mxu0 %v2035
      %v2214 = vpop.f32.mrf.mxu0
      %v2215 = vadd.f32 0.0, %v2214
      %v2216 = vpop.f32.mrf.mxu0
      %v2217 = vadd.f32 0.0, %v2216
      %2218 = vmatmul.bf16.gmra.mxu0 %v2043
      %v2219 = vpop.f32.mrf.mxu0
      %v2220 = vadd.f32 0.0, %v2219
      %v2221 = vpop.f32.mrf.mxu0
      %v2222 = vadd.f32 0.0, %v2221
      %2223 = vmatmul.bf16.gmra.mxu0 %v2051
      %v2224 = vpop.f32.mrf.mxu0
      %v2225 = vadd.f32 0.0, %v2224
      %v2226 = vpop.f32.mrf.mxu0
      %v2227 = vadd.f32 0.0, %v2226
      %2228 = vmatmul.bf16.gmra.mxu0 %v2059
      %v2229 = vpop.f32.mrf.mxu0
      %v2230 = vadd.f32 0.0, %v2229
      %v2231 = vpop.f32.mrf.mxu0
      %v2232 = vadd.f32 0.0, %v2231
      %2233 = vmatmul.bf16.gmra.mxu0 %v2067
      %v2234 = vpop.f32.mrf.mxu0
      %v2235 = vadd.f32 0.0, %v2234
      %v2236 = vpop.f32.mrf.mxu0
      %v2237 = vadd.f32 0.0, %v2236
      %2238 = vmatmul.bf16.gmra.mxu0 %v2075
      %v2239 = vpop.f32.mrf.mxu0
      %v2240 = vadd.f32 0.0, %v2239
      %v2241 = vpop.f32.mrf.mxu0
      %v2242 = vadd.f32 0.0, %v2241
      %2243 = vmatmul.bf16.gmra.mxu0 %v2083
      %v2244 = vpop.f32.mrf.mxu0
      %v2245 = vadd.f32 0.0, %v2244
      %v2246 = vpop.f32.mrf.mxu0
      %v2247 = vadd.f32 0.0, %v2246
      %2248 = vmatmul.bf16.gmra.mxu0 %v2091
      %v2249 = vpop.f32.mrf.mxu0
      %v2250 = vadd.f32 0.0, %v2249
      %v2251 = vpop.f32.mrf.mxu0
      %v2252 = vadd.f32 0.0, %v2251
      %2253 = vmatmul.bf16.gmra.mxu0 %v2099
      %v2254 = vpop.f32.mrf.mxu0
      %v2255 = vadd.f32 0.0, %v2254
      %v2256 = vpop.f32.mrf.mxu0
      %v2257 = vadd.f32 0.0, %v2256
      %2258 = vmatmul.bf16.gmra.mxu0 %v2107
      %v2259 = vpop.f32.mrf.mxu0
      %v2260 = vadd.f32 0.0, %v2259
      %v2261 = vpop.f32.mrf.mxu0
      %v2262 = vadd.f32 0.0, %v2261
      %2263 = vmatmul.bf16.gmra.mxu0 %v2115
      %v2264 = vpop.f32.mrf.mxu0
      %v2265 = vadd.f32 0.0, %v2264
      %v2266 = vpop.f32.mrf.mxu0
      %v2267 = vadd.f32 0.0, %v2266
      %2268 = vdwg.mxu0
      %v2269 = vadd.f32 %v1851, %v2190
      %v2270 = vadd.f32 %v1852, %v2192
      %v2271 = vadd.f32 %v1853, %v2195
      %v2272 = vadd.f32 %v1854, %v2197
      %v2273 = vadd.f32 %v1855, %v2200
      %v2274 = vadd.f32 %v1856, %v2202
      %v2275 = vadd.f32 %v1857, %v2205
      %v2276 = vadd.f32 %v1858, %v2207
      %v2277 = vadd.f32 %v1859, %v2210
      %v2278 = vadd.f32 %v1860, %v2212
      %v2279 = vadd.f32 %v1861, %v2215
      %v2280 = vadd.f32 %v1862, %v2217
      %v2281 = vadd.f32 %v1863, %v2220
      %v2282 = vadd.f32 %v1864, %v2222
      %v2283 = vadd.f32 %v1865, %v2225
      %v2284 = vadd.f32 %v1866, %v2227
      %v2285 = vadd.f32 %v1867, %v2230
      %v2286 = vadd.f32 %v1868, %v2232
      %v2287 = vadd.f32 %v1869, %v2235
      %v2288 = vadd.f32 %v1870, %v2237
      %v2289 = vadd.f32 %v1871, %v2240
      %v2290 = vadd.f32 %v1872, %v2242
      %v2291 = vadd.f32 %v1873, %v2245
      %v2292 = vadd.f32 %v1874, %v2247
      %v2293 = vadd.f32 %v1875, %v2250
      %v2294 = vadd.f32 %v1876, %v2252
      %v2295 = vadd.f32 %v1877, %v2255
      %v2296 = vadd.f32 %v1878, %v2257
      %v2297 = vadd.f32 %v1879, %v2260
      %v2298 = vadd.f32 %v1880, %v2262
      %v2299 = vadd.f32 %v1881, %v2265
      %v2300 = vadd.f32 %v1882, %v2267
      %2301 = vst [vmem:[#allocation3] sm:$0xff] %v2269
      %2302 = vst [vmem:[#allocation3 + $0x8] sm:$0xff] %v2270
      %2303 = vst [vmem:[#allocation3 + $0x10] sm:$0xff] %v2271
      %2304 = vst [vmem:[#allocation3 + $0x18] sm:$0xff] %v2272
      %2305 = vst [vmem:[#allocation3 + $0x20] sm:$0xff] %v2273
      %2306 = vst [vmem:[#allocation3 + $0x28] sm:$0xff] %v2274
      %2307 = vst [vmem:[#allocation3 + $0x30] sm:$0xff] %v2275
      %2308 = vst [vmem:[#allocation3 + $0x38] sm:$0xff] %v2276
      %2309 = vst [vmem:[#allocation3 + $0x40] sm:$0xff] %v2277
      %2310 = vst [vmem:[#allocation3 + $0x48] sm:$0xff] %v2278
      %2311 = vst [vmem:[#allocation3 + $0x50] sm:$0xff] %v2279
      %2312 = vst [vmem:[#allocation3 + $0x58] sm:$0xff] %v2280
      %2313 = vst [vmem:[#allocation3 + $0x60] sm:$0xff] %v2281
      %2314 = vst [vmem:[#allocation3 + $0x68] sm:$0xff] %v2282
      %2315 = vst [vmem:[#allocation3 + $0x70] sm:$0xff] %v2283
      %2316 = vst [vmem:[#allocation3 + $0x78] sm:$0xff] %v2284
      %2317 = vst [vmem:[#allocation3 + $0x80] sm:$0xff] %v2285
      %2318 = vst [vmem:[#allocation3 + $0x88] sm:$0xff] %v2286
      %2319 = vst [vmem:[#allocation3 + $0x90] sm:$0xff] %v2287
      %2320 = vst [vmem:[#allocation3 + $0x98] sm:$0xff] %v2288
      %2321 = vst [vmem:[#allocation3 + $0xa0] sm:$0xff] %v2289
      %2322 = vst [vmem:[#allocation3 + $0xa8] sm:$0xff] %v2290
      %2323 = vst [vmem:[#allocation3 + $0xb0] sm:$0xff] %v2291
      %2324 = vst [vmem:[#allocation3 + $0xb8] sm:$0xff] %v2292
      %2325 = vst [vmem:[#allocation3 + $0xc0] sm:$0xff] %v2293
      %2326 = vst [vmem:[#allocation3 + $0xc8] sm:$0xff] %v2294
      %2327 = vst [vmem:[#allocation3 + $0xd0] sm:$0xff] %v2295
      %2328 = vst [vmem:[#allocation3 + $0xd8] sm:$0xff] %v2296
      %2329 = vst [vmem:[#allocation3 + $0xe0] sm:$0xff] %v2297
      %2330 = vst [vmem:[#allocation3 + $0xe8] sm:$0xff] %v2298
      %2331 = vst [vmem:[#allocation3 + $0xf0] sm:$0xff] %v2299
      %2332 = vst [vmem:[#allocation3 + $0xf8] sm:$0xff] %v2300
      %v2333 = vld [vmem:[#allocation2] sm:$0xe]
      %v2334 = vld [vmem:[#allocation2 + $0x4] sm:$0xf]
      %v2335 = vld [vmem:[#allocation2 + $0x8] sm:$0xf]
      %v2336 = vld [vmem:[#allocation2 + $0xc] sm:$0xf]
      %v2337 = vld [vmem:[#allocation2 + $0x10] sm:$0xf]
      %v2338 = vld [vmem:[#allocation2 + $0x14] sm:$0xf]
      %v2339 = vld [vmem:[#allocation2 + $0x18] sm:$0xf]
      %v2340 = vld [vmem:[#allocation2 + $0x1c] sm:$0xf]
      %v2341 = vld [vmem:[#allocation2 + $0x20] sm:$0xf]
      %v2342 = vld [vmem:[#allocation2 + $0x24] sm:$0xf]
      %v2343 = vld [vmem:[#allocation2 + $0x28] sm:$0xf]
      %v2344 = vld [vmem:[#allocation2 + $0x2c] sm:$0xf]
      %v2345 = vld [vmem:[#allocation2 + $0x30] sm:$0xf]
      %v2346 = vld [vmem:[#allocation2 + $0x34] sm:$0xf]
      %v2347 = vld [vmem:[#allocation2 + $0x38] sm:$0xf]
      %v2348 = vld [vmem:[#allocation2 + $0x3c] sm:$0xf]
      %v2349 = vld [vmem:[#allocation2 + $0x40] sm:$0xf]
      %v2350 = vld [vmem:[#allocation2 + $0x44] sm:$0xf]
      %v2351 = vld [vmem:[#allocation2 + $0x48] sm:$0xf]
      %v2352 = vld [vmem:[#allocation2 + $0x4c] sm:$0xf]
      %v2353 = vld [vmem:[#allocation2 + $0x50] sm:$0xf]
      %v2354 = vld [vmem:[#allocation2 + $0x54] sm:$0xf]
      %v2355 = vld [vmem:[#allocation2 + $0x58] sm:$0xf]
      %v2356 = vld [vmem:[#allocation2 + $0x5c] sm:$0xf]
      %v2357 = vld [vmem:[#allocation2 + $0x60] sm:$0xf]
      %v2358 = vld [vmem:[#allocation2 + $0x64] sm:$0xf]
      %v2359 = vld [vmem:[#allocation2 + $0x68] sm:$0xf]
      %v2360 = vld [vmem:[#allocation2 + $0x6c] sm:$0xf]
      %v2361 = vld [vmem:[#allocation2 + $0x70] sm:$0xf]
      %v2362 = vld [vmem:[#allocation2 + $0x74] sm:$0xf]
      %v2363 = vld [vmem:[#allocation2 + $0x78] sm:$0xf]
      %v2364 = vld [vmem:[#allocation2 + $0x7c] sm:$0xf]
      %v2365 = vld [vmem:[#allocation2 + $0x80] sm:$0x1]
      %v2366 = vsel %vm400, 1, 0
      %v2367 = vsel %vm401, 1, 0
      %v2368 = vsel %vm402, 1, 0
      %v2369 = vsel %vm403, 1, 0
      %v2370 = vsel %vm404, 1, 0
      %v2371 = vsel %vm405, 1, 0
      %v2372 = vsel %vm406, 1, 0
      %v2373 = vsel %vm407, 1, 0
      %v2374 = vsel %vm408, 1, 0
      %v2375 = vsel %vm409, 1, 0
      %v2376 = vsel %vm410, 1, 0
      %v2377 = vsel %vm411, 1, 0
      %v2378 = vsel %vm412, 1, 0
      %v2379 = vsel %vm413, 1, 0
      %v2380 = vsel %vm414, 1, 0
      %v2381 = vsel %vm415, 1, 0
      %v2382 = vsel %vm416, 1, 0
      %v2383 = vsel %vm417, 1, 0
      %v2384 = vsel %vm418, 1, 0
      %v2385 = vsel %vm419, 1, 0
      %v2386 = vsel %vm420, 1, 0
      %v2387 = vsel %vm421, 1, 0
      %v2388 = vsel %vm422, 1, 0
      %v2389 = vsel %vm423, 1, 0
      %v2390 = vsel %vm424, 1, 0
      %v2391 = vsel %vm425, 1, 0
      %v2392 = vsel %vm426, 1, 0
      %v2393 = vsel %vm427, 1, 0
      %v2394 = vsel %vm428, 1, 0
      %v2395 = vsel %vm429, 1, 0
      %v2396 = vsel %vm430, 1, 0
      %v2397 = vsel %vm431, 1, 0
      %2398 = vset.pattern.permute.xlu0 0
      %2399 = vperm.xlu0 %2398, %v2366
      %v2400 = vpop.permute.xlu0 %2399
      %2401 = vset.pattern.permute.xlu0 0
      %2402 = vperm.xlu0 %2401, %v2367
      %v2403 = vpop.permute.xlu0 %2402
      %2404 = vset.pattern.permute.xlu0 0
      %2405 = vperm.xlu0 %2404, %v2368
      %v2406 = vpop.permute.xlu0 %2405
      %2407 = vset.pattern.permute.xlu0 0
      %2408 = vperm.xlu0 %2407, %v2369
      %v2409 = vpop.permute.xlu0 %2408
      %2410 = vset.pattern.permute.xlu0 0
      %2411 = vperm.xlu0 %2410, %v2370
      %v2412 = vpop.permute.xlu0 %2411
      %2413 = vset.pattern.permute.xlu0 0
      %2414 = vperm.xlu0 %2413, %v2371
      %v2415 = vpop.permute.xlu0 %2414
      %2416 = vset.pattern.permute.xlu0 0
      %2417 = vperm.xlu0 %2416, %v2372
      %v2418 = vpop.permute.xlu0 %2417
      %2419 = vset.pattern.permute.xlu0 0
      %2420 = vperm.xlu0 %2419, %v2373
      %v2421 = vpop.permute.xlu0 %2420
      %2422 = vset.pattern.permute.xlu0 0
      %2423 = vperm.xlu0 %2422, %v2374
      %v2424 = vpop.permute.xlu0 %2423
      %2425 = vset.pattern.permute.xlu0 0
      %2426 = vperm.xlu0 %2425, %v2375
      %v2427 = vpop.permute.xlu0 %2426
      %2428 = vset.pattern.permute.xlu0 0
      %2429 = vperm.xlu0 %2428, %v2376
      %v2430 = vpop.permute.xlu0 %2429
      %2431 = vset.pattern.permute.xlu0 0
      %2432 = vperm.xlu0 %2431, %v2377
      %v2433 = vpop.permute.xlu0 %2432
      %2434 = vset.pattern.permute.xlu0 0
      %2435 = vperm.xlu0 %2434, %v2378
      %v2436 = vpop.permute.xlu0 %2435
      %2437 = vset.pattern.permute.xlu0 0
      %2438 = vperm.xlu0 %2437, %v2379
      %v2439 = vpop.permute.xlu0 %2438
      %2440 = vset.pattern.permute.xlu0 0
      %2441 = vperm.xlu0 %2440, %v2380
      %v2442 = vpop.permute.xlu0 %2441
      %2443 = vset.pattern.permute.xlu0 0
      %2444 = vperm.xlu0 %2443, %v2381
      %v2445 = vpop.permute.xlu0 %2444
      %2446 = vset.pattern.permute.xlu0 0
      %2447 = vperm.xlu0 %2446, %v2382
      %v2448 = vpop.permute.xlu0 %2447
      %2449 = vset.pattern.permute.xlu0 0
      %2450 = vperm.xlu0 %2449, %v2383
      %v2451 = vpop.permute.xlu0 %2450
      %2452 = vset.pattern.permute.xlu0 0
      %2453 = vperm.xlu0 %2452, %v2384
      %v2454 = vpop.permute.xlu0 %2453
      %2455 = vset.pattern.permute.xlu0 0
      %2456 = vperm.xlu0 %2455, %v2385
      %v2457 = vpop.permute.xlu0 %2456
      %2458 = vset.pattern.permute.xlu0 0
      %2459 = vperm.xlu0 %2458, %v2386
      %v2460 = vpop.permute.xlu0 %2459
      %2461 = vset.pattern.permute.xlu0 0
      %2462 = vperm.xlu0 %2461, %v2387
      %v2463 = vpop.permute.xlu0 %2462
      %2464 = vset.pattern.permute.xlu0 0
      %2465 = vperm.xlu0 %2464, %v2388
      %v2466 = vpop.permute.xlu0 %2465
      %2467 = vset.pattern.permute.xlu0 0
      %2468 = vperm.xlu0 %2467, %v2389
      %v2469 = vpop.permute.xlu0 %2468
      %2470 = vset.pattern.permute.xlu0 0
      %2471 = vperm.xlu0 %2470, %v2390
      %v2472 = vpop.permute.xlu0 %2471
      %2473 = vset.pattern.permute.xlu0 0
      %2474 = vperm.xlu0 %2473, %v2391
      %v2475 = vpop.permute.xlu0 %2474
      %2476 = vset.pattern.permute.xlu0 0
      %2477 = vperm.xlu0 %2476, %v2392
      %v2478 = vpop.permute.xlu0 %2477
      %2479 = vset.pattern.permute.xlu0 0
      %2480 = vperm.xlu0 %2479, %v2393
      %v2481 = vpop.permute.xlu0 %2480
      %2482 = vset.pattern.permute.xlu0 0
      %2483 = vperm.xlu0 %2482, %v2394
      %v2484 = vpop.permute.xlu0 %2483
      %2485 = vset.pattern.permute.xlu0 0
      %2486 = vperm.xlu0 %2485, %v2395
      %v2487 = vpop.permute.xlu0 %2486
      %2488 = vset.pattern.permute.xlu0 0
      %2489 = vperm.xlu0 %2488, %v2396
      %v2490 = vpop.permute.xlu0 %2489
      %2491 = vset.pattern.permute.xlu0 0
      %2492 = vperm.xlu0 %2491, %v2397
      %v2493 = vpop.permute.xlu0 %2492
      %vm2494 = vcmp.eq.s32.totalorder %v2400, 1
      %vm2495 = vcmp.eq.s32.totalorder %v2403, 1
      %vm2496 = vcmp.eq.s32.totalorder %v2406, 1
      %vm2497 = vcmp.eq.s32.totalorder %v2409, 1
      %vm2498 = vcmp.eq.s32.totalorder %v2412, 1
      %vm2499 = vcmp.eq.s32.totalorder %v2415, 1
      %vm2500 = vcmp.eq.s32.totalorder %v2418, 1
      %vm2501 = vcmp.eq.s32.totalorder %v2421, 1
      %vm2502 = vcmp.eq.s32.totalorder %v2424, 1
      %vm2503 = vcmp.eq.s32.totalorder %v2427, 1
      %vm2504 = vcmp.eq.s32.totalorder %v2430, 1
      %vm2505 = vcmp.eq.s32.totalorder %v2433, 1
      %vm2506 = vcmp.eq.s32.totalorder %v2436, 1
      %vm2507 = vcmp.eq.s32.totalorder %v2439, 1
      %vm2508 = vcmp.eq.s32.totalorder %v2442, 1
      %vm2509 = vcmp.eq.s32.totalorder %v2445, 1
      %vm2510 = vcmp.eq.s32.totalorder %v2448, 1
      %vm2511 = vcmp.eq.s32.totalorder %v2451, 1
      %vm2512 = vcmp.eq.s32.totalorder %v2454, 1
      %vm2513 = vcmp.eq.s32.totalorder %v2457, 1
      %vm2514 = vcmp.eq.s32.totalorder %v2460, 1
      %vm2515 = vcmp.eq.s32.totalorder %v2463, 1
      %vm2516 = vcmp.eq.s32.totalorder %v2466, 1
      %vm2517 = vcmp.eq.s32.totalorder %v2469, 1
      %vm2518 = vcmp.eq.s32.totalorder %v2472, 1
      %vm2519 = vcmp.eq.s32.totalorder %v2475, 1
      %vm2520 = vcmp.eq.s32.totalorder %v2478, 1
      %vm2521 = vcmp.eq.s32.totalorder %v2481, 1
      %vm2522 = vcmp.eq.s32.totalorder %v2484, 1
      %vm2523 = vcmp.eq.s32.totalorder %v2487, 1
      %vm2524 = vcmp.eq.s32.totalorder %v2490, 1
      %vm2525 = vcmp.eq.s32.totalorder %v2493, 1
      %vm2526 = vmpackc.low %vm2494, %vm2494
      %vm2527 = vmpackc.low %vm2495, %vm2495
      %vm2528 = vmpackc.low %vm2496, %vm2496
      %vm2529 = vmpackc.low %vm2497, %vm2497
      %vm2530 = vmpackc.low %vm2498, %vm2498
      %vm2531 = vmpackc.low %vm2499, %vm2499
      %vm2532 = vmpackc.low %vm2500, %vm2500
      %vm2533 = vmpackc.low %vm2501, %vm2501
      %vm2534 = vmpackc.low %vm2502, %vm2502
      %vm2535 = vmpackc.low %vm2503, %vm2503
      %vm2536 = vmpackc.low %vm2504, %vm2504
      %vm2537 = vmpackc.low %vm2505, %vm2505
      %vm2538 = vmpackc.low %vm2506, %vm2506
      %vm2539 = vmpackc.low %vm2507, %vm2507
      %vm2540 = vmpackc.low %vm2508, %vm2508
      %vm2541 = vmpackc.low %vm2509, %vm2509
      %vm2542 = vmpackc.low %vm2510, %vm2510
      %vm2543 = vmpackc.low %vm2511, %vm2511
      %vm2544 = vmpackc.low %vm2512, %vm2512
      %vm2545 = vmpackc.low %vm2513, %vm2513
      %vm2546 = vmpackc.low %vm2514, %vm2514
      %vm2547 = vmpackc.low %vm2515, %vm2515
      %vm2548 = vmpackc.low %vm2516, %vm2516
      %vm2549 = vmpackc.low %vm2517, %vm2517
      %vm2550 = vmpackc.low %vm2518, %vm2518
      %vm2551 = vmpackc.low %vm2519, %vm2519
      %vm2552 = vmpackc.low %vm2520, %vm2520
      %vm2553 = vmpackc.low %vm2521, %vm2521
      %vm2554 = vmpackc.low %vm2522, %vm2522
      %vm2555 = vmpackc.low %vm2523, %vm2523
      %vm2556 = vmpackc.low %vm2524, %vm2524
      %vm2557 = vmpackc.low %vm2525, %vm2525
      %v2558 = vsel %vm2526, 65537, 0
      %v2559 = vsel %vm2527, 65537, 0
      %v2560 = vsel %vm2528, 65537, 0
      %v2561 = vsel %vm2529, 65537, 0
      %v2562 = vsel %vm2530, 65537, 0
      %v2563 = vsel %vm2531, 65537, 0
      %v2564 = vsel %vm2532, 65537, 0
      %v2565 = vsel %vm2533, 65537, 0
      %v2566 = vsel %vm2534, 65537, 0
      %v2567 = vsel %vm2535, 65537, 0
      %v2568 = vsel %vm2536, 65537, 0
      %v2569 = vsel %vm2537, 65537, 0
      %v2570 = vsel %vm2538, 65537, 0
      %v2571 = vsel %vm2539, 65537, 0
      %v2572 = vsel %vm2540, 65537, 0
      %v2573 = vsel %vm2541, 65537, 0
      %v2574 = vsel %vm2542, 65537, 0
      %v2575 = vsel %vm2543, 65537, 0
      %v2576 = vsel %vm2544, 65537, 0
      %v2577 = vsel %vm2545, 65537, 0
      %v2578 = vsel %vm2546, 65537, 0
      %v2579 = vsel %vm2547, 65537, 0
      %v2580 = vsel %vm2548, 65537, 0
      %v2581 = vsel %vm2549, 65537, 0
      %v2582 = vsel %vm2550, 65537, 0
      %v2583 = vsel %vm2551, 65537, 0
      %v2584 = vsel %vm2552, 65537, 0
      %v2585 = vsel %vm2553, 65537, 0
      %v2586 = vsel %vm2554, 65537, 0
      %v2587 = vsel %vm2555, 65537, 0
      %v2588 = vsel %vm2556, 65537, 0
      %v2589 = vsel %vm2557, 65537, 0
      %vm2590 = vcmask 1044484
      %vm2591 = vmor %vm434, %vm2590
      %v2592 = vrot.slane %v2558, 7
      %v2593 = vrot.slane %v2592, 4
      %v2594 = vrot.slane %v2559, 7
      %v2595 = vsel %vm2591, %v2593, %v2594
      %v2596 = vrot.slane %v2594, 4
      %v2597 = vrot.slane %v2560, 7
      %v2598 = vsel %vm2591, %v2596, %v2597
      %v2599 = vrot.slane %v2597, 4
      %v2600 = vrot.slane %v2561, 7
      %v2601 = vsel %vm2591, %v2599, %v2600
      %v2602 = vrot.slane %v2600, 4
      %v2603 = vrot.slane %v2562, 7
      %v2604 = vsel %vm2591, %v2602, %v2603
      %v2605 = vrot.slane %v2603, 4
      %v2606 = vrot.slane %v2563, 7
      %v2607 = vsel %vm2591, %v2605, %v2606
      %v2608 = vrot.slane %v2606, 4
      %v2609 = vrot.slane %v2564, 7
      %v2610 = vsel %vm2591, %v2608, %v2609
      %v2611 = vrot.slane %v2609, 4
      %v2612 = vrot.slane %v2565, 7
      %v2613 = vsel %vm2591, %v2611, %v2612
      %v2614 = vrot.slane %v2612, 4
      %v2615 = vrot.slane %v2566, 7
      %v2616 = vsel %vm2591, %v2614, %v2615
      %v2617 = vrot.slane %v2615, 4
      %v2618 = vrot.slane %v2567, 7
      %v2619 = vsel %vm2591, %v2617, %v2618
      %v2620 = vrot.slane %v2618, 4
      %v2621 = vrot.slane %v2568, 7
      %v2622 = vsel %vm2591, %v2620, %v2621
      %v2623 = vrot.slane %v2621, 4
      %v2624 = vrot.slane %v2569, 7
      %v2625 = vsel %vm2591, %v2623, %v2624
      %v2626 = vrot.slane %v2624, 4
      %v2627 = vrot.slane %v2570, 7
      %v2628 = vsel %vm2591, %v2626, %v2627
      %v2629 = vrot.slane %v2627, 4
      %v2630 = vrot.slane %v2571, 7
      %v2631 = vsel %vm2591, %v2629, %v2630
      %v2632 = vrot.slane %v2630, 4
      %v2633 = vrot.slane %v2572, 7
      %v2634 = vsel %vm2591, %v2632, %v2633
      %v2635 = vrot.slane %v2633, 4
      %v2636 = vrot.slane %v2573, 7
      %v2637 = vsel %vm2591, %v2635, %v2636
      %v2638 = vrot.slane %v2636, 4
      %v2639 = vrot.slane %v2574, 7
      %v2640 = vsel %vm2591, %v2638, %v2639
      %v2641 = vrot.slane %v2639, 4
      %v2642 = vrot.slane %v2575, 7
      %v2643 = vsel %vm2591, %v2641, %v2642
      %v2644 = vrot.slane %v2642, 4
      %v2645 = vrot.slane %v2576, 7
      %v2646 = vsel %vm2591, %v2644, %v2645
      %v2647 = vrot.slane %v2645, 4
      %v2648 = vrot.slane %v2577, 7
      %v2649 = vsel %vm2591, %v2647, %v2648
      %v2650 = vrot.slane %v2648, 4
      %v2651 = vrot.slane %v2578, 7
      %v2652 = vsel %vm2591, %v2650, %v2651
      %v2653 = vrot.slane %v2651, 4
      %v2654 = vrot.slane %v2579, 7
      %v2655 = vsel %vm2591, %v2653, %v2654
      %v2656 = vrot.slane %v2654, 4
      %v2657 = vrot.slane %v2580, 7
      %v2658 = vsel %vm2591, %v2656, %v2657
      %v2659 = vrot.slane %v2657, 4
      %v2660 = vrot.slane %v2581, 7
      %v2661 = vsel %vm2591, %v2659, %v2660
      %v2662 = vrot.slane %v2660, 4
      %v2663 = vrot.slane %v2582, 7
      %v2664 = vsel %vm2591, %v2662, %v2663
      %v2665 = vrot.slane %v2663, 4
      %v2666 = vrot.slane %v2583, 7
      %v2667 = vsel %vm2591, %v2665, %v2666
      %v2668 = vrot.slane %v2666, 4
      %v2669 = vrot.slane %v2584, 7
      %v2670 = vsel %vm2591, %v2668, %v2669
      %v2671 = vrot.slane %v2669, 4
      %v2672 = vrot.slane %v2585, 7
      %v2673 = vsel %vm2591, %v2671, %v2672
      %v2674 = vrot.slane %v2672, 4
      %v2675 = vrot.slane %v2586, 7
      %v2676 = vsel %vm2591, %v2674, %v2675
      %v2677 = vrot.slane %v2675, 4
      %v2678 = vrot.slane %v2587, 7
      %v2679 = vsel %vm2591, %v2677, %v2678
      %v2680 = vrot.slane %v2678, 4
      %v2681 = vrot.slane %v2588, 7
      %v2682 = vsel %vm2591, %v2680, %v2681
      %v2683 = vrot.slane %v2681, 4
      %v2684 = vrot.slane %v2589, 7
      %v2685 = vsel %vm2591, %v2683, %v2684
      %v2686 = vrot.slane %v2684, 4
      %v2687 = vunpack.c.l.b16 %v2592
      %v2688 = vunpack.c.h.b16 %v2592
      %v2689 = vunpack.c.l.b16 0
      %v2690 = vunpack.c.h.b16 0
      %vm2691 = vcmp.ne.s32.totalorder %v2687, %v2689
      %vm2692 = vcmp.ne.s32.totalorder %v2688, %v2690
      %vm2693 = vmpackc.low %vm2692, %vm2691
      %v2694 = vunpack.c.l.b16 %v2595
      %v2695 = vunpack.c.h.b16 %v2595
      %v2696 = vunpack.c.l.b16 0
      %v2697 = vunpack.c.h.b16 0
      %vm2698 = vcmp.ne.s32.totalorder %v2694, %v2696
      %vm2699 = vcmp.ne.s32.totalorder %v2695, %v2697
      %vm2700 = vmpackc.low %vm2699, %vm2698
      %v2701 = vunpack.c.l.b16 %v2598
      %v2702 = vunpack.c.h.b16 %v2598
      %v2703 = vunpack.c.l.b16 0
      %v2704 = vunpack.c.h.b16 0
      %vm2705 = vcmp.ne.s32.totalorder %v2701, %v2703
      %vm2706 = vcmp.ne.s32.totalorder %v2702, %v2704
      %vm2707 = vmpackc.low %vm2706, %vm2705
      %v2708 = vunpack.c.l.b16 %v2601
      %v2709 = vunpack.c.h.b16 %v2601
      %v2710 = vunpack.c.l.b16 0
      %v2711 = vunpack.c.h.b16 0
      %vm2712 = vcmp.ne.s32.totalorder %v2708, %v2710
      %vm2713 = vcmp.ne.s32.totalorder %v2709, %v2711
      %vm2714 = vmpackc.low %vm2713, %vm2712
      %v2715 = vunpack.c.l.b16 %v2604
      %v2716 = vunpack.c.h.b16 %v2604
      %v2717 = vunpack.c.l.b16 0
      %v2718 = vunpack.c.h.b16 0
      %vm2719 = vcmp.ne.s32.totalorder %v2715, %v2717
      %vm2720 = vcmp.ne.s32.totalorder %v2716, %v2718
      %vm2721 = vmpackc.low %vm2720, %vm2719
      %v2722 = vunpack.c.l.b16 %v2607
      %v2723 = vunpack.c.h.b16 %v2607
      %v2724 = vunpack.c.l.b16 0
      %v2725 = vunpack.c.h.b16 0
      %vm2726 = vcmp.ne.s32.totalorder %v2722, %v2724
      %vm2727 = vcmp.ne.s32.totalorder %v2723, %v2725
      %vm2728 = vmpackc.low %vm2727, %vm2726
      %v2729 = vunpack.c.l.b16 %v2610
      %v2730 = vunpack.c.h.b16 %v2610
      %v2731 = vunpack.c.l.b16 0
      %v2732 = vunpack.c.h.b16 0
      %vm2733 = vcmp.ne.s32.totalorder %v2729, %v2731
      %vm2734 = vcmp.ne.s32.totalorder %v2730, %v2732
      %vm2735 = vmpackc.low %vm2734, %vm2733
      %v2736 = vunpack.c.l.b16 %v2613
      %v2737 = vunpack.c.h.b16 %v2613
      %v2738 = vunpack.c.l.b16 0
      %v2739 = vunpack.c.h.b16 0
      %vm2740 = vcmp.ne.s32.totalorder %v2736, %v2738
      %vm2741 = vcmp.ne.s32.totalorder %v2737, %v2739
      %vm2742 = vmpackc.low %vm2741, %vm2740
      %v2743 = vunpack.c.l.b16 %v2616
      %v2744 = vunpack.c.h.b16 %v2616
      %v2745 = vunpack.c.l.b16 0
      %v2746 = vunpack.c.h.b16 0
      %vm2747 = vcmp.ne.s32.totalorder %v2743, %v2745
      %vm2748 = vcmp.ne.s32.totalorder %v2744, %v2746
      %vm2749 = vmpackc.low %vm2748, %vm2747
      %v2750 = vunpack.c.l.b16 %v2619
      %v2751 = vunpack.c.h.b16 %v2619
      %v2752 = vunpack.c.l.b16 0
      %v2753 = vunpack.c.h.b16 0
      %vm2754 = vcmp.ne.s32.totalorder %v2750, %v2752
      %vm2755 = vcmp.ne.s32.totalorder %v2751, %v2753
      %vm2756 = vmpackc.low %vm2755, %vm2754
      %v2757 = vunpack.c.l.b16 %v2622
      %v2758 = vunpack.c.h.b16 %v2622
      %v2759 = vunpack.c.l.b16 0
      %v2760 = vunpack.c.h.b16 0
      %vm2761 = vcmp.ne.s32.totalorder %v2757, %v2759
      %vm2762 = vcmp.ne.s32.totalorder %v2758, %v2760
      %vm2763 = vmpackc.low %vm2762, %vm2761
      %v2764 = vunpack.c.l.b16 %v2625
      %v2765 = vunpack.c.h.b16 %v2625
      %v2766 = vunpack.c.l.b16 0
      %v2767 = vunpack.c.h.b16 0
      %vm2768 = vcmp.ne.s32.totalorder %v2764, %v2766
      %vm2769 = vcmp.ne.s32.totalorder %v2765, %v2767
      %vm2770 = vmpackc.low %vm2769, %vm2768
      %v2771 = vunpack.c.l.b16 %v2628
      %v2772 = vunpack.c.h.b16 %v2628
      %v2773 = vunpack.c.l.b16 0
      %v2774 = vunpack.c.h.b16 0
      %vm2775 = vcmp.ne.s32.totalorder %v2771, %v2773
      %vm2776 = vcmp.ne.s32.totalorder %v2772, %v2774
      %vm2777 = vmpackc.low %vm2776, %vm2775
      %v2778 = vunpack.c.l.b16 %v2631
      %v2779 = vunpack.c.h.b16 %v2631
      %v2780 = vunpack.c.l.b16 0
      %v2781 = vunpack.c.h.b16 0
      %vm2782 = vcmp.ne.s32.totalorder %v2778, %v2780
      %vm2783 = vcmp.ne.s32.totalorder %v2779, %v2781
      %vm2784 = vmpackc.low %vm2783, %vm2782
      %v2785 = vunpack.c.l.b16 %v2634
      %v2786 = vunpack.c.h.b16 %v2634
      %v2787 = vunpack.c.l.b16 0
      %v2788 = vunpack.c.h.b16 0
      %vm2789 = vcmp.ne.s32.totalorder %v2785, %v2787
      %vm2790 = vcmp.ne.s32.totalorder %v2786, %v2788
      %vm2791 = vmpackc.low %vm2790, %vm2789
      %v2792 = vunpack.c.l.b16 %v2637
      %v2793 = vunpack.c.h.b16 %v2637
      %v2794 = vunpack.c.l.b16 0
      %v2795 = vunpack.c.h.b16 0
      %vm2796 = vcmp.ne.s32.totalorder %v2792, %v2794
      %vm2797 = vcmp.ne.s32.totalorder %v2793, %v2795
      %vm2798 = vmpackc.low %vm2797, %vm2796
      %v2799 = vunpack.c.l.b16 %v2640
      %v2800 = vunpack.c.h.b16 %v2640
      %v2801 = vunpack.c.l.b16 0
      %v2802 = vunpack.c.h.b16 0
      %vm2803 = vcmp.ne.s32.totalorder %v2799, %v2801
      %vm2804 = vcmp.ne.s32.totalorder %v2800, %v2802
      %vm2805 = vmpackc.low %vm2804, %vm2803
      %v2806 = vunpack.c.l.b16 %v2643
      %v2807 = vunpack.c.h.b16 %v2643
      %v2808 = vunpack.c.l.b16 0
      %v2809 = vunpack.c.h.b16 0
      %vm2810 = vcmp.ne.s32.totalorder %v2806, %v2808
      %vm2811 = vcmp.ne.s32.totalorder %v2807, %v2809
      %vm2812 = vmpackc.low %vm2811, %vm2810
      %v2813 = vunpack.c.l.b16 %v2646
      %v2814 = vunpack.c.h.b16 %v2646
      %v2815 = vunpack.c.l.b16 0
      %v2816 = vunpack.c.h.b16 0
      %vm2817 = vcmp.ne.s32.totalorder %v2813, %v2815
      %vm2818 = vcmp.ne.s32.totalorder %v2814, %v2816
      %vm2819 = vmpackc.low %vm2818, %vm2817
      %v2820 = vunpack.c.l.b16 %v2649
      %v2821 = vunpack.c.h.b16 %v2649
      %v2822 = vunpack.c.l.b16 0
      %v2823 = vunpack.c.h.b16 0
      %vm2824 = vcmp.ne.s32.totalorder %v2820, %v2822
      %vm2825 = vcmp.ne.s32.totalorder %v2821, %v2823
      %vm2826 = vmpackc.low %vm2825, %vm2824
      %v2827 = vunpack.c.l.b16 %v2652
      %v2828 = vunpack.c.h.b16 %v2652
      %v2829 = vunpack.c.l.b16 0
      %v2830 = vunpack.c.h.b16 0
      %vm2831 = vcmp.ne.s32.totalorder %v2827, %v2829
      %vm2832 = vcmp.ne.s32.totalorder %v2828, %v2830
      %vm2833 = vmpackc.low %vm2832, %vm2831
      %v2834 = vunpack.c.l.b16 %v2655
      %v2835 = vunpack.c.h.b16 %v2655
      %v2836 = vunpack.c.l.b16 0
      %v2837 = vunpack.c.h.b16 0
      %vm2838 = vcmp.ne.s32.totalorder %v2834, %v2836
      %vm2839 = vcmp.ne.s32.totalorder %v2835, %v2837
      %vm2840 = vmpackc.low %vm2839, %vm2838
      %v2841 = vunpack.c.l.b16 %v2658
      %v2842 = vunpack.c.h.b16 %v2658
      %v2843 = vunpack.c.l.b16 0
      %v2844 = vunpack.c.h.b16 0
      %vm2845 = vcmp.ne.s32.totalorder %v2841, %v2843
      %vm2846 = vcmp.ne.s32.totalorder %v2842, %v2844
      %vm2847 = vmpackc.low %vm2846, %vm2845
      %v2848 = vunpack.c.l.b16 %v2661
      %v2849 = vunpack.c.h.b16 %v2661
      %v2850 = vunpack.c.l.b16 0
      %v2851 = vunpack.c.h.b16 0
      %vm2852 = vcmp.ne.s32.totalorder %v2848, %v2850
      %vm2853 = vcmp.ne.s32.totalorder %v2849, %v2851
      %vm2854 = vmpackc.low %vm2853, %vm2852
      %v2855 = vunpack.c.l.b16 %v2664
      %v2856 = vunpack.c.h.b16 %v2664
      %v2857 = vunpack.c.l.b16 0
      %v2858 = vunpack.c.h.b16 0
      %vm2859 = vcmp.ne.s32.totalorder %v2855, %v2857
      %vm2860 = vcmp.ne.s32.totalorder %v2856, %v2858
      %vm2861 = vmpackc.low %vm2860, %vm2859
      %v2862 = vunpack.c.l.b16 %v2667
      %v2863 = vunpack.c.h.b16 %v2667
      %v2864 = vunpack.c.l.b16 0
      %v2865 = vunpack.c.h.b16 0
      %vm2866 = vcmp.ne.s32.totalorder %v2862, %v2864
      %vm2867 = vcmp.ne.s32.totalorder %v2863, %v2865
      %vm2868 = vmpackc.low %vm2867, %vm2866
      %v2869 = vunpack.c.l.b16 %v2670
      %v2870 = vunpack.c.h.b16 %v2670
      %v2871 = vunpack.c.l.b16 0
      %v2872 = vunpack.c.h.b16 0
      %vm2873 = vcmp.ne.s32.totalorder %v2869, %v2871
      %vm2874 = vcmp.ne.s32.totalorder %v2870, %v2872
      %vm2875 = vmpackc.low %vm2874, %vm2873
      %v2876 = vunpack.c.l.b16 %v2673
      %v2877 = vunpack.c.h.b16 %v2673
      %v2878 = vunpack.c.l.b16 0
      %v2879 = vunpack.c.h.b16 0
      %vm2880 = vcmp.ne.s32.totalorder %v2876, %v2878
      %vm2881 = vcmp.ne.s32.totalorder %v2877, %v2879
      %vm2882 = vmpackc.low %vm2881, %vm2880
      %v2883 = vunpack.c.l.b16 %v2676
      %v2884 = vunpack.c.h.b16 %v2676
      %v2885 = vunpack.c.l.b16 0
      %v2886 = vunpack.c.h.b16 0
      %vm2887 = vcmp.ne.s32.totalorder %v2883, %v2885
      %vm2888 = vcmp.ne.s32.totalorder %v2884, %v2886
      %vm2889 = vmpackc.low %vm2888, %vm2887
      %v2890 = vunpack.c.l.b16 %v2679
      %v2891 = vunpack.c.h.b16 %v2679
      %v2892 = vunpack.c.l.b16 0
      %v2893 = vunpack.c.h.b16 0
      %vm2894 = vcmp.ne.s32.totalorder %v2890, %v2892
      %vm2895 = vcmp.ne.s32.totalorder %v2891, %v2893
      %vm2896 = vmpackc.low %vm2895, %vm2894
      %v2897 = vunpack.c.l.b16 %v2682
      %v2898 = vunpack.c.h.b16 %v2682
      %v2899 = vunpack.c.l.b16 0
      %v2900 = vunpack.c.h.b16 0
      %vm2901 = vcmp.ne.s32.totalorder %v2897, %v2899
      %vm2902 = vcmp.ne.s32.totalorder %v2898, %v2900
      %vm2903 = vmpackc.low %vm2902, %vm2901
      %v2904 = vunpack.c.l.b16 %v2685
      %v2905 = vunpack.c.h.b16 %v2685
      %v2906 = vunpack.c.l.b16 0
      %v2907 = vunpack.c.h.b16 0
      %vm2908 = vcmp.ne.s32.totalorder %v2904, %v2906
      %vm2909 = vcmp.ne.s32.totalorder %v2905, %v2907
      %vm2910 = vmpackc.low %vm2909, %vm2908
      %v2911 = vunpack.c.l.b16 %v2686
      %v2912 = vunpack.c.h.b16 %v2686
      %v2913 = vunpack.c.l.b16 0
      %v2914 = vunpack.c.h.b16 0
      %vm2915 = vcmp.ne.s32.totalorder %v2911, %v2913
      %vm2916 = vcmp.ne.s32.totalorder %v2912, %v2914
      %vm2917 = vmpackc.low %vm2916, %vm2915
      %v2918 = vsel %vm2693, %v2333, 0
      %v2919 = vsel %vm2700, %v2334, 0
      %v2920 = vsel %vm2707, %v2335, 0
      %v2921 = vsel %vm2714, %v2336, 0
      %v2922 = vsel %vm2721, %v2337, 0
      %v2923 = vsel %vm2728, %v2338, 0
      %v2924 = vsel %vm2735, %v2339, 0
      %v2925 = vsel %vm2742, %v2340, 0
      %v2926 = vsel %vm2749, %v2341, 0
      %v2927 = vsel %vm2756, %v2342, 0
      %v2928 = vsel %vm2763, %v2343, 0
      %v2929 = vsel %vm2770, %v2344, 0
      %v2930 = vsel %vm2777, %v2345, 0
      %v2931 = vsel %vm2784, %v2346, 0
      %v2932 = vsel %vm2791, %v2347, 0
      %v2933 = vsel %vm2798, %v2348, 0
      %v2934 = vsel %vm2805, %v2349, 0
      %v2935 = vsel %vm2812, %v2350, 0
      %v2936 = vsel %vm2819, %v2351, 0
      %v2937 = vsel %vm2826, %v2352, 0
      %v2938 = vsel %vm2833, %v2353, 0
      %v2939 = vsel %vm2840, %v2354, 0
      %v2940 = vsel %vm2847, %v2355, 0
      %v2941 = vsel %vm2854, %v2356, 0
      %v2942 = vsel %vm2861, %v2357, 0
      %v2943 = vsel %vm2868, %v2358, 0
      %v2944 = vsel %vm2875, %v2359, 0
      %v2945 = vsel %vm2882, %v2360, 0
      %v2946 = vsel %vm2889, %v2361, 0
      %v2947 = vsel %vm2896, %v2362, 0
      %v2948 = vsel %vm2903, %v2363, 0
      %v2949 = vsel %vm2910, %v2364, 0
      %v2950 = vsel %vm2917, %v2365, 0
      %v2951 = vld [vmem:[#allocation3] sm:$0xff]
      %v2952 = vld [vmem:[#allocation3 + $0x8] sm:$0xff]
      %v2953 = vld [vmem:[#allocation3 + $0x10] sm:$0xff]
      %v2954 = vld [vmem:[#allocation3 + $0x18] sm:$0xff]
      %v2955 = vld [vmem:[#allocation3 + $0x20] sm:$0xff]
      %v2956 = vld [vmem:[#allocation3 + $0x28] sm:$0xff]
      %v2957 = vld [vmem:[#allocation3 + $0x30] sm:$0xff]
      %v2958 = vld [vmem:[#allocation3 + $0x38] sm:$0xff]
      %v2959 = vld [vmem:[#allocation3 + $0x40] sm:$0xff]
      %v2960 = vld [vmem:[#allocation3 + $0x48] sm:$0xff]
      %v2961 = vld [vmem:[#allocation3 + $0x50] sm:$0xff]
      %v2962 = vld [vmem:[#allocation3 + $0x58] sm:$0xff]
      %v2963 = vld [vmem:[#allocation3 + $0x60] sm:$0xff]
      %v2964 = vld [vmem:[#allocation3 + $0x68] sm:$0xff]
      %v2965 = vld [vmem:[#allocation3 + $0x70] sm:$0xff]
      %v2966 = vld [vmem:[#allocation3 + $0x78] sm:$0xff]
      %v2967 = vld [vmem:[#allocation3 + $0x80] sm:$0xff]
      %v2968 = vld [vmem:[#allocation3 + $0x88] sm:$0xff]
      %v2969 = vld [vmem:[#allocation3 + $0x90] sm:$0xff]
      %v2970 = vld [vmem:[#allocation3 + $0x98] sm:$0xff]
      %v2971 = vld [vmem:[#allocation3 + $0xa0] sm:$0xff]
      %v2972 = vld [vmem:[#allocation3 + $0xa8] sm:$0xff]
      %v2973 = vld [vmem:[#allocation3 + $0xb0] sm:$0xff]
      %v2974 = vld [vmem:[#allocation3 + $0xb8] sm:$0xff]
      %v2975 = vld [vmem:[#allocation3 + $0xc0] sm:$0xff]
      %v2976 = vld [vmem:[#allocation3 + $0xc8] sm:$0xff]
      %v2977 = vld [vmem:[#allocation3 + $0xd0] sm:$0xff]
      %v2978 = vld [vmem:[#allocation3 + $0xd8] sm:$0xff]
      %v2979 = vld [vmem:[#allocation3 + $0xe0] sm:$0xff]
      %v2980 = vld [vmem:[#allocation3 + $0xe8] sm:$0xff]
      %v2981 = vld [vmem:[#allocation3 + $0xf0] sm:$0xff]
      %v2982 = vld [vmem:[#allocation3 + $0xf8] sm:$0xff]
      %s2983 = scalar_lea.vmem %s7, 128
      %v2984 = vld [vmem:[%s2983] sm:$0xf]
      %v2985 = vld [vmem:[%s2983 + $0x4] sm:$0xf]
      %v2986 = vld [vmem:[%s2983 + $0x8] sm:$0xf]
      %v2987 = vld [vmem:[%s2983 + $0xc] sm:$0xf]
      %v2988 = vld [vmem:[%s2983 + $0x10] sm:$0xf]
      %v2989 = vld [vmem:[%s2983 + $0x14] sm:$0xf]
      %v2990 = vld [vmem:[%s2983 + $0x18] sm:$0xf]
      %v2991 = vld [vmem:[%s2983 + $0x1c] sm:$0xf]
      %v2992 = vld [vmem:[%s2983 + $0x20] sm:$0xf]
      %v2993 = vld [vmem:[%s2983 + $0x24] sm:$0xf]
      %v2994 = vld [vmem:[%s2983 + $0x28] sm:$0xf]
      %v2995 = vld [vmem:[%s2983 + $0x2c] sm:$0xf]
      %v2996 = vld [vmem:[%s2983 + $0x30] sm:$0xf]
      %v2997 = vld [vmem:[%s2983 + $0x34] sm:$0xf]
      %v2998 = vld [vmem:[%s2983 + $0x38] sm:$0xf]
      %v2999 = vld [vmem:[%s2983 + $0x3c] sm:$0xf]
      %v3033 = vunpack.c.l.b16 %v2918
      %v3034 = vunpack.c.l.b16 %v2919
      %v3035 = vunpack.c.l.b16 %v2920
      %v3036 = vunpack.c.l.b16 %v2921
      %v3037 = vunpack.c.l.b16 %v2922
      %v3038 = vunpack.c.l.b16 %v2923
      %v3039 = vunpack.c.l.b16 %v2924
      %v3040 = vunpack.c.l.b16 %v2925
      %v3041 = vunpack.c.l.b16 %v2926
      %v3042 = vunpack.c.l.b16 %v2927
      %v3043 = vunpack.c.l.b16 %v2928
      %v3044 = vunpack.c.l.b16 %v2929
      %v3045 = vunpack.c.l.b16 %v2930
      %v3046 = vunpack.c.l.b16 %v2931
      %v3047 = vunpack.c.l.b16 %v2932
      %v3048 = vunpack.c.l.b16 %v2933
      %v3049 = vunpack.c.l.b16 %v2934
      %v3050 = vunpack.c.l.b16 %v2935
      %v3051 = vunpack.c.l.b16 %v2936
      %v3052 = vunpack.c.l.b16 %v2937
      %v3053 = vunpack.c.l.b16 %v2938
      %v3054 = vunpack.c.l.b16 %v2939
      %v3055 = vunpack.c.l.b16 %v2940
      %v3056 = vunpack.c.l.b16 %v2941
      %v3057 = vunpack.c.l.b16 %v2942
      %v3058 = vunpack.c.l.b16 %v2943
      %v3059 = vunpack.c.l.b16 %v2944
      %v3060 = vunpack.c.l.b16 %v2945
      %v3061 = vunpack.c.l.b16 %v2946
      %v3062 = vunpack.c.l.b16 %v2947
      %v3063 = vunpack.c.l.b16 %v2948
      %v3064 = vunpack.c.l.b16 %v2949
      %v3065 = vunpack.c.l.b16 %v2950
      %v3066 = vpack.c.b16 %v3034, %v3033
      %v3067 = vpack.c.b16 %v3036, %v3035
      %v3068 = vpack.c.b16 %v3038, %v3037
      %v3069 = vpack.c.b16 %v3040, %v3039
      %v3070 = vpack.c.b16 %v3042, %v3041
      %v3071 = vpack.c.b16 %v3044, %v3043
      %v3072 = vpack.c.b16 %v3046, %v3045
      %v3073 = vpack.c.b16 %v3048, %v3047
      %v3074 = vpack.c.b16 %v3050, %v3049
      %v3075 = vpack.c.b16 %v3052, %v3051
      %v3076 = vpack.c.b16 %v3054, %v3053
      %v3077 = vpack.c.b16 %v3056, %v3055
      %v3078 = vpack.c.b16 %v3058, %v3057
      %v3079 = vpack.c.b16 %v3060, %v3059
      %v3080 = vpack.c.b16 %v3062, %v3061
      %v3081 = vpack.c.b16 %v3064, %v3063
      %v3082 = vpack.c.b16 %v3065, %v3065
      %vm3083 = vcmask 1046528
      %v3084 = vrot.slane %v3066, 1
      %v3085 = vrot.slane %v3067, 1
      %v3086 = vsel %vm3083, %v3084, %v3085
      %v3087 = vrot.slane %v3068, 1
      %v3088 = vsel %vm3083, %v3085, %v3087
      %v3089 = vrot.slane %v3069, 1
      %v3090 = vsel %vm3083, %v3087, %v3089
      %v3091 = vrot.slane %v3070, 1
      %v3092 = vsel %vm3083, %v3089, %v3091
      %v3093 = vrot.slane %v3071, 1
      %v3094 = vsel %vm3083, %v3091, %v3093
      %v3095 = vrot.slane %v3072, 1
      %v3096 = vsel %vm3083, %v3093, %v3095
      %v3097 = vrot.slane %v3073, 1
      %v3098 = vsel %vm3083, %v3095, %v3097
      %v3099 = vrot.slane %v3074, 1
      %v3100 = vsel %vm3083, %v3097, %v3099
      %v3101 = vrot.slane %v3075, 1
      %v3102 = vsel %vm3083, %v3099, %v3101
      %v3103 = vrot.slane %v3076, 1
      %v3104 = vsel %vm3083, %v3101, %v3103
      %v3105 = vrot.slane %v3077, 1
      %v3106 = vsel %vm3083, %v3103, %v3105
      %v3107 = vrot.slane %v3078, 1
      %v3108 = vsel %vm3083, %v3105, %v3107
      %v3109 = vrot.slane %v3079, 1
      %v3110 = vsel %vm3083, %v3107, %v3109
      %v3111 = vrot.slane %v3080, 1
      %v3112 = vsel %vm3083, %v3109, %v3111
      %v3113 = vrot.slane %v3081, 1
      %v3114 = vsel %vm3083, %v3111, %v3113
      %v3115 = vrot.slane %v3082, 1
      %v3116 = vsel %vm3083, %v3113, %v3115
      %v3149 = vunpack.c.l.b16 %v2984
      %v3150 = vunpack.c.l.b16 %v2985
      %v3151 = vunpack.c.l.b16 %v2986
      %v3152 = vunpack.c.l.b16 %v2987
      %v3153 = vunpack.c.l.b16 %v2988
      %v3154 = vunpack.c.l.b16 %v2989
      %v3155 = vunpack.c.l.b16 %v2990
      %v3156 = vunpack.c.l.b16 %v2991
      %v3157 = vunpack.c.l.b16 %v2992
      %v3158 = vunpack.c.l.b16 %v2993
      %v3159 = vunpack.c.l.b16 %v2994
      %v3160 = vunpack.c.l.b16 %v2995
      %v3161 = vunpack.c.l.b16 %v2996
      %v3162 = vunpack.c.l.b16 %v2997
      %v3163 = vunpack.c.l.b16 %v2998
      %v3164 = vunpack.c.l.b16 %v2999
      %v3165 = vpack.c.b16 %v3150, %v3149
      %v3166 = vpack.c.b16 %v3152, %v3151
      %v3167 = vpack.c.b16 %v3154, %v3153
      %v3168 = vpack.c.b16 %v3156, %v3155
      %v3169 = vpack.c.b16 %v3158, %v3157
      %v3170 = vpack.c.b16 %v3160, %v3159
      %v3171 = vpack.c.b16 %v3162, %v3161
      %v3172 = vpack.c.b16 %v3164, %v3163
      %3181 = vmatpush.bf16.msra.mxu0 %v3172
      %3182 = vmatpush.bf16.msra.mxu0 %v3171
      %3183 = vmatpush.bf16.msra.mxu0 %v3170
      %3184 = vmatpush.bf16.msra.mxu0 %v3169
      %3185 = vmatpush.bf16.msra.mxu0 %v3168
      %3186 = vmatpush.bf16.msra.mxu0 %v3167
      %3187 = vmatpush.bf16.msra.mxu0 %v3166
      %3188 = vmatpush.bf16.msra.mxu0 %v3165
      %3189 = vmatmul.bf16.gmra.mxu0 %v3086
      %v3190 = vpop.f32.mrf.mxu0
      %v3191 = vadd.f32 0.0, %v3190
      %v3192 = vpop.f32.mrf.mxu0
      %v3193 = vadd.f32 0.0, %v3192
      %3194 = vmatmul.bf16.gmra.mxu0 %v3088
      %v3195 = vpop.f32.mrf.mxu0
      %v3196 = vadd.f32 0.0, %v3195
      %v3197 = vpop.f32.mrf.mxu0
      %v3198 = vadd.f32 0.0, %v3197
      %3199 = vmatmul.bf16.gmra.mxu0 %v3090
      %v3200 = vpop.f32.mrf.mxu0
      %v3201 = vadd.f32 0.0, %v3200
      %v3202 = vpop.f32.mrf.mxu0
      %v3203 = vadd.f32 0.0, %v3202
      %3204 = vmatmul.bf16.gmra.mxu0 %v3092
      %v3205 = vpop.f32.mrf.mxu0
      %v3206 = vadd.f32 0.0, %v3205
      %v3207 = vpop.f32.mrf.mxu0
      %v3208 = vadd.f32 0.0, %v3207
      %3209 = vmatmul.bf16.gmra.mxu0 %v3094
      %v3210 = vpop.f32.mrf.mxu0
      %v3211 = vadd.f32 0.0, %v3210
      %v3212 = vpop.f32.mrf.mxu0
      %v3213 = vadd.f32 0.0, %v3212
      %3214 = vmatmul.bf16.gmra.mxu0 %v3096
      %v3215 = vpop.f32.mrf.mxu0
      %v3216 = vadd.f32 0.0, %v3215
      %v3217 = vpop.f32.mrf.mxu0
      %v3218 = vadd.f32 0.0, %v3217
      %3219 = vmatmul.bf16.gmra.mxu0 %v3098
      %v3220 = vpop.f32.mrf.mxu0
      %v3221 = vadd.f32 0.0, %v3220
      %v3222 = vpop.f32.mrf.mxu0
      %v3223 = vadd.f32 0.0, %v3222
      %3224 = vmatmul.bf16.gmra.mxu0 %v3100
      %v3225 = vpop.f32.mrf.mxu0
      %v3226 = vadd.f32 0.0, %v3225
      %v3227 = vpop.f32.mrf.mxu0
      %v3228 = vadd.f32 0.0, %v3227
      %3229 = vmatmul.bf16.gmra.mxu0 %v3102
      %v3230 = vpop.f32.mrf.mxu0
      %v3231 = vadd.f32 0.0, %v3230
      %v3232 = vpop.f32.mrf.mxu0
      %v3233 = vadd.f32 0.0, %v3232
      %3234 = vmatmul.bf16.gmra.mxu0 %v3104
      %v3235 = vpop.f32.mrf.mxu0
      %v3236 = vadd.f32 0.0, %v3235
      %v3237 = vpop.f32.mrf.mxu0
      %v3238 = vadd.f32 0.0, %v3237
      %3239 = vmatmul.bf16.gmra.mxu0 %v3106
      %v3240 = vpop.f32.mrf.mxu0
      %v3241 = vadd.f32 0.0, %v3240
      %v3242 = vpop.f32.mrf.mxu0
      %v3243 = vadd.f32 0.0, %v3242
      %3244 = vmatmul.bf16.gmra.mxu0 %v3108
      %v3245 = vpop.f32.mrf.mxu0
      %v3246 = vadd.f32 0.0, %v3245
      %v3247 = vpop.f32.mrf.mxu0
      %v3248 = vadd.f32 0.0, %v3247
      %3249 = vmatmul.bf16.gmra.mxu0 %v3110
      %v3250 = vpop.f32.mrf.mxu0
      %v3251 = vadd.f32 0.0, %v3250
      %v3252 = vpop.f32.mrf.mxu0
      %v3253 = vadd.f32 0.0, %v3252
      %3254 = vmatmul.bf16.gmra.mxu0 %v3112
      %v3255 = vpop.f32.mrf.mxu0
      %v3256 = vadd.f32 0.0, %v3255
      %v3257 = vpop.f32.mrf.mxu0
      %v3258 = vadd.f32 0.0, %v3257
      %3259 = vmatmul.bf16.gmra.mxu0 %v3114
      %v3260 = vpop.f32.mrf.mxu0
      %v3261 = vadd.f32 0.0, %v3260
      %v3262 = vpop.f32.mrf.mxu0
      %v3263 = vadd.f32 0.0, %v3262
      %3264 = vmatmul.bf16.gmra.mxu0 %v3116
      %v3265 = vpop.f32.mrf.mxu0
      %v3266 = vadd.f32 0.0, %v3265
      %v3267 = vpop.f32.mrf.mxu0
      %v3268 = vadd.f32 0.0, %v3267
      %3269 = vdwg.mxu0
      %v3270 = vadd.f32 %v2951, %v3191
      %v3271 = vadd.f32 %v2952, %v3193
      %v3272 = vadd.f32 %v2953, %v3196
      %v3273 = vadd.f32 %v2954, %v3198
      %v3274 = vadd.f32 %v2955, %v3201
      %v3275 = vadd.f32 %v2956, %v3203
      %v3276 = vadd.f32 %v2957, %v3206
      %v3277 = vadd.f32 %v2958, %v3208
      %v3278 = vadd.f32 %v2959, %v3211
      %v3279 = vadd.f32 %v2960, %v3213
      %v3280 = vadd.f32 %v2961, %v3216
      %v3281 = vadd.f32 %v2962, %v3218
      %v3282 = vadd.f32 %v2963, %v3221
      %v3283 = vadd.f32 %v2964, %v3223
      %v3284 = vadd.f32 %v2965, %v3226
      %v3285 = vadd.f32 %v2966, %v3228
      %v3286 = vadd.f32 %v2967, %v3231
      %v3287 = vadd.f32 %v2968, %v3233
      %v3288 = vadd.f32 %v2969, %v3236
      %v3289 = vadd.f32 %v2970, %v3238
      %v3290 = vadd.f32 %v2971, %v3241
      %v3291 = vadd.f32 %v2972, %v3243
      %v3292 = vadd.f32 %v2973, %v3246
      %v3293 = vadd.f32 %v2974, %v3248
      %v3294 = vadd.f32 %v2975, %v3251
      %v3295 = vadd.f32 %v2976, %v3253
      %v3296 = vadd.f32 %v2977, %v3256
      %v3297 = vadd.f32 %v2978, %v3258
      %v3298 = vadd.f32 %v2979, %v3261
      %v3299 = vadd.f32 %v2980, %v3263
      %v3300 = vadd.f32 %v2981, %v3266
      %v3301 = vadd.f32 %v2982, %v3268
      %3302 = vst [vmem:[#allocation3] sm:$0xff] %v3270
      %3303 = vst [vmem:[#allocation3 + $0x8] sm:$0xff] %v3271
      %3304 = vst [vmem:[#allocation3 + $0x10] sm:$0xff] %v3272
      %3305 = vst [vmem:[#allocation3 + $0x18] sm:$0xff] %v3273
      %3306 = vst [vmem:[#allocation3 + $0x20] sm:$0xff] %v3274
      %3307 = vst [vmem:[#allocation3 + $0x28] sm:$0xff] %v3275
      %3308 = vst [vmem:[#allocation3 + $0x30] sm:$0xff] %v3276
      %3309 = vst [vmem:[#allocation3 + $0x38] sm:$0xff] %v3277
      %3310 = vst [vmem:[#allocation3 + $0x40] sm:$0xff] %v3278
      %3311 = vst [vmem:[#allocation3 + $0x48] sm:$0xff] %v3279
      %3312 = vst [vmem:[#allocation3 + $0x50] sm:$0xff] %v3280
      %3313 = vst [vmem:[#allocation3 + $0x58] sm:$0xff] %v3281
      %3314 = vst [vmem:[#allocation3 + $0x60] sm:$0xff] %v3282
      %3315 = vst [vmem:[#allocation3 + $0x68] sm:$0xff] %v3283
      %3316 = vst [vmem:[#allocation3 + $0x70] sm:$0xff] %v3284
      %3317 = vst [vmem:[#allocation3 + $0x78] sm:$0xff] %v3285
      %3318 = vst [vmem:[#allocation3 + $0x80] sm:$0xff] %v3286
      %3319 = vst [vmem:[#allocation3 + $0x88] sm:$0xff] %v3287
      %3320 = vst [vmem:[#allocation3 + $0x90] sm:$0xff] %v3288
      %3321 = vst [vmem:[#allocation3 + $0x98] sm:$0xff] %v3289
      %3322 = vst [vmem:[#allocation3 + $0xa0] sm:$0xff] %v3290
      %3323 = vst [vmem:[#allocation3 + $0xa8] sm:$0xff] %v3291
      %3324 = vst [vmem:[#allocation3 + $0xb0] sm:$0xff] %v3292
      %3325 = vst [vmem:[#allocation3 + $0xb8] sm:$0xff] %v3293
      %3326 = vst [vmem:[#allocation3 + $0xc0] sm:$0xff] %v3294
      %3327 = vst [vmem:[#allocation3 + $0xc8] sm:$0xff] %v3295
      %3328 = vst [vmem:[#allocation3 + $0xd0] sm:$0xff] %v3296
      %3329 = vst [vmem:[#allocation3 + $0xd8] sm:$0xff] %v3297
      %3330 = vst [vmem:[#allocation3 + $0xe0] sm:$0xff] %v3298
      %3331 = vst [vmem:[#allocation3 + $0xe8] sm:$0xff] %v3299
      %3332 = vst [vmem:[#allocation3 + $0xf0] sm:$0xff] %v3300
      %3333 = vst [vmem:[#allocation3 + $0xf8] sm:$0xff] %v3301
      %v3334 = vld [vmem:[#allocation2 + $0x8] sm:$0xf]
      %v3335 = vld [vmem:[#allocation2 + $0xc] sm:$0xf]
      %v3336 = vld [vmem:[#allocation2 + $0x10] sm:$0xf]
      %v3337 = vld [vmem:[#allocation2 + $0x14] sm:$0xf]
      %v3338 = vld [vmem:[#allocation2 + $0x18] sm:$0xf]
      %v3339 = vld [vmem:[#allocation2 + $0x1c] sm:$0xf]
      %v3340 = vld [vmem:[#allocation2 + $0x20] sm:$0xf]
      %v3341 = vld [vmem:[#allocation2 + $0x24] sm:$0xf]
      %v3342 = vld [vmem:[#allocation2 + $0x28] sm:$0xf]
      %v3343 = vld [vmem:[#allocation2 + $0x2c] sm:$0xf]
      %v3344 = vld [vmem:[#allocation2 + $0x30] sm:$0xf]
      %v3345 = vld [vmem:[#allocation2 + $0x34] sm:$0xf]
      %v3346 = vld [vmem:[#allocation2 + $0x38] sm:$0xf]
      %v3347 = vld [vmem:[#allocation2 + $0x3c] sm:$0xf]
      %v3348 = vld [vmem:[#allocation2 + $0x40] sm:$0xf]
      %v3349 = vld [vmem:[#allocation2 + $0x44] sm:$0xf]
      %v3350 = vld [vmem:[#allocation2 + $0x48] sm:$0xf]
      %v3351 = vld [vmem:[#allocation2 + $0x4c] sm:$0xf]
      %v3352 = vld [vmem:[#allocation2 + $0x50] sm:$0xf]
      %v3353 = vld [vmem:[#allocation2 + $0x54] sm:$0xf]
      %v3354 = vld [vmem:[#allocation2 + $0x58] sm:$0xf]
      %v3355 = vld [vmem:[#allocation2 + $0x5c] sm:$0xf]
      %v3356 = vld [vmem:[#allocation2 + $0x60] sm:$0xf]
      %v3357 = vld [vmem:[#allocation2 + $0x64] sm:$0xf]
      %v3358 = vld [vmem:[#allocation2 + $0x68] sm:$0xf]
      %v3359 = vld [vmem:[#allocation2 + $0x6c] sm:$0xf]
      %v3360 = vld [vmem:[#allocation2 + $0x70] sm:$0xf]
      %v3361 = vld [vmem:[#allocation2 + $0x74] sm:$0xf]
      %v3362 = vld [vmem:[#allocation2 + $0x78] sm:$0xf]
      %v3363 = vld [vmem:[#allocation2 + $0x7c] sm:$0xf]
      %v3364 = vld [vmem:[#allocation2 + $0x80] sm:$0xf]
      %v3365 = vld [vmem:[#allocation2 + $0x84] sm:$0xf]
      %v3366 = vsel %vm1409, %v3334, 0
      %v3367 = vsel %vm1410, %v3335, 0
      %v3368 = vsel %vm1411, %v3336, 0
      %v3369 = vsel %vm1412, %v3337, 0
      %v3370 = vsel %vm1413, %v3338, 0
      %v3371 = vsel %vm1414, %v3339, 0
      %v3372 = vsel %vm1415, %v3340, 0
      %v3373 = vsel %vm1416, %v3341, 0
      %v3374 = vsel %vm1417, %v3342, 0
      %v3375 = vsel %vm1418, %v3343, 0
      %v3376 = vsel %vm1419, %v3344, 0
      %v3377 = vsel %vm1420, %v3345, 0
      %v3378 = vsel %vm1421, %v3346, 0
      %v3379 = vsel %vm1422, %v3347, 0
      %v3380 = vsel %vm1423, %v3348, 0
      %v3381 = vsel %vm1424, %v3349, 0
      %v3382 = vsel %vm1425, %v3350, 0
      %v3383 = vsel %vm1426, %v3351, 0
      %v3384 = vsel %vm1427, %v3352, 0
      %v3385 = vsel %vm1428, %v3353, 0
      %v3386 = vsel %vm1429, %v3354, 0
      %v3387 = vsel %vm1430, %v3355, 0
      %v3388 = vsel %vm1431, %v3356, 0
      %v3389 = vsel %vm1432, %v3357, 0
      %v3390 = vsel %vm1433, %v3358, 0
      %v3391 = vsel %vm1434, %v3359, 0
      %v3392 = vsel %vm1435, %v3360, 0
      %v3393 = vsel %vm1436, %v3361, 0
      %v3394 = vsel %vm1437, %v3362, 0
      %v3395 = vsel %vm1438, %v3363, 0
      %v3396 = vsel %vm1439, %v3364, 0
      %v3397 = vsel %vm1440, %v3365, 0
      %v3398 = vld [vmem:[#allocation3] sm:$0xff]
      %v3399 = vld [vmem:[#allocation3 + $0x8] sm:$0xff]
      %v3400 = vld [vmem:[#allocation3 + $0x10] sm:$0xff]
      %v3401 = vld [vmem:[#allocation3 + $0x18] sm:$0xff]
      %v3402 = vld [vmem:[#allocation3 + $0x20] sm:$0xff]
      %v3403 = vld [vmem:[#allocation3 + $0x28] sm:$0xff]
      %v3404 = vld [vmem:[#allocation3 + $0x30] sm:$0xff]
      %v3405 = vld [vmem:[#allocation3 + $0x38] sm:$0xff]
      %v3406 = vld [vmem:[#allocation3 + $0x40] sm:$0xff]
      %v3407 = vld [vmem:[#allocation3 + $0x48] sm:$0xff]
      %v3408 = vld [vmem:[#allocation3 + $0x50] sm:$0xff]
      %v3409 = vld [vmem:[#allocation3 + $0x58] sm:$0xff]
      %v3410 = vld [vmem:[#allocation3 + $0x60] sm:$0xff]
      %v3411 = vld [vmem:[#allocation3 + $0x68] sm:$0xff]
      %v3412 = vld [vmem:[#allocation3 + $0x70] sm:$0xff]
      %v3413 = vld [vmem:[#allocation3 + $0x78] sm:$0xff]
      %v3414 = vld [vmem:[#allocation3 + $0x80] sm:$0xff]
      %v3415 = vld [vmem:[#allocation3 + $0x88] sm:$0xff]
      %v3416 = vld [vmem:[#allocation3 + $0x90] sm:$0xff]
      %v3417 = vld [vmem:[#allocation3 + $0x98] sm:$0xff]
      %v3418 = vld [vmem:[#allocation3 + $0xa0] sm:$0xff]
      %v3419 = vld [vmem:[#allocation3 + $0xa8] sm:$0xff]
      %v3420 = vld [vmem:[#allocation3 + $0xb0] sm:$0xff]
      %v3421 = vld [vmem:[#allocation3 + $0xb8] sm:$0xff]
      %v3422 = vld [vmem:[#allocation3 + $0xc0] sm:$0xff]
      %v3423 = vld [vmem:[#allocation3 + $0xc8] sm:$0xff]
      %v3424 = vld [vmem:[#allocation3 + $0xd0] sm:$0xff]
      %v3425 = vld [vmem:[#allocation3 + $0xd8] sm:$0xff]
      %v3426 = vld [vmem:[#allocation3 + $0xe0] sm:$0xff]
      %v3427 = vld [vmem:[#allocation3 + $0xe8] sm:$0xff]
      %v3428 = vld [vmem:[#allocation3 + $0xf0] sm:$0xff]
      %v3429 = vld [vmem:[#allocation3 + $0xf8] sm:$0xff]
      %s3430 = scalar_lea.vmem %s7, 192
      %v3431 = vld [vmem:[%s3430] sm:$0xf]
      %v3432 = vld [vmem:[%s3430 + $0x4] sm:$0xf]
      %v3433 = vld [vmem:[%s3430 + $0x8] sm:$0xf]
      %v3434 = vld [vmem:[%s3430 + $0xc] sm:$0xf]
      %v3435 = vld [vmem:[%s3430 + $0x10] sm:$0xf]
      %v3436 = vld [vmem:[%s3430 + $0x14] sm:$0xf]
      %v3437 = vld [vmem:[%s3430 + $0x18] sm:$0xf]
      %v3438 = vld [vmem:[%s3430 + $0x1c] sm:$0xf]
      %v3439 = vld [vmem:[%s3430 + $0x20] sm:$0xf]
      %v3440 = vld [vmem:[%s3430 + $0x24] sm:$0xf]
      %v3441 = vld [vmem:[%s3430 + $0x28] sm:$0xf]
      %v3442 = vld [vmem:[%s3430 + $0x2c] sm:$0xf]
      %v3443 = vld [vmem:[%s3430 + $0x30] sm:$0xf]
      %v3444 = vld [vmem:[%s3430 + $0x34] sm:$0xf]
      %v3445 = vld [vmem:[%s3430 + $0x38] sm:$0xf]
      %v3446 = vld [vmem:[%s3430 + $0x3c] sm:$0xf]
      %v3479 = vunpack.c.l.b16 %v3366
      %v3480 = vunpack.c.l.b16 %v3367
      %v3481 = vunpack.c.l.b16 %v3368
      %v3482 = vunpack.c.l.b16 %v3369
      %v3483 = vunpack.c.l.b16 %v3370
      %v3484 = vunpack.c.l.b16 %v3371
      %v3485 = vunpack.c.l.b16 %v3372
      %v3486 = vunpack.c.l.b16 %v3373
      %v3487 = vunpack.c.l.b16 %v3374
      %v3488 = vunpack.c.l.b16 %v3375
      %v3489 = vunpack.c.l.b16 %v3376
      %v3490 = vunpack.c.l.b16 %v3377
      %v3491 = vunpack.c.l.b16 %v3378
      %v3492 = vunpack.c.l.b16 %v3379
      %v3493 = vunpack.c.l.b16 %v3380
      %v3494 = vunpack.c.l.b16 %v3381
      %v3495 = vunpack.c.l.b16 %v3382
      %v3496 = vunpack.c.l.b16 %v3383
      %v3497 = vunpack.c.l.b16 %v3384
      %v3498 = vunpack.c.l.b16 %v3385
      %v3499 = vunpack.c.l.b16 %v3386
      %v3500 = vunpack.c.l.b16 %v3387
      %v3501 = vunpack.c.l.b16 %v3388
      %v3502 = vunpack.c.l.b16 %v3389
      %v3503 = vunpack.c.l.b16 %v3390
      %v3504 = vunpack.c.l.b16 %v3391
      %v3505 = vunpack.c.l.b16 %v3392
      %v3506 = vunpack.c.l.b16 %v3393
      %v3507 = vunpack.c.l.b16 %v3394
      %v3508 = vunpack.c.l.b16 %v3395
      %v3509 = vunpack.c.l.b16 %v3396
      %v3510 = vunpack.c.l.b16 %v3397
      %v3511 = vpack.c.b16 %v3480, %v3479
      %v3512 = vpack.c.b16 %v3482, %v3481
      %v3513 = vpack.c.b16 %v3484, %v3483
      %v3514 = vpack.c.b16 %v3486, %v3485
      %v3515 = vpack.c.b16 %v3488, %v3487
      %v3516 = vpack.c.b16 %v3490, %v3489
      %v3517 = vpack.c.b16 %v3492, %v3491
      %v3518 = vpack.c.b16 %v3494, %v3493
      %v3519 = vpack.c.b16 %v3496, %v3495
      %v3520 = vpack.c.b16 %v3498, %v3497
      %v3521 = vpack.c.b16 %v3500, %v3499
      %v3522 = vpack.c.b16 %v3502, %v3501
      %v3523 = vpack.c.b16 %v3504, %v3503
      %v3524 = vpack.c.b16 %v3506, %v3505
      %v3525 = vpack.c.b16 %v3508, %v3507
      %v3526 = vpack.c.b16 %v3510, %v3509
      %v3559 = vunpack.c.l.b16 %v3431
      %v3560 = vunpack.c.l.b16 %v3432
      %v3561 = vunpack.c.l.b16 %v3433
      %v3562 = vunpack.c.l.b16 %v3434
      %v3563 = vunpack.c.l.b16 %v3435
      %v3564 = vunpack.c.l.b16 %v3436
      %v3565 = vunpack.c.l.b16 %v3437
      %v3566 = vunpack.c.l.b16 %v3438
      %v3567 = vunpack.c.l.b16 %v3439
      %v3568 = vunpack.c.l.b16 %v3440
      %v3569 = vunpack.c.l.b16 %v3441
      %v3570 = vunpack.c.l.b16 %v3442
      %v3571 = vunpack.c.l.b16 %v3443
      %v3572 = vunpack.c.l.b16 %v3444
      %v3573 = vunpack.c.l.b16 %v3445
      %v3574 = vunpack.c.l.b16 %v3446
      %v3575 = vpack.c.b16 %v3560, %v3559
      %v3576 = vpack.c.b16 %v3562, %v3561
      %v3577 = vpack.c.b16 %v3564, %v3563
      %v3578 = vpack.c.b16 %v3566, %v3565
      %v3579 = vpack.c.b16 %v3568, %v3567
      %v3580 = vpack.c.b16 %v3570, %v3569
      %v3581 = vpack.c.b16 %v3572, %v3571
      %v3582 = vpack.c.b16 %v3574, %v3573
      %3591 = vmatpush.bf16.msra.mxu0 %v3582
      %3592 = vmatpush.bf16.msra.mxu0 %v3581
      %3593 = vmatpush.bf16.msra.mxu0 %v3580
      %3594 = vmatpush.bf16.msra.mxu0 %v3579
      %3595 = vmatpush.bf16.msra.mxu0 %v3578
      %3596 = vmatpush.bf16.msra.mxu0 %v3577
      %3597 = vmatpush.bf16.msra.mxu0 %v3576
      %3598 = vmatpush.bf16.msra.mxu0 %v3575
      %3599 = vmatmul.bf16.gmra.mxu0 %v3511
      %v3600 = vpop.f32.mrf.mxu0
      %v3601 = vadd.f32 0.0, %v3600
      %v3602 = vpop.f32.mrf.mxu0
      %v3603 = vadd.f32 0.0, %v3602
      %3604 = vmatmul.bf16.gmra.mxu0 %v3512
      %v3605 = vpop.f32.mrf.mxu0
      %v3606 = vadd.f32 0.0, %v3605
      %v3607 = vpop.f32.mrf.mxu0
      %v3608 = vadd.f32 0.0, %v3607
      %3609 = vmatmul.bf16.gmra.mxu0 %v3513
      %v3610 = vpop.f32.mrf.mxu0
      %v3611 = vadd.f32 0.0, %v3610
      %v3612 = vpop.f32.mrf.mxu0
      %v3613 = vadd.f32 0.0, %v3612
      %3614 = vmatmul.bf16.gmra.mxu0 %v3514
      %v3615 = vpop.f32.mrf.mxu0
      %v3616 = vadd.f32 0.0, %v3615
      %v3617 = vpop.f32.mrf.mxu0
      %v3618 = vadd.f32 0.0, %v3617
      %3619 = vmatmul.bf16.gmra.mxu0 %v3515
      %v3620 = vpop.f32.mrf.mxu0
      %v3621 = vadd.f32 0.0, %v3620
      %v3622 = vpop.f32.mrf.mxu0
      %v3623 = vadd.f32 0.0, %v3622
      %3624 = vmatmul.bf16.gmra.mxu0 %v3516
      %v3625 = vpop.f32.mrf.mxu0
      %v3626 = vadd.f32 0.0, %v3625
      %v3627 = vpop.f32.mrf.mxu0
      %v3628 = vadd.f32 0.0, %v3627
      %3629 = vmatmul.bf16.gmra.mxu0 %v3517
      %v3630 = vpop.f32.mrf.mxu0
      %v3631 = vadd.f32 0.0, %v3630
      %v3632 = vpop.f32.mrf.mxu0
      %v3633 = vadd.f32 0.0, %v3632
      %3634 = vmatmul.bf16.gmra.mxu0 %v3518
      %v3635 = vpop.f32.mrf.mxu0
      %v3636 = vadd.f32 0.0, %v3635
      %v3637 = vpop.f32.mrf.mxu0
      %v3638 = vadd.f32 0.0, %v3637
      %3639 = vmatmul.bf16.gmra.mxu0 %v3519
      %v3640 = vpop.f32.mrf.mxu0
      %v3641 = vadd.f32 0.0, %v3640
      %v3642 = vpop.f32.mrf.mxu0
      %v3643 = vadd.f32 0.0, %v3642
      %3644 = vmatmul.bf16.gmra.mxu0 %v3520
      %v3645 = vpop.f32.mrf.mxu0
      %v3646 = vadd.f32 0.0, %v3645
      %v3647 = vpop.f32.mrf.mxu0
      %v3648 = vadd.f32 0.0, %v3647
      %3649 = vmatmul.bf16.gmra.mxu0 %v3521
      %v3650 = vpop.f32.mrf.mxu0
      %v3651 = vadd.f32 0.0, %v3650
      %v3652 = vpop.f32.mrf.mxu0
      %v3653 = vadd.f32 0.0, %v3652
      %3654 = vmatmul.bf16.gmra.mxu0 %v3522
      %v3655 = vpop.f32.mrf.mxu0
      %v3656 = vadd.f32 0.0, %v3655
      %v3657 = vpop.f32.mrf.mxu0
      %v3658 = vadd.f32 0.0, %v3657
      %3659 = vmatmul.bf16.gmra.mxu0 %v3523
      %v3660 = vpop.f32.mrf.mxu0
      %v3661 = vadd.f32 0.0, %v3660
      %v3662 = vpop.f32.mrf.mxu0
      %v3663 = vadd.f32 0.0, %v3662
      %3664 = vmatmul.bf16.gmra.mxu0 %v3524
      %v3665 = vpop.f32.mrf.mxu0
      %v3666 = vadd.f32 0.0, %v3665
      %v3667 = vpop.f32.mrf.mxu0
      %v3668 = vadd.f32 0.0, %v3667
      %3669 = vmatmul.bf16.gmra.mxu0 %v3525
      %v3670 = vpop.f32.mrf.mxu0
      %v3671 = vadd.f32 0.0, %v3670
      %v3672 = vpop.f32.mrf.mxu0
      %v3673 = vadd.f32 0.0, %v3672
      %3674 = vmatmul.bf16.gmra.mxu0 %v3526
      %v3675 = vpop.f32.mrf.mxu0
      %v3676 = vadd.f32 0.0, %v3675
      %v3677 = vpop.f32.mrf.mxu0
      %v3678 = vadd.f32 0.0, %v3677
      %3679 = vdwg.mxu0
      %v3680 = vadd.f32 %v3398, %v3601
      %v3681 = vadd.f32 %v3399, %v3603
      %v3682 = vadd.f32 %v3400, %v3606
      %v3683 = vadd.f32 %v3401, %v3608
      %v3684 = vadd.f32 %v3402, %v3611
      %v3685 = vadd.f32 %v3403, %v3613
      %v3686 = vadd.f32 %v3404, %v3616
      %v3687 = vadd.f32 %v3405, %v3618
      %v3688 = vadd.f32 %v3406, %v3621
      %v3689 = vadd.f32 %v3407, %v3623
      %v3690 = vadd.f32 %v3408, %v3626
      %v3691 = vadd.f32 %v3409, %v3628
      %v3692 = vadd.f32 %v3410, %v3631
      %v3693 = vadd.f32 %v3411, %v3633
      %v3694 = vadd.f32 %v3412, %v3636
      %v3695 = vadd.f32 %v3413, %v3638
      %v3696 = vadd.f32 %v3414, %v3641
      %v3697 = vadd.f32 %v3415, %v3643
      %v3698 = vadd.f32 %v3416, %v3646
      %v3699 = vadd.f32 %v3417, %v3648
      %v3700 = vadd.f32 %v3418, %v3651
      %v3701 = vadd.f32 %v3419, %v3653
      %v3702 = vadd.f32 %v3420, %v3656
      %v3703 = vadd.f32 %v3421, %v3658
      %v3704 = vadd.f32 %v3422, %v3661
      %v3705 = vadd.f32 %v3423, %v3663
      %v3706 = vadd.f32 %v3424, %v3666
      %v3707 = vadd.f32 %v3425, %v3668
      %v3708 = vadd.f32 %v3426, %v3671
      %v3709 = vadd.f32 %v3427, %v3673
      %v3710 = vadd.f32 %v3428, %v3676
      %v3711 = vadd.f32 %v3429, %v3678
      %3712 = vst [vmem:[#allocation3] sm:$0xff] %v3680
      %3713 = vst [vmem:[#allocation3 + $0x8] sm:$0xff] %v3681
      %3714 = vst [vmem:[#allocation3 + $0x10] sm:$0xff] %v3682
      %3715 = vst [vmem:[#allocation3 + $0x18] sm:$0xff] %v3683
      %3716 = vst [vmem:[#allocation3 + $0x20] sm:$0xff] %v3684
      %3717 = vst [vmem:[#allocation3 + $0x28] sm:$0xff] %v3685
      %3718 = vst [vmem:[#allocation3 + $0x30] sm:$0xff] %v3686
      %3719 = vst [vmem:[#allocation3 + $0x38] sm:$0xff] %v3687
      %3720 = vst [vmem:[#allocation3 + $0x40] sm:$0xff] %v3688
      %3721 = vst [vmem:[#allocation3 + $0x48] sm:$0xff] %v3689
      %3722 = vst [vmem:[#allocation3 + $0x50] sm:$0xff] %v3690
      %3723 = vst [vmem:[#allocation3 + $0x58] sm:$0xff] %v3691
      %3724 = vst [vmem:[#allocation3 + $0x60] sm:$0xff] %v3692
      %3725 = vst [vmem:[#allocation3 + $0x68] sm:$0xff] %v3693
      %3726 = vst [vmem:[#allocation3 + $0x70] sm:$0xff] %v3694
      %3727 = vst [vmem:[#allocation3 + $0x78] sm:$0xff] %v3695
      %3728 = vst [vmem:[#allocation3 + $0x80] sm:$0xff] %v3696
      %3729 = vst [vmem:[#allocation3 + $0x88] sm:$0xff] %v3697
      %3730 = vst [vmem:[#allocation3 + $0x90] sm:$0xff] %v3698
      %3731 = vst [vmem:[#allocation3 + $0x98] sm:$0xff] %v3699
      %3732 = vst [vmem:[#allocation3 + $0xa0] sm:$0xff] %v3700
      %3733 = vst [vmem:[#allocation3 + $0xa8] sm:$0xff] %v3701
      %3734 = vst [vmem:[#allocation3 + $0xb0] sm:$0xff] %v3702
      %3735 = vst [vmem:[#allocation3 + $0xb8] sm:$0xff] %v3703
      %3736 = vst [vmem:[#allocation3 + $0xc0] sm:$0xff] %v3704
      %3737 = vst [vmem:[#allocation3 + $0xc8] sm:$0xff] %v3705
      %3738 = vst [vmem:[#allocation3 + $0xd0] sm:$0xff] %v3706
      %3739 = vst [vmem:[#allocation3 + $0xd8] sm:$0xff] %v3707
      %3740 = vst [vmem:[#allocation3 + $0xe0] sm:$0xff] %v3708
      %3741 = vst [vmem:[#allocation3 + $0xe8] sm:$0xff] %v3709
      %3742 = vst [vmem:[#allocation3 + $0xf0] sm:$0xff] %v3710
      %3743 = vst [vmem:[#allocation3 + $0xf8] sm:$0xff] %v3711
      %v3744 = vld [vmem:[#allocation2 + $0x8] sm:$0xf]
      %v3745 = vld [vmem:[#allocation2 + $0xc] sm:$0xf]
      %v3746 = vld [vmem:[#allocation2 + $0x10] sm:$0xf]
      %v3747 = vld [vmem:[#allocation2 + $0x14] sm:$0xf]
      %v3748 = vld [vmem:[#allocation2 + $0x18] sm:$0xf]
      %v3749 = vld [vmem:[#allocation2 + $0x1c] sm:$0xf]
      %v3750 = vld [vmem:[#allocation2 + $0x20] sm:$0xf]
      %v3751 = vld [vmem:[#allocation2 + $0x24] sm:$0xf]
      %v3752 = vld [vmem:[#allocation2 + $0x28] sm:$0xf]
      %v3753 = vld [vmem:[#allocation2 + $0x2c] sm:$0xf]
      %v3754 = vld [vmem:[#allocation2 + $0x30] sm:$0xf]
      %v3755 = vld [vmem:[#allocation2 + $0x34] sm:$0xf]
      %v3756 = vld [vmem:[#allocation2 + $0x38] sm:$0xf]
      %v3757 = vld [vmem:[#allocation2 + $0x3c] sm:$0xf]
      %v3758 = vld [vmem:[#allocation2 + $0x40] sm:$0xf]
      %v3759 = vld [vmem:[#allocation2 + $0x44] sm:$0xf]
      %v3760 = vld [vmem:[#allocation2 + $0x48] sm:$0xf]
      %v3761 = vld [vmem:[#allocation2 + $0x4c] sm:$0xf]
      %v3762 = vld [vmem:[#allocation2 + $0x50] sm:$0xf]
      %v3763 = vld [vmem:[#allocation2 + $0x54] sm:$0xf]
      %v3764 = vld [vmem:[#allocation2 + $0x58] sm:$0xf]
      %v3765 = vld [vmem:[#allocation2 + $0x5c] sm:$0xf]
      %v3766 = vld [vmem:[#allocation2 + $0x60] sm:$0xf]
      %v3767 = vld [vmem:[#allocation2 + $0x64] sm:$0xf]
      %v3768 = vld [vmem:[#allocation2 + $0x68] sm:$0xf]
      %v3769 = vld [vmem:[#allocation2 + $0x6c] sm:$0xf]
      %v3770 = vld [vmem:[#allocation2 + $0x70] sm:$0xf]
      %v3771 = vld [vmem:[#allocation2 + $0x74] sm:$0xf]
      %v3772 = vld [vmem:[#allocation2 + $0x78] sm:$0xf]
      %v3773 = vld [vmem:[#allocation2 + $0x7c] sm:$0xf]
      %v3774 = vld [vmem:[#allocation2 + $0x80] sm:$0xf]
      %v3775 = vld [vmem:[#allocation2 + $0x84] sm:$0xf]
      %v3776 = vld [vmem:[#allocation2 + $0x88] sm:$0x1]
      %v3777 = vld [vmem:[#allocation3] sm:$0xff]
      %v3778 = vld [vmem:[#allocation3 + $0x8] sm:$0xff]
      %v3779 = vld [vmem:[#allocation3 + $0x10] sm:$0xff]
      %v3780 = vld [vmem:[#allocation3 + $0x18] sm:$0xff]
      %v3781 = vld [vmem:[#allocation3 + $0x20] sm:$0xff]
      %v3782 = vld [vmem:[#allocation3 + $0x28] sm:$0xff]
      %v3783 = vld [vmem:[#allocation3 + $0x30] sm:$0xff]
      %v3784 = vld [vmem:[#allocation3 + $0x38] sm:$0xff]
      %v3785 = vld [vmem:[#allocation3 + $0x40] sm:$0xff]
      %v3786 = vld [vmem:[#allocation3 + $0x48] sm:$0xff]
      %v3787 = vld [vmem:[#allocation3 + $0x50] sm:$0xff]
      %v3788 = vld [vmem:[#allocation3 + $0x58] sm:$0xff]
      %v3789 = vld [vmem:[#allocation3 + $0x60] sm:$0xff]
      %v3790 = vld [vmem:[#allocation3 + $0x68] sm:$0xff]
      %v3791 = vld [vmem:[#allocation3 + $0x70] sm:$0xff]
      %v3792 = vld [vmem:[#allocation3 + $0x78] sm:$0xff]
      %v3793 = vld [vmem:[#allocation3 + $0x80] sm:$0xff]
      %v3794 = vld [vmem:[#allocation3 + $0x88] sm:$0xff]
      %v3795 = vld [vmem:[#allocation3 + $0x90] sm:$0xff]
      %v3796 = vld [vmem:[#allocation3 + $0x98] sm:$0xff]
      %v3797 = vld [vmem:[#allocation3 + $0xa0] sm:$0xff]
      %v3798 = vld [vmem:[#allocation3 + $0xa8] sm:$0xff]
      %v3799 = vld [vmem:[#allocation3 + $0xb0] sm:$0xff]
      %v3800 = vld [vmem:[#allocation3 + $0xb8] sm:$0xff]
      %v3801 = vld [vmem:[#allocation3 + $0xc0] sm:$0xff]
      %v3802 = vld [vmem:[#allocation3 + $0xc8] sm:$0xff]
      %v3803 = vld [vmem:[#allocation3 + $0xd0] sm:$0xff]
      %v3804 = vld [vmem:[#allocation3 + $0xd8] sm:$0xff]
      %v3805 = vld [vmem:[#allocation3 + $0xe0] sm:$0xff]
      %v3806 = vld [vmem:[#allocation3 + $0xe8] sm:$0xff]
      %v3807 = vld [vmem:[#allocation3 + $0xf0] sm:$0xff]
      %v3808 = vld [vmem:[#allocation3 + $0xf8] sm:$0xff]
      %s3809 = scalar_lea.vmem %s7, 256
      %v3810 = vld [vmem:[%s3809] sm:$0xf]
      %v3811 = vld [vmem:[%s3809 + $0x4] sm:$0xf]
      %v3812 = vld [vmem:[%s3809 + $0x8] sm:$0xf]
      %v3813 = vld [vmem:[%s3809 + $0xc] sm:$0xf]
      %v3814 = vld [vmem:[%s3809 + $0x10] sm:$0xf]
      %v3815 = vld [vmem:[%s3809 + $0x14] sm:$0xf]
      %v3816 = vld [vmem:[%s3809 + $0x18] sm:$0xf]
      %v3817 = vld [vmem:[%s3809 + $0x1c] sm:$0xf]
      %v3818 = vld [vmem:[%s3809 + $0x20] sm:$0xf]
      %v3819 = vld [vmem:[%s3809 + $0x24] sm:$0xf]
      %v3820 = vld [vmem:[%s3809 + $0x28] sm:$0xf]
      %v3821 = vld [vmem:[%s3809 + $0x2c] sm:$0xf]
      %v3822 = vld [vmem:[%s3809 + $0x30] sm:$0xf]
      %v3823 = vld [vmem:[%s3809 + $0x34] sm:$0xf]
      %v3824 = vld [vmem:[%s3809 + $0x38] sm:$0xf]
      %v3825 = vld [vmem:[%s3809 + $0x3c] sm:$0xf]
      %v3859 = vunpack.c.l.b16 %v3744
      %v3860 = vunpack.c.l.b16 %v3745
      %v3861 = vunpack.c.l.b16 %v3746
      %v3862 = vunpack.c.l.b16 %v3747
      %v3863 = vunpack.c.l.b16 %v3748
      %v3864 = vunpack.c.l.b16 %v3749
      %v3865 = vunpack.c.l.b16 %v3750
      %v3866 = vunpack.c.l.b16 %v3751
      %v3867 = vunpack.c.l.b16 %v3752
      %v3868 = vunpack.c.l.b16 %v3753
      %v3869 = vunpack.c.l.b16 %v3754
      %v3870 = vunpack.c.l.b16 %v3755
      %v3871 = vunpack.c.l.b16 %v3756
      %v3872 = vunpack.c.l.b16 %v3757
      %v3873 = vunpack.c.l.b16 %v3758
      %v3874 = vunpack.c.l.b16 %v3759
      %v3875 = vunpack.c.l.b16 %v3760
      %v3876 = vunpack.c.l.b16 %v3761
      %v3877 = vunpack.c.l.b16 %v3762
      %v3878 = vunpack.c.l.b16 %v3763
      %v3879 = vunpack.c.l.b16 %v3764
      %v3880 = vunpack.c.l.b16 %v3765
      %v3881 = vunpack.c.l.b16 %v3766
      %v3882 = vunpack.c.l.b16 %v3767
      %v3883 = vunpack.c.l.b16 %v3768
      %v3884 = vunpack.c.l.b16 %v3769
      %v3885 = vunpack.c.l.b16 %v3770
      %v3886 = vunpack.c.l.b16 %v3771
      %v3887 = vunpack.c.l.b16 %v3772
      %v3888 = vunpack.c.l.b16 %v3773
      %v3889 = vunpack.c.l.b16 %v3774
      %v3890 = vunpack.c.l.b16 %v3775
      %v3891 = vunpack.c.l.b16 %v3776
      %v3892 = vpack.c.b16 %v3860, %v3859
      %v3893 = vpack.c.b16 %v3862, %v3861
      %v3894 = vpack.c.b16 %v3864, %v3863
      %v3895 = vpack.c.b16 %v3866, %v3865
      %v3896 = vpack.c.b16 %v3868, %v3867
      %v3897 = vpack.c.b16 %v3870, %v3869
      %v3898 = vpack.c.b16 %v3872, %v3871
      %v3899 = vpack.c.b16 %v3874, %v3873
      %v3900 = vpack.c.b16 %v3876, %v3875
      %v3901 = vpack.c.b16 %v3878, %v3877
      %v3902 = vpack.c.b16 %v3880, %v3879
      %v3903 = vpack.c.b16 %v3882, %v3881
      %v3904 = vpack.c.b16 %v3884, %v3883
      %v3905 = vpack.c.b16 %v3886, %v3885
      %v3906 = vpack.c.b16 %v3888, %v3887
      %v3907 = vpack.c.b16 %v3890, %v3889
      %v3908 = vpack.c.b16 %v3891, %v3891
      %v3910 = vshrl.u32 %v3892, 16
      %v3912 = vshll.u32 %v3892, 16
      %v3914 = vrot.slane %v3912, 1
      %v3915 = vor.u32 %v3910, %v3914
      %v3917 = vshll.u32 %v3893, 16
      %v3919 = vrot.slane %v3917, 1
      %v3920 = vsel %vm1983, %v3915, %v3919
      %v3921 = vshrl.u32 %v3893, 16
      %v3923 = vor.u32 %v3921, %v3919
      %v3925 = vshll.u32 %v3894, 16
      %v3927 = vrot.slane %v3925, 1
      %v3928 = vsel %vm1983, %v3923, %v3927
      %v3929 = vshrl.u32 %v3894, 16
      %v3931 = vor.u32 %v3929, %v3927
      %v3933 = vshll.u32 %v3895, 16
      %v3935 = vrot.slane %v3933, 1
      %v3936 = vsel %vm1983, %v3931, %v3935
      %v3937 = vshrl.u32 %v3895, 16
      %v3939 = vor.u32 %v3937, %v3935
      %v3941 = vshll.u32 %v3896, 16
      %v3943 = vrot.slane %v3941, 1
      %v3944 = vsel %vm1983, %v3939, %v3943
      %v3945 = vshrl.u32 %v3896, 16
      %v3947 = vor.u32 %v3945, %v3943
      %v3949 = vshll.u32 %v3897, 16
      %v3951 = vrot.slane %v3949, 1
      %v3952 = vsel %vm1983, %v3947, %v3951
      %v3953 = vshrl.u32 %v3897, 16
      %v3955 = vor.u32 %v3953, %v3951
      %v3957 = vshll.u32 %v3898, 16
      %v3959 = vrot.slane %v3957, 1
      %v3960 = vsel %vm1983, %v3955, %v3959
      %v3961 = vshrl.u32 %v3898, 16
      %v3963 = vor.u32 %v3961, %v3959
      %v3965 = vshll.u32 %v3899, 16
      %v3967 = vrot.slane %v3965, 1
      %v3968 = vsel %vm1983, %v3963, %v3967
      %v3969 = vshrl.u32 %v3899, 16
      %v3971 = vor.u32 %v3969, %v3967
      %v3973 = vshll.u32 %v3900, 16
      %v3975 = vrot.slane %v3973, 1
      %v3976 = vsel %vm1983, %v3971, %v3975
      %v3977 = vshrl.u32 %v3900, 16
      %v3979 = vor.u32 %v3977, %v3975
      %v3981 = vshll.u32 %v3901, 16
      %v3983 = vrot.slane %v3981, 1
      %v3984 = vsel %vm1983, %v3979, %v3983
      %v3985 = vshrl.u32 %v3901, 16
      %v3987 = vor.u32 %v3985, %v3983
      %v3989 = vshll.u32 %v3902, 16
      %v3991 = vrot.slane %v3989, 1
      %v3992 = vsel %vm1983, %v3987, %v3991
      %v3993 = vshrl.u32 %v3902, 16
      %v3995 = vor.u32 %v3993, %v3991
      %v3997 = vshll.u32 %v3903, 16
      %v3999 = vrot.slane %v3997, 1
      %v4000 = vsel %vm1983, %v3995, %v3999
      %v4001 = vshrl.u32 %v3903, 16
      %v4003 = vor.u32 %v4001, %v3999
      %v4005 = vshll.u32 %v3904, 16
      %v4007 = vrot.slane %v4005, 1
      %v4008 = vsel %vm1983, %v4003, %v4007
      %v4009 = vshrl.u32 %v3904, 16
      %v4011 = vor.u32 %v4009, %v4007
      %v4013 = vshll.u32 %v3905, 16
      %v4015 = vrot.slane %v4013, 1
      %v4016 = vsel %vm1983, %v4011, %v4015
      %v4017 = vshrl.u32 %v3905, 16
      %v4019 = vor.u32 %v4017, %v4015
      %v4021 = vshll.u32 %v3906, 16
      %v4023 = vrot.slane %v4021, 1
      %v4024 = vsel %vm1983, %v4019, %v4023
      %v4025 = vshrl.u32 %v3906, 16
      %v4027 = vor.u32 %v4025, %v4023
      %v4029 = vshll.u32 %v3907, 16
      %v4031 = vrot.slane %v4029, 1
      %v4032 = vsel %vm1983, %v4027, %v4031
      %v4033 = vshrl.u32 %v3907, 16
      %v4035 = vor.u32 %v4033, %v4031
      %v4037 = vshll.u32 %v3908, 16
      %v4039 = vrot.slane %v4037, 1
      %v4040 = vsel %vm1983, %v4035, %v4039
      %v4073 = vunpack.c.l.b16 %v3810
      %v4074 = vunpack.c.l.b16 %v3811
      %v4075 = vunpack.c.l.b16 %v3812
      %v4076 = vunpack.c.l.b16 %v3813
      %v4077 = vunpack.c.l.b16 %v3814
      %v4078 = vunpack.c.l.b16 %v3815
      %v4079 = vunpack.c.l.b16 %v3816
      %v4080 = vunpack.c.l.b16 %v3817
      %v4081 = vunpack.c.l.b16 %v3818
      %v4082 = vunpack.c.l.b16 %v3819
      %v4083 = vunpack.c.l.b16 %v3820
      %v4084 = vunpack.c.l.b16 %v3821
      %v4085 = vunpack.c.l.b16 %v3822
      %v4086 = vunpack.c.l.b16 %v3823
      %v4087 = vunpack.c.l.b16 %v3824
      %v4088 = vunpack.c.l.b16 %v3825
      %v4089 = vpack.c.b16 %v4074, %v4073
      %v4090 = vpack.c.b16 %v4076, %v4075
      %v4091 = vpack.c.b16 %v4078, %v4077
      %v4092 = vpack.c.b16 %v4080, %v4079
      %v4093 = vpack.c.b16 %v4082, %v4081
      %v4094 = vpack.c.b16 %v4084, %v4083
      %v4095 = vpack.c.b16 %v4086, %v4085
      %v4096 = vpack.c.b16 %v4088, %v4087
      %4105 = vmatpush.bf16.msra.mxu0 %v4096
      %4106 = vmatpush.bf16.msra.mxu0 %v4095
      %4107 = vmatpush.bf16.msra.mxu0 %v4094
      %4108 = vmatpush.bf16.msra.mxu0 %v4093
      %4109 = vmatpush.bf16.msra.mxu0 %v4092
      %4110 = vmatpush.bf16.msra.mxu0 %v4091
      %4111 = vmatpush.bf16.msra.mxu0 %v4090
      %4112 = vmatpush.bf16.msra.mxu0 %v4089
      %4113 = vmatmul.bf16.gmra.mxu0 %v3920
      %v4114 = vpop.f32.mrf.mxu0
      %v4115 = vadd.f32 0.0, %v4114
      %v4116 = vpop.f32.mrf.mxu0
      %v4117 = vadd.f32 0.0, %v4116
      %4118 = vmatmul.bf16.gmra.mxu0 %v3928
      %v4119 = vpop.f32.mrf.mxu0
      %v4120 = vadd.f32 0.0, %v4119
      %v4121 = vpop.f32.mrf.mxu0
      %v4122 = vadd.f32 0.0, %v4121
      %4123 = vmatmul.bf16.gmra.mxu0 %v3936
      %v4124 = vpop.f32.mrf.mxu0
      %v4125 = vadd.f32 0.0, %v4124
      %v4126 = vpop.f32.mrf.mxu0
      %v4127 = vadd.f32 0.0, %v4126
      %4128 = vmatmul.bf16.gmra.mxu0 %v3944
      %v4129 = vpop.f32.mrf.mxu0
      %v4130 = vadd.f32 0.0, %v4129
      %v4131 = vpop.f32.mrf.mxu0
      %v4132 = vadd.f32 0.0, %v4131
      %4133 = vmatmul.bf16.gmra.mxu0 %v3952
      %v4134 = vpop.f32.mrf.mxu0
      %v4135 = vadd.f32 0.0, %v4134
      %v4136 = vpop.f32.mrf.mxu0
      %v4137 = vadd.f32 0.0, %v4136
      %4138 = vmatmul.bf16.gmra.mxu0 %v3960
      %v4139 = vpop.f32.mrf.mxu0
      %v4140 = vadd.f32 0.0, %v4139
      %v4141 = vpop.f32.mrf.mxu0
      %v4142 = vadd.f32 0.0, %v4141
      %4143 = vmatmul.bf16.gmra.mxu0 %v3968
      %v4144 = vpop.f32.mrf.mxu0
      %v4145 = vadd.f32 0.0, %v4144
      %v4146 = vpop.f32.mrf.mxu0
      %v4147 = vadd.f32 0.0, %v4146
      %4148 = vmatmul.bf16.gmra.mxu0 %v3976
      %v4149 = vpop.f32.mrf.mxu0
      %v4150 = vadd.f32 0.0, %v4149
      %v4151 = vpop.f32.mrf.mxu0
      %v4152 = vadd.f32 0.0, %v4151
      %4153 = vmatmul.bf16.gmra.mxu0 %v3984
      %v4154 = vpop.f32.mrf.mxu0
      %v4155 = vadd.f32 0.0, %v4154
      %v4156 = vpop.f32.mrf.mxu0
      %v4157 = vadd.f32 0.0, %v4156
      %4158 = vmatmul.bf16.gmra.mxu0 %v3992
      %v4159 = vpop.f32.mrf.mxu0
      %v4160 = vadd.f32 0.0, %v4159
      %v4161 = vpop.f32.mrf.mxu0
      %v4162 = vadd.f32 0.0, %v4161
      %4163 = vmatmul.bf16.gmra.mxu0 %v4000
      %v4164 = vpop.f32.mrf.mxu0
      %v4165 = vadd.f32 0.0, %v4164
      %v4166 = vpop.f32.mrf.mxu0
      %v4167 = vadd.f32 0.0, %v4166
      %4168 = vmatmul.bf16.gmra.mxu0 %v4008
      %v4169 = vpop.f32.mrf.mxu0
      %v4170 = vadd.f32 0.0, %v4169
      %v4171 = vpop.f32.mrf.mxu0
      %v4172 = vadd.f32 0.0, %v4171
      %4173 = vmatmul.bf16.gmra.mxu0 %v4016
      %v4174 = vpop.f32.mrf.mxu0
      %v4175 = vadd.f32 0.0, %v4174
      %v4176 = vpop.f32.mrf.mxu0
      %v4177 = vadd.f32 0.0, %v4176
      %4178 = vmatmul.bf16.gmra.mxu0 %v4024
      %v4179 = vpop.f32.mrf.mxu0
      %v4180 = vadd.f32 0.0, %v4179
      %v4181 = vpop.f32.mrf.mxu0
      %v4182 = vadd.f32 0.0, %v4181
      %4183 = vmatmul.bf16.gmra.mxu0 %v4032
      %v4184 = vpop.f32.mrf.mxu0
      %v4185 = vadd.f32 0.0, %v4184
      %v4186 = vpop.f32.mrf.mxu0
      %v4187 = vadd.f32 0.0, %v4186
      %4188 = vmatmul.bf16.gmra.mxu0 %v4040
      %v4189 = vpop.f32.mrf.mxu0
      %v4190 = vadd.f32 0.0, %v4189
      %v4191 = vpop.f32.mrf.mxu0
      %v4192 = vadd.f32 0.0, %v4191
      %4193 = vdwg.mxu0
      %v4194 = vadd.f32 %v3777, %v4115
      %v4195 = vadd.f32 %v3778, %v4117
      %v4196 = vadd.f32 %v3779, %v4120
      %v4197 = vadd.f32 %v3780, %v4122
      %v4198 = vadd.f32 %v3781, %v4125
      %v4199 = vadd.f32 %v3782, %v4127
      %v4200 = vadd.f32 %v3783, %v4130
      %v4201 = vadd.f32 %v3784, %v4132
      %v4202 = vadd.f32 %v3785, %v4135
      %v4203 = vadd.f32 %v3786, %v4137
      %v4204 = vadd.f32 %v3787, %v4140
      %v4205 = vadd.f32 %v3788, %v4142
      %v4206 = vadd.f32 %v3789, %v4145
      %v4207 = vadd.f32 %v3790, %v4147
      %v4208 = vadd.f32 %v3791, %v4150
      %v4209 = vadd.f32 %v3792, %v4152
      %v4210 = vadd.f32 %v3793, %v4155
      %v4211 = vadd.f32 %v3794, %v4157
      %v4212 = vadd.f32 %v3795, %v4160
      %v4213 = vadd.f32 %v3796, %v4162
      %v4214 = vadd.f32 %v3797, %v4165
      %v4215 = vadd.f32 %v3798, %v4167
      %v4216 = vadd.f32 %v3799, %v4170
      %v4217 = vadd.f32 %v3800, %v4172
      %v4218 = vadd.f32 %v3801, %v4175
      %v4219 = vadd.f32 %v3802, %v4177
      %v4220 = vadd.f32 %v3803, %v4180
      %v4221 = vadd.f32 %v3804, %v4182
      %v4222 = vadd.f32 %v3805, %v4185
      %v4223 = vadd.f32 %v3806, %v4187
      %v4224 = vadd.f32 %v3807, %v4190
      %v4225 = vadd.f32 %v3808, %v4192
      %4226 = vst [vmem:[#allocation3] sm:$0xff] %v4194
      %4227 = vst [vmem:[#allocation3 + $0x8] sm:$0xff] %v4195
      %4228 = vst [vmem:[#allocation3 + $0x10] sm:$0xff] %v4196
      %4229 = vst [vmem:[#allocation3 + $0x18] sm:$0xff] %v4197
      %4230 = vst [vmem:[#allocation3 + $0x20] sm:$0xff] %v4198
      %4231 = vst [vmem:[#allocation3 + $0x28] sm:$0xff] %v4199
      %4232 = vst [vmem:[#allocation3 + $0x30] sm:$0xff] %v4200
      %4233 = vst [vmem:[#allocation3 + $0x38] sm:$0xff] %v4201
      %4234 = vst [vmem:[#allocation3 + $0x40] sm:$0xff] %v4202
      %4235 = vst [vmem:[#allocation3 + $0x48] sm:$0xff] %v4203
      %4236 = vst [vmem:[#allocation3 + $0x50] sm:$0xff] %v4204
      %4237 = vst [vmem:[#allocation3 + $0x58] sm:$0xff] %v4205
      %4238 = vst [vmem:[#allocation3 + $0x60] sm:$0xff] %v4206
      %4239 = vst [vmem:[#allocation3 + $0x68] sm:$0xff] %v4207
      %4240 = vst [vmem:[#allocation3 + $0x70] sm:$0xff] %v4208
      %4241 = vst [vmem:[#allocation3 + $0x78] sm:$0xff] %v4209
      %4242 = vst [vmem:[#allocation3 + $0x80] sm:$0xff] %v4210
      %4243 = vst [vmem:[#allocation3 + $0x88] sm:$0xff] %v4211
      %4244 = vst [vmem:[#allocation3 + $0x90] sm:$0xff] %v4212
      %4245 = vst [vmem:[#allocation3 + $0x98] sm:$0xff] %v4213
      %4246 = vst [vmem:[#allocation3 + $0xa0] sm:$0xff] %v4214
      %4247 = vst [vmem:[#allocation3 + $0xa8] sm:$0xff] %v4215
      %4248 = vst [vmem:[#allocation3 + $0xb0] sm:$0xff] %v4216
      %4249 = vst [vmem:[#allocation3 + $0xb8] sm:$0xff] %v4217
      %4250 = vst [vmem:[#allocation3 + $0xc0] sm:$0xff] %v4218
      %4251 = vst [vmem:[#allocation3 + $0xc8] sm:$0xff] %v4219
      %4252 = vst [vmem:[#allocation3 + $0xd0] sm:$0xff] %v4220
      %4253 = vst [vmem:[#allocation3 + $0xd8] sm:$0xff] %v4221
      %4254 = vst [vmem:[#allocation3 + $0xe0] sm:$0xff] %v4222
      %4255 = vst [vmem:[#allocation3 + $0xe8] sm:$0xff] %v4223
      %4256 = vst [vmem:[#allocation3 + $0xf0] sm:$0xff] %v4224
      %4257 = vst [vmem:[#allocation3 + $0xf8] sm:$0xff] %v4225
      %v4258 = vld [vmem:[#allocation2 + $0x8] sm:$0xe]
      %v4259 = vld [vmem:[#allocation2 + $0xc] sm:$0xf]
      %v4260 = vld [vmem:[#allocation2 + $0x10] sm:$0xf]
      %v4261 = vld [vmem:[#allocation2 + $0x14] sm:$0xf]
      %v4262 = vld [vmem:[#allocation2 + $0x18] sm:$0xf]
      %v4263 = vld [vmem:[#allocation2 + $0x1c] sm:$0xf]
      %v4264 = vld [vmem:[#allocation2 + $0x20] sm:$0xf]
      %v4265 = vld [vmem:[#allocation2 + $0x24] sm:$0xf]
      %v4266 = vld [vmem:[#allocation2 + $0x28] sm:$0xf]
      %v4267 = vld [vmem:[#allocation2 + $0x2c] sm:$0xf]
      %v4268 = vld [vmem:[#allocation2 + $0x30] sm:$0xf]
      %v4269 = vld [vmem:[#allocation2 + $0x34] sm:$0xf]
      %v4270 = vld [vmem:[#allocation2 + $0x38] sm:$0xf]
      %v4271 = vld [vmem:[#allocation2 + $0x3c] sm:$0xf]
      %v4272 = vld [vmem:[#allocation2 + $0x40] sm:$0xf]
      %v4273 = vld [vmem:[#allocation2 + $0x44] sm:$0xf]
      %v4274 = vld [vmem:[#allocation2 + $0x48] sm:$0xf]
      %v4275 = vld [vmem:[#allocation2 + $0x4c] sm:$0xf]
      %v4276 = vld [vmem:[#allocation2 + $0x50] sm:$0xf]
      %v4277 = vld [vmem:[#allocation2 + $0x54] sm:$0xf]
      %v4278 = vld [vmem:[#allocation2 + $0x58] sm:$0xf]
      %v4279 = vld [vmem:[#allocation2 + $0x5c] sm:$0xf]
      %v4280 = vld [vmem:[#allocation2 + $0x60] sm:$0xf]
      %v4281 = vld [vmem:[#allocation2 + $0x64] sm:$0xf]
      %v4282 = vld [vmem:[#allocation2 + $0x68] sm:$0xf]
      %v4283 = vld [vmem:[#allocation2 + $0x6c] sm:$0xf]
      %v4284 = vld [vmem:[#allocation2 + $0x70] sm:$0xf]
      %v4285 = vld [vmem:[#allocation2 + $0x74] sm:$0xf]
      %v4286 = vld [vmem:[#allocation2 + $0x78] sm:$0xf]
      %v4287 = vld [vmem:[#allocation2 + $0x7c] sm:$0xf]
      %v4288 = vld [vmem:[#allocation2 + $0x80] sm:$0xf]
      %v4289 = vld [vmem:[#allocation2 + $0x84] sm:$0xf]
      %v4290 = vld [vmem:[#allocation2 + $0x88] sm:$0x1]
      %v4291 = vsel %vm2693, %v4258, 0
      %v4292 = vsel %vm2700, %v4259, 0
      %v4293 = vsel %vm2707, %v4260, 0
      %v4294 = vsel %vm2714, %v4261, 0
      %v4295 = vsel %vm2721, %v4262, 0
      %v4296 = vsel %vm2728, %v4263, 0
      %v4297 = vsel %vm2735, %v4264, 0
      %v4298 = vsel %vm2742, %v4265, 0
      %v4299 = vsel %vm2749, %v4266, 0
      %v4300 = vsel %vm2756, %v4267, 0
      %v4301 = vsel %vm2763, %v4268, 0
      %v4302 = vsel %vm2770, %v4269, 0
      %v4303 = vsel %vm2777, %v4270, 0
      %v4304 = vsel %vm2784, %v4271, 0
      %v4305 = vsel %vm2791, %v4272, 0
      %v4306 = vsel %vm2798, %v4273, 0
      %v4307 = vsel %vm2805, %v4274, 0
      %v4308 = vsel %vm2812, %v4275, 0
      %v4309 = vsel %vm2819, %v4276, 0
      %v4310 = vsel %vm2826, %v4277, 0
      %v4311 = vsel %vm2833, %v4278, 0
      %v4312 = vsel %vm2840, %v4279, 0
      %v4313 = vsel %vm2847, %v4280, 0
      %v4314 = vsel %vm2854, %v4281, 0
      %v4315 = vsel %vm2861, %v4282, 0
      %v4316 = vsel %vm2868, %v4283, 0
      %v4317 = vsel %vm2875, %v4284, 0
      %v4318 = vsel %vm2882, %v4285, 0
      %v4319 = vsel %vm2889, %v4286, 0
      %v4320 = vsel %vm2896, %v4287, 0
      %v4321 = vsel %vm2903, %v4288, 0
      %v4322 = vsel %vm2910, %v4289, 0
      %v4323 = vsel %vm2917, %v4290, 0
      %v4324 = vld [vmem:[#allocation3] sm:$0xff]
      %v4325 = vld [vmem:[#allocation3 + $0x8] sm:$0xff]
      %v4326 = vld [vmem:[#allocation3 + $0x10] sm:$0xff]
      %v4327 = vld [vmem:[#allocation3 + $0x18] sm:$0xff]
      %v4328 = vld [vmem:[#allocation3 + $0x20] sm:$0xff]
      %v4329 = vld [vmem:[#allocation3 + $0x28] sm:$0xff]
      %v4330 = vld [vmem:[#allocation3 + $0x30] sm:$0xff]
      %v4331 = vld [vmem:[#allocation3 + $0x38] sm:$0xff]
      %v4332 = vld [vmem:[#allocation3 + $0x40] sm:$0xff]
      %v4333 = vld [vmem:[#allocation3 + $0x48] sm:$0xff]
      %v4334 = vld [vmem:[#allocation3 + $0x50] sm:$0xff]
      %v4335 = vld [vmem:[#allocation3 + $0x58] sm:$0xff]
      %v4336 = vld [vmem:[#allocation3 + $0x60] sm:$0xff]
      %v4337 = vld [vmem:[#allocation3 + $0x68] sm:$0xff]
      %v4338 = vld [vmem:[#allocation3 + $0x70] sm:$0xff]
      %v4339 = vld [vmem:[#allocation3 + $0x78] sm:$0xff]
      %v4340 = vld [vmem:[#allocation3 + $0x80] sm:$0xff]
      %v4341 = vld [vmem:[#allocation3 + $0x88] sm:$0xff]
      %v4342 = vld [vmem:[#allocation3 + $0x90] sm:$0xff]
      %v4343 = vld [vmem:[#allocation3 + $0x98] sm:$0xff]
      %v4344 = vld [vmem:[#allocation3 + $0xa0] sm:$0xff]
      %v4345 = vld [vmem:[#allocation3 + $0xa8] sm:$0xff]
      %v4346 = vld [vmem:[#allocation3 + $0xb0] sm:$0xff]
      %v4347 = vld [vmem:[#allocation3 + $0xb8] sm:$0xff]
      %v4348 = vld [vmem:[#allocation3 + $0xc0] sm:$0xff]
      %v4349 = vld [vmem:[#allocation3 + $0xc8] sm:$0xff]
      %v4350 = vld [vmem:[#allocation3 + $0xd0] sm:$0xff]
      %v4351 = vld [vmem:[#allocation3 + $0xd8] sm:$0xff]
      %v4352 = vld [vmem:[#allocation3 + $0xe0] sm:$0xff]
      %v4353 = vld [vmem:[#allocation3 + $0xe8] sm:$0xff]
      %v4354 = vld [vmem:[#allocation3 + $0xf0] sm:$0xff]
      %v4355 = vld [vmem:[#allocation3 + $0xf8] sm:$0xff]
      %s4356 = scalar_lea.vmem %s7, 320
      %v4357 = vld [vmem:[%s4356] sm:$0xf]
      %v4358 = vld [vmem:[%s4356 + $0x4] sm:$0xf]
      %v4359 = vld [vmem:[%s4356 + $0x8] sm:$0xf]
      %v4360 = vld [vmem:[%s4356 + $0xc] sm:$0xf]
      %v4361 = vld [vmem:[%s4356 + $0x10] sm:$0xf]
      %v4362 = vld [vmem:[%s4356 + $0x14] sm:$0xf]
      %v4363 = vld [vmem:[%s4356 + $0x18] sm:$0xf]
      %v4364 = vld [vmem:[%s4356 + $0x1c] sm:$0xf]
      %v4365 = vld [vmem:[%s4356 + $0x20] sm:$0xf]
      %v4366 = vld [vmem:[%s4356 + $0x24] sm:$0xf]
      %v4367 = vld [vmem:[%s4356 + $0x28] sm:$0xf]
      %v4368 = vld [vmem:[%s4356 + $0x2c] sm:$0xf]
      %v4369 = vld [vmem:[%s4356 + $0x30] sm:$0xf]
      %v4370 = vld [vmem:[%s4356 + $0x34] sm:$0xf]
      %v4371 = vld [vmem:[%s4356 + $0x38] sm:$0xf]
      %v4372 = vld [vmem:[%s4356 + $0x3c] sm:$0xf]
      %v4406 = vunpack.c.l.b16 %v4291
      %v4407 = vunpack.c.l.b16 %v4292
      %v4408 = vunpack.c.l.b16 %v4293
      %v4409 = vunpack.c.l.b16 %v4294
      %v4410 = vunpack.c.l.b16 %v4295
      %v4411 = vunpack.c.l.b16 %v4296
      %v4412 = vunpack.c.l.b16 %v4297
      %v4413 = vunpack.c.l.b16 %v4298
      %v4414 = vunpack.c.l.b16 %v4299
      %v4415 = vunpack.c.l.b16 %v4300
      %v4416 = vunpack.c.l.b16 %v4301
      %v4417 = vunpack.c.l.b16 %v4302
      %v4418 = vunpack.c.l.b16 %v4303
      %v4419 = vunpack.c.l.b16 %v4304
      %v4420 = vunpack.c.l.b16 %v4305
      %v4421 = vunpack.c.l.b16 %v4306
      %v4422 = vunpack.c.l.b16 %v4307
      %v4423 = vunpack.c.l.b16 %v4308
      %v4424 = vunpack.c.l.b16 %v4309
      %v4425 = vunpack.c.l.b16 %v4310
      %v4426 = vunpack.c.l.b16 %v4311
      %v4427 = vunpack.c.l.b16 %v4312
      %v4428 = vunpack.c.l.b16 %v4313
      %v4429 = vunpack.c.l.b16 %v4314
      %v4430 = vunpack.c.l.b16 %v4315
      %v4431 = vunpack.c.l.b16 %v4316
      %v4432 = vunpack.c.l.b16 %v4317
      %v4433 = vunpack.c.l.b16 %v4318
      %v4434 = vunpack.c.l.b16 %v4319
      %v4435 = vunpack.c.l.b16 %v4320
      %v4436 = vunpack.c.l.b16 %v4321
      %v4437 = vunpack.c.l.b16 %v4322
      %v4438 = vunpack.c.l.b16 %v4323
      %v4439 = vpack.c.b16 %v4407, %v4406
      %v4440 = vpack.c.b16 %v4409, %v4408
      %v4441 = vpack.c.b16 %v4411, %v4410
      %v4442 = vpack.c.b16 %v4413, %v4412
      %v4443 = vpack.c.b16 %v4415, %v4414
      %v4444 = vpack.c.b16 %v4417, %v4416
      %v4445 = vpack.c.b16 %v4419, %v4418
      %v4446 = vpack.c.b16 %v4421, %v4420
      %v4447 = vpack.c.b16 %v4423, %v4422
      %v4448 = vpack.c.b16 %v4425, %v4424
      %v4449 = vpack.c.b16 %v4427, %v4426
      %v4450 = vpack.c.b16 %v4429, %v4428
      %v4451 = vpack.c.b16 %v4431, %v4430
      %v4452 = vpack.c.b16 %v4433, %v4432
      %v4453 = vpack.c.b16 %v4435, %v4434
      %v4454 = vpack.c.b16 %v4437, %v4436
      %v4455 = vpack.c.b16 %v4438, %v4438
      %v4456 = vrot.slane %v4439, 1
      %v4457 = vrot.slane %v4440, 1
      %v4458 = vsel %vm3083, %v4456, %v4457
      %v4459 = vrot.slane %v4441, 1
      %v4460 = vsel %vm3083, %v4457, %v4459
      %v4461 = vrot.slane %v4442, 1
      %v4462 = vsel %vm3083, %v4459, %v4461
      %v4463 = vrot.slane %v4443, 1
      %v4464 = vsel %vm3083, %v4461, %v4463
      %v4465 = vrot.slane %v4444, 1
      %v4466 = vsel %vm3083, %v4463, %v4465
      %v4467 = vrot.slane %v4445, 1
      %v4468 = vsel %vm3083, %v4465, %v4467
      %v4469 = vrot.slane %v4446, 1
      %v4470 = vsel %vm3083, %v4467, %v4469
      %v4471 = vrot.slane %v4447, 1
      %v4472 = vsel %vm3083, %v4469, %v4471
      %v4473 = vrot.slane %v4448, 1
      %v4474 = vsel %vm3083, %v4471, %v4473
      %v4475 = vrot.slane %v4449, 1
      %v4476 = vsel %vm3083, %v4473, %v4475
      %v4477 = vrot.slane %v4450, 1
      %v4478 = vsel %vm3083, %v4475, %v4477
      %v4479 = vrot.slane %v4451, 1
      %v4480 = vsel %vm3083, %v4477, %v4479
      %v4481 = vrot.slane %v4452, 1
      %v4482 = vsel %vm3083, %v4479, %v4481
      %v4483 = vrot.slane %v4453, 1
      %v4484 = vsel %vm3083, %v4481, %v4483
      %v4485 = vrot.slane %v4454, 1
      %v4486 = vsel %vm3083, %v4483, %v4485
      %v4487 = vrot.slane %v4455, 1
      %v4488 = vsel %vm3083, %v4485, %v4487
      %v4521 = vunpack.c.l.b16 %v4357
      %v4522 = vunpack.c.l.b16 %v4358
      %v4523 = vunpack.c.l.b16 %v4359
      %v4524 = vunpack.c.l.b16 %v4360
      %v4525 = vunpack.c.l.b16 %v4361
      %v4526 = vunpack.c.l.b16 %v4362
      %v4527 = vunpack.c.l.b16 %v4363
      %v4528 = vunpack.c.l.b16 %v4364
      %v4529 = vunpack.c.l.b16 %v4365
      %v4530 = vunpack.c.l.b16 %v4366
      %v4531 = vunpack.c.l.b16 %v4367
      %v4532 = vunpack.c.l.b16 %v4368
      %v4533 = vunpack.c.l.b16 %v4369
      %v4534 = vunpack.c.l.b16 %v4370
      %v4535 = vunpack.c.l.b16 %v4371
      %v4536 = vunpack.c.l.b16 %v4372
      %v4537 = vpack.c.b16 %v4522, %v4521
      %v4538 = vpack.c.b16 %v4524, %v4523
      %v4539 = vpack.c.b16 %v4526, %v4525
      %v4540 = vpack.c.b16 %v4528, %v4527
      %v4541 = vpack.c.b16 %v4530, %v4529
      %v4542 = vpack.c.b16 %v4532, %v4531
      %v4543 = vpack.c.b16 %v4534, %v4533
      %v4544 = vpack.c.b16 %v4536, %v4535
      %4553 = vmatpush.bf16.msra.mxu0 %v4544
      %4554 = vmatpush.bf16.msra.mxu0 %v4543
      %4555 = vmatpush.bf16.msra.mxu0 %v4542
      %4556 = vmatpush.bf16.msra.mxu0 %v4541
      %4557 = vmatpush.bf16.msra.mxu0 %v4540
      %4558 = vmatpush.bf16.msra.mxu0 %v4539
      %4559 = vmatpush.bf16.msra.mxu0 %v4538
      %4560 = vmatpush.bf16.msra.mxu0 %v4537
      %4561 = vmatmul.bf16.gmra.mxu0 %v4458
      %v4562 = vpop.f32.mrf.mxu0
      %v4563 = vadd.f32 0.0, %v4562
      %v4564 = vpop.f32.mrf.mxu0
      %v4565 = vadd.f32 0.0, %v4564
      %4566 = vmatmul.bf16.gmra.mxu0 %v4460
      %v4567 = vpop.f32.mrf.mxu0
      %v4568 = vadd.f32 0.0, %v4567
      %v4569 = vpop.f32.mrf.mxu0
      %v4570 = vadd.f32 0.0, %v4569
      %4571 = vmatmul.bf16.gmra.mxu0 %v4462
      %v4572 = vpop.f32.mrf.mxu0
      %v4573 = vadd.f32 0.0, %v4572
      %v4574 = vpop.f32.mrf.mxu0
      %v4575 = vadd.f32 0.0, %v4574
      %4576 = vmatmul.bf16.gmra.mxu0 %v4464
      %v4577 = vpop.f32.mrf.mxu0
      %v4578 = vadd.f32 0.0, %v4577
      %v4579 = vpop.f32.mrf.mxu0
      %v4580 = vadd.f32 0.0, %v4579
      %4581 = vmatmul.bf16.gmra.mxu0 %v4466
      %v4582 = vpop.f32.mrf.mxu0
      %v4583 = vadd.f32 0.0, %v4582
      %v4584 = vpop.f32.mrf.mxu0
      %v4585 = vadd.f32 0.0, %v4584
      %4586 = vmatmul.bf16.gmra.mxu0 %v4468
      %v4587 = vpop.f32.mrf.mxu0
      %v4588 = vadd.f32 0.0, %v4587
      %v4589 = vpop.f32.mrf.mxu0
      %v4590 = vadd.f32 0.0, %v4589
      %4591 = vmatmul.bf16.gmra.mxu0 %v4470
      %v4592 = vpop.f32.mrf.mxu0
      %v4593 = vadd.f32 0.0, %v4592
      %v4594 = vpop.f32.mrf.mxu0
      %v4595 = vadd.f32 0.0, %v4594
      %4596 = vmatmul.bf16.gmra.mxu0 %v4472
      %v4597 = vpop.f32.mrf.mxu0
      %v4598 = vadd.f32 0.0, %v4597
      %v4599 = vpop.f32.mrf.mxu0
      %v4600 = vadd.f32 0.0, %v4599
      %4601 = vmatmul.bf16.gmra.mxu0 %v4474
      %v4602 = vpop.f32.mrf.mxu0
      %v4603 = vadd.f32 0.0, %v4602
      %v4604 = vpop.f32.mrf.mxu0
      %v4605 = vadd.f32 0.0, %v4604
      %4606 = vmatmul.bf16.gmra.mxu0 %v4476
      %v4607 = vpop.f32.mrf.mxu0
      %v4608 = vadd.f32 0.0, %v4607
      %v4609 = vpop.f32.mrf.mxu0
      %v4610 = vadd.f32 0.0, %v4609
      %4611 = vmatmul.bf16.gmra.mxu0 %v4478
      %v4612 = vpop.f32.mrf.mxu0
      %v4613 = vadd.f32 0.0, %v4612
      %v4614 = vpop.f32.mrf.mxu0
      %v4615 = vadd.f32 0.0, %v4614
      %4616 = vmatmul.bf16.gmra.mxu0 %v4480
      %v4617 = vpop.f32.mrf.mxu0
      %v4618 = vadd.f32 0.0, %v4617
      %v4619 = vpop.f32.mrf.mxu0
      %v4620 = vadd.f32 0.0, %v4619
      %4621 = vmatmul.bf16.gmra.mxu0 %v4482
      %v4622 = vpop.f32.mrf.mxu0
      %v4623 = vadd.f32 0.0, %v4622
      %v4624 = vpop.f32.mrf.mxu0
      %v4625 = vadd.f32 0.0, %v4624
      %4626 = vmatmul.bf16.gmra.mxu0 %v4484
      %v4627 = vpop.f32.mrf.mxu0
      %v4628 = vadd.f32 0.0, %v4627
      %v4629 = vpop.f32.mrf.mxu0
      %v4630 = vadd.f32 0.0, %v4629
      %4631 = vmatmul.bf16.gmra.mxu0 %v4486
      %v4632 = vpop.f32.mrf.mxu0
      %v4633 = vadd.f32 0.0, %v4632
      %v4634 = vpop.f32.mrf.mxu0
      %v4635 = vadd.f32 0.0, %v4634
      %4636 = vmatmul.bf16.gmra.mxu0 %v4488
      %v4637 = vpop.f32.mrf.mxu0
      %v4638 = vadd.f32 0.0, %v4637
      %v4639 = vpop.f32.mrf.mxu0
      %v4640 = vadd.f32 0.0, %v4639
      %4641 = vdwg.mxu0
      %v4642 = vadd.f32 %v4324, %v4563
      %v4643 = vadd.f32 %v4325, %v4565
      %v4644 = vadd.f32 %v4326, %v4568
      %v4645 = vadd.f32 %v4327, %v4570
      %v4646 = vadd.f32 %v4328, %v4573
      %v4647 = vadd.f32 %v4329, %v4575
      %v4648 = vadd.f32 %v4330, %v4578
      %v4649 = vadd.f32 %v4331, %v4580
      %v4650 = vadd.f32 %v4332, %v4583
      %v4651 = vadd.f32 %v4333, %v4585
      %v4652 = vadd.f32 %v4334, %v4588
      %v4653 = vadd.f32 %v4335, %v4590
      %v4654 = vadd.f32 %v4336, %v4593
      %v4655 = vadd.f32 %v4337, %v4595
      %v4656 = vadd.f32 %v4338, %v4598
      %v4657 = vadd.f32 %v4339, %v4600
      %v4658 = vadd.f32 %v4340, %v4603
      %v4659 = vadd.f32 %v4341, %v4605
      %v4660 = vadd.f32 %v4342, %v4608
      %v4661 = vadd.f32 %v4343, %v4610
      %v4662 = vadd.f32 %v4344, %v4613
      %v4663 = vadd.f32 %v4345, %v4615
      %v4664 = vadd.f32 %v4346, %v4618
      %v4665 = vadd.f32 %v4347, %v4620
      %v4666 = vadd.f32 %v4348, %v4623
      %v4667 = vadd.f32 %v4349, %v4625
      %v4668 = vadd.f32 %v4350, %v4628
      %v4669 = vadd.f32 %v4351, %v4630
      %v4670 = vadd.f32 %v4352, %v4633
      %v4671 = vadd.f32 %v4353, %v4635
      %v4672 = vadd.f32 %v4354, %v4638
      %v4673 = vadd.f32 %v4355, %v4640
      %4674 = vst [vmem:[#allocation3] sm:$0xff] %v4642
      %4675 = vst [vmem:[#allocation3 + $0x8] sm:$0xff] %v4643
      %4676 = vst [vmem:[#allocation3 + $0x10] sm:$0xff] %v4644
      %4677 = vst [vmem:[#allocation3 + $0x18] sm:$0xff] %v4645
      %4678 = vst [vmem:[#allocation3 + $0x20] sm:$0xff] %v4646
      %4679 = vst [vmem:[#allocation3 + $0x28] sm:$0xff] %v4647
      %4680 = vst [vmem:[#allocation3 + $0x30] sm:$0xff] %v4648
      %4681 = vst [vmem:[#allocation3 + $0x38] sm:$0xff] %v4649
      %4682 = vst [vmem:[#allocation3 + $0x40] sm:$0xff] %v4650
      %4683 = vst [vmem:[#allocation3 + $0x48] sm:$0xff] %v4651
      %4684 = vst [vmem:[#allocation3 + $0x50] sm:$0xff] %v4652
      %4685 = vst [vmem:[#allocation3 + $0x58] sm:$0xff] %v4653
      %4686 = vst [vmem:[#allocation3 + $0x60] sm:$0xff] %v4654
      %4687 = vst [vmem:[#allocation3 + $0x68] sm:$0xff] %v4655
      %4688 = vst [vmem:[#allocation3 + $0x70] sm:$0xff] %v4656
      %4689 = vst [vmem:[#allocation3 + $0x78] sm:$0xff] %v4657
      %4690 = vst [vmem:[#allocation3 + $0x80] sm:$0xff] %v4658
      %4691 = vst [vmem:[#allocation3 + $0x88] sm:$0xff] %v4659
      %4692 = vst [vmem:[#allocation3 + $0x90] sm:$0xff] %v4660
      %4693 = vst [vmem:[#allocation3 + $0x98] sm:$0xff] %v4661
      %4694 = vst [vmem:[#allocation3 + $0xa0] sm:$0xff] %v4662
      %4695 = vst [vmem:[#allocation3 + $0xa8] sm:$0xff] %v4663
      %4696 = vst [vmem:[#allocation3 + $0xb0] sm:$0xff] %v4664
      %4697 = vst [vmem:[#allocation3 + $0xb8] sm:$0xff] %v4665
      %4698 = vst [vmem:[#allocation3 + $0xc0] sm:$0xff] %v4666
      %4699 = vst [vmem:[#allocation3 + $0xc8] sm:$0xff] %v4667
      %4700 = vst [vmem:[#allocation3 + $0xd0] sm:$0xff] %v4668
      %4701 = vst [vmem:[#allocation3 + $0xd8] sm:$0xff] %v4669
      %4702 = vst [vmem:[#allocation3 + $0xe0] sm:$0xff] %v4670
      %4703 = vst [vmem:[#allocation3 + $0xe8] sm:$0xff] %v4671
      %4704 = vst [vmem:[#allocation3 + $0xf0] sm:$0xff] %v4672
      %4705 = vst [vmem:[#allocation3 + $0xf8] sm:$0xff] %v4673
      %v4706 = vld [vmem:[#allocation2 + $0x10] sm:$0xf]
      %v4707 = vld [vmem:[#allocation2 + $0x14] sm:$0xf]
      %v4708 = vld [vmem:[#allocation2 + $0x18] sm:$0xf]
      %v4709 = vld [vmem:[#allocation2 + $0x1c] sm:$0xf]
      %v4710 = vld [vmem:[#allocation2 + $0x20] sm:$0xf]
      %v4711 = vld [vmem:[#allocation2 + $0x24] sm:$0xf]
      %v4712 = vld [vmem:[#allocation2 + $0x28] sm:$0xf]
      %v4713 = vld [vmem:[#allocation2 + $0x2c] sm:$0xf]
      %v4714 = vld [vmem:[#allocation2 + $0x30] sm:$0xf]
      %v4715 = vld [vmem:[#allocation2 + $0x34] sm:$0xf]
      %v4716 = vld [vmem:[#allocation2 + $0x38] sm:$0xf]
      %v4717 = vld [vmem:[#allocation2 + $0x3c] sm:$0xf]
      %v4718 = vld [vmem:[#allocation2 + $0x40] sm:$0xf]
      %v4719 = vld [vmem:[#allocation2 + $0x44] sm:$0xf]
      %v4720 = vld [vmem:[#allocation2 + $0x48] sm:$0xf]
      %v4721 = vld [vmem:[#allocation2 + $0x4c] sm:$0xf]
      %v4722 = vld [vmem:[#allocation2 + $0x50] sm:$0xf]
      %v4723 = vld [vmem:[#allocation2 + $0x54] sm:$0xf]
      %v4724 = vld [vmem:[#allocation2 + $0x58] sm:$0xf]
      %v4725 = vld [vmem:[#allocation2 + $0x5c] sm:$0xf]
      %v4726 = vld [vmem:[#allocation2 + $0x60] sm:$0xf]
      %v4727 = vld [vmem:[#allocation2 + $0x64] sm:$0xf]
      %v4728 = vld [vmem:[#allocation2 + $0x68] sm:$0xf]
      %v4729 = vld [vmem:[#allocation2 + $0x6c] sm:$0xf]
      %v4730 = vld [vmem:[#allocation2 + $0x70] sm:$0xf]
      %v4731 = vld [vmem:[#allocation2 + $0x74] sm:$0xf]
      %v4732 = vld [vmem:[#allocation2 + $0x78] sm:$0xf]
      %v4733 = vld [vmem:[#allocation2 + $0x7c] sm:$0xf]
      %v4734 = vld [vmem:[#allocation2 + $0x80] sm:$0xf]
      %v4735 = vld [vmem:[#allocation2 + $0x84] sm:$0xf]
      %v4736 = vld [vmem:[#allocation2 + $0x88] sm:$0xf]
      %v4737 = vld [vmem:[#allocation2 + $0x8c] sm:$0xf]
      %v4738 = vsel %vm1409, %v4706, 0
      %v4739 = vsel %vm1410, %v4707, 0
      %v4740 = vsel %vm1411, %v4708, 0
      %v4741 = vsel %vm1412, %v4709, 0
      %v4742 = vsel %vm1413, %v4710, 0
      %v4743 = vsel %vm1414, %v4711, 0
      %v4744 = vsel %vm1415, %v4712, 0
      %v4745 = vsel %vm1416, %v4713, 0
      %v4746 = vsel %vm1417, %v4714, 0
      %v4747 = vsel %vm1418, %v4715, 0
      %v4748 = vsel %vm1419, %v4716, 0
      %v4749 = vsel %vm1420, %v4717, 0
      %v4750 = vsel %vm1421, %v4718, 0
      %v4751 = vsel %vm1422, %v4719, 0
      %v4752 = vsel %vm1423, %v4720, 0
      %v4753 = vsel %vm1424, %v4721, 0
      %v4754 = vsel %vm1425, %v4722, 0
      %v4755 = vsel %vm1426, %v4723, 0
      %v4756 = vsel %vm1427, %v4724, 0
      %v4757 = vsel %vm1428, %v4725, 0
      %v4758 = vsel %vm1429, %v4726, 0
      %v4759 = vsel %vm1430, %v4727, 0
      %v4760 = vsel %vm1431, %v4728, 0
      %v4761 = vsel %vm1432, %v4729, 0
      %v4762 = vsel %vm1433, %v4730, 0
      %v4763 = vsel %vm1434, %v4731, 0
      %v4764 = vsel %vm1435, %v4732, 0
      %v4765 = vsel %vm1436, %v4733, 0
      %v4766 = vsel %vm1437, %v4734, 0
      %v4767 = vsel %vm1438, %v4735, 0
      %v4768 = vsel %vm1439, %v4736, 0
      %v4769 = vsel %vm1440, %v4737, 0
      %v4770 = vld [vmem:[#allocation3] sm:$0xff]
      %v4771 = vld [vmem:[#allocation3 + $0x8] sm:$0xff]
      %v4772 = vld [vmem:[#allocation3 + $0x10] sm:$0xff]
      %v4773 = vld [vmem:[#allocation3 + $0x18] sm:$0xff]
      %v4774 = vld [vmem:[#allocation3 + $0x20] sm:$0xff]
      %v4775 = vld [vmem:[#allocation3 + $0x28] sm:$0xff]
      %v4776 = vld [vmem:[#allocation3 + $0x30] sm:$0xff]
      %v4777 = vld [vmem:[#allocation3 + $0x38] sm:$0xff]
      %v4778 = vld [vmem:[#allocation3 + $0x40] sm:$0xff]
      %v4779 = vld [vmem:[#allocation3 + $0x48] sm:$0xff]
      %v4780 = vld [vmem:[#allocation3 + $0x50] sm:$0xff]
      %v4781 = vld [vmem:[#allocation3 + $0x58] sm:$0xff]
      %v4782 = vld [vmem:[#allocation3 + $0x60] sm:$0xff]
      %v4783 = vld [vmem:[#allocation3 + $0x68] sm:$0xff]
      %v4784 = vld [vmem:[#allocation3 + $0x70] sm:$0xff]
      %v4785 = vld [vmem:[#allocation3 + $0x78] sm:$0xff]
      %v4786 = vld [vmem:[#allocation3 + $0x80] sm:$0xff]
      %v4787 = vld [vmem:[#allocation3 + $0x88] sm:$0xff]
      %v4788 = vld [vmem:[#allocation3 + $0x90] sm:$0xff]
      %v4789 = vld [vmem:[#allocation3 + $0x98] sm:$0xff]
      %v4790 = vld [vmem:[#allocation3 + $0xa0] sm:$0xff]
      %v4791 = vld [vmem:[#allocation3 + $0xa8] sm:$0xff]
      %v4792 = vld [vmem:[#allocation3 + $0xb0] sm:$0xff]
      %v4793 = vld [vmem:[#allocation3 + $0xb8] sm:$0xff]
      %v4794 = vld [vmem:[#allocation3 + $0xc0] sm:$0xff]
      %v4795 = vld [vmem:[#allocation3 + $0xc8] sm:$0xff]
      %v4796 = vld [vmem:[#allocation3 + $0xd0] sm:$0xff]
      %v4797 = vld [vmem:[#allocation3 + $0xd8] sm:$0xff]
      %v4798 = vld [vmem:[#allocation3 + $0xe0] sm:$0xff]
      %v4799 = vld [vmem:[#allocation3 + $0xe8] sm:$0xff]
      %v4800 = vld [vmem:[#allocation3 + $0xf0] sm:$0xff]
      %v4801 = vld [vmem:[#allocation3 + $0xf8] sm:$0xff]
      %s4802 = scalar_lea.vmem %s7, 384
      %v4803 = vld [vmem:[%s4802] sm:$0xf]
      %v4804 = vld [vmem:[%s4802 + $0x4] sm:$0xf]
      %v4805 = vld [vmem:[%s4802 + $0x8] sm:$0xf]
      %v4806 = vld [vmem:[%s4802 + $0xc] sm:$0xf]
      %v4807 = vld [vmem:[%s4802 + $0x10] sm:$0xf]
      %v4808 = vld [vmem:[%s4802 + $0x14] sm:$0xf]
      %v4809 = vld [vmem:[%s4802 + $0x18] sm:$0xf]
      %v4810 = vld [vmem:[%s4802 + $0x1c] sm:$0xf]
      %v4811 = vld [vmem:[%s4802 + $0x20] sm:$0xf]
      %v4812 = vld [vmem:[%s4802 + $0x24] sm:$0xf]
      %v4813 = vld [vmem:[%s4802 + $0x28] sm:$0xf]
      %v4814 = vld [vmem:[%s4802 + $0x2c] sm:$0xf]
      %v4815 = vld [vmem:[%s4802 + $0x30] sm:$0xf]
      %v4816 = vld [vmem:[%s4802 + $0x34] sm:$0xf]
      %v4817 = vld [vmem:[%s4802 + $0x38] sm:$0xf]
      %v4818 = vld [vmem:[%s4802 + $0x3c] sm:$0xf]
      %v4851 = vunpack.c.l.b16 %v4738
      %v4852 = vunpack.c.l.b16 %v4739
      %v4853 = vunpack.c.l.b16 %v4740
      %v4854 = vunpack.c.l.b16 %v4741
      %v4855 = vunpack.c.l.b16 %v4742
      %v4856 = vunpack.c.l.b16 %v4743
      %v4857 = vunpack.c.l.b16 %v4744
      %v4858 = vunpack.c.l.b16 %v4745
      %v4859 = vunpack.c.l.b16 %v4746
      %v4860 = vunpack.c.l.b16 %v4747
      %v4861 = vunpack.c.l.b16 %v4748
      %v4862 = vunpack.c.l.b16 %v4749
      %v4863 = vunpack.c.l.b16 %v4750
      %v4864 = vunpack.c.l.b16 %v4751
      %v4865 = vunpack.c.l.b16 %v4752
      %v4866 = vunpack.c.l.b16 %v4753
      %v4867 = vunpack.c.l.b16 %v4754
      %v4868 = vunpack.c.l.b16 %v4755
      %v4869 = vunpack.c.l.b16 %v4756
      %v4870 = vunpack.c.l.b16 %v4757
      %v4871 = vunpack.c.l.b16 %v4758
      %v4872 = vunpack.c.l.b16 %v4759
      %v4873 = vunpack.c.l.b16 %v4760
      %v4874 = vunpack.c.l.b16 %v4761
      %v4875 = vunpack.c.l.b16 %v4762
      %v4876 = vunpack.c.l.b16 %v4763
      %v4877 = vunpack.c.l.b16 %v4764
      %v4878 = vunpack.c.l.b16 %v4765
      %v4879 = vunpack.c.l.b16 %v4766
      %v4880 = vunpack.c.l.b16 %v4767
      %v4881 = vunpack.c.l.b16 %v4768
      %v4882 = vunpack.c.l.b16 %v4769
      %v4883 = vpack.c.b16 %v4852, %v4851
      %v4884 = vpack.c.b16 %v4854, %v4853
      %v4885 = vpack.c.b16 %v4856, %v4855
      %v4886 = vpack.c.b16 %v4858, %v4857
      %v4887 = vpack.c.b16 %v4860, %v4859
      %v4888 = vpack.c.b16 %v4862, %v4861
      %v4889 = vpack.c.b16 %v4864, %v4863
      %v4890 = vpack.c.b16 %v4866, %v4865
      %v4891 = vpack.c.b16 %v4868, %v4867
      %v4892 = vpack.c.b16 %v4870, %v4869
      %v4893 = vpack.c.b16 %v4872, %v4871
      %v4894 = vpack.c.b16 %v4874, %v4873
      %v4895 = vpack.c.b16 %v4876, %v4875
      %v4896 = vpack.c.b16 %v4878, %v4877
      %v4897 = vpack.c.b16 %v4880, %v4879
      %v4898 = vpack.c.b16 %v4882, %v4881
      %v4931 = vunpack.c.l.b16 %v4803
      %v4932 = vunpack.c.l.b16 %v4804
      %v4933 = vunpack.c.l.b16 %v4805
      %v4934 = vunpack.c.l.b16 %v4806
      %v4935 = vunpack.c.l.b16 %v4807
      %v4936 = vunpack.c.l.b16 %v4808
      %v4937 = vunpack.c.l.b16 %v4809
      %v4938 = vunpack.c.l.b16 %v4810
      %v4939 = vunpack.c.l.b16 %v4811
      %v4940 = vunpack.c.l.b16 %v4812
      %v4941 = vunpack.c.l.b16 %v4813
      %v4942 = vunpack.c.l.b16 %v4814
      %v4943 = vunpack.c.l.b16 %v4815
      %v4944 = vunpack.c.l.b16 %v4816
      %v4945 = vunpack.c.l.b16 %v4817
      %v4946 = vunpack.c.l.b16 %v4818
      %v4947 = vpack.c.b16 %v4932, %v4931
      %v4948 = vpack.c.b16 %v4934, %v4933
      %v4949 = vpack.c.b16 %v4936, %v4935
      %v4950 = vpack.c.b16 %v4938, %v4937
      %v4951 = vpack.c.b16 %v4940, %v4939
      %v4952 = vpack.c.b16 %v4942, %v4941
      %v4953 = vpack.c.b16 %v4944, %v4943
      %v4954 = vpack.c.b16 %v4946, %v4945
      %4963 = vmatpush.bf16.msra.mxu0 %v4954
      %4964 = vmatpush.bf16.msra.mxu0 %v4953
      %4965 = vmatpush.bf16.msra.mxu0 %v4952
      %4966 = vmatpush.bf16.msra.mxu0 %v4951
      %4967 = vmatpush.bf16.msra.mxu0 %v4950
      %4968 = vmatpush.bf16.msra.mxu0 %v4949
      %4969 = vmatpush.bf16.msra.mxu0 %v4948
      %4970 = vmatpush.bf16.msra.mxu0 %v4947
      %4971 = vmatmul.bf16.gmra.mxu0 %v4883
      %v4972 = vpop.f32.mrf.mxu0
      %v4973 = vadd.f32 0.0, %v4972
      %v4974 = vpop.f32.mrf.mxu0
      %v4975 = vadd.f32 0.0, %v4974
      %4976 = vmatmul.bf16.gmra.mxu0 %v4884
      %v4977 = vpop.f32.mrf.mxu0
      %v4978 = vadd.f32 0.0, %v4977
      %v4979 = vpop.f32.mrf.mxu0
      %v4980 = vadd.f32 0.0, %v4979
      %4981 = vmatmul.bf16.gmra.mxu0 %v4885
      %v4982 = vpop.f32.mrf.mxu0
      %v4983 = vadd.f32 0.0, %v4982
      %v4984 = vpop.f32.mrf.mxu0
      %v4985 = vadd.f32 0.0, %v4984
      %4986 = vmatmul.bf16.gmra.mxu0 %v4886
      %v4987 = vpop.f32.mrf.mxu0
      %v4988 = vadd.f32 0.0, %v4987
      %v4989 = vpop.f32.mrf.mxu0
      %v4990 = vadd.f32 0.0, %v4989
      %4991 = vmatmul.bf16.gmra.mxu0 %v4887
      %v4992 = vpop.f32.mrf.mxu0
      %v4993 = vadd.f32 0.0, %v4992
      %v4994 = vpop.f32.mrf.mxu0
      %v4995 = vadd.f32 0.0, %v4994
      %4996 = vmatmul.bf16.gmra.mxu0 %v4888
      %v4997 = vpop.f32.mrf.mxu0
      %v4998 = vadd.f32 0.0, %v4997
      %v4999 = vpop.f32.mrf.mxu0
      %v5000 = vadd.f32 0.0, %v4999
      %5001 = vmatmul.bf16.gmra.mxu0 %v4889
      %v5002 = vpop.f32.mrf.mxu0
      %v5003 = vadd.f32 0.0, %v5002
      %v5004 = vpop.f32.mrf.mxu0
      %v5005 = vadd.f32 0.0, %v5004
      %5006 = vmatmul.bf16.gmra.mxu0 %v4890
      %v5007 = vpop.f32.mrf.mxu0
      %v5008 = vadd.f32 0.0, %v5007
      %v5009 = vpop.f32.mrf.mxu0
      %v5010 = vadd.f32 0.0, %v5009
      %5011 = vmatmul.bf16.gmra.mxu0 %v4891
      %v5012 = vpop.f32.mrf.mxu0
      %v5013 = vadd.f32 0.0, %v5012
      %v5014 = vpop.f32.mrf.mxu0
      %v5015 = vadd.f32 0.0, %v5014
      %5016 = vmatmul.bf16.gmra.mxu0 %v4892
      %v5017 = vpop.f32.mrf.mxu0
      %v5018 = vadd.f32 0.0, %v5017
      %v5019 = vpop.f32.mrf.mxu0
      %v5020 = vadd.f32 0.0, %v5019
      %5021 = vmatmul.bf16.gmra.mxu0 %v4893
      %v5022 = vpop.f32.mrf.mxu0
      %v5023 = vadd.f32 0.0, %v5022
      %v5024 = vpop.f32.mrf.mxu0
      %v5025 = vadd.f32 0.0, %v5024
      %5026 = vmatmul.bf16.gmra.mxu0 %v4894
      %v5027 = vpop.f32.mrf.mxu0
      %v5028 = vadd.f32 0.0, %v5027
      %v5029 = vpop.f32.mrf.mxu0
      %v5030 = vadd.f32 0.0, %v5029
      %5031 = vmatmul.bf16.gmra.mxu0 %v4895
      %v5032 = vpop.f32.mrf.mxu0
      %v5033 = vadd.f32 0.0, %v5032
      %v5034 = vpop.f32.mrf.mxu0
      %v5035 = vadd.f32 0.0, %v5034
      %5036 = vmatmul.bf16.gmra.mxu0 %v4896
      %v5037 = vpop.f32.mrf.mxu0
      %v5038 = vadd.f32 0.0, %v5037
      %v5039 = vpop.f32.mrf.mxu0
      %v5040 = vadd.f32 0.0, %v5039
      %5041 = vmatmul.bf16.gmra.mxu0 %v4897
      %v5042 = vpop.f32.mrf.mxu0
      %v5043 = vadd.f32 0.0, %v5042
      %v5044 = vpop.f32.mrf.mxu0
      %v5045 = vadd.f32 0.0, %v5044
      %5046 = vmatmul.bf16.gmra.mxu0 %v4898
      %v5047 = vpop.f32.mrf.mxu0
      %v5048 = vadd.f32 0.0, %v5047
      %v5049 = vpop.f32.mrf.mxu0
      %v5050 = vadd.f32 0.0, %v5049
      %5051 = vdwg.mxu0
      %v5052 = vadd.f32 %v4770, %v4973
      %v5053 = vadd.f32 %v4771, %v4975
      %v5054 = vadd.f32 %v4772, %v4978
      %v5055 = vadd.f32 %v4773, %v4980
      %v5056 = vadd.f32 %v4774, %v4983
      %v5057 = vadd.f32 %v4775, %v4985
      %v5058 = vadd.f32 %v4776, %v4988
      %v5059 = vadd.f32 %v4777, %v4990
      %v5060 = vadd.f32 %v4778, %v4993
      %v5061 = vadd.f32 %v4779, %v4995
      %v5062 = vadd.f32 %v4780, %v4998
      %v5063 = vadd.f32 %v4781, %v5000
      %v5064 = vadd.f32 %v4782, %v5003
      %v5065 = vadd.f32 %v4783, %v5005
      %v5066 = vadd.f32 %v4784, %v5008
      %v5067 = vadd.f32 %v4785, %v5010
      %v5068 = vadd.f32 %v4786, %v5013
      %v5069 = vadd.f32 %v4787, %v5015
      %v5070 = vadd.f32 %v4788, %v5018
      %v5071 = vadd.f32 %v4789, %v5020
      %v5072 = vadd.f32 %v4790, %v5023
      %v5073 = vadd.f32 %v4791, %v5025
      %v5074 = vadd.f32 %v4792, %v5028
      %v5075 = vadd.f32 %v4793, %v5030
      %v5076 = vadd.f32 %v4794, %v5033
      %v5077 = vadd.f32 %v4795, %v5035
      %v5078 = vadd.f32 %v4796, %v5038
      %v5079 = vadd.f32 %v4797, %v5040
      %v5080 = vadd.f32 %v4798, %v5043
      %v5081 = vadd.f32 %v4799, %v5045
      %v5082 = vadd.f32 %v4800, %v5048
      %v5083 = vadd.f32 %v4801, %v5050
      %5084 = vst [vmem:[#allocation3] sm:$0xff] %v5052
      %5085 = vst [vmem:[#allocation3 + $0x8] sm:$0xff] %v5053
      %5086 = vst [vmem:[#allocation3 + $0x10] sm:$0xff] %v5054
      %5087 = vst [vmem:[#allocation3 + $0x18] sm:$0xff] %v5055
      %5088 = vst [vmem:[#allocation3 + $0x20] sm:$0xff] %v5056
      %5089 = vst [vmem:[#allocation3 + $0x28] sm:$0xff] %v5057
      %5090 = vst [vmem:[#allocation3 + $0x30] sm:$0xff] %v5058
      %5091 = vst [vmem:[#allocation3 + $0x38] sm:$0xff] %v5059
      %5092 = vst [vmem:[#allocation3 + $0x40] sm:$0xff] %v5060
      %5093 = vst [vmem:[#allocation3 + $0x48] sm:$0xff] %v5061
      %5094 = vst [vmem:[#allocation3 + $0x50] sm:$0xff] %v5062
      %5095 = vst [vmem:[#allocation3 + $0x58] sm:$0xff] %v5063
      %5096 = vst [vmem:[#allocation3 + $0x60] sm:$0xff] %v5064
      %5097 = vst [vmem:[#allocation3 + $0x68] sm:$0xff] %v5065
      %5098 = vst [vmem:[#allocation3 + $0x70] sm:$0xff] %v5066
      %5099 = vst [vmem:[#allocation3 + $0x78] sm:$0xff] %v5067
      %5100 = vst [vmem:[#allocation3 + $0x80] sm:$0xff] %v5068
      %5101 = vst [vmem:[#allocation3 + $0x88] sm:$0xff] %v5069
      %5102 = vst [vmem:[#allocation3 + $0x90] sm:$0xff] %v5070
      %5103 = vst [vmem:[#allocation3 + $0x98] sm:$0xff] %v5071
      %5104 = vst [vmem:[#allocation3 + $0xa0] sm:$0xff] %v5072
      %5105 = vst [vmem:[#allocation3 + $0xa8] sm:$0xff] %v5073
      %5106 = vst [vmem:[#allocation3 + $0xb0] sm:$0xff] %v5074
      %5107 = vst [vmem:[#allocation3 + $0xb8] sm:$0xff] %v5075
      %5108 = vst [vmem:[#allocation3 + $0xc0] sm:$0xff] %v5076
      %5109 = vst [vmem:[#allocation3 + $0xc8] sm:$0xff] %v5077
      %5110 = vst [vmem:[#allocation3 + $0xd0] sm:$0xff] %v5078
      %5111 = vst [vmem:[#allocation3 + $0xd8] sm:$0xff] %v5079
      %5112 = vst [vmem:[#allocation3 + $0xe0] sm:$0xff] %v5080
      %5113 = vst [vmem:[#allocation3 + $0xe8] sm:$0xff] %v5081
      %5114 = vst [vmem:[#allocation3 + $0xf0] sm:$0xff] %v5082
      %5115 = vst [vmem:[#allocation3 + $0xf8] sm:$0xff] %v5083
      %v5116 = vld [vmem:[#allocation2 + $0x10] sm:$0xf]
      %v5117 = vld [vmem:[#allocation2 + $0x14] sm:$0xf]
      %v5118 = vld [vmem:[#allocation2 + $0x18] sm:$0xf]
      %v5119 = vld [vmem:[#allocation2 + $0x1c] sm:$0xf]
      %v5120 = vld [vmem:[#allocation2 + $0x20] sm:$0xf]
      %v5121 = vld [vmem:[#allocation2 + $0x24] sm:$0xf]
      %v5122 = vld [vmem:[#allocation2 + $0x28] sm:$0xf]
      %v5123 = vld [vmem:[#allocation2 + $0x2c] sm:$0xf]
      %v5124 = vld [vmem:[#allocation2 + $0x30] sm:$0xf]
      %v5125 = vld [vmem:[#allocation2 + $0x34] sm:$0xf]
      %v5126 = vld [vmem:[#allocation2 + $0x38] sm:$0xf]
      %v5127 = vld [vmem:[#allocation2 + $0x3c] sm:$0xf]
      %v5128 = vld [vmem:[#allocation2 + $0x40] sm:$0xf]
      %v5129 = vld [vmem:[#allocation2 + $0x44] sm:$0xf]
      %v5130 = vld [vmem:[#allocation2 + $0x48] sm:$0xf]
      %v5131 = vld [vmem:[#allocation2 + $0x4c] sm:$0xf]
      %v5132 = vld [vmem:[#allocation2 + $0x50] sm:$0xf]
      %v5133 = vld [vmem:[#allocation2 + $0x54] sm:$0xf]
      %v5134 = vld [vmem:[#allocation2 + $0x58] sm:$0xf]
      %v5135 = vld [vmem:[#allocation2 + $0x5c] sm:$0xf]
      %v5136 = vld [vmem:[#allocation2 + $0x60] sm:$0xf]
      %v5137 = vld [vmem:[#allocation2 + $0x64] sm:$0xf]
      %v5138 = vld [vmem:[#allocation2 + $0x68] sm:$0xf]
      %v5139 = vld [vmem:[#allocation2 + $0x6c] sm:$0xf]
      %v5140 = vld [vmem:[#allocation2 + $0x70] sm:$0xf]
      %v5141 = vld [vmem:[#allocation2 + $0x74] sm:$0xf]
      %v5142 = vld [vmem:[#allocation2 + $0x78] sm:$0xf]
      %v5143 = vld [vmem:[#allocation2 + $0x7c] sm:$0xf]
      %v5144 = vld [vmem:[#allocation2 + $0x80] sm:$0xf]
      %v5145 = vld [vmem:[#allocation2 + $0x84] sm:$0xf]
      %v5146 = vld [vmem:[#allocation2 + $0x88] sm:$0xf]
      %v5147 = vld [vmem:[#allocation2 + $0x8c] sm:$0xf]
      %v5148 = vld [vmem:[#allocation2 + $0x90] sm:$0x1]
      %v5149 = vld [vmem:[#allocation3] sm:$0xff]
      %v5150 = vld [vmem:[#allocation3 + $0x8] sm:$0xff]
      %v5151 = vld [vmem:[#allocation3 + $0x10] sm:$0xff]
      %v5152 = vld [vmem:[#allocation3 + $0x18] sm:$0xff]
      %v5153 = vld [vmem:[#allocation3 + $0x20] sm:$0xff]
      %v5154 = vld [vmem:[#allocation3 + $0x28] sm:$0xff]
      %v5155 = vld [vmem:[#allocation3 + $0x30] sm:$0xff]
      %v5156 = vld [vmem:[#allocation3 + $0x38] sm:$0xff]
      %v5157 = vld [vmem:[#allocation3 + $0x40] sm:$0xff]
      %v5158 = vld [vmem:[#allocation3 + $0x48] sm:$0xff]
      %v5159 = vld [vmem:[#allocation3 + $0x50] sm:$0xff]
      %v5160 = vld [vmem:[#allocation3 + $0x58] sm:$0xff]
      %v5161 = vld [vmem:[#allocation3 + $0x60] sm:$0xff]
      %v5162 = vld [vmem:[#allocation3 + $0x68] sm:$0xff]
      %v5163 = vld [vmem:[#allocation3 + $0x70] sm:$0xff]
      %v5164 = vld [vmem:[#allocation3 + $0x78] sm:$0xff]
      %v5165 = vld [vmem:[#allocation3 + $0x80] sm:$0xff]
      %v5166 = vld [vmem:[#allocation3 + $0x88] sm:$0xff]
      %v5167 = vld [vmem:[#allocation3 + $0x90] sm:$0xff]
      %v5168 = vld [vmem:[#allocation3 + $0x98] sm:$0xff]
      %v5169 = vld [vmem:[#allocation3 + $0xa0] sm:$0xff]
      %v5170 = vld [vmem:[#allocation3 + $0xa8] sm:$0xff]
      %v5171 = vld [vmem:[#allocation3 + $0xb0] sm:$0xff]
      %v5172 = vld [vmem:[#allocation3 + $0xb8] sm:$0xff]
      %v5173 = vld [vmem:[#allocation3 + $0xc0] sm:$0xff]
      %v5174 = vld [vmem:[#allocation3 + $0xc8] sm:$0xff]
      %v5175 = vld [vmem:[#allocation3 + $0xd0] sm:$0xff]
      %v5176 = vld [vmem:[#allocation3 + $0xd8] sm:$0xff]
      %v5177 = vld [vmem:[#allocation3 + $0xe0] sm:$0xff]
      %v5178 = vld [vmem:[#allocation3 + $0xe8] sm:$0xff]
      %v5179 = vld [vmem:[#allocation3 + $0xf0] sm:$0xff]
      %v5180 = vld [vmem:[#allocation3 + $0xf8] sm:$0xff]
      %s5181 = scalar_lea.vmem %s7, 448
      %v5182 = vld [vmem:[%s5181] sm:$0xf]
      %v5183 = vld [vmem:[%s5181 + $0x4] sm:$0xf]
      %v5184 = vld [vmem:[%s5181 + $0x8] sm:$0xf]
      %v5185 = vld [vmem:[%s5181 + $0xc] sm:$0xf]
      %v5186 = vld [vmem:[%s5181 + $0x10] sm:$0xf]
      %v5187 = vld [vmem:[%s5181 + $0x14] sm:$0xf]
      %v5188 = vld [vmem:[%s5181 + $0x18] sm:$0xf]
      %v5189 = vld [vmem:[%s5181 + $0x1c] sm:$0xf]
      %v5190 = vld [vmem:[%s5181 + $0x20] sm:$0xf]
      %v5191 = vld [vmem:[%s5181 + $0x24] sm:$0xf]
      %v5192 = vld [vmem:[%s5181 + $0x28] sm:$0xf]
      %v5193 = vld [vmem:[%s5181 + $0x2c] sm:$0xf]
      %v5194 = vld [vmem:[%s5181 + $0x30] sm:$0xf]
      %v5195 = vld [vmem:[%s5181 + $0x34] sm:$0xf]
      %v5196 = vld [vmem:[%s5181 + $0x38] sm:$0xf]
      %v5197 = vld [vmem:[%s5181 + $0x3c] sm:$0xf]
      %v5231 = vunpack.c.l.b16 %v5116
      %v5232 = vunpack.c.l.b16 %v5117
      %v5233 = vunpack.c.l.b16 %v5118
      %v5234 = vunpack.c.l.b16 %v5119
      %v5235 = vunpack.c.l.b16 %v5120
      %v5236 = vunpack.c.l.b16 %v5121
      %v5237 = vunpack.c.l.b16 %v5122
      %v5238 = vunpack.c.l.b16 %v5123
      %v5239 = vunpack.c.l.b16 %v5124
      %v5240 = vunpack.c.l.b16 %v5125
      %v5241 = vunpack.c.l.b16 %v5126
      %v5242 = vunpack.c.l.b16 %v5127
      %v5243 = vunpack.c.l.b16 %v5128
      %v5244 = vunpack.c.l.b16 %v5129
      %v5245 = vunpack.c.l.b16 %v5130
      %v5246 = vunpack.c.l.b16 %v5131
      %v5247 = vunpack.c.l.b16 %v5132
      %v5248 = vunpack.c.l.b16 %v5133
      %v5249 = vunpack.c.l.b16 %v5134
      %v5250 = vunpack.c.l.b16 %v5135
      %v5251 = vunpack.c.l.b16 %v5136
      %v5252 = vunpack.c.l.b16 %v5137
      %v5253 = vunpack.c.l.b16 %v5138
      %v5254 = vunpack.c.l.b16 %v5139
      %v5255 = vunpack.c.l.b16 %v5140
      %v5256 = vunpack.c.l.b16 %v5141
      %v5257 = vunpack.c.l.b16 %v5142
      %v5258 = vunpack.c.l.b16 %v5143
      %v5259 = vunpack.c.l.b16 %v5144
      %v5260 = vunpack.c.l.b16 %v5145
      %v5261 = vunpack.c.l.b16 %v5146
      %v5262 = vunpack.c.l.b16 %v5147
      %v5263 = vunpack.c.l.b16 %v5148
      %v5264 = vpack.c.b16 %v5232, %v5231
      %v5265 = vpack.c.b16 %v5234, %v5233
      %v5266 = vpack.c.b16 %v5236, %v5235
      %v5267 = vpack.c.b16 %v5238, %v5237
      %v5268 = vpack.c.b16 %v5240, %v5239
      %v5269 = vpack.c.b16 %v5242, %v5241
      %v5270 = vpack.c.b16 %v5244, %v5243
      %v5271 = vpack.c.b16 %v5246, %v5245
      %v5272 = vpack.c.b16 %v5248, %v5247
      %v5273 = vpack.c.b16 %v5250, %v5249
      %v5274 = vpack.c.b16 %v5252, %v5251
      %v5275 = vpack.c.b16 %v5254, %v5253
      %v5276 = vpack.c.b16 %v5256, %v5255
      %v5277 = vpack.c.b16 %v5258, %v5257
      %v5278 = vpack.c.b16 %v5260, %v5259
      %v5279 = vpack.c.b16 %v5262, %v5261
      %v5280 = vpack.c.b16 %v5263, %v5263
      %v5282 = vshrl.u32 %v5264, 16
      %v5284 = vshll.u32 %v5264, 16
      %v5286 = vrot.slane %v5284, 1
      %v5287 = vor.u32 %v5282, %v5286
      %v5289 = vshll.u32 %v5265, 16
      %v5291 = vrot.slane %v5289, 1
      %v5292 = vsel %vm1983, %v5287, %v5291
      %v5293 = vshrl.u32 %v5265, 16
      %v5295 = vor.u32 %v5293, %v5291
      %v5297 = vshll.u32 %v5266, 16
      %v5299 = vrot.slane %v5297, 1
      %v5300 = vsel %vm1983, %v5295, %v5299
      %v5301 = vshrl.u32 %v5266, 16
      %v5303 = vor.u32 %v5301, %v5299
      %v5305 = vshll.u32 %v5267, 16
      %v5307 = vrot.slane %v5305, 1
      %v5308 = vsel %vm1983, %v5303, %v5307
      %v5309 = vshrl.u32 %v5267, 16
      %v5311 = vor.u32 %v5309, %v5307
      %v5313 = vshll.u32 %v5268, 16
      %v5315 = vrot.slane %v5313, 1
      %v5316 = vsel %vm1983, %v5311, %v5315
      %v5317 = vshrl.u32 %v5268, 16
      %v5319 = vor.u32 %v5317, %v5315
      %v5321 = vshll.u32 %v5269, 16
      %v5323 = vrot.slane %v5321, 1
      %v5324 = vsel %vm1983, %v5319, %v5323
      %v5325 = vshrl.u32 %v5269, 16
      %v5327 = vor.u32 %v5325, %v5323
      %v5329 = vshll.u32 %v5270, 16
      %v5331 = vrot.slane %v5329, 1
      %v5332 = vsel %vm1983, %v5327, %v5331
      %v5333 = vshrl.u32 %v5270, 16
      %v5335 = vor.u32 %v5333, %v5331
      %v5337 = vshll.u32 %v5271, 16
      %v5339 = vrot.slane %v5337, 1
      %v5340 = vsel %vm1983, %v5335, %v5339
      %v5341 = vshrl.u32 %v5271, 16
      %v5343 = vor.u32 %v5341, %v5339
      %v5345 = vshll.u32 %v5272, 16
      %v5347 = vrot.slane %v5345, 1
      %v5348 = vsel %vm1983, %v5343, %v5347
      %v5349 = vshrl.u32 %v5272, 16
      %v5351 = vor.u32 %v5349, %v5347
      %v5353 = vshll.u32 %v5273, 16
      %v5355 = vrot.slane %v5353, 1
      %v5356 = vsel %vm1983, %v5351, %v5355
      %v5357 = vshrl.u32 %v5273, 16
      %v5359 = vor.u32 %v5357, %v5355
      %v5361 = vshll.u32 %v5274, 16
      %v5363 = vrot.slane %v5361, 1
      %v5364 = vsel %vm1983, %v5359, %v5363
      %v5365 = vshrl.u32 %v5274, 16
      %v5367 = vor.u32 %v5365, %v5363
      %v5369 = vshll.u32 %v5275, 16
      %v5371 = vrot.slane %v5369, 1
      %v5372 = vsel %vm1983, %v5367, %v5371
      %v5373 = vshrl.u32 %v5275, 16
      %v5375 = vor.u32 %v5373, %v5371
      %v5377 = vshll.u32 %v5276, 16
      %v5379 = vrot.slane %v5377, 1
      %v5380 = vsel %vm1983, %v5375, %v5379
      %v5381 = vshrl.u32 %v5276, 16
      %v5383 = vor.u32 %v5381, %v5379
      %v5385 = vshll.u32 %v5277, 16
      %v5387 = vrot.slane %v5385, 1
      %v5388 = vsel %vm1983, %v5383, %v5387
      %v5389 = vshrl.u32 %v5277, 16
      %v5391 = vor.u32 %v5389, %v5387
      %v5393 = vshll.u32 %v5278, 16
      %v5395 = vrot.slane %v5393, 1
      %v5396 = vsel %vm1983, %v5391, %v5395
      %v5397 = vshrl.u32 %v5278, 16
      %v5399 = vor.u32 %v5397, %v5395
      %v5401 = vshll.u32 %v5279, 16
      %v5403 = vrot.slane %v5401, 1
      %v5404 = vsel %vm1983, %v5399, %v5403
      %v5405 = vshrl.u32 %v5279, 16
      %v5407 = vor.u32 %v5405, %v5403
      %v5409 = vshll.u32 %v5280, 16
      %v5411 = vrot.slane %v5409, 1
      %v5412 = vsel %vm1983, %v5407, %v5411
      %v5445 = vunpack.c.l.b16 %v5182
      %v5446 = vunpack.c.l.b16 %v5183
      %v5447 = vunpack.c.l.b16 %v5184
      %v5448 = vunpack.c.l.b16 %v5185
      %v5449 = vunpack.c.l.b16 %v5186
      %v5450 = vunpack.c.l.b16 %v5187
      %v5451 = vunpack.c.l.b16 %v5188
      %v5452 = vunpack.c.l.b16 %v5189
      %v5453 = vunpack.c.l.b16 %v5190
      %v5454 = vunpack.c.l.b16 %v5191
      %v5455 = vunpack.c.l.b16 %v5192
      %v5456 = vunpack.c.l.b16 %v5193
      %v5457 = vunpack.c.l.b16 %v5194
      %v5458 = vunpack.c.l.b16 %v5195
      %v5459 = vunpack.c.l.b16 %v5196
      %v5460 = vunpack.c.l.b16 %v5197
      %v5461 = vpack.c.b16 %v5446, %v5445
      %v5462 = vpack.c.b16 %v5448, %v5447
      %v5463 = vpack.c.b16 %v5450, %v5449
      %v5464 = vpack.c.b16 %v5452, %v5451
      %v5465 = vpack.c.b16 %v5454, %v5453
      %v5466 = vpack.c.b16 %v5456, %v5455
      %v5467 = vpack.c.b16 %v5458, %v5457
      %v5468 = vpack.c.b16 %v5460, %v5459
      %5477 = vmatpush.bf16.msra.mxu0 %v5468
      %5478 = vmatpush.bf16.msra.mxu0 %v5467
      %5479 = vmatpush.bf16.msra.mxu0 %v5466
      %5480 = vmatpush.bf16.msra.mxu0 %v5465
      %5481 = vmatpush.bf16.msra.mxu0 %v5464
      %5482 = vmatpush.bf16.msra.mxu0 %v5463
      %5483 = vmatpush.bf16.msra.mxu0 %v5462
      %5484 = vmatpush.bf16.msra.mxu0 %v5461
      %5485 = vmatmul.bf16.gmra.mxu0 %v5292
      %v5486 = vpop.f32.mrf.mxu0
      %v5487 = vadd.f32 0.0, %v5486
      %v5488 = vpop.f32.mrf.mxu0
      %v5489 = vadd.f32 0.0, %v5488
      %5490 = vmatmul.bf16.gmra.mxu0 %v5300
      %v5491 = vpop.f32.mrf.mxu0
      %v5492 = vadd.f32 0.0, %v5491
      %v5493 = vpop.f32.mrf.mxu0
      %v5494 = vadd.f32 0.0, %v5493
      %5495 = vmatmul.bf16.gmra.mxu0 %v5308
      %v5496 = vpop.f32.mrf.mxu0
      %v5497 = vadd.f32 0.0, %v5496
      %v5498 = vpop.f32.mrf.mxu0
      %v5499 = vadd.f32 0.0, %v5498
      %5500 = vmatmul.bf16.gmra.mxu0 %v5316
      %v5501 = vpop.f32.mrf.mxu0
      %v5502 = vadd.f32 0.0, %v5501
      %v5503 = vpop.f32.mrf.mxu0
      %v5504 = vadd.f32 0.0, %v5503
      %5505 = vmatmul.bf16.gmra.mxu0 %v5324
      %v5506 = vpop.f32.mrf.mxu0
      %v5507 = vadd.f32 0.0, %v5506
      %v5508 = vpop.f32.mrf.mxu0
      %v5509 = vadd.f32 0.0, %v5508
      %5510 = vmatmul.bf16.gmra.mxu0 %v5332
      %v5511 = vpop.f32.mrf.mxu0
      %v5512 = vadd.f32 0.0, %v5511
      %v5513 = vpop.f32.mrf.mxu0
      %v5514 = vadd.f32 0.0, %v5513
      %5515 = vmatmul.bf16.gmra.mxu0 %v5340
      %v5516 = vpop.f32.mrf.mxu0
      %v5517 = vadd.f32 0.0, %v5516
      %v5518 = vpop.f32.mrf.mxu0
      %v5519 = vadd.f32 0.0, %v5518
      %5520 = vmatmul.bf16.gmra.mxu0 %v5348
      %v5521 = vpop.f32.mrf.mxu0
      %v5522 = vadd.f32 0.0, %v5521
      %v5523 = vpop.f32.mrf.mxu0
      %v5524 = vadd.f32 0.0, %v5523
      %5525 = vmatmul.bf16.gmra.mxu0 %v5356
      %v5526 = vpop.f32.mrf.mxu0
      %v5527 = vadd.f32 0.0, %v5526
      %v5528 = vpop.f32.mrf.mxu0
      %v5529 = vadd.f32 0.0, %v5528
      %5530 = vmatmul.bf16.gmra.mxu0 %v5364
      %v5531 = vpop.f32.mrf.mxu0
      %v5532 = vadd.f32 0.0, %v5531
      %v5533 = vpop.f32.mrf.mxu0
      %v5534 = vadd.f32 0.0, %v5533
      %5535 = vmatmul.bf16.gmra.mxu0 %v5372
      %v5536 = vpop.f32.mrf.mxu0
      %v5537 = vadd.f32 0.0, %v5536
      %v5538 = vpop.f32.mrf.mxu0
      %v5539 = vadd.f32 0.0, %v5538
      %5540 = vmatmul.bf16.gmra.mxu0 %v5380
      %v5541 = vpop.f32.mrf.mxu0
      %v5542 = vadd.f32 0.0, %v5541
      %v5543 = vpop.f32.mrf.mxu0
      %v5544 = vadd.f32 0.0, %v5543
      %5545 = vmatmul.bf16.gmra.mxu0 %v5388
      %v5546 = vpop.f32.mrf.mxu0
      %v5547 = vadd.f32 0.0, %v5546
      %v5548 = vpop.f32.mrf.mxu0
      %v5549 = vadd.f32 0.0, %v5548
      %5550 = vmatmul.bf16.gmra.mxu0 %v5396
      %v5551 = vpop.f32.mrf.mxu0
      %v5552 = vadd.f32 0.0, %v5551
      %v5553 = vpop.f32.mrf.mxu0
      %v5554 = vadd.f32 0.0, %v5553
      %5555 = vmatmul.bf16.gmra.mxu0 %v5404
      %v5556 = vpop.f32.mrf.mxu0
      %v5557 = vadd.f32 0.0, %v5556
      %v5558 = vpop.f32.mrf.mxu0
      %v5559 = vadd.f32 0.0, %v5558
      %5560 = vmatmul.bf16.gmra.mxu0 %v5412
      %v5561 = vpop.f32.mrf.mxu0
      %v5562 = vadd.f32 0.0, %v5561
      %v5563 = vpop.f32.mrf.mxu0
      %v5564 = vadd.f32 0.0, %v5563
      %5565 = vdwg.mxu0
      %v5566 = vadd.f32 %v5149, %v5487
      %v5567 = vadd.f32 %v5150, %v5489
      %v5568 = vadd.f32 %v5151, %v5492
      %v5569 = vadd.f32 %v5152, %v5494
      %v5570 = vadd.f32 %v5153, %v5497
      %v5571 = vadd.f32 %v5154, %v5499
      %v5572 = vadd.f32 %v5155, %v5502
      %v5573 = vadd.f32 %v5156, %v5504
      %v5574 = vadd.f32 %v5157, %v5507
      %v5575 = vadd.f32 %v5158, %v5509
      %v5576 = vadd.f32 %v5159, %v5512
      %v5577 = vadd.f32 %v5160, %v5514
      %v5578 = vadd.f32 %v5161, %v5517
      %v5579 = vadd.f32 %v5162, %v5519
      %v5580 = vadd.f32 %v5163, %v5522
      %v5581 = vadd.f32 %v5164, %v5524
      %v5582 = vadd.f32 %v5165, %v5527
      %v5583 = vadd.f32 %v5166, %v5529
      %v5584 = vadd.f32 %v5167, %v5532
      %v5585 = vadd.f32 %v5168, %v5534
      %v5586 = vadd.f32 %v5169, %v5537
      %v5587 = vadd.f32 %v5170, %v5539
      %v5588 = vadd.f32 %v5171, %v5542
      %v5589 = vadd.f32 %v5172, %v5544
      %v5590 = vadd.f32 %v5173, %v5547
      %v5591 = vadd.f32 %v5174, %v5549
      %v5592 = vadd.f32 %v5175, %v5552
      %v5593 = vadd.f32 %v5176, %v5554
      %v5594 = vadd.f32 %v5177, %v5557
      %v5595 = vadd.f32 %v5178, %v5559
      %v5596 = vadd.f32 %v5179, %v5562
      %v5597 = vadd.f32 %v5180, %v5564
      %5598 = vst [vmem:[#allocation3] sm:$0xff] %v5566
      %5599 = vst [vmem:[#allocation3 + $0x8] sm:$0xff] %v5567
      %5600 = vst [vmem:[#allocation3 + $0x10] sm:$0xff] %v5568
      %5601 = vst [vmem:[#allocation3 + $0x18] sm:$0xff] %v5569
      %5602 = vst [vmem:[#allocation3 + $0x20] sm:$0xff] %v5570
      %5603 = vst [vmem:[#allocation3 + $0x28] sm:$0xff] %v5571
      %5604 = vst [vmem:[#allocation3 + $0x30] sm:$0xff] %v5572
      %5605 = vst [vmem:[#allocation3 + $0x38] sm:$0xff] %v5573
      %5606 = vst [vmem:[#allocation3 + $0x40] sm:$0xff] %v5574
      %5607 = vst [vmem:[#allocation3 + $0x48] sm:$0xff] %v5575
      %5608 = vst [vmem:[#allocation3 + $0x50] sm:$0xff] %v5576
      %5609 = vst [vmem:[#allocation3 + $0x58] sm:$0xff] %v5577
      %5610 = vst [vmem:[#allocation3 + $0x60] sm:$0xff] %v5578
      %5611 = vst [vmem:[#allocation3 + $0x68] sm:$0xff] %v5579
      %5612 = vst [vmem:[#allocation3 + $0x70] sm:$0xff] %v5580
      %5613 = vst [vmem:[#allocation3 + $0x78] sm:$0xff] %v5581
      %5614 = vst [vmem:[#allocation3 + $0x80] sm:$0xff] %v5582
      %5615 = vst [vmem:[#allocation3 + $0x88] sm:$0xff] %v5583
      %5616 = vst [vmem:[#allocation3 + $0x90] sm:$0xff] %v5584
      %5617 = vst [vmem:[#allocation3 + $0x98] sm:$0xff] %v5585
      %5618 = vst [vmem:[#allocation3 + $0xa0] sm:$0xff] %v5586
      %5619 = vst [vmem:[#allocation3 + $0xa8] sm:$0xff] %v5587
      %5620 = vst [vmem:[#allocation3 + $0xb0] sm:$0xff] %v5588
      %5621 = vst [vmem:[#allocation3 + $0xb8] sm:$0xff] %v5589
      %5622 = vst [vmem:[#allocation3 + $0xc0] sm:$0xff] %v5590
      %5623 = vst [vmem:[#allocation3 + $0xc8] sm:$0xff] %v5591
      %5624 = vst [vmem:[#allocation3 + $0xd0] sm:$0xff] %v5592
      %5625 = vst [vmem:[#allocation3 + $0xd8] sm:$0xff] %v5593
      %5626 = vst [vmem:[#allocation3 + $0xe0] sm:$0xff] %v5594
      %5627 = vst [vmem:[#allocation3 + $0xe8] sm:$0xff] %v5595
      %5628 = vst [vmem:[#allocation3 + $0xf0] sm:$0xff] %v5596
      %5629 = vst [vmem:[#allocation3 + $0xf8] sm:$0xff] %v5597
      %v5630 = vld [vmem:[#allocation2 + $0x10] sm:$0xe]
      %v5631 = vld [vmem:[#allocation2 + $0x14] sm:$0xf]
      %v5632 = vld [vmem:[#allocation2 + $0x18] sm:$0xf]
      %v5633 = vld [vmem:[#allocation2 + $0x1c] sm:$0xf]
      %v5634 = vld [vmem:[#allocation2 + $0x20] sm:$0xf]
      %v5635 = vld [vmem:[#allocation2 + $0x24] sm:$0xf]
      %v5636 = vld [vmem:[#allocation2 + $0x28] sm:$0xf]
      %v5637 = vld [vmem:[#allocation2 + $0x2c] sm:$0xf]
      %v5638 = vld [vmem:[#allocation2 + $0x30] sm:$0xf]
      %v5639 = vld [vmem:[#allocation2 + $0x34] sm:$0xf]
      %v5640 = vld [vmem:[#allocation2 + $0x38] sm:$0xf]
      %v5641 = vld [vmem:[#allocation2 + $0x3c] sm:$0xf]
      %v5642 = vld [vmem:[#allocation2 + $0x40] sm:$0xf]
      %v5643 = vld [vmem:[#allocation2 + $0x44] sm:$0xf]
      %v5644 = vld [vmem:[#allocation2 + $0x48] sm:$0xf]
      %v5645 = vld [vmem:[#allocation2 + $0x4c] sm:$0xf]
      %v5646 = vld [vmem:[#allocation2 + $0x50] sm:$0xf]
      %v5647 = vld [vmem:[#allocation2 + $0x54] sm:$0xf]
      %v5648 = vld [vmem:[#allocation2 + $0x58] sm:$0xf]
      %v5649 = vld [vmem:[#allocation2 + $0x5c] sm:$0xf]
      %v5650 = vld [vmem:[#allocation2 + $0x60] sm:$0xf]
      %v5651 = vld [vmem:[#allocation2 + $0x64] sm:$0xf]
      %v5652 = vld [vmem:[#allocation2 + $0x68] sm:$0xf]
      %v5653 = vld [vmem:[#allocation2 + $0x6c] sm:$0xf]
      %v5654 = vld [vmem:[#allocation2 + $0x70] sm:$0xf]
      %v5655 = vld [vmem:[#allocation2 + $0x74] sm:$0xf]
      %v5656 = vld [vmem:[#allocation2 + $0x78] sm:$0xf]
      %v5657 = vld [vmem:[#allocation2 + $0x7c] sm:$0xf]
      %v5658 = vld [vmem:[#allocation2 + $0x80] sm:$0xf]
      %v5659 = vld [vmem:[#allocation2 + $0x84] sm:$0xf]
      %v5660 = vld [vmem:[#allocation2 + $0x88] sm:$0xf]
      %v5661 = vld [vmem:[#allocation2 + $0x8c] sm:$0xf]
      %v5662 = vld [vmem:[#allocation2 + $0x90] sm:$0x1]
      %v5663 = vsel %vm2693, %v5630, 0
      %v5664 = vsel %vm2700, %v5631, 0
      %v5665 = vsel %vm2707, %v5632, 0
      %v5666 = vsel %vm2714, %v5633, 0
      %v5667 = vsel %vm2721, %v5634, 0
      %v5668 = vsel %vm2728, %v5635, 0
      %v5669 = vsel %vm2735, %v5636, 0
      %v5670 = vsel %vm2742, %v5637, 0
      %v5671 = vsel %vm2749, %v5638, 0
      %v5672 = vsel %vm2756, %v5639, 0
      %v5673 = vsel %vm2763, %v5640, 0
      %v5674 = vsel %vm2770, %v5641, 0
      %v5675 = vsel %vm2777, %v5642, 0
      %v5676 = vsel %vm2784, %v5643, 0
      %v5677 = vsel %vm2791, %v5644, 0
      %v5678 = vsel %vm2798, %v5645, 0
      %v5679 = vsel %vm2805, %v5646, 0
      %v5680 = vsel %vm2812, %v5647, 0
      %v5681 = vsel %vm2819, %v5648, 0
      %v5682 = vsel %vm2826, %v5649, 0
      %v5683 = vsel %vm2833, %v5650, 0
      %v5684 = vsel %vm2840, %v5651, 0
      %v5685 = vsel %vm2847, %v5652, 0
      %v5686 = vsel %vm2854, %v5653, 0
      %v5687 = vsel %vm2861, %v5654, 0
      %v5688 = vsel %vm2868, %v5655, 0
      %v5689 = vsel %vm2875, %v5656, 0
      %v5690 = vsel %vm2882, %v5657, 0
      %v5691 = vsel %vm2889, %v5658, 0
      %v5692 = vsel %vm2896, %v5659, 0
      %v5693 = vsel %vm2903, %v5660, 0
      %v5694 = vsel %vm2910, %v5661, 0
      %v5695 = vsel %vm2917, %v5662, 0
      %v5696 = vld [vmem:[#allocation3] sm:$0xff]
      %v5697 = vld [vmem:[#allocation3 + $0x8] sm:$0xff]
      %v5698 = vld [vmem:[#allocation3 + $0x10] sm:$0xff]
      %v5699 = vld [vmem:[#allocation3 + $0x18] sm:$0xff]
      %v5700 = vld [vmem:[#allocation3 + $0x20] sm:$0xff]
      %v5701 = vld [vmem:[#allocation3 + $0x28] sm:$0xff]
      %v5702 = vld [vmem:[#allocation3 + $0x30] sm:$0xff]
      %v5703 = vld [vmem:[#allocation3 + $0x38] sm:$0xff]
      %v5704 = vld [vmem:[#allocation3 + $0x40] sm:$0xff]
      %v5705 = vld [vmem:[#allocation3 + $0x48] sm:$0xff]
      %v5706 = vld [vmem:[#allocation3 + $0x50] sm:$0xff]
      %v5707 = vld [vmem:[#allocation3 + $0x58] sm:$0xff]
      %v5708 = vld [vmem:[#allocation3 + $0x60] sm:$0xff]
      %v5709 = vld [vmem:[#allocation3 + $0x68] sm:$0xff]
      %v5710 = vld [vmem:[#allocation3 + $0x70] sm:$0xff]
      %v5711 = vld [vmem:[#allocation3 + $0x78] sm:$0xff]
      %v5712 = vld [vmem:[#allocation3 + $0x80] sm:$0xff]
      %v5713 = vld [vmem:[#allocation3 + $0x88] sm:$0xff]
      %v5714 = vld [vmem:[#allocation3 + $0x90] sm:$0xff]
      %v5715 = vld [vmem:[#allocation3 + $0x98] sm:$0xff]
      %v5716 = vld [vmem:[#allocation3 + $0xa0] sm:$0xff]
      %v5717 = vld [vmem:[#allocation3 + $0xa8] sm:$0xff]
      %v5718 = vld [vmem:[#allocation3 + $0xb0] sm:$0xff]
      %v5719 = vld [vmem:[#allocation3 + $0xb8] sm:$0xff]
      %v5720 = vld [vmem:[#allocation3 + $0xc0] sm:$0xff]
      %v5721 = vld [vmem:[#allocation3 + $0xc8] sm:$0xff]
      %v5722 = vld [vmem:[#allocation3 + $0xd0] sm:$0xff]
      %v5723 = vld [vmem:[#allocation3 + $0xd8] sm:$0xff]
      %v5724 = vld [vmem:[#allocation3 + $0xe0] sm:$0xff]
      %v5725 = vld [vmem:[#allocation3 + $0xe8] sm:$0xff]
      %v5726 = vld [vmem:[#allocation3 + $0xf0] sm:$0xff]
      %v5727 = vld [vmem:[#allocation3 + $0xf8] sm:$0xff]
      %s5728 = scalar_lea.vmem %s7, 512
      %v5729 = vld [vmem:[%s5728] sm:$0xf]
      %v5730 = vld [vmem:[%s5728 + $0x4] sm:$0xf]
      %v5731 = vld [vmem:[%s5728 + $0x8] sm:$0xf]
      %v5732 = vld [vmem:[%s5728 + $0xc] sm:$0xf]
      %v5733 = vld [vmem:[%s5728 + $0x10] sm:$0xf]
      %v5734 = vld [vmem:[%s5728 + $0x14] sm:$0xf]
      %v5735 = vld [vmem:[%s5728 + $0x18] sm:$0xf]
      %v5736 = vld [vmem:[%s5728 + $0x1c] sm:$0xf]
      %v5737 = vld [vmem:[%s5728 + $0x20] sm:$0xf]
      %v5738 = vld [vmem:[%s5728 + $0x24] sm:$0xf]
      %v5739 = vld [vmem:[%s5728 + $0x28] sm:$0xf]
      %v5740 = vld [vmem:[%s5728 + $0x2c] sm:$0xf]
      %v5741 = vld [vmem:[%s5728 + $0x30] sm:$0xf]
      %v5742 = vld [vmem:[%s5728 + $0x34] sm:$0xf]
      %v5743 = vld [vmem:[%s5728 + $0x38] sm:$0xf]
      %v5744 = vld [vmem:[%s5728 + $0x3c] sm:$0xf]
      %v5778 = vunpack.c.l.b16 %v5663
      %v5779 = vunpack.c.l.b16 %v5664
      %v5780 = vunpack.c.l.b16 %v5665
      %v5781 = vunpack.c.l.b16 %v5666
      %v5782 = vunpack.c.l.b16 %v5667
      %v5783 = vunpack.c.l.b16 %v5668
      %v5784 = vunpack.c.l.b16 %v5669
      %v5785 = vunpack.c.l.b16 %v5670
      %v5786 = vunpack.c.l.b16 %v5671
      %v5787 = vunpack.c.l.b16 %v5672
      %v5788 = vunpack.c.l.b16 %v5673
      %v5789 = vunpack.c.l.b16 %v5674
      %v5790 = vunpack.c.l.b16 %v5675
      %v5791 = vunpack.c.l.b16 %v5676
      %v5792 = vunpack.c.l.b16 %v5677
      %v5793 = vunpack.c.l.b16 %v5678
      %v5794 = vunpack.c.l.b16 %v5679
      %v5795 = vunpack.c.l.b16 %v5680
      %v5796 = vunpack.c.l.b16 %v5681
      %v5797 = vunpack.c.l.b16 %v5682
      %v5798 = vunpack.c.l.b16 %v5683
      %v5799 = vunpack.c.l.b16 %v5684
      %v5800 = vunpack.c.l.b16 %v5685
      %v5801 = vunpack.c.l.b16 %v5686
      %v5802 = vunpack.c.l.b16 %v5687
      %v5803 = vunpack.c.l.b16 %v5688
      %v5804 = vunpack.c.l.b16 %v5689
      %v5805 = vunpack.c.l.b16 %v5690
      %v5806 = vunpack.c.l.b16 %v5691
      %v5807 = vunpack.c.l.b16 %v5692
      %v5808 = vunpack.c.l.b16 %v5693
      %v5809 = vunpack.c.l.b16 %v5694
      %v5810 = vunpack.c.l.b16 %v5695
      %v5811 = vpack.c.b16 %v5779, %v5778
      %v5812 = vpack.c.b16 %v5781, %v5780
      %v5813 = vpack.c.b16 %v5783, %v5782
      %v5814 = vpack.c.b16 %v5785, %v5784
      %v5815 = vpack.c.b16 %v5787, %v5786
      %v5816 = vpack.c.b16 %v5789, %v5788
      %v5817 = vpack.c.b16 %v5791, %v5790
      %v5818 = vpack.c.b16 %v5793, %v5792
      %v5819 = vpack.c.b16 %v5795, %v5794
      %v5820 = vpack.c.b16 %v5797, %v5796
      %v5821 = vpack.c.b16 %v5799, %v5798
      %v5822 = vpack.c.b16 %v5801, %v5800
      %v5823 = vpack.c.b16 %v5803, %v5802
      %v5824 = vpack.c.b16 %v5805, %v5804
      %v5825 = vpack.c.b16 %v5807, %v5806
      %v5826 = vpack.c.b16 %v5809, %v5808
      %v5827 = vpack.c.b16 %v5810, %v5810
      %v5828 = vrot.slane %v5811, 1
      %v5829 = vrot.slane %v5812, 1
      %v5830 = vsel %vm3083, %v5828, %v5829
      %v5831 = vrot.slane %v5813, 1
      %v5832 = vsel %vm3083, %v5829, %v5831
      %v5833 = vrot.slane %v5814, 1
      %v5834 = vsel %vm3083, %v5831, %v5833
      %v5835 = vrot.slane %v5815, 1
      %v5836 = vsel %vm3083, %v5833, %v5835
      %v5837 = vrot.slane %v5816, 1
      %v5838 = vsel %vm3083, %v5835, %v5837
      %v5839 = vrot.slane %v5817, 1
      %v5840 = vsel %vm3083, %v5837, %v5839
      %v5841 = vrot.slane %v5818, 1
      %v5842 = vsel %vm3083, %v5839, %v5841
      %v5843 = vrot.slane %v5819, 1
      %v5844 = vsel %vm3083, %v5841, %v5843
      %v5845 = vrot.slane %v5820, 1
      %v5846 = vsel %vm3083, %v5843, %v5845
      %v5847 = vrot.slane %v5821, 1
      %v5848 = vsel %vm3083, %v5845, %v5847
      %v5849 = vrot.slane %v5822, 1
      %v5850 = vsel %vm3083, %v5847, %v5849
      %v5851 = vrot.slane %v5823, 1
      %v5852 = vsel %vm3083, %v5849, %v5851
      %v5853 = vrot.slane %v5824, 1
      %v5854 = vsel %vm3083, %v5851, %v5853
      %v5855 = vrot.slane %v5825, 1
      %v5856 = vsel %vm3083, %v5853, %v5855
      %v5857 = vrot.slane %v5826, 1
      %v5858 = vsel %vm3083, %v5855, %v5857
      %v5859 = vrot.slane %v5827, 1
      %v5860 = vsel %vm3083, %v5857, %v5859
      %v5893 = vunpack.c.l.b16 %v5729
      %v5894 = vunpack.c.l.b16 %v5730
      %v5895 = vunpack.c.l.b16 %v5731
      %v5896 = vunpack.c.l.b16 %v5732
      %v5897 = vunpack.c.l.b16 %v5733
      %v5898 = vunpack.c.l.b16 %v5734
      %v5899 = vunpack.c.l.b16 %v5735
      %v5900 = vunpack.c.l.b16 %v5736
      %v5901 = vunpack.c.l.b16 %v5737
      %v5902 = vunpack.c.l.b16 %v5738
      %v5903 = vunpack.c.l.b16 %v5739
      %v5904 = vunpack.c.l.b16 %v5740
      %v5905 = vunpack.c.l.b16 %v5741
      %v5906 = vunpack.c.l.b16 %v5742
      %v5907 = vunpack.c.l.b16 %v5743
      %v5908 = vunpack.c.l.b16 %v5744
      %v5909 = vpack.c.b16 %v5894, %v5893
      %v5910 = vpack.c.b16 %v5896, %v5895
      %v5911 = vpack.c.b16 %v5898, %v5897
      %v5912 = vpack.c.b16 %v5900, %v5899
      %v5913 = vpack.c.b16 %v5902, %v5901
      %v5914 = vpack.c.b16 %v5904, %v5903
      %v5915 = vpack.c.b16 %v5906, %v5905
      %v5916 = vpack.c.b16 %v5908, %v5907
      %5925 = vmatpush.bf16.msra.mxu0 %v5916
      %5926 = vmatpush.bf16.msra.mxu0 %v5915
      %5927 = vmatpush.bf16.msra.mxu0 %v5914
      %5928 = vmatpush.bf16.msra.mxu0 %v5913
      %5929 = vmatpush.bf16.msra.mxu0 %v5912
      %5930 = vmatpush.bf16.msra.mxu0 %v5911
      %5931 = vmatpush.bf16.msra.mxu0 %v5910
      %5932 = vmatpush.bf16.msra.mxu0 %v5909
      %5933 = vmatmul.bf16.gmra.mxu0 %v5830
      %v5934 = vpop.f32.mrf.mxu0
      %v5935 = vadd.f32 0.0, %v5934
      %v5936 = vpop.f32.mrf.mxu0
      %v5937 = vadd.f32 0.0, %v5936
      %5938 = vmatmul.bf16.gmra.mxu0 %v5832
      %v5939 = vpop.f32.mrf.mxu0
      %v5940 = vadd.f32 0.0, %v5939
      %v5941 = vpop.f32.mrf.mxu0
      %v5942 = vadd.f32 0.0, %v5941
      %5943 = vmatmul.bf16.gmra.mxu0 %v5834
      %v5944 = vpop.f32.mrf.mxu0
      %v5945 = vadd.f32 0.0, %v5944
      %v5946 = vpop.f32.mrf.mxu0
      %v5947 = vadd.f32 0.0, %v5946
      %5948 = vmatmul.bf16.gmra.mxu0 %v5836
      %v5949 = vpop.f32.mrf.mxu0
      %v5950 = vadd.f32 0.0, %v5949
      %v5951 = vpop.f32.mrf.mxu0
      %v5952 = vadd.f32 0.0, %v5951
      %5953 = vmatmul.bf16.gmra.mxu0 %v5838
      %v5954 = vpop.f32.mrf.mxu0
      %v5955 = vadd.f32 0.0, %v5954
      %v5956 = vpop.f32.mrf.mxu0
      %v5957 = vadd.f32 0.0, %v5956
      %5958 = vmatmul.bf16.gmra.mxu0 %v5840
      %v5959 = vpop.f32.mrf.mxu0
      %v5960 = vadd.f32 0.0, %v5959
      %v5961 = vpop.f32.mrf.mxu0
      %v5962 = vadd.f32 0.0, %v5961
      %5963 = vmatmul.bf16.gmra.mxu0 %v5842
      %v5964 = vpop.f32.mrf.mxu0
      %v5965 = vadd.f32 0.0, %v5964
      %v5966 = vpop.f32.mrf.mxu0
      %v5967 = vadd.f32 0.0, %v5966
      %5968 = vmatmul.bf16.gmra.mxu0 %v5844
      %v5969 = vpop.f32.mrf.mxu0
      %v5970 = vadd.f32 0.0, %v5969
      %v5971 = vpop.f32.mrf.mxu0
      %v5972 = vadd.f32 0.0, %v5971
      %5973 = vmatmul.bf16.gmra.mxu0 %v5846
      %v5974 = vpop.f32.mrf.mxu0
      %v5975 = vadd.f32 0.0, %v5974
      %v5976 = vpop.f32.mrf.mxu0
      %v5977 = vadd.f32 0.0, %v5976
      %5978 = vmatmul.bf16.gmra.mxu0 %v5848
      %v5979 = vpop.f32.mrf.mxu0
      %v5980 = vadd.f32 0.0, %v5979
      %v5981 = vpop.f32.mrf.mxu0
      %v5982 = vadd.f32 0.0, %v5981
      %5983 = vmatmul.bf16.gmra.mxu0 %v5850
      %v5984 = vpop.f32.mrf.mxu0
      %v5985 = vadd.f32 0.0, %v5984
      %v5986 = vpop.f32.mrf.mxu0
      %v5987 = vadd.f32 0.0, %v5986
      %5988 = vmatmul.bf16.gmra.mxu0 %v5852
      %v5989 = vpop.f32.mrf.mxu0
      %v5990 = vadd.f32 0.0, %v5989
      %v5991 = vpop.f32.mrf.mxu0
      %v5992 = vadd.f32 0.0, %v5991
      %5993 = vmatmul.bf16.gmra.mxu0 %v5854
      %v5994 = vpop.f32.mrf.mxu0
      %v5995 = vadd.f32 0.0, %v5994
      %v5996 = vpop.f32.mrf.mxu0
      %v5997 = vadd.f32 0.0, %v5996
      %5998 = vmatmul.bf16.gmra.mxu0 %v5856
      %v5999 = vpop.f32.mrf.mxu0
      %v6000 = vadd.f32 0.0, %v5999
      %v6001 = vpop.f32.mrf.mxu0
      %v6002 = vadd.f32 0.0, %v6001
      %6003 = vmatmul.bf16.gmra.mxu0 %v5858
      %v6004 = vpop.f32.mrf.mxu0
      %v6005 = vadd.f32 0.0, %v6004
      %v6006 = vpop.f32.mrf.mxu0
      %v6007 = vadd.f32 0.0, %v6006
      %6008 = vmatmul.bf16.gmra.mxu0 %v5860
      %v6009 = vpop.f32.mrf.mxu0
      %v6010 = vadd.f32 0.0, %v6009
      %v6011 = vpop.f32.mrf.mxu0
      %v6012 = vadd.f32 0.0, %v6011
      %6013 = vdwg.mxu0
      %v6014 = vadd.f32 %v5696, %v5935
      %v6015 = vadd.f32 %v5697, %v5937
      %v6016 = vadd.f32 %v5698, %v5940
      %v6017 = vadd.f32 %v5699, %v5942
      %v6018 = vadd.f32 %v5700, %v5945
      %v6019 = vadd.f32 %v5701, %v5947
      %v6020 = vadd.f32 %v5702, %v5950
      %v6021 = vadd.f32 %v5703, %v5952
      %v6022 = vadd.f32 %v5704, %v5955
      %v6023 = vadd.f32 %v5705, %v5957
      %v6024 = vadd.f32 %v5706, %v5960
      %v6025 = vadd.f32 %v5707, %v5962
      %v6026 = vadd.f32 %v5708, %v5965
      %v6027 = vadd.f32 %v5709, %v5967
      %v6028 = vadd.f32 %v5710, %v5970
      %v6029 = vadd.f32 %v5711, %v5972
      %v6030 = vadd.f32 %v5712, %v5975
      %v6031 = vadd.f32 %v5713, %v5977
      %v6032 = vadd.f32 %v5714, %v5980
      %v6033 = vadd.f32 %v5715, %v5982
      %v6034 = vadd.f32 %v5716, %v5985
      %v6035 = vadd.f32 %v5717, %v5987
      %v6036 = vadd.f32 %v5718, %v5990
      %v6037 = vadd.f32 %v5719, %v5992
      %v6038 = vadd.f32 %v5720, %v5995
      %v6039 = vadd.f32 %v5721, %v5997
      %v6040 = vadd.f32 %v5722, %v6000
      %v6041 = vadd.f32 %v5723, %v6002
      %v6042 = vadd.f32 %v5724, %v6005
      %v6043 = vadd.f32 %v5725, %v6007
      %v6044 = vadd.f32 %v5726, %v6010
      %v6045 = vadd.f32 %v5727, %v6012
      %6046 = vst [vmem:[#allocation3] sm:$0xff] %v6014
      %6047 = vst [vmem:[#allocation3 + $0x8] sm:$0xff] %v6015
      %6048 = vst [vmem:[#allocation3 + $0x10] sm:$0xff] %v6016
      %6049 = vst [vmem:[#allocation3 + $0x18] sm:$0xff] %v6017
      %6050 = vst [vmem:[#allocation3 + $0x20] sm:$0xff] %v6018
      %6051 = vst [vmem:[#allocation3 + $0x28] sm:$0xff] %v6019
      %6052 = vst [vmem:[#allocation3 + $0x30] sm:$0xff] %v6020
      %6053 = vst [vmem:[#allocation3 + $0x38] sm:$0xff] %v6021
      %6054 = vst [vmem:[#allocation3 + $0x40] sm:$0xff] %v6022
      %6055 = vst [vmem:[#allocation3 + $0x48] sm:$0xff] %v6023
      %6056 = vst [vmem:[#allocation3 + $0x50] sm:$0xff] %v6024
      %6057 = vst [vmem:[#allocation3 + $0x58] sm:$0xff] %v6025
      %6058 = vst [vmem:[#allocation3 + $0x60] sm:$0xff] %v6026
      %6059 = vst [vmem:[#allocation3 + $0x68] sm:$0xff] %v6027
      %6060 = vst [vmem:[#allocation3 + $0x70] sm:$0xff] %v6028
      %6061 = vst [vmem:[#allocation3 + $0x78] sm:$0xff] %v6029
      %6062 = vst [vmem:[#allocation3 + $0x80] sm:$0xff] %v6030
      %6063 = vst [vmem:[#allocation3 + $0x88] sm:$0xff] %v6031
      %6064 = vst [vmem:[#allocation3 + $0x90] sm:$0xff] %v6032
      %6065 = vst [vmem:[#allocation3 + $0x98] sm:$0xff] %v6033
      %6066 = vst [vmem:[#allocation3 + $0xa0] sm:$0xff] %v6034
      %6067 = vst [vmem:[#allocation3 + $0xa8] sm:$0xff] %v6035
      %6068 = vst [vmem:[#allocation3 + $0xb0] sm:$0xff] %v6036
      %6069 = vst [vmem:[#allocation3 + $0xb8] sm:$0xff] %v6037
      %6070 = vst [vmem:[#allocation3 + $0xc0] sm:$0xff] %v6038
      %6071 = vst [vmem:[#allocation3 + $0xc8] sm:$0xff] %v6039
      %6072 = vst [vmem:[#allocation3 + $0xd0] sm:$0xff] %v6040
      %6073 = vst [vmem:[#allocation3 + $0xd8] sm:$0xff] %v6041
      %6074 = vst [vmem:[#allocation3 + $0xe0] sm:$0xff] %v6042
      %6075 = vst [vmem:[#allocation3 + $0xe8] sm:$0xff] %v6043
      %6076 = vst [vmem:[#allocation3 + $0xf0] sm:$0xff] %v6044
      %6077 = vst [vmem:[#allocation3 + $0xf8] sm:$0xff] %v6045
      %v6078 = vld [vmem:[#allocation3] sm:$0xff]
      %v6079 = vld [vmem:[#allocation3 + $0x8] sm:$0xff]
      %v6080 = vld [vmem:[#allocation3 + $0x10] sm:$0xff]
      %v6081 = vld [vmem:[#allocation3 + $0x18] sm:$0xff]
      %v6082 = vld [vmem:[#allocation3 + $0x20] sm:$0xff]
      %v6083 = vld [vmem:[#allocation3 + $0x28] sm:$0xff]
      %v6084 = vld [vmem:[#allocation3 + $0x30] sm:$0xff]
      %v6085 = vld [vmem:[#allocation3 + $0x38] sm:$0xff]
      %v6086 = vld [vmem:[#allocation3 + $0x40] sm:$0xff]
      %v6087 = vld [vmem:[#allocation3 + $0x48] sm:$0xff]
      %v6088 = vld [vmem:[#allocation3 + $0x50] sm:$0xff]
      %v6089 = vld [vmem:[#allocation3 + $0x58] sm:$0xff]
      %v6090 = vld [vmem:[#allocation3 + $0x60] sm:$0xff]
      %v6091 = vld [vmem:[#allocation3 + $0x68] sm:$0xff]
      %v6092 = vld [vmem:[#allocation3 + $0x70] sm:$0xff]
      %v6093 = vld [vmem:[#allocation3 + $0x78] sm:$0xff]
      %v6094 = vld [vmem:[#allocation3 + $0x80] sm:$0xff]
      %v6095 = vld [vmem:[#allocation3 + $0x88] sm:$0xff]
      %v6096 = vld [vmem:[#allocation3 + $0x90] sm:$0xff]
      %v6097 = vld [vmem:[#allocation3 + $0x98] sm:$0xff]
      %v6098 = vld [vmem:[#allocation3 + $0xa0] sm:$0xff]
      %v6099 = vld [vmem:[#allocation3 + $0xa8] sm:$0xff]
      %v6100 = vld [vmem:[#allocation3 + $0xb0] sm:$0xff]
      %v6101 = vld [vmem:[#allocation3 + $0xb8] sm:$0xff]
      %v6102 = vld [vmem:[#allocation3 + $0xc0] sm:$0xff]
      %v6103 = vld [vmem:[#allocation3 + $0xc8] sm:$0xff]
      %v6104 = vld [vmem:[#allocation3 + $0xd0] sm:$0xff]
      %v6105 = vld [vmem:[#allocation3 + $0xd8] sm:$0xff]
      %v6106 = vld [vmem:[#allocation3 + $0xe0] sm:$0xff]
      %v6107 = vld [vmem:[#allocation3 + $0xe8] sm:$0xff]
      %v6108 = vld [vmem:[#allocation3 + $0xf0] sm:$0xff]
      %v6109 = vld [vmem:[#allocation3 + $0xf8] sm:$0xff]
      %v6110 = vld [vmem:[%s4] sm:$0x1]
      %v6111 = vld [vmem:[%s5] sm:$0x1]
      %v6112 = vadd.f32 %v6078, %v6079
      %v6113 = vadd.f32 %v6112, %v6080
      %v6114 = vadd.f32 %v6113, %v6081
      %v6115 = vadd.f32 %v6114, %v6082
      %v6116 = vadd.f32 %v6115, %v6083
      %v6117 = vadd.f32 %v6116, %v6084
      %v6118 = vadd.f32 %v6117, %v6085
      %v6119 = vadd.f32 %v6118, %v6086
      %v6120 = vadd.f32 %v6119, %v6087
      %v6121 = vadd.f32 %v6120, %v6088
      %v6122 = vadd.f32 %v6121, %v6089
      %v6123 = vadd.f32 %v6122, %v6090
      %v6124 = vadd.f32 %v6123, %v6091
      %v6125 = vadd.f32 %v6124, %v6092
      %v6126 = vadd.f32 %v6125, %v6093
      %v6127 = vadd.f32 %v6126, %v6094
      %v6128 = vadd.f32 %v6127, %v6095
      %v6129 = vadd.f32 %v6128, %v6096
      %v6130 = vadd.f32 %v6129, %v6097
      %v6131 = vadd.f32 %v6130, %v6098
      %v6132 = vadd.f32 %v6131, %v6099
      %v6133 = vadd.f32 %v6132, %v6100
      %v6134 = vadd.f32 %v6133, %v6101
      %v6135 = vadd.f32 %v6134, %v6102
      %v6136 = vadd.f32 %v6135, %v6103
      %v6137 = vadd.f32 %v6136, %v6104
      %v6138 = vadd.f32 %v6137, %v6105
      %v6139 = vadd.f32 %v6138, %v6106
      %v6140 = vadd.f32 %v6139, %v6107
      %v6141 = vadd.f32 %v6140, %v6108
      %v6142 = vadd.f32 %v6141, %v6109
      %v6143 = vrot.slane %v6142, 4
      %v6144 = vadd.f32 %v6142, %v6143
      %v6145 = vrot.slane %v6144, 2
      %v6146 = vadd.f32 %v6144, %v6145
      %v6147 = vrot.slane %v6146, 1
      %v6148 = vadd.f32 %v6146, %v6147
      %v6149 = vld [vmem:[%s6] sm:$0xff]
      %v6150 = vld [vmem:[%s6 + $0x8] sm:$0xff]
      %v6151 = vld [vmem:[%s6 + $0x10] sm:$0xff]
      %v6152 = vld [vmem:[%s6 + $0x18] sm:$0xff]
      %v6153 = vld [vmem:[%s6 + $0x20] sm:$0xff]
      %v6154 = vld [vmem:[%s6 + $0x28] sm:$0xff]
      %v6155 = vld [vmem:[%s6 + $0x30] sm:$0xff]
      %v6156 = vld [vmem:[%s6 + $0x38] sm:$0xff]
      %v6157 = vld [vmem:[%s6 + $0x40] sm:$0xff]
      %v6158 = vld [vmem:[%s6 + $0x48] sm:$0xff]
      %v6159 = vld [vmem:[%s6 + $0x50] sm:$0xff]
      %v6160 = vld [vmem:[%s6 + $0x58] sm:$0xff]
      %v6161 = vld [vmem:[%s6 + $0x60] sm:$0xff]
      %v6162 = vld [vmem:[%s6 + $0x68] sm:$0xff]
      %v6163 = vld [vmem:[%s6 + $0x70] sm:$0xff]
      %v6164 = vld [vmem:[%s6 + $0x78] sm:$0xff]
      %6165 = vmatpush.msra.mxu0 %v6164
      %6166 = vmatpush.msra.mxu0 %v6163
      %6167 = vmatpush.msra.mxu0 %v6162
      %6168 = vmatpush.msra.mxu0 %v6161
      %6169 = vmatpush.msra.mxu0 %v6160
      %6170 = vmatpush.msra.mxu0 %v6159
      %6171 = vmatpush.msra.mxu0 %v6158
      %6172 = vmatpush.msra.mxu0 %v6157
      %6173 = vmatpush.msra.mxu0 %v6156
      %6174 = vmatpush.msra.mxu0 %v6155
      %6175 = vmatpush.msra.mxu0 %v6154
      %6176 = vmatpush.msra.mxu0 %v6153
      %6177 = vmatpush.msra.mxu0 %v6152
      %6178 = vmatpush.msra.mxu0 %v6151
      %6179 = vmatpush.msra.mxu0 %v6150
      %6180 = vmatpush.msra.mxu0 %v6149
      %6181 = vmatmul.f32.gmra.mxu0 %v6148
      %v6182 = vpop.f32.mrf.mxu0
      %v6183 = vadd.f32 0.0, %v6182
      %6184 = vdwg.mxu0
      %v6185 = vmul.f32 %v6183, 0.00390625
      %v6186 = vperm.slane %v6185, 0
      %v6187 = vsub.f32 %v6078, %v6186
      %v6188 = vsub.f32 %v6079, %v6186
      %v6189 = vsub.f32 %v6080, %v6186
      %v6190 = vsub.f32 %v6081, %v6186
      %v6191 = vsub.f32 %v6082, %v6186
      %v6192 = vsub.f32 %v6083, %v6186
      %v6193 = vsub.f32 %v6084, %v6186
      %v6194 = vsub.f32 %v6085, %v6186
      %v6195 = vsub.f32 %v6086, %v6186
      %v6196 = vsub.f32 %v6087, %v6186
      %v6197 = vsub.f32 %v6088, %v6186
      %v6198 = vsub.f32 %v6089, %v6186
      %v6199 = vsub.f32 %v6090, %v6186
      %v6200 = vsub.f32 %v6091, %v6186
      %v6201 = vsub.f32 %v6092, %v6186
      %v6202 = vsub.f32 %v6093, %v6186
      %v6203 = vsub.f32 %v6094, %v6186
      %v6204 = vsub.f32 %v6095, %v6186
      %v6205 = vsub.f32 %v6096, %v6186
      %v6206 = vsub.f32 %v6097, %v6186
      %v6207 = vsub.f32 %v6098, %v6186
      %v6208 = vsub.f32 %v6099, %v6186
      %v6209 = vsub.f32 %v6100, %v6186
      %v6210 = vsub.f32 %v6101, %v6186
      %v6211 = vsub.f32 %v6102, %v6186
      %v6212 = vsub.f32 %v6103, %v6186
      %v6213 = vsub.f32 %v6104, %v6186
      %v6214 = vsub.f32 %v6105, %v6186
      %v6215 = vsub.f32 %v6106, %v6186
      %v6216 = vsub.f32 %v6107, %v6186
      %v6217 = vsub.f32 %v6108, %v6186
      %v6218 = vsub.f32 %v6109, %v6186
      %v6219 = vmul.f32 %v6187, %v6187
      %v6220 = vmul.f32 %v6188, %v6188
      %v6221 = vmul.f32 %v6189, %v6189
      %v6222 = vmul.f32 %v6190, %v6190
      %v6223 = vmul.f32 %v6191, %v6191
      %v6224 = vmul.f32 %v6192, %v6192
      %v6225 = vmul.f32 %v6193, %v6193
      %v6226 = vmul.f32 %v6194, %v6194
      %v6227 = vmul.f32 %v6195, %v6195
      %v6228 = vmul.f32 %v6196, %v6196
      %v6229 = vmul.f32 %v6197, %v6197
      %v6230 = vmul.f32 %v6198, %v6198
      %v6231 = vmul.f32 %v6199, %v6199
      %v6232 = vmul.f32 %v6200, %v6200
      %v6233 = vmul.f32 %v6201, %v6201
      %v6234 = vmul.f32 %v6202, %v6202
      %v6235 = vmul.f32 %v6203, %v6203
      %v6236 = vmul.f32 %v6204, %v6204
      %v6237 = vmul.f32 %v6205, %v6205
      %v6238 = vmul.f32 %v6206, %v6206
      %v6239 = vmul.f32 %v6207, %v6207
      %v6240 = vmul.f32 %v6208, %v6208
      %v6241 = vmul.f32 %v6209, %v6209
      %v6242 = vmul.f32 %v6210, %v6210
      %v6243 = vmul.f32 %v6211, %v6211
      %v6244 = vmul.f32 %v6212, %v6212
      %v6245 = vmul.f32 %v6213, %v6213
      %v6246 = vmul.f32 %v6214, %v6214
      %v6247 = vmul.f32 %v6215, %v6215
      %v6248 = vmul.f32 %v6216, %v6216
      %v6249 = vmul.f32 %v6217, %v6217
      %v6250 = vmul.f32 %v6218, %v6218
      %v6251 = vadd.f32 %v6219, %v6220
      %v6252 = vadd.f32 %v6251, %v6221
      %v6253 = vadd.f32 %v6252, %v6222
      %v6254 = vadd.f32 %v6253, %v6223
      %v6255 = vadd.f32 %v6254, %v6224
      %v6256 = vadd.f32 %v6255, %v6225
      %v6257 = vadd.f32 %v6256, %v6226
      %v6258 = vadd.f32 %v6257, %v6227
      %v6259 = vadd.f32 %v6258, %v6228
      %v6260 = vadd.f32 %v6259, %v6229
      %v6261 = vadd.f32 %v6260, %v6230
      %v6262 = vadd.f32 %v6261, %v6231
      %v6263 = vadd.f32 %v6262, %v6232
      %v6264 = vadd.f32 %v6263, %v6233
      %v6265 = vadd.f32 %v6264, %v6234
      %v6266 = vadd.f32 %v6265, %v6235
      %v6267 = vadd.f32 %v6266, %v6236
      %v6268 = vadd.f32 %v6267, %v6237
      %v6269 = vadd.f32 %v6268, %v6238
      %v6270 = vadd.f32 %v6269, %v6239
      %v6271 = vadd.f32 %v6270, %v6240
      %v6272 = vadd.f32 %v6271, %v6241
      %v6273 = vadd.f32 %v6272, %v6242
      %v6274 = vadd.f32 %v6273, %v6243
      %v6275 = vadd.f32 %v6274, %v6244
      %v6276 = vadd.f32 %v6275, %v6245
      %v6277 = vadd.f32 %v6276, %v6246
      %v6278 = vadd.f32 %v6277, %v6247
      %v6279 = vadd.f32 %v6278, %v6248
      %v6280 = vadd.f32 %v6279, %v6249
      %v6281 = vadd.f32 %v6280, %v6250
      %v6282 = vrot.slane %v6281, 4
      %v6283 = vadd.f32 %v6281, %v6282
      %v6284 = vrot.slane %v6283, 2
      %v6285 = vadd.f32 %v6283, %v6284
      %v6286 = vrot.slane %v6285, 1
      %v6287 = vadd.f32 %v6285, %v6286
      %6288 = vmatpush.msra.mxu0 %v6164
      %6289 = vmatpush.msra.mxu0 %v6163
      %6290 = vmatpush.msra.mxu0 %v6162
      %6291 = vmatpush.msra.mxu0 %v6161
      %6292 = vmatpush.msra.mxu0 %v6160
      %6293 = vmatpush.msra.mxu0 %v6159
      %6294 = vmatpush.msra.mxu0 %v6158
      %6295 = vmatpush.msra.mxu0 %v6157
      %6296 = vmatpush.msra.mxu0 %v6156
      %6297 = vmatpush.msra.mxu0 %v6155
      %6298 = vmatpush.msra.mxu0 %v6154
      %6299 = vmatpush.msra.mxu0 %v6153
      %6300 = vmatpush.msra.mxu0 %v6152
      %6301 = vmatpush.msra.mxu0 %v6151
      %6302 = vmatpush.msra.mxu0 %v6150
      %6303 = vmatpush.msra.mxu0 %v6149
      %6304 = vmatmul.f32.gmra.mxu0 %v6287
      %v6305 = vpop.f32.mrf.mxu0
      %v6306 = vadd.f32 0.0, %v6305
      %6307 = vdwg.mxu0
      %v6308 = vmul.f32 %v6306, 0.00390625
      %v6309 = vadd.f32 %v6308, 1e-05
      %v6310 = vrsqrt.pop %v6309
      %v6311 = vmul.f32 %v6310, %v6309
      %v6312 = vmul.f32 %v6311, %v6310
      %v6313 = vmul.f32 0.5, %v6312
      %v6314 = vsub.f32 1.5, %v6313
      %v6315 = vmul.f32 %v6310, %v6314
      %vm6316 = vweird.f32 %v6309
      %vm6317 = vweird.f32 %v6310
      %vm6318 = vmor %vm6316, %vm6317
      %v6319 = vsel %vm6318, %v6310, %v6315
      %v6320 = vmul.f32 %v6319, %v6110
      %v6321 = vmul.f32 %v6185, %v6320
      %v6322 = vsub.f32 %v6111, %v6321
      %v6323 = vperm.slane %v6320, 0
      %v6324 = vmul.f32 %v6078, %v6323
      %v6325 = vmul.f32 %v6079, %v6323
      %v6326 = vmul.f32 %v6080, %v6323
      %v6327 = vmul.f32 %v6081, %v6323
      %v6328 = vmul.f32 %v6082, %v6323
      %v6329 = vmul.f32 %v6083, %v6323
      %v6330 = vmul.f32 %v6084, %v6323
      %v6331 = vmul.f32 %v6085, %v6323
      %v6332 = vmul.f32 %v6086, %v6323
      %v6333 = vmul.f32 %v6087, %v6323
      %v6334 = vmul.f32 %v6088, %v6323
      %v6335 = vmul.f32 %v6089, %v6323
      %v6336 = vmul.f32 %v6090, %v6323
      %v6337 = vmul.f32 %v6091, %v6323
      %v6338 = vmul.f32 %v6092, %v6323
      %v6339 = vmul.f32 %v6093, %v6323
      %v6340 = vmul.f32 %v6094, %v6323
      %v6341 = vmul.f32 %v6095, %v6323
      %v6342 = vmul.f32 %v6096, %v6323
      %v6343 = vmul.f32 %v6097, %v6323
      %v6344 = vmul.f32 %v6098, %v6323
      %v6345 = vmul.f32 %v6099, %v6323
      %v6346 = vmul.f32 %v6100, %v6323
      %v6347 = vmul.f32 %v6101, %v6323
      %v6348 = vmul.f32 %v6102, %v6323
      %v6349 = vmul.f32 %v6103, %v6323
      %v6350 = vmul.f32 %v6104, %v6323
      %v6351 = vmul.f32 %v6105, %v6323
      %v6352 = vmul.f32 %v6106, %v6323
      %v6353 = vmul.f32 %v6107, %v6323
      %v6354 = vmul.f32 %v6108, %v6323
      %v6355 = vmul.f32 %v6109, %v6323
      %v6357 = vperm.slane %v6322, 0
      %v6359 = vadd.f32 %v6324, %v6357
      %v6360 = vadd.f32 %v6325, %v6357
      %v6361 = vadd.f32 %v6326, %v6357
      %v6362 = vadd.f32 %v6327, %v6357
      %v6363 = vadd.f32 %v6328, %v6357
      %v6364 = vadd.f32 %v6329, %v6357
      %v6365 = vadd.f32 %v6330, %v6357
      %v6366 = vadd.f32 %v6331, %v6357
      %v6367 = vadd.f32 %v6332, %v6357
      %v6368 = vadd.f32 %v6333, %v6357
      %v6369 = vadd.f32 %v6334, %v6357
      %v6370 = vadd.f32 %v6335, %v6357
      %v6371 = vadd.f32 %v6336, %v6357
      %v6372 = vadd.f32 %v6337, %v6357
      %v6373 = vadd.f32 %v6338, %v6357
      %v6374 = vadd.f32 %v6339, %v6357
      %v6375 = vadd.f32 %v6340, %v6357
      %v6376 = vadd.f32 %v6341, %v6357
      %v6377 = vadd.f32 %v6342, %v6357
      %v6378 = vadd.f32 %v6343, %v6357
      %v6379 = vadd.f32 %v6344, %v6357
      %v6380 = vadd.f32 %v6345, %v6357
      %v6381 = vadd.f32 %v6346, %v6357
      %v6382 = vadd.f32 %v6347, %v6357
      %v6383 = vadd.f32 %v6348, %v6357
      %v6384 = vadd.f32 %v6349, %v6357
      %v6385 = vadd.f32 %v6350, %v6357
      %v6386 = vadd.f32 %v6351, %v6357
      %v6387 = vadd.f32 %v6352, %v6357
      %v6388 = vadd.f32 %v6353, %v6357
      %v6389 = vadd.f32 %v6354, %v6357
      %v6390 = vadd.f32 %v6355, %v6357
      %v6391 = vmax.f32 %v6359, 0.0
      %v6392 = vmax.f32 %v6360, 0.0
      %v6393 = vmax.f32 %v6361, 0.0
      %v6394 = vmax.f32 %v6362, 0.0
      %v6395 = vmax.f32 %v6363, 0.0
      %v6396 = vmax.f32 %v6364, 0.0
      %v6397 = vmax.f32 %v6365, 0.0
      %v6398 = vmax.f32 %v6366, 0.0
      %v6399 = vmax.f32 %v6367, 0.0
      %v6400 = vmax.f32 %v6368, 0.0
      %v6401 = vmax.f32 %v6369, 0.0
      %v6402 = vmax.f32 %v6370, 0.0
      %v6403 = vmax.f32 %v6371, 0.0
      %v6404 = vmax.f32 %v6372, 0.0
      %v6405 = vmax.f32 %v6373, 0.0
      %v6406 = vmax.f32 %v6374, 0.0
      %v6407 = vmax.f32 %v6375, 0.0
      %v6408 = vmax.f32 %v6376, 0.0
      %v6409 = vmax.f32 %v6377, 0.0
      %v6410 = vmax.f32 %v6378, 0.0
      %v6411 = vmax.f32 %v6379, 0.0
      %v6412 = vmax.f32 %v6380, 0.0
      %v6413 = vmax.f32 %v6381, 0.0
      %v6414 = vmax.f32 %v6382, 0.0
      %v6415 = vmax.f32 %v6383, 0.0
      %v6416 = vmax.f32 %v6384, 0.0
      %v6417 = vmax.f32 %v6385, 0.0
      %v6418 = vmax.f32 %v6386, 0.0
      %v6419 = vmax.f32 %v6387, 0.0
      %v6420 = vmax.f32 %v6388, 0.0
      %v6421 = vmax.f32 %v6389, 0.0
      %v6422 = vmax.f32 %v6390, 0.0
      %v6423 = vpack.c.bf16 %v6391, %v6391
      %v6424 = vpack.c.bf16 %v6392, %v6392
      %v6425 = vpack.c.bf16 %v6393, %v6393
      %v6426 = vpack.c.bf16 %v6394, %v6394
      %v6427 = vpack.c.bf16 %v6395, %v6395
      %v6428 = vpack.c.bf16 %v6396, %v6396
      %v6429 = vpack.c.bf16 %v6397, %v6397
      %v6430 = vpack.c.bf16 %v6398, %v6398
      %v6431 = vpack.c.bf16 %v6399, %v6399
      %v6432 = vpack.c.bf16 %v6400, %v6400
      %v6433 = vpack.c.bf16 %v6401, %v6401
      %v6434 = vpack.c.bf16 %v6402, %v6402
      %v6435 = vpack.c.bf16 %v6403, %v6403
      %v6436 = vpack.c.bf16 %v6404, %v6404
      %v6437 = vpack.c.bf16 %v6405, %v6405
      %v6438 = vpack.c.bf16 %v6406, %v6406
      %v6439 = vpack.c.bf16 %v6407, %v6407
      %v6440 = vpack.c.bf16 %v6408, %v6408
      %v6441 = vpack.c.bf16 %v6409, %v6409
      %v6442 = vpack.c.bf16 %v6410, %v6410
      %v6443 = vpack.c.bf16 %v6411, %v6411
      %v6444 = vpack.c.bf16 %v6412, %v6412
      %v6445 = vpack.c.bf16 %v6413, %v6413
      %v6446 = vpack.c.bf16 %v6414, %v6414
      %v6447 = vpack.c.bf16 %v6415, %v6415
      %v6448 = vpack.c.bf16 %v6416, %v6416
      %v6449 = vpack.c.bf16 %v6417, %v6417
      %v6450 = vpack.c.bf16 %v6418, %v6418
      %v6451 = vpack.c.bf16 %v6419, %v6419
      %v6452 = vpack.c.bf16 %v6420, %v6420
      %v6453 = vpack.c.bf16 %v6421, %v6421
      %v6454 = vpack.c.bf16 %v6422, %v6422
      %v6456 = vshrl.u32 %v6423, 16
      %v6458 = vrot.slane %v6456, 7
      %v6459 = vshll.u32 %v6423, 16
      %v6461 = vor.u32 %v6458, %v6459
      %v6462 = vrot.slane %v6458, 4
      %v6464 = vshrl.u32 %v6424, 16
      %v6466 = vrot.slane %v6464, 7
      %v6467 = vshll.u32 %v6424, 16
      %v6469 = vor.u32 %v6466, %v6467
      %v6470 = vsel %vm827, %v6462, %v6469
      %v6471 = vrot.slane %v6466, 4
      %v6473 = vshrl.u32 %v6425, 16
      %v6475 = vrot.slane %v6473, 7
      %v6476 = vshll.u32 %v6425, 16
      %v6478 = vor.u32 %v6475, %v6476
      %v6479 = vsel %vm827, %v6471, %v6478
      %v6480 = vrot.slane %v6475, 4
      %v6482 = vshrl.u32 %v6426, 16
      %v6484 = vrot.slane %v6482, 7
      %v6485 = vshll.u32 %v6426, 16
      %v6487 = vor.u32 %v6484, %v6485
      %v6488 = vsel %vm827, %v6480, %v6487
      %v6489 = vrot.slane %v6484, 4
      %v6491 = vshrl.u32 %v6427, 16
      %v6493 = vrot.slane %v6491, 7
      %v6494 = vshll.u32 %v6427, 16
      %v6496 = vor.u32 %v6493, %v6494
      %v6497 = vsel %vm827, %v6489, %v6496
      %v6498 = vrot.slane %v6493, 4
      %v6500 = vshrl.u32 %v6428, 16
      %v6502 = vrot.slane %v6500, 7
      %v6503 = vshll.u32 %v6428, 16
      %v6505 = vor.u32 %v6502, %v6503
      %v6506 = vsel %vm827, %v6498, %v6505
      %v6507 = vrot.slane %v6502, 4
      %v6509 = vshrl.u32 %v6429, 16
      %v6511 = vrot.slane %v6509, 7
      %v6512 = vshll.u32 %v6429, 16
      %v6514 = vor.u32 %v6511, %v6512
      %v6515 = vsel %vm827, %v6507, %v6514
      %v6516 = vrot.slane %v6511, 4
      %v6518 = vshrl.u32 %v6430, 16
      %v6520 = vrot.slane %v6518, 7
      %v6521 = vshll.u32 %v6430, 16
      %v6523 = vor.u32 %v6520, %v6521
      %v6524 = vsel %vm827, %v6516, %v6523
      %v6525 = vrot.slane %v6520, 4
      %v6527 = vshrl.u32 %v6431, 16
      %v6529 = vrot.slane %v6527, 7
      %v6530 = vshll.u32 %v6431, 16
      %v6532 = vor.u32 %v6529, %v6530
      %v6533 = vsel %vm827, %v6525, %v6532
      %v6534 = vrot.slane %v6529, 4
      %v6536 = vshrl.u32 %v6432, 16
      %v6538 = vrot.slane %v6536, 7
      %v6539 = vshll.u32 %v6432, 16
      %v6541 = vor.u32 %v6538, %v6539
      %v6542 = vsel %vm827, %v6534, %v6541
      %v6543 = vrot.slane %v6538, 4
      %v6545 = vshrl.u32 %v6433, 16
      %v6547 = vrot.slane %v6545, 7
      %v6548 = vshll.u32 %v6433, 16
      %v6550 = vor.u32 %v6547, %v6548
      %v6551 = vsel %vm827, %v6543, %v6550
      %v6552 = vrot.slane %v6547, 4
      %v6554 = vshrl.u32 %v6434, 16
      %v6556 = vrot.slane %v6554, 7
      %v6557 = vshll.u32 %v6434, 16
      %v6559 = vor.u32 %v6556, %v6557
      %v6560 = vsel %vm827, %v6552, %v6559
      %v6561 = vrot.slane %v6556, 4
      %v6563 = vshrl.u32 %v6435, 16
      %v6565 = vrot.slane %v6563, 7
      %v6566 = vshll.u32 %v6435, 16
      %v6568 = vor.u32 %v6565, %v6566
      %v6569 = vsel %vm827, %v6561, %v6568
      %v6570 = vrot.slane %v6565, 4
      %v6572 = vshrl.u32 %v6436, 16
      %v6574 = vrot.slane %v6572, 7
      %v6575 = vshll.u32 %v6436, 16
      %v6577 = vor.u32 %v6574, %v6575
      %v6578 = vsel %vm827, %v6570, %v6577
      %v6579 = vrot.slane %v6574, 4
      %v6581 = vshrl.u32 %v6437, 16
      %v6583 = vrot.slane %v6581, 7
      %v6584 = vshll.u32 %v6437, 16
      %v6586 = vor.u32 %v6583, %v6584
      %v6587 = vsel %vm827, %v6579, %v6586
      %v6588 = vrot.slane %v6583, 4
      %v6590 = vshrl.u32 %v6438, 16
      %v6592 = vrot.slane %v6590, 7
      %v6593 = vshll.u32 %v6438, 16
      %v6595 = vor.u32 %v6592, %v6593
      %v6596 = vsel %vm827, %v6588, %v6595
      %v6597 = vrot.slane %v6592, 4
      %v6599 = vshrl.u32 %v6439, 16
      %v6601 = vrot.slane %v6599, 7
      %v6602 = vshll.u32 %v6439, 16
      %v6604 = vor.u32 %v6601, %v6602
      %v6605 = vsel %vm827, %v6597, %v6604
      %v6606 = vrot.slane %v6601, 4
      %v6608 = vshrl.u32 %v6440, 16
      %v6610 = vrot.slane %v6608, 7
      %v6611 = vshll.u32 %v6440, 16
      %v6613 = vor.u32 %v6610, %v6611
      %v6614 = vsel %vm827, %v6606, %v6613
      %v6615 = vrot.slane %v6610, 4
      %v6617 = vshrl.u32 %v6441, 16
      %v6619 = vrot.slane %v6617, 7
      %v6620 = vshll.u32 %v6441, 16
      %v6622 = vor.u32 %v6619, %v6620
      %v6623 = vsel %vm827, %v6615, %v6622
      %v6624 = vrot.slane %v6619, 4
      %v6626 = vshrl.u32 %v6442, 16
      %v6628 = vrot.slane %v6626, 7
      %v6629 = vshll.u32 %v6442, 16
      %v6631 = vor.u32 %v6628, %v6629
      %v6632 = vsel %vm827, %v6624, %v6631
      %v6633 = vrot.slane %v6628, 4
      %v6635 = vshrl.u32 %v6443, 16
      %v6637 = vrot.slane %v6635, 7
      %v6638 = vshll.u32 %v6443, 16
      %v6640 = vor.u32 %v6637, %v6638
      %v6641 = vsel %vm827, %v6633, %v6640
      %v6642 = vrot.slane %v6637, 4
      %v6644 = vshrl.u32 %v6444, 16
      %v6646 = vrot.slane %v6644, 7
      %v6647 = vshll.u32 %v6444, 16
      %v6649 = vor.u32 %v6646, %v6647
      %v6650 = vsel %vm827, %v6642, %v6649
      %v6651 = vrot.slane %v6646, 4
      %v6653 = vshrl.u32 %v6445, 16
      %v6655 = vrot.slane %v6653, 7
      %v6656 = vshll.u32 %v6445, 16
      %v6658 = vor.u32 %v6655, %v6656
      %v6659 = vsel %vm827, %v6651, %v6658
      %v6660 = vrot.slane %v6655, 4
      %v6662 = vshrl.u32 %v6446, 16
      %v6664 = vrot.slane %v6662, 7
      %v6665 = vshll.u32 %v6446, 16
      %v6667 = vor.u32 %v6664, %v6665
      %v6668 = vsel %vm827, %v6660, %v6667
      %v6669 = vrot.slane %v6664, 4
      %v6671 = vshrl.u32 %v6447, 16
      %v6673 = vrot.slane %v6671, 7
      %v6674 = vshll.u32 %v6447, 16
      %v6676 = vor.u32 %v6673, %v6674
      %v6677 = vsel %vm827, %v6669, %v6676
      %v6678 = vrot.slane %v6673, 4
      %v6680 = vshrl.u32 %v6448, 16
      %v6682 = vrot.slane %v6680, 7
      %v6683 = vshll.u32 %v6448, 16
      %v6685 = vor.u32 %v6682, %v6683
      %v6686 = vsel %vm827, %v6678, %v6685
      %v6687 = vrot.slane %v6682, 4
      %v6689 = vshrl.u32 %v6449, 16
      %v6691 = vrot.slane %v6689, 7
      %v6692 = vshll.u32 %v6449, 16
      %v6694 = vor.u32 %v6691, %v6692
      %v6695 = vsel %vm827, %v6687, %v6694
      %v6696 = vrot.slane %v6691, 4
      %v6698 = vshrl.u32 %v6450, 16
      %v6700 = vrot.slane %v6698, 7
      %v6701 = vshll.u32 %v6450, 16
      %v6703 = vor.u32 %v6700, %v6701
      %v6704 = vsel %vm827, %v6696, %v6703
      %v6705 = vrot.slane %v6700, 4
      %v6707 = vshrl.u32 %v6451, 16
      %v6709 = vrot.slane %v6707, 7
      %v6710 = vshll.u32 %v6451, 16
      %v6712 = vor.u32 %v6709, %v6710
      %v6713 = vsel %vm827, %v6705, %v6712
      %v6714 = vrot.slane %v6709, 4
      %v6716 = vshrl.u32 %v6452, 16
      %v6718 = vrot.slane %v6716, 7
      %v6719 = vshll.u32 %v6452, 16
      %v6721 = vor.u32 %v6718, %v6719
      %v6722 = vsel %vm827, %v6714, %v6721
      %v6723 = vrot.slane %v6718, 4
      %v6725 = vshrl.u32 %v6453, 16
      %v6727 = vrot.slane %v6725, 7
      %v6728 = vshll.u32 %v6453, 16
      %v6730 = vor.u32 %v6727, %v6728
      %v6731 = vsel %vm827, %v6723, %v6730
      %v6732 = vrot.slane %v6727, 4
      %v6734 = vshrl.u32 %v6454, 16
      %v6736 = vrot.slane %v6734, 7
      %v6737 = vshll.u32 %v6454, 16
      %v6739 = vor.u32 %v6736, %v6737
      %v6740 = vsel %vm827, %v6732, %v6739
      %v6741 = vrot.slane %v6736, 4
      %v6775 = vld [vmem:[#allocation2 + $0x8] sm:$0xf]
      %v6776 = vsel %vm442, %v6461, %v6775
      %6777 = vst [vmem:[#allocation2 + $0x8] sm:$0xf] %v6776
      %6778 = vst [vmem:[#allocation2 + $0xc] sm:$0xf] %v6470
      %6779 = vst [vmem:[#allocation2 + $0x10] sm:$0xf] %v6479
      %6780 = vst [vmem:[#allocation2 + $0x14] sm:$0xf] %v6488
      %6781 = vst [vmem:[#allocation2 + $0x18] sm:$0xf] %v6497
      %6782 = vst [vmem:[#allocation2 + $0x1c] sm:$0xf] %v6506
      %6783 = vst [vmem:[#allocation2 + $0x20] sm:$0xf] %v6515
      %6784 = vst [vmem:[#allocation2 + $0x24] sm:$0xf] %v6524
      %6785 = vst [vmem:[#allocation2 + $0x28] sm:$0xf] %v6533
      %6786 = vst [vmem:[#allocation2 + $0x2c] sm:$0xf] %v6542
      %6787 = vst [vmem:[#allocation2 + $0x30] sm:$0xf] %v6551
      %6788 = vst [vmem:[#allocation2 + $0x34] sm:$0xf] %v6560
      %6789 = vst [vmem:[#allocation2 + $0x38] sm:$0xf] %v6569
      %6790 = vst [vmem:[#allocation2 + $0x3c] sm:$0xf] %v6578
      %6791 = vst [vmem:[#allocation2 + $0x40] sm:$0xf] %v6587
      %6792 = vst [vmem:[#allocation2 + $0x44] sm:$0xf] %v6596
      %6793 = vst [vmem:[#allocation2 + $0x48] sm:$0xf] %v6605
      %6794 = vst [vmem:[#allocation2 + $0x4c] sm:$0xf] %v6614
      %6795 = vst [vmem:[#allocation2 + $0x50] sm:$0xf] %v6623
      %6796 = vst [vmem:[#allocation2 + $0x54] sm:$0xf] %v6632
      %6797 = vst [vmem:[#allocation2 + $0x58] sm:$0xf] %v6641
      %6798 = vst [vmem:[#allocation2 + $0x5c] sm:$0xf] %v6650
      %6799 = vst [vmem:[#allocation2 + $0x60] sm:$0xf] %v6659
      %6800 = vst [vmem:[#allocation2 + $0x64] sm:$0xf] %v6668
      %6801 = vst [vmem:[#allocation2 + $0x68] sm:$0xf] %v6677
      %6802 = vst [vmem:[#allocation2 + $0x6c] sm:$0xf] %v6686
      %6803 = vst [vmem:[#allocation2 + $0x70] sm:$0xf] %v6695
      %6804 = vst [vmem:[#allocation2 + $0x74] sm:$0xf] %v6704
      %6805 = vst [vmem:[#allocation2 + $0x78] sm:$0xf] %v6713
      %6806 = vst [vmem:[#allocation2 + $0x7c] sm:$0xf] %v6722
      %6807 = vst [vmem:[#allocation2 + $0x80] sm:$0xf] %v6731
      %6808 = vst [vmem:[#allocation2 + $0x84] sm:$0xf] %v6740
      %v6809 = vld [vmem:[#allocation2 + $0x88] sm:$0x1]
      %v6810 = vsel %vm436, %v6741, %v6809
      %6811 = vst [vmem:[#allocation2 + $0x88] sm:$0x1] %v6810
      %v6812 = vld [vmem:[%s327] sm:$0xff]
      %v6813 = vld [vmem:[%s327 + $0x8] sm:$0xff]
      %v6814 = vld [vmem:[%s327 + $0x10] sm:$0xff]
      %v6815 = vld [vmem:[%s327 + $0x18] sm:$0xff]
      %v6816 = vld [vmem:[%s327 + $0x20] sm:$0xff]
      %v6817 = vld [vmem:[%s327 + $0x28] sm:$0xff]
      %v6818 = vld [vmem:[%s327 + $0x30] sm:$0xff]
      %v6819 = vld [vmem:[%s327 + $0x38] sm:$0xff]
      %v6820 = vld [vmem:[%s327 + $0x40] sm:$0xff]
      %v6821 = vld [vmem:[%s327 + $0x48] sm:$0xff]
      %v6822 = vld [vmem:[%s327 + $0x50] sm:$0xff]
      %v6823 = vld [vmem:[%s327 + $0x58] sm:$0xff]
      %v6824 = vld [vmem:[%s327 + $0x60] sm:$0xff]
      %v6825 = vld [vmem:[%s327 + $0x68] sm:$0xff]
      %v6826 = vld [vmem:[%s327 + $0x70] sm:$0xff]
      %v6827 = vld [vmem:[%s327 + $0x78] sm:$0xff]
      %v6828 = vld [vmem:[%s327 + $0x80] sm:$0xff]
      %v6829 = vld [vmem:[%s327 + $0x88] sm:$0xff]
      %v6830 = vld [vmem:[%s327 + $0x90] sm:$0xff]
      %v6831 = vld [vmem:[%s327 + $0x98] sm:$0xff]
      %v6832 = vld [vmem:[%s327 + $0xa0] sm:$0xff]
      %v6833 = vld [vmem:[%s327 + $0xa8] sm:$0xff]
      %v6834 = vld [vmem:[%s327 + $0xb0] sm:$0xff]
      %v6835 = vld [vmem:[%s327 + $0xb8] sm:$0xff]
      %v6836 = vld [vmem:[%s327 + $0xc0] sm:$0xff]
      %v6837 = vld [vmem:[%s327 + $0xc8] sm:$0xff]
      %v6838 = vld [vmem:[%s327 + $0xd0] sm:$0xff]
      %v6839 = vld [vmem:[%s327 + $0xd8] sm:$0xff]
      %v6840 = vld [vmem:[%s327 + $0xe0] sm:$0xff]
      %v6841 = vld [vmem:[%s327 + $0xe8] sm:$0xff]
      %v6842 = vld [vmem:[%s327 + $0xf0] sm:$0xff]
      %v6843 = vld [vmem:[%s327 + $0xf8] sm:$0xff]
      %6844 = vst [vmem:[#allocation3] sm:$0xff] %v6812
      %6845 = vst [vmem:[#allocation3 + $0x8] sm:$0xff] %v6813
      %6846 = vst [vmem:[#allocation3 + $0x10] sm:$0xff] %v6814
      %6847 = vst [vmem:[#allocation3 + $0x18] sm:$0xff] %v6815
      %6848 = vst [vmem:[#allocation3 + $0x20] sm:$0xff] %v6816
      %6849 = vst [vmem:[#allocation3 + $0x28] sm:$0xff] %v6817
      %6850 = vst [vmem:[#allocation3 + $0x30] sm:$0xff] %v6818
      %6851 = vst [vmem:[#allocation3 + $0x38] sm:$0xff] %v6819
      %6852 = vst [vmem:[#allocation3 + $0x40] sm:$0xff] %v6820
      %6853 = vst [vmem:[#allocation3 + $0x48] sm:$0xff] %v6821
      %6854 = vst [vmem:[#allocation3 + $0x50] sm:$0xff] %v6822
      %6855 = vst [vmem:[#allocation3 + $0x58] sm:$0xff] %v6823
      %6856 = vst [vmem:[#allocation3 + $0x60] sm:$0xff] %v6824
      %6857 = vst [vmem:[#allocation3 + $0x68] sm:$0xff] %v6825
      %6858 = vst [vmem:[#allocation3 + $0x70] sm:$0xff] %v6826
      %6859 = vst [vmem:[#allocation3 + $0x78] sm:$0xff] %v6827
      %6860 = vst [vmem:[#allocation3 + $0x80] sm:$0xff] %v6828
      %6861 = vst [vmem:[#allocation3 + $0x88] sm:$0xff] %v6829
      %6862 = vst [vmem:[#allocation3 + $0x90] sm:$0xff] %v6830
      %6863 = vst [vmem:[#allocation3 + $0x98] sm:$0xff] %v6831
      %6864 = vst [vmem:[#allocation3 + $0xa0] sm:$0xff] %v6832
      %6865 = vst [vmem:[#allocation3 + $0xa8] sm:$0xff] %v6833
      %6866 = vst [vmem:[#allocation3 + $0xb0] sm:$0xff] %v6834
      %6867 = vst [vmem:[#allocation3 + $0xb8] sm:$0xff] %v6835
      %6868 = vst [vmem:[#allocation3 + $0xc0] sm:$0xff] %v6836
      %6869 = vst [vmem:[#allocation3 + $0xc8] sm:$0xff] %v6837
      %6870 = vst [vmem:[#allocation3 + $0xd0] sm:$0xff] %v6838
      %6871 = vst [vmem:[#allocation3 + $0xd8] sm:$0xff] %v6839
      %6872 = vst [vmem:[#allocation3 + $0xe0] sm:$0xff] %v6840
      %6873 = vst [vmem:[#allocation3 + $0xe8] sm:$0xff] %v6841
      %6874 = vst [vmem:[#allocation3 + $0xf0] sm:$0xff] %v6842
      %6875 = vst [vmem:[#allocation3 + $0xf8] sm:$0xff] %v6843
      %v6876 = vld [vmem:[#allocation2] sm:$0xf]
      %v6877 = vld [vmem:[#allocation2 + $0x4] sm:$0xf]
      %v6878 = vld [vmem:[#allocation2 + $0x8] sm:$0xf]
      %v6879 = vld [vmem:[#allocation2 + $0xc] sm:$0xf]
      %v6880 = vld [vmem:[#allocation2 + $0x10] sm:$0xf]
      %v6881 = vld [vmem:[#allocation2 + $0x14] sm:$0xf]
      %v6882 = vld [vmem:[#allocation2 + $0x18] sm:$0xf]
      %v6883 = vld [vmem:[#allocation2 + $0x1c] sm:$0xf]
      %v6884 = vld [vmem:[#allocation2 + $0x20] sm:$0xf]
      %v6885 = vld [vmem:[#allocation2 + $0x24] sm:$0xf]
      %v6886 = vld [vmem:[#allocation2 + $0x28] sm:$0xf]
      %v6887 = vld [vmem:[#allocation2 + $0x2c] sm:$0xf]
      %v6888 = vld [vmem:[#allocation2 + $0x30] sm:$0xf]
      %v6889 = vld [vmem:[#allocation2 + $0x34] sm:$0xf]
      %v6890 = vld [vmem:[#allocation2 + $0x38] sm:$0xf]
      %v6891 = vld [vmem:[#allocation2 + $0x3c] sm:$0xf]
      %v6892 = vld [vmem:[#allocation2 + $0x40] sm:$0xf]
      %v6893 = vld [vmem:[#allocation2 + $0x44] sm:$0xf]
      %v6894 = vld [vmem:[#allocation2 + $0x48] sm:$0xf]
      %v6895 = vld [vmem:[#allocation2 + $0x4c] sm:$0xf]
      %v6896 = vld [vmem:[#allocation2 + $0x50] sm:$0xf]
      %v6897 = vld [vmem:[#allocation2 + $0x54] sm:$0xf]
      %v6898 = vld [vmem:[#allocation2 + $0x58] sm:$0xf]
      %v6899 = vld [vmem:[#allocation2 + $0x5c] sm:$0xf]
      %v6900 = vld [vmem:[#allocation2 + $0x60] sm:$0xf]
      %v6901 = vld [vmem:[#allocation2 + $0x64] sm:$0xf]
      %v6902 = vld [vmem:[#allocation2 + $0x68] sm:$0xf]
      %v6903 = vld [vmem:[#allocation2 + $0x6c] sm:$0xf]
      %v6904 = vld [vmem:[#allocation2 + $0x70] sm:$0xf]
      %v6905 = vld [vmem:[#allocation2 + $0x74] sm:$0xf]
      %v6906 = vld [vmem:[#allocation2 + $0x78] sm:$0xf]
      %v6907 = vld [vmem:[#allocation2 + $0x7c] sm:$0xf]
      %v6908 = vsel %vm1409, %v6876, 0
      %v6909 = vsel %vm1410, %v6877, 0
      %v6910 = vsel %vm1411, %v6878, 0
      %v6911 = vsel %vm1412, %v6879, 0
      %v6912 = vsel %vm1413, %v6880, 0
      %v6913 = vsel %vm1414, %v6881, 0
      %v6914 = vsel %vm1415, %v6882, 0
      %v6915 = vsel %vm1416, %v6883, 0
      %v6916 = vsel %vm1417, %v6884, 0
      %v6917 = vsel %vm1418, %v6885, 0
      %v6918 = vsel %vm1419, %v6886, 0
      %v6919 = vsel %vm1420, %v6887, 0
      %v6920 = vsel %vm1421, %v6888, 0
      %v6921 = vsel %vm1422, %v6889, 0
      %v6922 = vsel %vm1423, %v6890, 0
      %v6923 = vsel %vm1424, %v6891, 0
      %v6924 = vsel %vm1425, %v6892, 0
      %v6925 = vsel %vm1426, %v6893, 0
      %v6926 = vsel %vm1427, %v6894, 0
      %v6927 = vsel %vm1428, %v6895, 0
      %v6928 = vsel %vm1429, %v6896, 0
      %v6929 = vsel %vm1430, %v6897, 0
      %v6930 = vsel %vm1431, %v6898, 0
      %v6931 = vsel %vm1432, %v6899, 0
      %v6932 = vsel %vm1433, %v6900, 0
      %v6933 = vsel %vm1434, %v6901, 0
      %v6934 = vsel %vm1435, %v6902, 0
      %v6935 = vsel %vm1436, %v6903, 0
      %v6936 = vsel %vm1437, %v6904, 0
      %v6937 = vsel %vm1438, %v6905, 0
      %v6938 = vsel %vm1439, %v6906, 0
      %v6939 = vsel %vm1440, %v6907, 0
      %v6940 = vld [vmem:[#allocation3] sm:$0xff]
      %v6941 = vld [vmem:[#allocation3 + $0x8] sm:$0xff]
      %v6942 = vld [vmem:[#allocation3 + $0x10] sm:$0xff]
      %v6943 = vld [vmem:[#allocation3 + $0x18] sm:$0xff]
      %v6944 = vld [vmem:[#allocation3 + $0x20] sm:$0xff]
      %v6945 = vld [vmem:[#allocation3 + $0x28] sm:$0xff]
      %v6946 = vld [vmem:[#allocation3 + $0x30] sm:$0xff]
      %v6947 = vld [vmem:[#allocation3 + $0x38] sm:$0xff]
      %v6948 = vld [vmem:[#allocation3 + $0x40] sm:$0xff]
      %v6949 = vld [vmem:[#allocation3 + $0x48] sm:$0xff]
      %v6950 = vld [vmem:[#allocation3 + $0x50] sm:$0xff]
      %v6951 = vld [vmem:[#allocation3 + $0x58] sm:$0xff]
      %v6952 = vld [vmem:[#allocation3 + $0x60] sm:$0xff]
      %v6953 = vld [vmem:[#allocation3 + $0x68] sm:$0xff]
      %v6954 = vld [vmem:[#allocation3 + $0x70] sm:$0xff]
      %v6955 = vld [vmem:[#allocation3 + $0x78] sm:$0xff]
      %v6956 = vld [vmem:[#allocation3 + $0x80] sm:$0xff]
      %v6957 = vld [vmem:[#allocation3 + $0x88] sm:$0xff]
      %v6958 = vld [vmem:[#allocation3 + $0x90] sm:$0xff]
      %v6959 = vld [vmem:[#allocation3 + $0x98] sm:$0xff]
      %v6960 = vld [vmem:[#allocation3 + $0xa0] sm:$0xff]
      %v6961 = vld [vmem:[#allocation3 + $0xa8] sm:$0xff]
      %v6962 = vld [vmem:[#allocation3 + $0xb0] sm:$0xff]
      %v6963 = vld [vmem:[#allocation3 + $0xb8] sm:$0xff]
      %v6964 = vld [vmem:[#allocation3 + $0xc0] sm:$0xff]
      %v6965 = vld [vmem:[#allocation3 + $0xc8] sm:$0xff]
      %v6966 = vld [vmem:[#allocation3 + $0xd0] sm:$0xff]
      %v6967 = vld [vmem:[#allocation3 + $0xd8] sm:$0xff]
      %v6968 = vld [vmem:[#allocation3 + $0xe0] sm:$0xff]
      %v6969 = vld [vmem:[#allocation3 + $0xe8] sm:$0xff]
      %v6970 = vld [vmem:[#allocation3 + $0xf0] sm:$0xff]
      %v6971 = vld [vmem:[#allocation3 + $0xf8] sm:$0xff]
      %v6972 = vld [vmem:[%s8] sm:$0xf]
      %v6973 = vld [vmem:[%s8 + $0x4] sm:$0xf]
      %v6974 = vld [vmem:[%s8 + $0x8] sm:$0xf]
      %v6975 = vld [vmem:[%s8 + $0xc] sm:$0xf]
      %v6976 = vld [vmem:[%s8 + $0x10] sm:$0xf]
      %v6977 = vld [vmem:[%s8 + $0x14] sm:$0xf]
      %v6978 = vld [vmem:[%s8 + $0x18] sm:$0xf]
      %v6979 = vld [vmem:[%s8 + $0x1c] sm:$0xf]
      %v6980 = vld [vmem:[%s8 + $0x20] sm:$0xf]
      %v6981 = vld [vmem:[%s8 + $0x24] sm:$0xf]
      %v6982 = vld [vmem:[%s8 + $0x28] sm:$0xf]
      %v6983 = vld [vmem:[%s8 + $0x2c] sm:$0xf]
      %v6984 = vld [vmem:[%s8 + $0x30] sm:$0xf]
      %v6985 = vld [vmem:[%s8 + $0x34] sm:$0xf]
      %v6986 = vld [vmem:[%s8 + $0x38] sm:$0xf]
      %v6987 = vld [vmem:[%s8 + $0x3c] sm:$0xf]
      %v7020 = vunpack.c.l.b16 %v6908
      %v7021 = vunpack.c.l.b16 %v6909
      %v7022 = vunpack.c.l.b16 %v6910
      %v7023 = vunpack.c.l.b16 %v6911
      %v7024 = vunpack.c.l.b16 %v6912
      %v7025 = vunpack.c.l.b16 %v6913
      %v7026 = vunpack.c.l.b16 %v6914
      %v7027 = vunpack.c.l.b16 %v6915
      %v7028 = vunpack.c.l.b16 %v6916
      %v7029 = vunpack.c.l.b16 %v6917
      %v7030 = vunpack.c.l.b16 %v6918
      %v7031 = vunpack.c.l.b16 %v6919
      %v7032 = vunpack.c.l.b16 %v6920
      %v7033 = vunpack.c.l.b16 %v6921
      %v7034 = vunpack.c.l.b16 %v6922
      %v7035 = vunpack.c.l.b16 %v6923
      %v7036 = vunpack.c.l.b16 %v6924
      %v7037 = vunpack.c.l.b16 %v6925
      %v7038 = vunpack.c.l.b16 %v6926
      %v7039 = vunpack.c.l.b16 %v6927
      %v7040 = vunpack.c.l.b16 %v6928
      %v7041 = vunpack.c.l.b16 %v6929
      %v7042 = vunpack.c.l.b16 %v6930
      %v7043 = vunpack.c.l.b16 %v6931
      %v7044 = vunpack.c.l.b16 %v6932
      %v7045 = vunpack.c.l.b16 %v6933
      %v7046 = vunpack.c.l.b16 %v6934
      %v7047 = vunpack.c.l.b16 %v6935
      %v7048 = vunpack.c.l.b16 %v6936
      %v7049 = vunpack.c.l.b16 %v6937
      %v7050 = vunpack.c.l.b16 %v6938
      %v7051 = vunpack.c.l.b16 %v6939
      %v7052 = vpack.c.b16 %v7021, %v7020
      %v7053 = vpack.c.b16 %v7023, %v7022
      %v7054 = vpack.c.b16 %v7025, %v7024
      %v7055 = vpack.c.b16 %v7027, %v7026
      %v7056 = vpack.c.b16 %v7029, %v7028
      %v7057 = vpack.c.b16 %v7031, %v7030
      %v7058 = vpack.c.b16 %v7033, %v7032
      %v7059 = vpack.c.b16 %v7035, %v7034
      %v7060 = vpack.c.b16 %v7037, %v7036
      %v7061 = vpack.c.b16 %v7039, %v7038
      %v7062 = vpack.c.b16 %v7041, %v7040
      %v7063 = vpack.c.b16 %v7043, %v7042
      %v7064 = vpack.c.b16 %v7045, %v7044
      %v7065 = vpack.c.b16 %v7047, %v7046
      %v7066 = vpack.c.b16 %v7049, %v7048
      %v7067 = vpack.c.b16 %v7051, %v7050
      %v7100 = vunpack.c.l.b16 %v6972
      %v7101 = vunpack.c.l.b16 %v6973
      %v7102 = vunpack.c.l.b16 %v6974
      %v7103 = vunpack.c.l.b16 %v6975
      %v7104 = vunpack.c.l.b16 %v6976
      %v7105 = vunpack.c.l.b16 %v6977
      %v7106 = vunpack.c.l.b16 %v6978
      %v7107 = vunpack.c.l.b16 %v6979
      %v7108 = vunpack.c.l.b16 %v6980
      %v7109 = vunpack.c.l.b16 %v6981
      %v7110 = vunpack.c.l.b16 %v6982
      %v7111 = vunpack.c.l.b16 %v6983
      %v7112 = vunpack.c.l.b16 %v6984
      %v7113 = vunpack.c.l.b16 %v6985
      %v7114 = vunpack.c.l.b16 %v6986
      %v7115 = vunpack.c.l.b16 %v6987
      %v7116 = vpack.c.b16 %v7101, %v7100
      %v7117 = vpack.c.b16 %v7103, %v7102
      %v7118 = vpack.c.b16 %v7105, %v7104
      %v7119 = vpack.c.b16 %v7107, %v7106
      %v7120 = vpack.c.b16 %v7109, %v7108
      %v7121 = vpack.c.b16 %v7111, %v7110
      %v7122 = vpack.c.b16 %v7113, %v7112
      %v7123 = vpack.c.b16 %v7115, %v7114
      %7132 = vmatpush.bf16.msra.mxu0 %v7123
      %7133 = vmatpush.bf16.msra.mxu0 %v7122
      %7134 = vmatpush.bf16.msra.mxu0 %v7121
      %7135 = vmatpush.bf16.msra.mxu0 %v7120
      %7136 = vmatpush.bf16.msra.mxu0 %v7119
      %7137 = vmatpush.bf16.msra.mxu0 %v7118
      %7138 = vmatpush.bf16.msra.mxu0 %v7117
      %7139 = vmatpush.bf16.msra.mxu0 %v7116
      %7140 = vmatmul.bf16.gmra.mxu0 %v7052
      %v7141 = vpop.f32.mrf.mxu0
      %v7142 = vadd.f32 0.0, %v7141
      %v7143 = vpop.f32.mrf.mxu0
      %v7144 = vadd.f32 0.0, %v7143
      %7145 = vmatmul.bf16.gmra.mxu0 %v7053
      %v7146 = vpop.f32.mrf.mxu0
      %v7147 = vadd.f32 0.0, %v7146
      %v7148 = vpop.f32.mrf.mxu0
      %v7149 = vadd.f32 0.0, %v7148
      %7150 = vmatmul.bf16.gmra.mxu0 %v7054
      %v7151 = vpop.f32.mrf.mxu0
      %v7152 = vadd.f32 0.0, %v7151
      %v7153 = vpop.f32.mrf.mxu0
      %v7154 = vadd.f32 0.0, %v7153
      %7155 = vmatmul.bf16.gmra.mxu0 %v7055
      %v7156 = vpop.f32.mrf.mxu0
      %v7157 = vadd.f32 0.0, %v7156
      %v7158 = vpop.f32.mrf.mxu0
      %v7159 = vadd.f32 0.0, %v7158
      %7160 = vmatmul.bf16.gmra.mxu0 %v7056
      %v7161 = vpop.f32.mrf.mxu0
      %v7162 = vadd.f32 0.0, %v7161
      %v7163 = vpop.f32.mrf.mxu0
      %v7164 = vadd.f32 0.0, %v7163
      %7165 = vmatmul.bf16.gmra.mxu0 %v7057
      %v7166 = vpop.f32.mrf.mxu0
      %v7167 = vadd.f32 0.0, %v7166
      %v7168 = vpop.f32.mrf.mxu0
      %v7169 = vadd.f32 0.0, %v7168
      %7170 = vmatmul.bf16.gmra.mxu0 %v7058
      %v7171 = vpop.f32.mrf.mxu0
      %v7172 = vadd.f32 0.0, %v7171
      %v7173 = vpop.f32.mrf.mxu0
      %v7174 = vadd.f32 0.0, %v7173
      %7175 = vmatmul.bf16.gmra.mxu0 %v7059
      %v7176 = vpop.f32.mrf.mxu0
      %v7177 = vadd.f32 0.0, %v7176
      %v7178 = vpop.f32.mrf.mxu0
      %v7179 = vadd.f32 0.0, %v7178
      %7180 = vmatmul.bf16.gmra.mxu0 %v7060
      %v7181 = vpop.f32.mrf.mxu0
      %v7182 = vadd.f32 0.0, %v7181
      %v7183 = vpop.f32.mrf.mxu0
      %v7184 = vadd.f32 0.0, %v7183
      %7185 = vmatmul.bf16.gmra.mxu0 %v7061
      %v7186 = vpop.f32.mrf.mxu0
      %v7187 = vadd.f32 0.0, %v7186
      %v7188 = vpop.f32.mrf.mxu0
      %v7189 = vadd.f32 0.0, %v7188
      %7190 = vmatmul.bf16.gmra.mxu0 %v7062
      %v7191 = vpop.f32.mrf.mxu0
      %v7192 = vadd.f32 0.0, %v7191
      %v7193 = vpop.f32.mrf.mxu0
      %v7194 = vadd.f32 0.0, %v7193
      %7195 = vmatmul.bf16.gmra.mxu0 %v7063
      %v7196 = vpop.f32.mrf.mxu0
      %v7197 = vadd.f32 0.0, %v7196
      %v7198 = vpop.f32.mrf.mxu0
      %v7199 = vadd.f32 0.0, %v7198
      %7200 = vmatmul.bf16.gmra.mxu0 %v7064
      %v7201 = vpop.f32.mrf.mxu0
      %v7202 = vadd.f32 0.0, %v7201
      %v7203 = vpop.f32.mrf.mxu0
      %v7204 = vadd.f32 0.0, %v7203
      %7205 = vmatmul.bf16.gmra.mxu0 %v7065
      %v7206 = vpop.f32.mrf.mxu0
      %v7207 = vadd.f32 0.0, %v7206
      %v7208 = vpop.f32.mrf.mxu0
      %v7209 = vadd.f32 0.0, %v7208
      %7210 = vmatmul.bf16.gmra.mxu0 %v7066
      %v7211 = vpop.f32.mrf.mxu0
      %v7212 = vadd.f32 0.0, %v7211
      %v7213 = vpop.f32.mrf.mxu0
      %v7214 = vadd.f32 0.0, %v7213
      %7215 = vmatmul.bf16.gmra.mxu0 %v7067
      %v7216 = vpop.f32.mrf.mxu0
      %v7217 = vadd.f32 0.0, %v7216
      %v7218 = vpop.f32.mrf.mxu0
      %v7219 = vadd.f32 0.0, %v7218
      %7220 = vdwg.mxu0
      %v7221 = vadd.f32 %v6940, %v7142
      %v7222 = vadd.f32 %v6941, %v7144
      %v7223 = vadd.f32 %v6942, %v7147
      %v7224 = vadd.f32 %v6943, %v7149
      %v7225 = vadd.f32 %v6944, %v7152
      %v7226 = vadd.f32 %v6945, %v7154
      %v7227 = vadd.f32 %v6946, %v7157
      %v7228 = vadd.f32 %v6947, %v7159
      %v7229 = vadd.f32 %v6948, %v7162
      %v7230 = vadd.f32 %v6949, %v7164
      %v7231 = vadd.f32 %v6950, %v7167
      %v7232 = vadd.f32 %v6951, %v7169
      %v7233 = vadd.f32 %v6952, %v7172
      %v7234 = vadd.f32 %v6953, %v7174
      %v7235 = vadd.f32 %v6954, %v7177
      %v7236 = vadd.f32 %v6955, %v7179
      %v7237 = vadd.f32 %v6956, %v7182
      %v7238 = vadd.f32 %v6957, %v7184
      %v7239 = vadd.f32 %v6958, %v7187
      %v7240 = vadd.f32 %v6959, %v7189
      %v7241 = vadd.f32 %v6960, %v7192
      %v7242 = vadd.f32 %v6961, %v7194
      %v7243 = vadd.f32 %v6962, %v7197
      %v7244 = vadd.f32 %v6963, %v7199
      %v7245 = vadd.f32 %v6964, %v7202
      %v7246 = vadd.f32 %v6965, %v7204
      %v7247 = vadd.f32 %v6966, %v7207
      %v7248 = vadd.f32 %v6967, %v7209
      %v7249 = vadd.f32 %v6968, %v7212
      %v7250 = vadd.f32 %v6969, %v7214
      %v7251 = vadd.f32 %v6970, %v7217
      %v7252 = vadd.f32 %v6971, %v7219
      %7253 = vst [vmem:[#allocation3] sm:$0xff] %v7221
      %7254 = vst [vmem:[#allocation3 + $0x8] sm:$0xff] %v7222
      %7255 = vst [vmem:[#allocation3 + $0x10] sm:$0xff] %v7223
      %7256 = vst [vmem:[#allocation3 + $0x18] sm:$0xff] %v7224
      %7257 = vst [vmem:[#allocation3 + $0x20] sm:$0xff] %v7225
      %7258 = vst [vmem:[#allocation3 + $0x28] sm:$0xff] %v7226
      %7259 = vst [vmem:[#allocation3 + $0x30] sm:$0xff] %v7227
      %7260 = vst [vmem:[#allocation3 + $0x38] sm:$0xff] %v7228
      %7261 = vst [vmem:[#allocation3 + $0x40] sm:$0xff] %v7229
      %7262 = vst [vmem:[#allocation3 + $0x48] sm:$0xff] %v7230
      %7263 = vst [vmem:[#allocation3 + $0x50] sm:$0xff] %v7231
      %7264 = vst [vmem:[#allocation3 + $0x58] sm:$0xff] %v7232
      %7265 = vst [vmem:[#allocation3 + $0x60] sm:$0xff] %v7233
      %7266 = vst [vmem:[#allocation3 + $0x68] sm:$0xff] %v7234
      %7267 = vst [vmem:[#allocation3 + $0x70] sm:$0xff] %v7235
      %7268 = vst [vmem:[#allocation3 + $0x78] sm:$0xff] %v7236
      %7269 = vst [vmem:[#allocation3 + $0x80] sm:$0xff] %v7237
      %7270 = vst [vmem:[#allocation3 + $0x88] sm:$0xff] %v7238
      %7271 = vst [vmem:[#allocation3 + $0x90] sm:$0xff] %v7239
      %7272 = vst [vmem:[#allocation3 + $0x98] sm:$0xff] %v7240
      %7273 = vst [vmem:[#allocation3 + $0xa0] sm:$0xff] %v7241
      %7274 = vst [vmem:[#allocation3 + $0xa8] sm:$0xff] %v7242
      %7275 = vst [vmem:[#allocation3 + $0xb0] sm:$0xff] %v7243
      %7276 = vst [vmem:[#allocation3 + $0xb8] sm:$0xff] %v7244
      %7277 = vst [vmem:[#allocation3 + $0xc0] sm:$0xff] %v7245
      %7278 = vst [vmem:[#allocation3 + $0xc8] sm:$0xff] %v7246
      %7279 = vst [vmem:[#allocation3 + $0xd0] sm:$0xff] %v7247
      %7280 = vst [vmem:[#allocation3 + $0xd8] sm:$0xff] %v7248
      %7281 = vst [vmem:[#allocation3 + $0xe0] sm:$0xff] %v7249
      %7282 = vst [vmem:[#allocation3 + $0xe8] sm:$0xff] %v7250
      %7283 = vst [vmem:[#allocation3 + $0xf0] sm:$0xff] %v7251
      %7284 = vst [vmem:[#allocation3 + $0xf8] sm:$0xff] %v7252
      %v7285 = vld [vmem:[#allocation2] sm:$0xf]
      %v7286 = vld [vmem:[#allocation2 + $0x4] sm:$0xf]
      %v7287 = vld [vmem:[#allocation2 + $0x8] sm:$0xf]
      %v7288 = vld [vmem:[#allocation2 + $0xc] sm:$0xf]
      %v7289 = vld [vmem:[#allocation2 + $0x10] sm:$0xf]
      %v7290 = vld [vmem:[#allocation2 + $0x14] sm:$0xf]
      %v7291 = vld [vmem:[#allocation2 + $0x18] sm:$0xf]
      %v7292 = vld [vmem:[#allocation2 + $0x1c] sm:$0xf]
      %v7293 = vld [vmem:[#allocation2 + $0x20] sm:$0xf]
      %v7294 = vld [vmem:[#allocation2 + $0x24] sm:$0xf]
      %v7295 = vld [vmem:[#allocation2 + $0x28] sm:$0xf]
      %v7296 = vld [vmem:[#allocation2 + $0x2c] sm:$0xf]
      %v7297 = vld [vmem:[#allocation2 + $0x30] sm:$0xf]
      %v7298 = vld [vmem:[#allocation2 + $0x34] sm:$0xf]
      %v7299 = vld [vmem:[#allocation2 + $0x38] sm:$0xf]
      %v7300 = vld [vmem:[#allocation2 + $0x3c] sm:$0xf]
      %v7301 = vld [vmem:[#allocation2 + $0x40] sm:$0xf]
      %v7302 = vld [vmem:[#allocation2 + $0x44] sm:$0xf]
      %v7303 = vld [vmem:[#allocation2 + $0x48] sm:$0xf]
      %v7304 = vld [vmem:[#allocation2 + $0x4c] sm:$0xf]
      %v7305 = vld [vmem:[#allocation2 + $0x50] sm:$0xf]
      %v7306 = vld [vmem:[#allocation2 + $0x54] sm:$0xf]
      %v7307 = vld [vmem:[#allocation2 + $0x58] sm:$0xf]
      %v7308 = vld [vmem:[#allocation2 + $0x5c] sm:$0xf]
      %v7309 = vld [vmem:[#allocation2 + $0x60] sm:$0xf]
      %v7310 = vld [vmem:[#allocation2 + $0x64] sm:$0xf]
      %v7311 = vld [vmem:[#allocation2 + $0x68] sm:$0xf]
      %v7312 = vld [vmem:[#allocation2 + $0x6c] sm:$0xf]
      %v7313 = vld [vmem:[#allocation2 + $0x70] sm:$0xf]
      %v7314 = vld [vmem:[#allocation2 + $0x74] sm:$0xf]
      %v7315 = vld [vmem:[#allocation2 + $0x78] sm:$0xf]
      %v7316 = vld [vmem:[#allocation2 + $0x7c] sm:$0xf]
      %v7317 = vld [vmem:[#allocation2 + $0x80] sm:$0x1]
      %v7318 = vld [vmem:[#allocation3] sm:$0xff]
      %v7319 = vld [vmem:[#allocation3 + $0x8] sm:$0xff]
      %v7320 = vld [vmem:[#allocation3 + $0x10] sm:$0xff]
      %v7321 = vld [vmem:[#allocation3 + $0x18] sm:$0xff]
      %v7322 = vld [vmem:[#allocation3 + $0x20] sm:$0xff]
      %v7323 = vld [vmem:[#allocation3 + $0x28] sm:$0xff]
      %v7324 = vld [vmem:[#allocation3 + $0x30] sm:$0xff]
      %v7325 = vld [vmem:[#allocation3 + $0x38] sm:$0xff]
      %v7326 = vld [vmem:[#allocation3 + $0x40] sm:$0xff]
      %v7327 = vld [vmem:[#allocation3 + $0x48] sm:$0xff]
      %v7328 = vld [vmem:[#allocation3 + $0x50] sm:$0xff]
      %v7329 = vld [vmem:[#allocation3 + $0x58] sm:$0xff]
      %v7330 = vld [vmem:[#allocation3 + $0x60] sm:$0xff]
      %v7331 = vld [vmem:[#allocation3 + $0x68] sm:$0xff]
      %v7332 = vld [vmem:[#allocation3 + $0x70] sm:$0xff]
      %v7333 = vld [vmem:[#allocation3 + $0x78] sm:$0xff]
      %v7334 = vld [vmem:[#allocation3 + $0x80] sm:$0xff]
      %v7335 = vld [vmem:[#allocation3 + $0x88] sm:$0xff]
      %v7336 = vld [vmem:[#allocation3 + $0x90] sm:$0xff]
      %v7337 = vld [vmem:[#allocation3 + $0x98] sm:$0xff]
      %v7338 = vld [vmem:[#allocation3 + $0xa0] sm:$0xff]
      %v7339 = vld [vmem:[#allocation3 + $0xa8] sm:$0xff]
      %v7340 = vld [vmem:[#allocation3 + $0xb0] sm:$0xff]
      %v7341 = vld [vmem:[#allocation3 + $0xb8] sm:$0xff]
      %v7342 = vld [vmem:[#allocation3 + $0xc0] sm:$0xff]
      %v7343 = vld [vmem:[#allocation3 + $0xc8] sm:$0xff]
      %v7344 = vld [vmem:[#allocation3 + $0xd0] sm:$0xff]
      %v7345 = vld [vmem:[#allocation3 + $0xd8] sm:$0xff]
      %v7346 = vld [vmem:[#allocation3 + $0xe0] sm:$0xff]
      %v7347 = vld [vmem:[#allocation3 + $0xe8] sm:$0xff]
      %v7348 = vld [vmem:[#allocation3 + $0xf0] sm:$0xff]
      %v7349 = vld [vmem:[#allocation3 + $0xf8] sm:$0xff]
      %s7350 = scalar_lea.vmem %s8, 64
      %v7351 = vld [vmem:[%s7350] sm:$0xf]
      %v7352 = vld [vmem:[%s7350 + $0x4] sm:$0xf]
      %v7353 = vld [vmem:[%s7350 + $0x8] sm:$0xf]
      %v7354 = vld [vmem:[%s7350 + $0xc] sm:$0xf]
      %v7355 = vld [vmem:[%s7350 + $0x10] sm:$0xf]
      %v7356 = vld [vmem:[%s7350 + $0x14] sm:$0xf]
      %v7357 = vld [vmem:[%s7350 + $0x18] sm:$0xf]
      %v7358 = vld [vmem:[%s7350 + $0x1c] sm:$0xf]
      %v7359 = vld [vmem:[%s7350 + $0x20] sm:$0xf]
      %v7360 = vld [vmem:[%s7350 + $0x24] sm:$0xf]
      %v7361 = vld [vmem:[%s7350 + $0x28] sm:$0xf]
      %v7362 = vld [vmem:[%s7350 + $0x2c] sm:$0xf]
      %v7363 = vld [vmem:[%s7350 + $0x30] sm:$0xf]
      %v7364 = vld [vmem:[%s7350 + $0x34] sm:$0xf]
      %v7365 = vld [vmem:[%s7350 + $0x38] sm:$0xf]
      %v7366 = vld [vmem:[%s7350 + $0x3c] sm:$0xf]
      %v7400 = vunpack.c.l.b16 %v7285
      %v7401 = vunpack.c.l.b16 %v7286
      %v7402 = vunpack.c.l.b16 %v7287
      %v7403 = vunpack.c.l.b16 %v7288
      %v7404 = vunpack.c.l.b16 %v7289
      %v7405 = vunpack.c.l.b16 %v7290
      %v7406 = vunpack.c.l.b16 %v7291
      %v7407 = vunpack.c.l.b16 %v7292
      %v7408 = vunpack.c.l.b16 %v7293
      %v7409 = vunpack.c.l.b16 %v7294
      %v7410 = vunpack.c.l.b16 %v7295
      %v7411 = vunpack.c.l.b16 %v7296
      %v7412 = vunpack.c.l.b16 %v7297
      %v7413 = vunpack.c.l.b16 %v7298
      %v7414 = vunpack.c.l.b16 %v7299
      %v7415 = vunpack.c.l.b16 %v7300
      %v7416 = vunpack.c.l.b16 %v7301
      %v7417 = vunpack.c.l.b16 %v7302
      %v7418 = vunpack.c.l.b16 %v7303
      %v7419 = vunpack.c.l.b16 %v7304
      %v7420 = vunpack.c.l.b16 %v7305
      %v7421 = vunpack.c.l.b16 %v7306
      %v7422 = vunpack.c.l.b16 %v7307
      %v7423 = vunpack.c.l.b16 %v7308
      %v7424 = vunpack.c.l.b16 %v7309
      %v7425 = vunpack.c.l.b16 %v7310
      %v7426 = vunpack.c.l.b16 %v7311
      %v7427 = vunpack.c.l.b16 %v7312
      %v7428 = vunpack.c.l.b16 %v7313
      %v7429 = vunpack.c.l.b16 %v7314
      %v7430 = vunpack.c.l.b16 %v7315
      %v7431 = vunpack.c.l.b16 %v7316
      %v7432 = vunpack.c.l.b16 %v7317
      %v7433 = vpack.c.b16 %v7401, %v7400
      %v7434 = vpack.c.b16 %v7403, %v7402
      %v7435 = vpack.c.b16 %v7405, %v7404
      %v7436 = vpack.c.b16 %v7407, %v7406
      %v7437 = vpack.c.b16 %v7409, %v7408
      %v7438 = vpack.c.b16 %v7411, %v7410
      %v7439 = vpack.c.b16 %v7413, %v7412
      %v7440 = vpack.c.b16 %v7415, %v7414
      %v7441 = vpack.c.b16 %v7417, %v7416
      %v7442 = vpack.c.b16 %v7419, %v7418
      %v7443 = vpack.c.b16 %v7421, %v7420
      %v7444 = vpack.c.b16 %v7423, %v7422
      %v7445 = vpack.c.b16 %v7425, %v7424
      %v7446 = vpack.c.b16 %v7427, %v7426
      %v7447 = vpack.c.b16 %v7429, %v7428
      %v7448 = vpack.c.b16 %v7431, %v7430
      %v7449 = vpack.c.b16 %v7432, %v7432
      %v7451 = vshrl.u32 %v7433, 16
      %v7453 = vshll.u32 %v7433, 16
      %v7455 = vrot.slane %v7453, 1
      %v7456 = vor.u32 %v7451, %v7455
      %v7458 = vshll.u32 %v7434, 16
      %v7460 = vrot.slane %v7458, 1
      %v7461 = vsel %vm1983, %v7456, %v7460
      %v7462 = vshrl.u32 %v7434, 16
      %v7464 = vor.u32 %v7462, %v7460
      %v7466 = vshll.u32 %v7435, 16
      %v7468 = vrot.slane %v7466, 1
      %v7469 = vsel %vm1983, %v7464, %v7468
      %v7470 = vshrl.u32 %v7435, 16
      %v7472 = vor.u32 %v7470, %v7468
      %v7474 = vshll.u32 %v7436, 16
      %v7476 = vrot.slane %v7474, 1
      %v7477 = vsel %vm1983, %v7472, %v7476
      %v7478 = vshrl.u32 %v7436, 16
      %v7480 = vor.u32 %v7478, %v7476
      %v7482 = vshll.u32 %v7437, 16
      %v7484 = vrot.slane %v7482, 1
      %v7485 = vsel %vm1983, %v7480, %v7484
      %v7486 = vshrl.u32 %v7437, 16
      %v7488 = vor.u32 %v7486, %v7484
      %v7490 = vshll.u32 %v7438, 16
      %v7492 = vrot.slane %v7490, 1
      %v7493 = vsel %vm1983, %v7488, %v7492
      %v7494 = vshrl.u32 %v7438, 16
      %v7496 = vor.u32 %v7494, %v7492
      %v7498 = vshll.u32 %v7439, 16
      %v7500 = vrot.slane %v7498, 1
      %v7501 = vsel %vm1983, %v7496, %v7500
      %v7502 = vshrl.u32 %v7439, 16
      %v7504 = vor.u32 %v7502, %v7500
      %v7506 = vshll.u32 %v7440, 16
      %v7508 = vrot.slane %v7506, 1
      %v7509 = vsel %vm1983, %v7504, %v7508
      %v7510 = vshrl.u32 %v7440, 16
      %v7512 = vor.u32 %v7510, %v7508
      %v7514 = vshll.u32 %v7441, 16
      %v7516 = vrot.slane %v7514, 1
      %v7517 = vsel %vm1983, %v7512, %v7516
      %v7518 = vshrl.u32 %v7441, 16
      %v7520 = vor.u32 %v7518, %v7516
      %v7522 = vshll.u32 %v7442, 16
      %v7524 = vrot.slane %v7522, 1
      %v7525 = vsel %vm1983, %v7520, %v7524
      %v7526 = vshrl.u32 %v7442, 16
      %v7528 = vor.u32 %v7526, %v7524
      %v7530 = vshll.u32 %v7443, 16
      %v7532 = vrot.slane %v7530, 1
      %v7533 = vsel %vm1983, %v7528, %v7532
      %v7534 = vshrl.u32 %v7443, 16
      %v7536 = vor.u32 %v7534, %v7532
      %v7538 = vshll.u32 %v7444, 16
      %v7540 = vrot.slane %v7538, 1
      %v7541 = vsel %vm1983, %v7536, %v7540
      %v7542 = vshrl.u32 %v7444, 16
      %v7544 = vor.u32 %v7542, %v7540
      %v7546 = vshll.u32 %v7445, 16
      %v7548 = vrot.slane %v7546, 1
      %v7549 = vsel %vm1983, %v7544, %v7548
      %v7550 = vshrl.u32 %v7445, 16
      %v7552 = vor.u32 %v7550, %v7548
      %v7554 = vshll.u32 %v7446, 16
      %v7556 = vrot.slane %v7554, 1
      %v7557 = vsel %vm1983, %v7552, %v7556
      %v7558 = vshrl.u32 %v7446, 16
      %v7560 = vor.u32 %v7558, %v7556
      %v7562 = vshll.u32 %v7447, 16
      %v7564 = vrot.slane %v7562, 1
      %v7565 = vsel %vm1983, %v7560, %v7564
      %v7566 = vshrl.u32 %v7447, 16
      %v7568 = vor.u32 %v7566, %v7564
      %v7570 = vshll.u32 %v7448, 16
      %v7572 = vrot.slane %v7570, 1
      %v7573 = vsel %vm1983, %v7568, %v7572
      %v7574 = vshrl.u32 %v7448, 16
      %v7576 = vor.u32 %v7574, %v7572
      %v7578 = vshll.u32 %v7449, 16
      %v7580 = vrot.slane %v7578, 1
      %v7581 = vsel %vm1983, %v7576, %v7580
      %v7614 = vunpack.c.l.b16 %v7351
      %v7615 = vunpack.c.l.b16 %v7352
      %v7616 = vunpack.c.l.b16 %v7353
      %v7617 = vunpack.c.l.b16 %v7354
      %v7618 = vunpack.c.l.b16 %v7355
      %v7619 = vunpack.c.l.b16 %v7356
      %v7620 = vunpack.c.l.b16 %v7357
      %v7621 = vunpack.c.l.b16 %v7358
      %v7622 = vunpack.c.l.b16 %v7359
      %v7623 = vunpack.c.l.b16 %v7360
      %v7624 = vunpack.c.l.b16 %v7361
      %v7625 = vunpack.c.l.b16 %v7362
      %v7626 = vunpack.c.l.b16 %v7363
      %v7627 = vunpack.c.l.b16 %v7364
      %v7628 = vunpack.c.l.b16 %v7365
      %v7629 = vunpack.c.l.b16 %v7366
      %v7630 = vpack.c.b16 %v7615, %v7614
      %v7631 = vpack.c.b16 %v7617, %v7616
      %v7632 = vpack.c.b16 %v7619, %v7618
      %v7633 = vpack.c.b16 %v7621, %v7620
      %v7634 = vpack.c.b16 %v7623, %v7622
      %v7635 = vpack.c.b16 %v7625, %v7624
      %v7636 = vpack.c.b16 %v7627, %v7626
      %v7637 = vpack.c.b16 %v7629, %v7628
      %7646 = vmatpush.bf16.msra.mxu0 %v7637
      %7647 = vmatpush.bf16.msra.mxu0 %v7636
      %7648 = vmatpush.bf16.msra.mxu0 %v7635
      %7649 = vmatpush.bf16.msra.mxu0 %v7634
      %7650 = vmatpush.bf16.msra.mxu0 %v7633
      %7651 = vmatpush.bf16.msra.mxu0 %v7632
      %7652 = vmatpush.bf16.msra.mxu0 %v7631
      %7653 = vmatpush.bf16.msra.mxu0 %v7630
      %7654 = vmatmul.bf16.gmra.mxu0 %v7461
      %v7655 = vpop.f32.mrf.mxu0
      %v7656 = vadd.f32 0.0, %v7655
      %v7657 = vpop.f32.mrf.mxu0
      %v7658 = vadd.f32 0.0, %v7657
      %7659 = vmatmul.bf16.gmra.mxu0 %v7469
      %v7660 = vpop.f32.mrf.mxu0
      %v7661 = vadd.f32 0.0, %v7660
      %v7662 = vpop.f32.mrf.mxu0
      %v7663 = vadd.f32 0.0, %v7662
      %7664 = vmatmul.bf16.gmra.mxu0 %v7477
      %v7665 = vpop.f32.mrf.mxu0
      %v7666 = vadd.f32 0.0, %v7665
      %v7667 = vpop.f32.mrf.mxu0
      %v7668 = vadd.f32 0.0, %v7667
      %7669 = vmatmul.bf16.gmra.mxu0 %v7485
      %v7670 = vpop.f32.mrf.mxu0
      %v7671 = vadd.f32 0.0, %v7670
      %v7672 = vpop.f32.mrf.mxu0
      %v7673 = vadd.f32 0.0, %v7672
      %7674 = vmatmul.bf16.gmra.mxu0 %v7493
      %v7675 = vpop.f32.mrf.mxu0
      %v7676 = vadd.f32 0.0, %v7675
      %v7677 = vpop.f32.mrf.mxu0
      %v7678 = vadd.f32 0.0, %v7677
      %7679 = vmatmul.bf16.gmra.mxu0 %v7501
      %v7680 = vpop.f32.mrf.mxu0
      %v7681 = vadd.f32 0.0, %v7680
      %v7682 = vpop.f32.mrf.mxu0
      %v7683 = vadd.f32 0.0, %v7682
      %7684 = vmatmul.bf16.gmra.mxu0 %v7509
      %v7685 = vpop.f32.mrf.mxu0
      %v7686 = vadd.f32 0.0, %v7685
      %v7687 = vpop.f32.mrf.mxu0
      %v7688 = vadd.f32 0.0, %v7687
      %7689 = vmatmul.bf16.gmra.mxu0 %v7517
      %v7690 = vpop.f32.mrf.mxu0
      %v7691 = vadd.f32 0.0, %v7690
      %v7692 = vpop.f32.mrf.mxu0
      %v7693 = vadd.f32 0.0, %v7692
      %7694 = vmatmul.bf16.gmra.mxu0 %v7525
      %v7695 = vpop.f32.mrf.mxu0
      %v7696 = vadd.f32 0.0, %v7695
      %v7697 = vpop.f32.mrf.mxu0
      %v7698 = vadd.f32 0.0, %v7697
      %7699 = vmatmul.bf16.gmra.mxu0 %v7533
      %v7700 = vpop.f32.mrf.mxu0
      %v7701 = vadd.f32 0.0, %v7700
      %v7702 = vpop.f32.mrf.mxu0
      %v7703 = vadd.f32 0.0, %v7702
      %7704 = vmatmul.bf16.gmra.mxu0 %v7541
      %v7705 = vpop.f32.mrf.mxu0
      %v7706 = vadd.f32 0.0, %v7705
      %v7707 = vpop.f32.mrf.mxu0
      %v7708 = vadd.f32 0.0, %v7707
      %7709 = vmatmul.bf16.gmra.mxu0 %v7549
      %v7710 = vpop.f32.mrf.mxu0
      %v7711 = vadd.f32 0.0, %v7710
      %v7712 = vpop.f32.mrf.mxu0
      %v7713 = vadd.f32 0.0, %v7712
      %7714 = vmatmul.bf16.gmra.mxu0 %v7557
      %v7715 = vpop.f32.mrf.mxu0
      %v7716 = vadd.f32 0.0, %v7715
      %v7717 = vpop.f32.mrf.mxu0
      %v7718 = vadd.f32 0.0, %v7717
      %7719 = vmatmul.bf16.gmra.mxu0 %v7565
      %v7720 = vpop.f32.mrf.mxu0
      %v7721 = vadd.f32 0.0, %v7720
      %v7722 = vpop.f32.mrf.mxu0
      %v7723 = vadd.f32 0.0, %v7722
      %7724 = vmatmul.bf16.gmra.mxu0 %v7573
      %v7725 = vpop.f32.mrf.mxu0
      %v7726 = vadd.f32 0.0, %v7725
      %v7727 = vpop.f32.mrf.mxu0
      %v7728 = vadd.f32 0.0, %v7727
      %7729 = vmatmul.bf16.gmra.mxu0 %v7581
      %v7730 = vpop.f32.mrf.mxu0
      %v7731 = vadd.f32 0.0, %v7730
      %v7732 = vpop.f32.mrf.mxu0
      %v7733 = vadd.f32 0.0, %v7732
      %7734 = vdwg.mxu0
      %v7735 = vadd.f32 %v7318, %v7656
      %v7736 = vadd.f32 %v7319, %v7658
      %v7737 = vadd.f32 %v7320, %v7661
      %v7738 = vadd.f32 %v7321, %v7663
      %v7739 = vadd.f32 %v7322, %v7666
      %v7740 = vadd.f32 %v7323, %v7668
      %v7741 = vadd.f32 %v7324, %v7671
      %v7742 = vadd.f32 %v7325, %v7673
      %v7743 = vadd.f32 %v7326, %v7676
      %v7744 = vadd.f32 %v7327, %v7678
      %v7745 = vadd.f32 %v7328, %v7681
      %v7746 = vadd.f32 %v7329, %v7683
      %v7747 = vadd.f32 %v7330, %v7686
      %v7748 = vadd.f32 %v7331, %v7688
      %v7749 = vadd.f32 %v7332, %v7691
      %v7750 = vadd.f32 %v7333, %v7693
      %v7751 = vadd.f32 %v7334, %v7696
      %v7752 = vadd.f32 %v7335, %v7698
      %v7753 = vadd.f32 %v7336, %v7701
      %v7754 = vadd.f32 %v7337, %v7703
      %v7755 = vadd.f32 %v7338, %v7706
      %v7756 = vadd.f32 %v7339, %v7708
      %v7757 = vadd.f32 %v7340, %v7711
      %v7758 = vadd.f32 %v7341, %v7713
      %v7759 = vadd.f32 %v7342, %v7716
      %v7760 = vadd.f32 %v7343, %v7718
      %v7761 = vadd.f32 %v7344, %v7721
      %v7762 = vadd.f32 %v7345, %v7723
      %v7763 = vadd.f32 %v7346, %v7726
      %v7764 = vadd.f32 %v7347, %v7728
      %v7765 = vadd.f32 %v7348, %v7731
      %v7766 = vadd.f32 %v7349, %v7733
      %7767 = vst [vmem:[#allocation3] sm:$0xff] %v7735
      %7768 = vst [vmem:[#allocation3 + $0x8] sm:$0xff] %v7736
      %7769 = vst [vmem:[#allocation3 + $0x10] sm:$0xff] %v7737
      %7770 = vst [vmem:[#allocation3 + $0x18] sm:$0xff] %v7738
      %7771 = vst [vmem:[#allocation3 + $0x20] sm:$0xff] %v7739
      %7772 = vst [vmem:[#allocation3 + $0x28] sm:$0xff] %v7740
      %7773 = vst [vmem:[#allocation3 + $0x30] sm:$0xff] %v7741
      %7774 = vst [vmem:[#allocation3 + $0x38] sm:$0xff] %v7742
      %7775 = vst [vmem:[#allocation3 + $0x40] sm:$0xff] %v7743
      %7776 = vst [vmem:[#allocation3 + $0x48] sm:$0xff] %v7744
      %7777 = vst [vmem:[#allocation3 + $0x50] sm:$0xff] %v7745
      %7778 = vst [vmem:[#allocation3 + $0x58] sm:$0xff] %v7746
      %7779 = vst [vmem:[#allocation3 + $0x60] sm:$0xff] %v7747
      %7780 = vst [vmem:[#allocation3 + $0x68] sm:$0xff] %v7748
      %7781 = vst [vmem:[#allocation3 + $0x70] sm:$0xff] %v7749
      %7782 = vst [vmem:[#allocation3 + $0x78] sm:$0xff] %v7750
      %7783 = vst [vmem:[#allocation3 + $0x80] sm:$0xff] %v7751
      %7784 = vst [vmem:[#allocation3 + $0x88] sm:$0xff] %v7752
      %7785 = vst [vmem:[#allocation3 + $0x90] sm:$0xff] %v7753
      %7786 = vst [vmem:[#allocation3 + $0x98] sm:$0xff] %v7754
      %7787 = vst [vmem:[#allocation3 + $0xa0] sm:$0xff] %v7755
      %7788 = vst [vmem:[#allocation3 + $0xa8] sm:$0xff] %v7756
      %7789 = vst [vmem:[#allocation3 + $0xb0] sm:$0xff] %v7757
      %7790 = vst [vmem:[#allocation3 + $0xb8] sm:$0xff] %v7758
      %7791 = vst [vmem:[#allocation3 + $0xc0] sm:$0xff] %v7759
      %7792 = vst [vmem:[#allocation3 + $0xc8] sm:$0xff] %v7760
      %7793 = vst [vmem:[#allocation3 + $0xd0] sm:$0xff] %v7761
      %7794 = vst [vmem:[#allocation3 + $0xd8] sm:$0xff] %v7762
      %7795 = vst [vmem:[#allocation3 + $0xe0] sm:$0xff] %v7763
      %7796 = vst [vmem:[#allocation3 + $0xe8] sm:$0xff] %v7764
      %7797 = vst [vmem:[#allocation3 + $0xf0] sm:$0xff] %v7765
      %7798 = vst [vmem:[#allocation3 + $0xf8] sm:$0xff] %v7766
      %v7799 = vld [vmem:[#allocation2] sm:$0xe]
      %v7800 = vld [vmem:[#allocation2 + $0x4] sm:$0xf]
      %v7801 = vld [vmem:[#allocation2 + $0x8] sm:$0xf]
      %v7802 = vld [vmem:[#allocation2 + $0xc] sm:$0xf]
      %v7803 = vld [vmem:[#allocation2 + $0x10] sm:$0xf]
      %v7804 = vld [vmem:[#allocation2 + $0x14] sm:$0xf]
      %v7805 = vld [vmem:[#allocation2 + $0x18] sm:$0xf]
      %v7806 = vld [vmem:[#allocation2 + $0x1c] sm:$0xf]
      %v7807 = vld [vmem:[#allocation2 + $0x20] sm:$0xf]
      %v7808 = vld [vmem:[#allocation2 + $0x24] sm:$0xf]
      %v7809 = vld [vmem:[#allocation2 + $0x28] sm:$0xf]
      %v7810 = vld [vmem:[#allocation2 + $0x2c] sm:$0xf]
      %v7811 = vld [vmem:[#allocation2 + $0x30] sm:$0xf]
      %v7812 = vld [vmem:[#allocation2 + $0x34] sm:$0xf]
      %v7813 = vld [vmem:[#allocation2 + $0x38] sm:$0xf]
      %v7814 = vld [vmem:[#allocation2 + $0x3c] sm:$0xf]
      %v7815 = vld [vmem:[#allocation2 + $0x40] sm:$0xf]
      %v7816 = vld [vmem:[#allocation2 + $0x44] sm:$0xf]
      %v7817 = vld [vmem:[#allocation2 + $0x48] sm:$0xf]
      %v7818 = vld [vmem:[#allocation2 + $0x4c] sm:$0xf]
      %v7819 = vld [vmem:[#allocation2 + $0x50] sm:$0xf]
      %v7820 = vld [vmem:[#allocation2 + $0x54] sm:$0xf]
      %v7821 = vld [vmem:[#allocation2 + $0x58] sm:$0xf]
      %v7822 = vld [vmem:[#allocation2 + $0x5c] sm:$0xf]
      %v7823 = vld [vmem:[#allocation2 + $0x60] sm:$0xf]
      %v7824 = vld [vmem:[#allocation2 + $0x64] sm:$0xf]
      %v7825 = vld [vmem:[#allocation2 + $0x68] sm:$0xf]
      %v7826 = vld [vmem:[#allocation2 + $0x6c] sm:$0xf]
      %v7827 = vld [vmem:[#allocation2 + $0x70] sm:$0xf]
      %v7828 = vld [vmem:[#allocation2 + $0x74] sm:$0xf]
      %v7829 = vld [vmem:[#allocation2 + $0x78] sm:$0xf]
      %v7830 = vld [vmem:[#allocation2 + $0x7c] sm:$0xf]
      %v7831 = vld [vmem:[#allocation2 + $0x80] sm:$0x1]
      %v7832 = vsel %vm2693, %v7799, 0
      %v7833 = vsel %vm2700, %v7800, 0
      %v7834 = vsel %vm2707, %v7801, 0
      %v7835 = vsel %vm2714, %v7802, 0
      %v7836 = vsel %vm2721, %v7803, 0
      %v7837 = vsel %vm2728, %v7804, 0
      %v7838 = vsel %vm2735, %v7805, 0
      %v7839 = vsel %vm2742, %v7806, 0
      %v7840 = vsel %vm2749, %v7807, 0
      %v7841 = vsel %vm2756, %v7808, 0
      %v7842 = vsel %vm2763, %v7809, 0
      %v7843 = vsel %vm2770, %v7810, 0
      %v7844 = vsel %vm2777, %v7811, 0
      %v7845 = vsel %vm2784, %v7812, 0
      %v7846 = vsel %vm2791, %v7813, 0
      %v7847 = vsel %vm2798, %v7814, 0
      %v7848 = vsel %vm2805, %v7815, 0
      %v7849 = vsel %vm2812, %v7816, 0
      %v7850 = vsel %vm2819, %v7817, 0
      %v7851 = vsel %vm2826, %v7818, 0
      %v7852 = vsel %vm2833, %v7819, 0
      %v7853 = vsel %vm2840, %v7820, 0
      %v7854 = vsel %vm2847, %v7821, 0
      %v7855 = vsel %vm2854, %v7822, 0
      %v7856 = vsel %vm2861, %v7823, 0
      %v7857 = vsel %vm2868, %v7824, 0
      %v7858 = vsel %vm2875, %v7825, 0
      %v7859 = vsel %vm2882, %v7826, 0
      %v7860 = vsel %vm2889, %v7827, 0
      %v7861 = vsel %vm2896, %v7828, 0
      %v7862 = vsel %vm2903, %v7829, 0
      %v7863 = vsel %vm2910, %v7830, 0
      %v7864 = vsel %vm2917, %v7831, 0
      %v7865 = vld [vmem:[#allocation3] sm:$0xff]
      %v7866 = vld [vmem:[#allocation3 + $0x8] sm:$0xff]
      %v7867 = vld [vmem:[#allocation3 + $0x10] sm:$0xff]
      %v7868 = vld [vmem:[#allocation3 + $0x18] sm:$0xff]
      %v7869 = vld [vmem:[#allocation3 + $0x20] sm:$0xff]
      %v7870 = vld [vmem:[#allocation3 + $0x28] sm:$0xff]
      %v7871 = vld [vmem:[#allocation3 + $0x30] sm:$0xff]
      %v7872 = vld [vmem:[#allocation3 + $0x38] sm:$0xff]
      %v7873 = vld [vmem:[#allocation3 + $0x40] sm:$0xff]
      %v7874 = vld [vmem:[#allocation3 + $0x48] sm:$0xff]
      %v7875 = vld [vmem:[#allocation3 + $0x50] sm:$0xff]
      %v7876 = vld [vmem:[#allocation3 + $0x58] sm:$0xff]
      %v7877 = vld [vmem:[#allocation3 + $0x60] sm:$0xff]
      %v7878 = vld [vmem:[#allocation3 + $0x68] sm:$0xff]
      %v7879 = vld [vmem:[#allocation3 + $0x70] sm:$0xff]
      %v7880 = vld [vmem:[#allocation3 + $0x78] sm:$0xff]
      %v7881 = vld [vmem:[#allocation3 + $0x80] sm:$0xff]
      %v7882 = vld [vmem:[#allocation3 + $0x88] sm:$0xff]
      %v7883 = vld [vmem:[#allocation3 + $0x90] sm:$0xff]
      %v7884 = vld [vmem:[#allocation3 + $0x98] sm:$0xff]
      %v7885 = vld [vmem:[#allocation3 + $0xa0] sm:$0xff]
      %v7886 = vld [vmem:[#allocation3 + $0xa8] sm:$0xff]
      %v7887 = vld [vmem:[#allocation3 + $0xb0] sm:$0xff]
      %v7888 = vld [vmem:[#allocation3 + $0xb8] sm:$0xff]
      %v7889 = vld [vmem:[#allocation3 + $0xc0] sm:$0xff]
      %v7890 = vld [vmem:[#allocation3 + $0xc8] sm:$0xff]
      %v7891 = vld [vmem:[#allocation3 + $0xd0] sm:$0xff]
      %v7892 = vld [vmem:[#allocation3 + $0xd8] sm:$0xff]
      %v7893 = vld [vmem:[#allocation3 + $0xe0] sm:$0xff]
      %v7894 = vld [vmem:[#allocation3 + $0xe8] sm:$0xff]
      %v7895 = vld [vmem:[#allocation3 + $0xf0] sm:$0xff]
      %v7896 = vld [vmem:[#allocation3 + $0xf8] sm:$0xff]
      %s7897 = scalar_lea.vmem %s8, 128
      %v7898 = vld [vmem:[%s7897] sm:$0xf]
      %v7899 = vld [vmem:[%s7897 + $0x4] sm:$0xf]
      %v7900 = vld [vmem:[%s7897 + $0x8] sm:$0xf]
      %v7901 = vld [vmem:[%s7897 + $0xc] sm:$0xf]
      %v7902 = vld [vmem:[%s7897 + $0x10] sm:$0xf]
      %v7903 = vld [vmem:[%s7897 + $0x14] sm:$0xf]
      %v7904 = vld [vmem:[%s7897 + $0x18] sm:$0xf]
      %v7905 = vld [vmem:[%s7897 + $0x1c] sm:$0xf]
      %v7906 = vld [vmem:[%s7897 + $0x20] sm:$0xf]
      %v7907 = vld [vmem:[%s7897 + $0x24] sm:$0xf]
      %v7908 = vld [vmem:[%s7897 + $0x28] sm:$0xf]
      %v7909 = vld [vmem:[%s7897 + $0x2c] sm:$0xf]
      %v7910 = vld [vmem:[%s7897 + $0x30] sm:$0xf]
      %v7911 = vld [vmem:[%s7897 + $0x34] sm:$0xf]
      %v7912 = vld [vmem:[%s7897 + $0x38] sm:$0xf]
      %v7913 = vld [vmem:[%s7897 + $0x3c] sm:$0xf]
      %v7947 = vunpack.c.l.b16 %v7832
      %v7948 = vunpack.c.l.b16 %v7833
      %v7949 = vunpack.c.l.b16 %v7834
      %v7950 = vunpack.c.l.b16 %v7835
      %v7951 = vunpack.c.l.b16 %v7836
      %v7952 = vunpack.c.l.b16 %v7837
      %v7953 = vunpack.c.l.b16 %v7838
      %v7954 = vunpack.c.l.b16 %v7839
      %v7955 = vunpack.c.l.b16 %v7840
      %v7956 = vunpack.c.l.b16 %v7841
      %v7957 = vunpack.c.l.b16 %v7842
      %v7958 = vunpack.c.l.b16 %v7843
      %v7959 = vunpack.c.l.b16 %v7844
      %v7960 = vunpack.c.l.b16 %v7845
      %v7961 = vunpack.c.l.b16 %v7846
      %v7962 = vunpack.c.l.b16 %v7847
      %v7963 = vunpack.c.l.b16 %v7848
      %v7964 = vunpack.c.l.b16 %v7849
      %v7965 = vunpack.c.l.b16 %v7850
      %v7966 = vunpack.c.l.b16 %v7851
      %v7967 = vunpack.c.l.b16 %v7852
      %v7968 = vunpack.c.l.b16 %v7853
      %v7969 = vunpack.c.l.b16 %v7854
      %v7970 = vunpack.c.l.b16 %v7855
      %v7971 = vunpack.c.l.b16 %v7856
      %v7972 = vunpack.c.l.b16 %v7857
      %v7973 = vunpack.c.l.b16 %v7858
      %v7974 = vunpack.c.l.b16 %v7859
      %v7975 = vunpack.c.l.b16 %v7860
      %v7976 = vunpack.c.l.b16 %v7861
      %v7977 = vunpack.c.l.b16 %v7862
      %v7978 = vunpack.c.l.b16 %v7863
      %v7979 = vunpack.c.l.b16 %v7864
      %v7980 = vpack.c.b16 %v7948, %v7947
      %v7981 = vpack.c.b16 %v7950, %v7949
      %v7982 = vpack.c.b16 %v7952, %v7951
      %v7983 = vpack.c.b16 %v7954, %v7953
      %v7984 = vpack.c.b16 %v7956, %v7955
      %v7985 = vpack.c.b16 %v7958, %v7957
      %v7986 = vpack.c.b16 %v7960, %v7959
      %v7987 = vpack.c.b16 %v7962, %v7961
      %v7988 = vpack.c.b16 %v7964, %v7963
      %v7989 = vpack.c.b16 %v7966, %v7965
      %v7990 = vpack.c.b16 %v7968, %v7967
      %v7991 = vpack.c.b16 %v7970, %v7969
      %v7992 = vpack.c.b16 %v7972, %v7971
      %v7993 = vpack.c.b16 %v7974, %v7973
      %v7994 = vpack.c.b16 %v7976, %v7975
      %v7995 = vpack.c.b16 %v7978, %v7977
      %v7996 = vpack.c.b16 %v7979, %v7979
      %v7997 = vrot.slane %v7980, 1
      %v7998 = vrot.slane %v7981, 1
      %v7999 = vsel %vm3083, %v7997, %v7998
      %v8000 = vrot.slane %v7982, 1
      %v8001 = vsel %vm3083, %v7998, %v8000
      %v8002 = vrot.slane %v7983, 1
      %v8003 = vsel %vm3083, %v8000, %v8002
      %v8004 = vrot.slane %v7984, 1
      %v8005 = vsel %vm3083, %v8002, %v8004
      %v8006 = vrot.slane %v7985, 1
      %v8007 = vsel %vm3083, %v8004, %v8006
      %v8008 = vrot.slane %v7986, 1
      %v8009 = vsel %vm3083, %v8006, %v8008
      %v8010 = vrot.slane %v7987, 1
      %v8011 = vsel %vm3083, %v8008, %v8010
      %v8012 = vrot.slane %v7988, 1
      %v8013 = vsel %vm3083, %v8010, %v8012
      %v8014 = vrot.slane %v7989, 1
      %v8015 = vsel %vm3083, %v8012, %v8014
      %v8016 = vrot.slane %v7990, 1
      %v8017 = vsel %vm3083, %v8014, %v8016
      %v8018 = vrot.slane %v7991, 1
      %v8019 = vsel %vm3083, %v8016, %v8018
      %v8020 = vrot.slane %v7992, 1
      %v8021 = vsel %vm3083, %v8018, %v8020
      %v8022 = vrot.slane %v7993, 1
      %v8023 = vsel %vm3083, %v8020, %v8022
      %v8024 = vrot.slane %v7994, 1
      %v8025 = vsel %vm3083, %v8022, %v8024
      %v8026 = vrot.slane %v7995, 1
      %v8027 = vsel %vm3083, %v8024, %v8026
      %v8028 = vrot.slane %v7996, 1
      %v8029 = vsel %vm3083, %v8026, %v8028
      %v8062 = vunpack.c.l.b16 %v7898
      %v8063 = vunpack.c.l.b16 %v7899
      %v8064 = vunpack.c.l.b16 %v7900
      %v8065 = vunpack.c.l.b16 %v7901
      %v8066 = vunpack.c.l.b16 %v7902
      %v8067 = vunpack.c.l.b16 %v7903
      %v8068 = vunpack.c.l.b16 %v7904
      %v8069 = vunpack.c.l.b16 %v7905
      %v8070 = vunpack.c.l.b16 %v7906
      %v8071 = vunpack.c.l.b16 %v7907
      %v8072 = vunpack.c.l.b16 %v7908
      %v8073 = vunpack.c.l.b16 %v7909
      %v8074 = vunpack.c.l.b16 %v7910
      %v8075 = vunpack.c.l.b16 %v7911
      %v8076 = vunpack.c.l.b16 %v7912
      %v8077 = vunpack.c.l.b16 %v7913
      %v8078 = vpack.c.b16 %v8063, %v8062
      %v8079 = vpack.c.b16 %v8065, %v8064
      %v8080 = vpack.c.b16 %v8067, %v8066
      %v8081 = vpack.c.b16 %v8069, %v8068
      %v8082 = vpack.c.b16 %v8071, %v8070
      %v8083 = vpack.c.b16 %v8073, %v8072
      %v8084 = vpack.c.b16 %v8075, %v8074
      %v8085 = vpack.c.b16 %v8077, %v8076
      %8094 = vmatpush.bf16.msra.mxu0 %v8085
      %8095 = vmatpush.bf16.msra.mxu0 %v8084
      %8096 = vmatpush.bf16.msra.mxu0 %v8083
      %8097 = vmatpush.bf16.msra.mxu0 %v8082
      %8098 = vmatpush.bf16.msra.mxu0 %v8081
      %8099 = vmatpush.bf16.msra.mxu0 %v8080
      %8100 = vmatpush.bf16.msra.mxu0 %v8079
      %8101 = vmatpush.bf16.msra.mxu0 %v8078
      %8102 = vmatmul.bf16.gmra.mxu0 %v7999
      %v8103 = vpop.f32.mrf.mxu0
      %v8104 = vadd.f32 0.0, %v8103
      %v8105 = vpop.f32.mrf.mxu0
      %v8106 = vadd.f32 0.0, %v8105
      %8107 = vmatmul.bf16.gmra.mxu0 %v8001
      %v8108 = vpop.f32.mrf.mxu0
      %v8109 = vadd.f32 0.0, %v8108
      %v8110 = vpop.f32.mrf.mxu0
      %v8111 = vadd.f32 0.0, %v8110
      %8112 = vmatmul.bf16.gmra.mxu0 %v8003
      %v8113 = vpop.f32.mrf.mxu0
      %v8114 = vadd.f32 0.0, %v8113
      %v8115 = vpop.f32.mrf.mxu0
      %v8116 = vadd.f32 0.0, %v8115
      %8117 = vmatmul.bf16.gmra.mxu0 %v8005
      %v8118 = vpop.f32.mrf.mxu0
      %v8119 = vadd.f32 0.0, %v8118
      %v8120 = vpop.f32.mrf.mxu0
      %v8121 = vadd.f32 0.0, %v8120
      %8122 = vmatmul.bf16.gmra.mxu0 %v8007
      %v8123 = vpop.f32.mrf.mxu0
      %v8124 = vadd.f32 0.0, %v8123
      %v8125 = vpop.f32.mrf.mxu0
      %v8126 = vadd.f32 0.0, %v8125
      %8127 = vmatmul.bf16.gmra.mxu0 %v8009
      %v8128 = vpop.f32.mrf.mxu0
      %v8129 = vadd.f32 0.0, %v8128
      %v8130 = vpop.f32.mrf.mxu0
      %v8131 = vadd.f32 0.0, %v8130
      %8132 = vmatmul.bf16.gmra.mxu0 %v8011
      %v8133 = vpop.f32.mrf.mxu0
      %v8134 = vadd.f32 0.0, %v8133
      %v8135 = vpop.f32.mrf.mxu0
      %v8136 = vadd.f32 0.0, %v8135
      %8137 = vmatmul.bf16.gmra.mxu0 %v8013
      %v8138 = vpop.f32.mrf.mxu0
      %v8139 = vadd.f32 0.0, %v8138
      %v8140 = vpop.f32.mrf.mxu0
      %v8141 = vadd.f32 0.0, %v8140
      %8142 = vmatmul.bf16.gmra.mxu0 %v8015
      %v8143 = vpop.f32.mrf.mxu0
      %v8144 = vadd.f32 0.0, %v8143
      %v8145 = vpop.f32.mrf.mxu0
      %v8146 = vadd.f32 0.0, %v8145
      %8147 = vmatmul.bf16.gmra.mxu0 %v8017
      %v8148 = vpop.f32.mrf.mxu0
      %v8149 = vadd.f32 0.0, %v8148
      %v8150 = vpop.f32.mrf.mxu0
      %v8151 = vadd.f32 0.0, %v8150
      %8152 = vmatmul.bf16.gmra.mxu0 %v8019
      %v8153 = vpop.f32.mrf.mxu0
      %v8154 = vadd.f32 0.0, %v8153
      %v8155 = vpop.f32.mrf.mxu0
      %v8156 = vadd.f32 0.0, %v8155
      %8157 = vmatmul.bf16.gmra.mxu0 %v8021
      %v8158 = vpop.f32.mrf.mxu0
      %v8159 = vadd.f32 0.0, %v8158
      %v8160 = vpop.f32.mrf.mxu0
      %v8161 = vadd.f32 0.0, %v8160
      %8162 = vmatmul.bf16.gmra.mxu0 %v8023
      %v8163 = vpop.f32.mrf.mxu0
      %v8164 = vadd.f32 0.0, %v8163
      %v8165 = vpop.f32.mrf.mxu0
      %v8166 = vadd.f32 0.0, %v8165
      %8167 = vmatmul.bf16.gmra.mxu0 %v8025
      %v8168 = vpop.f32.mrf.mxu0
      %v8169 = vadd.f32 0.0, %v8168
      %v8170 = vpop.f32.mrf.mxu0
      %v8171 = vadd.f32 0.0, %v8170
      %8172 = vmatmul.bf16.gmra.mxu0 %v8027
      %v8173 = vpop.f32.mrf.mxu0
      %v8174 = vadd.f32 0.0, %v8173
      %v8175 = vpop.f32.mrf.mxu0
      %v8176 = vadd.f32 0.0, %v8175
      %8177 = vmatmul.bf16.gmra.mxu0 %v8029
      %v8178 = vpop.f32.mrf.mxu0
      %v8179 = vadd.f32 0.0, %v8178
      %v8180 = vpop.f32.mrf.mxu0
      %v8181 = vadd.f32 0.0, %v8180
      %8182 = vdwg.mxu0
      %v8183 = vadd.f32 %v7865, %v8104
      %v8184 = vadd.f32 %v7866, %v8106
      %v8185 = vadd.f32 %v7867, %v8109
      %v8186 = vadd.f32 %v7868, %v8111
      %v8187 = vadd.f32 %v7869, %v8114
      %v8188 = vadd.f32 %v7870, %v8116
      %v8189 = vadd.f32 %v7871, %v8119
      %v8190 = vadd.f32 %v7872, %v8121
      %v8191 = vadd.f32 %v7873, %v8124
      %v8192 = vadd.f32 %v7874, %v8126
      %v8193 = vadd.f32 %v7875, %v8129
      %v8194 = vadd.f32 %v7876, %v8131
      %v8195 = vadd.f32 %v7877, %v8134
      %v8196 = vadd.f32 %v7878, %v8136
      %v8197 = vadd.f32 %v7879, %v8139
      %v8198 = vadd.f32 %v7880, %v8141
      %v8199 = vadd.f32 %v7881, %v8144
      %v8200 = vadd.f32 %v7882, %v8146
      %v8201 = vadd.f32 %v7883, %v8149
      %v8202 = vadd.f32 %v7884, %v8151
      %v8203 = vadd.f32 %v7885, %v8154
      %v8204 = vadd.f32 %v7886, %v8156
      %v8205 = vadd.f32 %v7887, %v8159
      %v8206 = vadd.f32 %v7888, %v8161
      %v8207 = vadd.f32 %v7889, %v8164
      %v8208 = vadd.f32 %v7890, %v8166
      %v8209 = vadd.f32 %v7891, %v8169
      %v8210 = vadd.f32 %v7892, %v8171
      %v8211 = vadd.f32 %v7893, %v8174
      %v8212 = vadd.f32 %v7894, %v8176
      %v8213 = vadd.f32 %v7895, %v8179
      %v8214 = vadd.f32 %v7896, %v8181
      %8215 = vst [vmem:[#allocation3] sm:$0xff] %v8183
      %8216 = vst [vmem:[#allocation3 + $0x8] sm:$0xff] %v8184
      %8217 = vst [vmem:[#allocation3 + $0x10] sm:$0xff] %v8185
      %8218 = vst [vmem:[#allocation3 + $0x18] sm:$0xff] %v8186
      %8219 = vst [vmem:[#allocation3 + $0x20] sm:$0xff] %v8187
      %8220 = vst [vmem:[#allocation3 + $0x28] sm:$0xff] %v8188
      %8221 = vst [vmem:[#allocation3 + $0x30] sm:$0xff] %v8189
      %8222 = vst [vmem:[#allocation3 + $0x38] sm:$0xff] %v8190
      %8223 = vst [vmem:[#allocation3 + $0x40] sm:$0xff] %v8191
      %8224 = vst [vmem:[#allocation3 + $0x48] sm:$0xff] %v8192
      %8225 = vst [vmem:[#allocation3 + $0x50] sm:$0xff] %v8193
      %8226 = vst [vmem:[#allocation3 + $0x58] sm:$0xff] %v8194
      %8227 = vst [vmem:[#allocation3 + $0x60] sm:$0xff] %v8195
      %8228 = vst [vmem:[#allocation3 + $0x68] sm:$0xff] %v8196
      %8229 = vst [vmem:[#allocation3 + $0x70] sm:$0xff] %v8197
      %8230 = vst [vmem:[#allocation3 + $0x78] sm:$0xff] %v8198
      %8231 = vst [vmem:[#allocation3 + $0x80] sm:$0xff] %v8199
      %8232 = vst [vmem:[#allocation3 + $0x88] sm:$0xff] %v8200
      %8233 = vst [vmem:[#allocation3 + $0x90] sm:$0xff] %v8201
      %8234 = vst [vmem:[#allocation3 + $0x98] sm:$0xff] %v8202
      %8235 = vst [vmem:[#allocation3 + $0xa0] sm:$0xff] %v8203
      %8236 = vst [vmem:[#allocation3 + $0xa8] sm:$0xff] %v8204
      %8237 = vst [vmem:[#allocation3 + $0xb0] sm:$0xff] %v8205
      %8238 = vst [vmem:[#allocation3 + $0xb8] sm:$0xff] %v8206
      %8239 = vst [vmem:[#allocation3 + $0xc0] sm:$0xff] %v8207
      %8240 = vst [vmem:[#allocation3 + $0xc8] sm:$0xff] %v8208
      %8241 = vst [vmem:[#allocation3 + $0xd0] sm:$0xff] %v8209
      %8242 = vst [vmem:[#allocation3 + $0xd8] sm:$0xff] %v8210
      %8243 = vst [vmem:[#allocation3 + $0xe0] sm:$0xff] %v8211
      %8244 = vst [vmem:[#allocation3 + $0xe8] sm:$0xff] %v8212
      %8245 = vst [vmem:[#allocation3 + $0xf0] sm:$0xff] %v8213
      %8246 = vst [vmem:[#allocation3 + $0xf8] sm:$0xff] %v8214
      %v8247 = vld [vmem:[#allocation2 + $0x8] sm:$0xf]
      %v8248 = vld [vmem:[#allocation2 + $0xc] sm:$0xf]
      %v8249 = vld [vmem:[#allocation2 + $0x10] sm:$0xf]
      %v8250 = vld [vmem:[#allocation2 + $0x14] sm:$0xf]
      %v8251 = vld [vmem:[#allocation2 + $0x18] sm:$0xf]
      %v8252 = vld [vmem:[#allocation2 + $0x1c] sm:$0xf]
      %v8253 = vld [vmem:[#allocation2 + $0x20] sm:$0xf]
      %v8254 = vld [vmem:[#allocation2 + $0x24] sm:$0xf]
      %v8255 = vld [vmem:[#allocation2 + $0x28] sm:$0xf]
      %v8256 = vld [vmem:[#allocation2 + $0x2c] sm:$0xf]
      %v8257 = vld [vmem:[#allocation2 + $0x30] sm:$0xf]
      %v8258 = vld [vmem:[#allocation2 + $0x34] sm:$0xf]
      %v8259 = vld [vmem:[#allocation2 + $0x38] sm:$0xf]
      %v8260 = vld [vmem:[#allocation2 + $0x3c] sm:$0xf]
      %v8261 = vld [vmem:[#allocation2 + $0x40] sm:$0xf]
      %v8262 = vld [vmem:[#allocation2 + $0x44] sm:$0xf]
      %v8263 = vld [vmem:[#allocation2 + $0x48] sm:$0xf]
      %v8264 = vld [vmem:[#allocation2 + $0x4c] sm:$0xf]
      %v8265 = vld [vmem:[#allocation2 + $0x50] sm:$0xf]
      %v8266 = vld [vmem:[#allocation2 + $0x54] sm:$0xf]
      %v8267 = vld [vmem:[#allocation2 + $0x58] sm:$0xf]
      %v8268 = vld [vmem:[#allocation2 + $0x5c] sm:$0xf]
      %v8269 = vld [vmem:[#allocation2 + $0x60] sm:$0xf]
      %v8270 = vld [vmem:[#allocation2 + $0x64] sm:$0xf]
      %v8271 = vld [vmem:[#allocation2 + $0x68] sm:$0xf]
      %v8272 = vld [vmem:[#allocation2 + $0x6c] sm:$0xf]
      %v8273 = vld [vmem:[#allocation2 + $0x70] sm:$0xf]
      %v8274 = vld [vmem:[#allocation2 + $0x74] sm:$0xf]
      %v8275 = vld [vmem:[#allocation2 + $0x78] sm:$0xf]
      %v8276 = vld [vmem:[#allocation2 + $0x7c] sm:$0xf]
      %v8277 = vld [vmem:[#allocation2 + $0x80] sm:$0xf]
      %v8278 = vld [vmem:[#allocation2 + $0x84] sm:$0xf]
      %v8279 = vsel %vm1409, %v8247, 0
      %v8280 = vsel %vm1410, %v8248, 0
      %v8281 = vsel %vm1411, %v8249, 0
      %v8282 = vsel %vm1412, %v8250, 0
      %v8283 = vsel %vm1413, %v8251, 0
      %v8284 = vsel %vm1414, %v8252, 0
      %v8285 = vsel %vm1415, %v8253, 0
      %v8286 = vsel %vm1416, %v8254, 0
      %v8287 = vsel %vm1417, %v8255, 0
      %v8288 = vsel %vm1418, %v8256, 0
      %v8289 = vsel %vm1419, %v8257, 0
      %v8290 = vsel %vm1420, %v8258, 0
      %v8291 = vsel %vm1421, %v8259, 0
      %v8292 = vsel %vm1422, %v8260, 0
      %v8293 = vsel %vm1423, %v8261, 0
      %v8294 = vsel %vm1424, %v8262, 0
      %v8295 = vsel %vm1425, %v8263, 0
      %v8296 = vsel %vm1426, %v8264, 0
      %v8297 = vsel %vm1427, %v8265, 0
      %v8298 = vsel %vm1428, %v8266, 0
      %v8299 = vsel %vm1429, %v8267, 0
      %v8300 = vsel %vm1430, %v8268, 0
      %v8301 = vsel %vm1431, %v8269, 0
      %v8302 = vsel %vm1432, %v8270, 0
      %v8303 = vsel %vm1433, %v8271, 0
      %v8304 = vsel %vm1434, %v8272, 0
      %v8305 = vsel %vm1435, %v8273, 0
      %v8306 = vsel %vm1436, %v8274, 0
      %v8307 = vsel %vm1437, %v8275, 0
      %v8308 = vsel %vm1438, %v8276, 0
      %v8309 = vsel %vm1439, %v8277, 0
      %v8310 = vsel %vm1440, %v8278, 0
      %v8311 = vld [vmem:[#allocation3] sm:$0xff]
      %v8312 = vld [vmem:[#allocation3 + $0x8] sm:$0xff]
      %v8313 = vld [vmem:[#allocation3 + $0x10] sm:$0xff]
      %v8314 = vld [vmem:[#allocation3 + $0x18] sm:$0xff]
      %v8315 = vld [vmem:[#allocation3 + $0x20] sm:$0xff]
      %v8316 = vld [vmem:[#allocation3 + $0x28] sm:$0xff]
      %v8317 = vld [vmem:[#allocation3 + $0x30] sm:$0xff]
      %v8318 = vld [vmem:[#allocation3 + $0x38] sm:$0xff]
      %v8319 = vld [vmem:[#allocation3 + $0x40] sm:$0xff]
      %v8320 = vld [vmem:[#allocation3 + $0x48] sm:$0xff]
      %v8321 = vld [vmem:[#allocation3 + $0x50] sm:$0xff]
      %v8322 = vld [vmem:[#allocation3 + $0x58] sm:$0xff]
      %v8323 = vld [vmem:[#allocation3 + $0x60] sm:$0xff]
      %v8324 = vld [vmem:[#allocation3 + $0x68] sm:$0xff]
      %v8325 = vld [vmem:[#allocation3 + $0x70] sm:$0xff]
      %v8326 = vld [vmem:[#allocation3 + $0x78] sm:$0xff]
      %v8327 = vld [vmem:[#allocation3 + $0x80] sm:$0xff]
      %v8328 = vld [vmem:[#allocation3 + $0x88] sm:$0xff]
      %v8329 = vld [vmem:[#allocation3 + $0x90] sm:$0xff]
      %v8330 = vld [vmem:[#allocation3 + $0x98] sm:$0xff]
      %v8331 = vld [vmem:[#allocation3 + $0xa0] sm:$0xff]
      %v8332 = vld [vmem:[#allocation3 + $0xa8] sm:$0xff]
      %v8333 = vld [vmem:[#allocation3 + $0xb0] sm:$0xff]
      %v8334 = vld [vmem:[#allocation3 + $0xb8] sm:$0xff]
      %v8335 = vld [vmem:[#allocation3 + $0xc0] sm:$0xff]
      %v8336 = vld [vmem:[#allocation3 + $0xc8] sm:$0xff]
      %v8337 = vld [vmem:[#allocation3 + $0xd0] sm:$0xff]
      %v8338 = vld [vmem:[#allocation3 + $0xd8] sm:$0xff]
      %v8339 = vld [vmem:[#allocation3 + $0xe0] sm:$0xff]
      %v8340 = vld [vmem:[#allocation3 + $0xe8] sm:$0xff]
      %v8341 = vld [vmem:[#allocation3 + $0xf0] sm:$0xff]
      %v8342 = vld [vmem:[#allocation3 + $0xf8] sm:$0xff]
      %s8343 = scalar_lea.vmem %s8, 192
      %v8344 = vld [vmem:[%s8343] sm:$0xf]
      %v8345 = vld [vmem:[%s8343 + $0x4] sm:$0xf]
      %v8346 = vld [vmem:[%s8343 + $0x8] sm:$0xf]
      %v8347 = vld [vmem:[%s8343 + $0xc] sm:$0xf]
      %v8348 = vld [vmem:[%s8343 + $0x10] sm:$0xf]
      %v8349 = vld [vmem:[%s8343 + $0x14] sm:$0xf]
      %v8350 = vld [vmem:[%s8343 + $0x18] sm:$0xf]
      %v8351 = vld [vmem:[%s8343 + $0x1c] sm:$0xf]
      %v8352 = vld [vmem:[%s8343 + $0x20] sm:$0xf]
      %v8353 = vld [vmem:[%s8343 + $0x24] sm:$0xf]
      %v8354 = vld [vmem:[%s8343 + $0x28] sm:$0xf]
      %v8355 = vld [vmem:[%s8343 + $0x2c] sm:$0xf]
      %v8356 = vld [vmem:[%s8343 + $0x30] sm:$0xf]
      %v8357 = vld [vmem:[%s8343 + $0x34] sm:$0xf]
      %v8358 = vld [vmem:[%s8343 + $0x38] sm:$0xf]
      %v8359 = vld [vmem:[%s8343 + $0x3c] sm:$0xf]
      %v8392 = vunpack.c.l.b16 %v8279
      %v8393 = vunpack.c.l.b16 %v8280
      %v8394 = vunpack.c.l.b16 %v8281
      %v8395 = vunpack.c.l.b16 %v8282
      %v8396 = vunpack.c.l.b16 %v8283
      %v8397 = vunpack.c.l.b16 %v8284
      %v8398 = vunpack.c.l.b16 %v8285
      %v8399 = vunpack.c.l.b16 %v8286
      %v8400 = vunpack.c.l.b16 %v8287
      %v8401 = vunpack.c.l.b16 %v8288
      %v8402 = vunpack.c.l.b16 %v8289
      %v8403 = vunpack.c.l.b16 %v8290
      %v8404 = vunpack.c.l.b16 %v8291
      %v8405 = vunpack.c.l.b16 %v8292
      %v8406 = vunpack.c.l.b16 %v8293
      %v8407 = vunpack.c.l.b16 %v8294
      %v8408 = vunpack.c.l.b16 %v8295
      %v8409 = vunpack.c.l.b16 %v8296
      %v8410 = vunpack.c.l.b16 %v8297
      %v8411 = vunpack.c.l.b16 %v8298
      %v8412 = vunpack.c.l.b16 %v8299
      %v8413 = vunpack.c.l.b16 %v8300
      %v8414 = vunpack.c.l.b16 %v8301
      %v8415 = vunpack.c.l.b16 %v8302
      %v8416 = vunpack.c.l.b16 %v8303
      %v8417 = vunpack.c.l.b16 %v8304
      %v8418 = vunpack.c.l.b16 %v8305
      %v8419 = vunpack.c.l.b16 %v8306
      %v8420 = vunpack.c.l.b16 %v8307
      %v8421 = vunpack.c.l.b16 %v8308
      %v8422 = vunpack.c.l.b16 %v8309
      %v8423 = vunpack.c.l.b16 %v8310
      %v8424 = vpack.c.b16 %v8393, %v8392
      %v8425 = vpack.c.b16 %v8395, %v8394
      %v8426 = vpack.c.b16 %v8397, %v8396
      %v8427 = vpack.c.b16 %v8399, %v8398
      %v8428 = vpack.c.b16 %v8401, %v8400
      %v8429 = vpack.c.b16 %v8403, %v8402
      %v8430 = vpack.c.b16 %v8405, %v8404
      %v8431 = vpack.c.b16 %v8407, %v8406
      %v8432 = vpack.c.b16 %v8409, %v8408
      %v8433 = vpack.c.b16 %v8411, %v8410
      %v8434 = vpack.c.b16 %v8413, %v8412
      %v8435 = vpack.c.b16 %v8415, %v8414
      %v8436 = vpack.c.b16 %v8417, %v8416
      %v8437 = vpack.c.b16 %v8419, %v8418
      %v8438 = vpack.c.b16 %v8421, %v8420
      %v8439 = vpack.c.b16 %v8423, %v8422
      %v8472 = vunpack.c.l.b16 %v8344
      %v8473 = vunpack.c.l.b16 %v8345
      %v8474 = vunpack.c.l.b16 %v8346
      %v8475 = vunpack.c.l.b16 %v8347
      %v8476 = vunpack.c.l.b16 %v8348
      %v8477 = vunpack.c.l.b16 %v8349
      %v8478 = vunpack.c.l.b16 %v8350
      %v8479 = vunpack.c.l.b16 %v8351
      %v8480 = vunpack.c.l.b16 %v8352
      %v8481 = vunpack.c.l.b16 %v8353
      %v8482 = vunpack.c.l.b16 %v8354
      %v8483 = vunpack.c.l.b16 %v8355
      %v8484 = vunpack.c.l.b16 %v8356
      %v8485 = vunpack.c.l.b16 %v8357
      %v8486 = vunpack.c.l.b16 %v8358
      %v8487 = vunpack.c.l.b16 %v8359
      %v8488 = vpack.c.b16 %v8473, %v8472
      %v8489 = vpack.c.b16 %v8475, %v8474
      %v8490 = vpack.c.b16 %v8477, %v8476
      %v8491 = vpack.c.b16 %v8479, %v8478
      %v8492 = vpack.c.b16 %v8481, %v8480
      %v8493 = vpack.c.b16 %v8483, %v8482
      %v8494 = vpack.c.b16 %v8485, %v8484
      %v8495 = vpack.c.b16 %v8487, %v8486
      %8504 = vmatpush.bf16.msra.mxu0 %v8495
      %8505 = vmatpush.bf16.msra.mxu0 %v8494
      %8506 = vmatpush.bf16.msra.mxu0 %v8493
      %8507 = vmatpush.bf16.msra.mxu0 %v8492
      %8508 = vmatpush.bf16.msra.mxu0 %v8491
      %8509 = vmatpush.bf16.msra.mxu0 %v8490
      %8510 = vmatpush.bf16.msra.mxu0 %v8489
      %8511 = vmatpush.bf16.msra.mxu0 %v8488
      %8512 = vmatmul.bf16.gmra.mxu0 %v8424
      %v8513 = vpop.f32.mrf.mxu0
      %v8514 = vadd.f32 0.0, %v8513
      %v8515 = vpop.f32.mrf.mxu0
      %v8516 = vadd.f32 0.0, %v8515
      %8517 = vmatmul.bf16.gmra.mxu0 %v8425
      %v8518 = vpop.f32.mrf.mxu0
      %v8519 = vadd.f32 0.0, %v8518
      %v8520 = vpop.f32.mrf.mxu0
      %v8521 = vadd.f32 0.0, %v8520
      %8522 = vmatmul.bf16.gmra.mxu0 %v8426
      %v8523 = vpop.f32.mrf.mxu0
      %v8524 = vadd.f32 0.0, %v8523
      %v8525 = vpop.f32.mrf.mxu0
      %v8526 = vadd.f32 0.0, %v8525
      %8527 = vmatmul.bf16.gmra.mxu0 %v8427
      %v8528 = vpop.f32.mrf.mxu0
      %v8529 = vadd.f32 0.0, %v8528
      %v8530 = vpop.f32.mrf.mxu0
      %v8531 = vadd.f32 0.0, %v8530
      %8532 = vmatmul.bf16.gmra.mxu0 %v8428
      %v8533 = vpop.f32.mrf.mxu0
      %v8534 = vadd.f32 0.0, %v8533
      %v8535 = vpop.f32.mrf.mxu0
      %v8536 = vadd.f32 0.0, %v8535
      %8537 = vmatmul.bf16.gmra.mxu0 %v8429
      %v8538 = vpop.f32.mrf.mxu0
      %v8539 = vadd.f32 0.0, %v8538
      %v8540 = vpop.f32.mrf.mxu0
      %v8541 = vadd.f32 0.0, %v8540
      %8542 = vmatmul.bf16.gmra.mxu0 %v8430
      %v8543 = vpop.f32.mrf.mxu0
      %v8544 = vadd.f32 0.0, %v8543
      %v8545 = vpop.f32.mrf.mxu0
      %v8546 = vadd.f32 0.0, %v8545
      %8547 = vmatmul.bf16.gmra.mxu0 %v8431
      %v8548 = vpop.f32.mrf.mxu0
      %v8549 = vadd.f32 0.0, %v8548
      %v8550 = vpop.f32.mrf.mxu0
      %v8551 = vadd.f32 0.0, %v8550
      %8552 = vmatmul.bf16.gmra.mxu0 %v8432
      %v8553 = vpop.f32.mrf.mxu0
      %v8554 = vadd.f32 0.0, %v8553
      %v8555 = vpop.f32.mrf.mxu0
      %v8556 = vadd.f32 0.0, %v8555
      %8557 = vmatmul.bf16.gmra.mxu0 %v8433
      %v8558 = vpop.f32.mrf.mxu0
      %v8559 = vadd.f32 0.0, %v8558
      %v8560 = vpop.f32.mrf.mxu0
      %v8561 = vadd.f32 0.0, %v8560
      %8562 = vmatmul.bf16.gmra.mxu0 %v8434
      %v8563 = vpop.f32.mrf.mxu0
      %v8564 = vadd.f32 0.0, %v8563
      %v8565 = vpop.f32.mrf.mxu0
      %v8566 = vadd.f32 0.0, %v8565
      %8567 = vmatmul.bf16.gmra.mxu0 %v8435
      %v8568 = vpop.f32.mrf.mxu0
      %v8569 = vadd.f32 0.0, %v8568
      %v8570 = vpop.f32.mrf.mxu0
      %v8571 = vadd.f32 0.0, %v8570
      %8572 = vmatmul.bf16.gmra.mxu0 %v8436
      %v8573 = vpop.f32.mrf.mxu0
      %v8574 = vadd.f32 0.0, %v8573
      %v8575 = vpop.f32.mrf.mxu0
      %v8576 = vadd.f32 0.0, %v8575
      %8577 = vmatmul.bf16.gmra.mxu0 %v8437
      %v8578 = vpop.f32.mrf.mxu0
      %v8579 = vadd.f32 0.0, %v8578
      %v8580 = vpop.f32.mrf.mxu0
      %v8581 = vadd.f32 0.0, %v8580
      %8582 = vmatmul.bf16.gmra.mxu0 %v8438
      %v8583 = vpop.f32.mrf.mxu0
      %v8584 = vadd.f32 0.0, %v8583
      %v8585 = vpop.f32.mrf.mxu0
      %v8586 = vadd.f32 0.0, %v8585
      %8587 = vmatmul.bf16.gmra.mxu0 %v8439
      %v8588 = vpop.f32.mrf.mxu0
      %v8589 = vadd.f32 0.0, %v8588
      %v8590 = vpop.f32.mrf.mxu0
      %v8591 = vadd.f32 0.0, %v8590
      %8592 = vdwg.mxu0
      %v8593 = vadd.f32 %v8311, %v8514
      %v8594 = vadd.f32 %v8312, %v8516
      %v8595 = vadd.f32 %v8313, %v8519
      %v8596 = vadd.f32 %v8314, %v8521
      %v8597 = vadd.f32 %v8315, %v8524
      %v8598 = vadd.f32 %v8316, %v8526
      %v8599 = vadd.f32 %v8317, %v8529
      %v8600 = vadd.f32 %v8318, %v8531
      %v8601 = vadd.f32 %v8319, %v8534
      %v8602 = vadd.f32 %v8320, %v8536
      %v8603 = vadd.f32 %v8321, %v8539
      %v8604 = vadd.f32 %v8322, %v8541
      %v8605 = vadd.f32 %v8323, %v8544
      %v8606 = vadd.f32 %v8324, %v8546
      %v8607 = vadd.f32 %v8325, %v8549
      %v8608 = vadd.f32 %v8326, %v8551
      %v8609 = vadd.f32 %v8327, %v8554
      %v8610 = vadd.f32 %v8328, %v8556
      %v8611 = vadd.f32 %v8329, %v8559
      %v8612 = vadd.f32 %v8330, %v8561
      %v8613 = vadd.f32 %v8331, %v8564
      %v8614 = vadd.f32 %v8332, %v8566
      %v8615 = vadd.f32 %v8333, %v8569
      %v8616 = vadd.f32 %v8334, %v8571
      %v8617 = vadd.f32 %v8335, %v8574
      %v8618 = vadd.f32 %v8336, %v8576
      %v8619 = vadd.f32 %v8337, %v8579
      %v8620 = vadd.f32 %v8338, %v8581
      %v8621 = vadd.f32 %v8339, %v8584
      %v8622 = vadd.f32 %v8340, %v8586
      %v8623 = vadd.f32 %v8341, %v8589
      %v8624 = vadd.f32 %v8342, %v8591
      %8625 = vst [vmem:[#allocation3] sm:$0xff] %v8593
      %8626 = vst [vmem:[#allocation3 + $0x8] sm:$0xff] %v8594
      %8627 = vst [vmem:[#allocation3 + $0x10] sm:$0xff] %v8595
      %8628 = vst [vmem:[#allocation3 + $0x18] sm:$0xff] %v8596
      %8629 = vst [vmem:[#allocation3 + $0x20] sm:$0xff] %v8597
      %8630 = vst [vmem:[#allocation3 + $0x28] sm:$0xff] %v8598
      %8631 = vst [vmem:[#allocation3 + $0x30] sm:$0xff] %v8599
      %8632 = vst [vmem:[#allocation3 + $0x38] sm:$0xff] %v8600
      %8633 = vst [vmem:[#allocation3 + $0x40] sm:$0xff] %v8601
      %8634 = vst [vmem:[#allocation3 + $0x48] sm:$0xff] %v8602
      %8635 = vst [vmem:[#allocation3 + $0x50] sm:$0xff] %v8603
      %8636 = vst [vmem:[#allocation3 + $0x58] sm:$0xff] %v8604
      %8637 = vst [vmem:[#allocation3 + $0x60] sm:$0xff] %v8605
      %8638 = vst [vmem:[#allocation3 + $0x68] sm:$0xff] %v8606
      %8639 = vst [vmem:[#allocation3 + $0x70] sm:$0xff] %v8607
      %8640 = vst [vmem:[#allocation3 + $0x78] sm:$0xff] %v8608
      %8641 = vst [vmem:[#allocation3 + $0x80] sm:$0xff] %v8609
      %8642 = vst [vmem:[#allocation3 + $0x88] sm:$0xff] %v8610
      %8643 = vst [vmem:[#allocation3 + $0x90] sm:$0xff] %v8611
      %8644 = vst [vmem:[#allocation3 + $0x98] sm:$0xff] %v8612
      %8645 = vst [vmem:[#allocation3 + $0xa0] sm:$0xff] %v8613
      %8646 = vst [vmem:[#allocation3 + $0xa8] sm:$0xff] %v8614
      %8647 = vst [vmem:[#allocation3 + $0xb0] sm:$0xff] %v8615
      %8648 = vst [vmem:[#allocation3 + $0xb8] sm:$0xff] %v8616
      %8649 = vst [vmem:[#allocation3 + $0xc0] sm:$0xff] %v8617
      %8650 = vst [vmem:[#allocation3 + $0xc8] sm:$0xff] %v8618
      %8651 = vst [vmem:[#allocation3 + $0xd0] sm:$0xff] %v8619
      %8652 = vst [vmem:[#allocation3 + $0xd8] sm:$0xff] %v8620
      %8653 = vst [vmem:[#allocation3 + $0xe0] sm:$0xff] %v8621
      %8654 = vst [vmem:[#allocation3 + $0xe8] sm:$0xff] %v8622
      %8655 = vst [vmem:[#allocation3 + $0xf0] sm:$0xff] %v8623
      %8656 = vst [vmem:[#allocation3 + $0xf8] sm:$0xff] %v8624
      %v8657 = vld [vmem:[#allocation2 + $0x8] sm:$0xf]
      %v8658 = vld [vmem:[#allocation2 + $0xc] sm:$0xf]
      %v8659 = vld [vmem:[#allocation2 + $0x10] sm:$0xf]
      %v8660 = vld [vmem:[#allocation2 + $0x14] sm:$0xf]
      %v8661 = vld [vmem:[#allocation2 + $0x18] sm:$0xf]
      %v8662 = vld [vmem:[#allocation2 + $0x1c] sm:$0xf]
      %v8663 = vld [vmem:[#allocation2 + $0x20] sm:$0xf]
      %v8664 = vld [vmem:[#allocation2 + $0x24] sm:$0xf]
      %v8665 = vld [vmem:[#allocation2 + $0x28] sm:$0xf]
      %v8666 = vld [vmem:[#allocation2 + $0x2c] sm:$0xf]
      %v8667 = vld [vmem:[#allocation2 + $0x30] sm:$0xf]
      %v8668 = vld [vmem:[#allocation2 + $0x34] sm:$0xf]
      %v8669 = vld [vmem:[#allocation2 + $0x38] sm:$0xf]
      %v8670 = vld [vmem:[#allocation2 + $0x3c] sm:$0xf]
      %v8671 = vld [vmem:[#allocation2 + $0x40] sm:$0xf]
      %v8672 = vld [vmem:[#allocation2 + $0x44] sm:$0xf]
      %v8673 = vld [vmem:[#allocation2 + $0x48] sm:$0xf]
      %v8674 = vld [vmem:[#allocation2 + $0x4c] sm:$0xf]
      %v8675 = vld [vmem:[#allocation2 + $0x50] sm:$0xf]
      %v8676 = vld [vmem:[#allocation2 + $0x54] sm:$0xf]
      %v8677 = vld [vmem:[#allocation2 + $0x58] sm:$0xf]
      %v8678 = vld [vmem:[#allocation2 + $0x5c] sm:$0xf]
      %v8679 = vld [vmem:[#allocation2 + $0x60] sm:$0xf]
      %v8680 = vld [vmem:[#allocation2 + $0x64] sm:$0xf]
      %v8681 = vld [vmem:[#allocation2 + $0x68] sm:$0xf]
      %v8682 = vld [vmem:[#allocation2 + $0x6c] sm:$0xf]
      %v8683 = vld [vmem:[#allocation2 + $0x70] sm:$0xf]
      %v8684 = vld [vmem:[#allocation2 + $0x74] sm:$0xf]
      %v8685 = vld [vmem:[#allocation2 + $0x78] sm:$0xf]
      %v8686 = vld [vmem:[#allocation2 + $0x7c] sm:$0xf]
      %v8687 = vld [vmem:[#allocation2 + $0x80] sm:$0xf]
      %v8688 = vld [vmem:[#allocation2 + $0x84] sm:$0xf]
      %v8689 = vld [vmem:[#allocation2 + $0x88] sm:$0x1]
      %v8690 = vld [vmem:[#allocation3] sm:$0xff]
      %v8691 = vld [vmem:[#allocation3 + $0x8] sm:$0xff]
      %v8692 = vld [vmem:[#allocation3 + $0x10] sm:$0xff]
      %v8693 = vld [vmem:[#allocation3 + $0x18] sm:$0xff]
      %v8694 = vld [vmem:[#allocation3 + $0x20] sm:$0xff]
      %v8695 = vld [vmem:[#allocation3 + $0x28] sm:$0xff]
      %v8696 = vld [vmem:[#allocation3 + $0x30] sm:$0xff]
      %v8697 = vld [vmem:[#allocation3 + $0x38] sm:$0xff]
      %v8698 = vld [vmem:[#allocation3 + $0x40] sm:$0xff]
      %v8699 = vld [vmem:[#allocation3 + $0x48] sm:$0xff]
      %v8700 = vld [vmem:[#allocation3 + $0x50] sm:$0xff]
      %v8701 = vld [vmem:[#allocation3 + $0x58] sm:$0xff]
      %v8702 = vld [vmem:[#allocation3 + $0x60] sm:$0xff]
      %v8703 = vld [vmem:[#allocation3 + $0x68] sm:$0xff]
      %v8704 = vld [vmem:[#allocation3 + $0x70] sm:$0xff]
      %v8705 = vld [vmem:[#allocation3 + $0x78] sm:$0xff]
      %v8706 = vld [vmem:[#allocation3 + $0x80] sm:$0xff]
      %v8707 = vld [vmem:[#allocation3 + $0x88] sm:$0xff]
      %v8708 = vld [vmem:[#allocation3 + $0x90] sm:$0xff]
      %v8709 = vld [vmem:[#allocation3 + $0x98] sm:$0xff]
      %v8710 = vld [vmem:[#allocation3 + $0xa0] sm:$0xff]
      %v8711 = vld [vmem:[#allocation3 + $0xa8] sm:$0xff]
      %v8712 = vld [vmem:[#allocation3 + $0xb0] sm:$0xff]
      %v8713 = vld [vmem:[#allocation3 + $0xb8] sm:$0xff]
      %v8714 = vld [vmem:[#allocation3 + $0xc0] sm:$0xff]
      %v8715 = vld [vmem:[#allocation3 + $0xc8] sm:$0xff]
      %v8716 = vld [vmem:[#allocation3 + $0xd0] sm:$0xff]
      %v8717 = vld [vmem:[#allocation3 + $0xd8] sm:$0xff]
      %v8718 = vld [vmem:[#allocation3 + $0xe0] sm:$0xff]
      %v8719 = vld [vmem:[#allocation3 + $0xe8] sm:$0xff]
      %v8720 = vld [vmem:[#allocation3 + $0xf0] sm:$0xff]
      %v8721 = vld [vmem:[#allocation3 + $0xf8] sm:$0xff]
      %s8722 = scalar_lea.vmem %s8, 256
      %v8723 = vld [vmem:[%s8722] sm:$0xf]
      %v8724 = vld [vmem:[%s8722 + $0x4] sm:$0xf]
      %v8725 = vld [vmem:[%s8722 + $0x8] sm:$0xf]
      %v8726 = vld [vmem:[%s8722 + $0xc] sm:$0xf]
      %v8727 = vld [vmem:[%s8722 + $0x10] sm:$0xf]
      %v8728 = vld [vmem:[%s8722 + $0x14] sm:$0xf]
      %v8729 = vld [vmem:[%s8722 + $0x18] sm:$0xf]
      %v8730 = vld [vmem:[%s8722 + $0x1c] sm:$0xf]
      %v8731 = vld [vmem:[%s8722 + $0x20] sm:$0xf]
      %v8732 = vld [vmem:[%s8722 + $0x24] sm:$0xf]
      %v8733 = vld [vmem:[%s8722 + $0x28] sm:$0xf]
      %v8734 = vld [vmem:[%s8722 + $0x2c] sm:$0xf]
      %v8735 = vld [vmem:[%s8722 + $0x30] sm:$0xf]
      %v8736 = vld [vmem:[%s8722 + $0x34] sm:$0xf]
      %v8737 = vld [vmem:[%s8722 + $0x38] sm:$0xf]
      %v8738 = vld [vmem:[%s8722 + $0x3c] sm:$0xf]
      %v8772 = vunpack.c.l.b16 %v8657
      %v8773 = vunpack.c.l.b16 %v8658
      %v8774 = vunpack.c.l.b16 %v8659
      %v8775 = vunpack.c.l.b16 %v8660
      %v8776 = vunpack.c.l.b16 %v8661
      %v8777 = vunpack.c.l.b16 %v8662
      %v8778 = vunpack.c.l.b16 %v8663
      %v8779 = vunpack.c.l.b16 %v8664
      %v8780 = vunpack.c.l.b16 %v8665
      %v8781 = vunpack.c.l.b16 %v8666
      %v8782 = vunpack.c.l.b16 %v8667
      %v8783 = vunpack.c.l.b16 %v8668
      %v8784 = vunpack.c.l.b16 %v8669
      %v8785 = vunpack.c.l.b16 %v8670
      %v8786 = vunpack.c.l.b16 %v8671
      %v8787 = vunpack.c.l.b16 %v8672
      %v8788 = vunpack.c.l.b16 %v8673
      %v8789 = vunpack.c.l.b16 %v8674
      %v8790 = vunpack.c.l.b16 %v8675
      %v8791 = vunpack.c.l.b16 %v8676
      %v8792 = vunpack.c.l.b16 %v8677
      %v8793 = vunpack.c.l.b16 %v8678
      %v8794 = vunpack.c.l.b16 %v8679
      %v8795 = vunpack.c.l.b16 %v8680
      %v8796 = vunpack.c.l.b16 %v8681
      %v8797 = vunpack.c.l.b16 %v8682
      %v8798 = vunpack.c.l.b16 %v8683
      %v8799 = vunpack.c.l.b16 %v8684
      %v8800 = vunpack.c.l.b16 %v8685
      %v8801 = vunpack.c.l.b16 %v8686
      %v8802 = vunpack.c.l.b16 %v8687
      %v8803 = vunpack.c.l.b16 %v8688
      %v8804 = vunpack.c.l.b16 %v8689
      %v8805 = vpack.c.b16 %v8773, %v8772
      %v8806 = vpack.c.b16 %v8775, %v8774
      %v8807 = vpack.c.b16 %v8777, %v8776
      %v8808 = vpack.c.b16 %v8779, %v8778
      %v8809 = vpack.c.b16 %v8781, %v8780
      %v8810 = vpack.c.b16 %v8783, %v8782
      %v8811 = vpack.c.b16 %v8785, %v8784
      %v8812 = vpack.c.b16 %v8787, %v8786
      %v8813 = vpack.c.b16 %v8789, %v8788
      %v8814 = vpack.c.b16 %v8791, %v8790
      %v8815 = vpack.c.b16 %v8793, %v8792
      %v8816 = vpack.c.b16 %v8795, %v8794
      %v8817 = vpack.c.b16 %v8797, %v8796
      %v8818 = vpack.c.b16 %v8799, %v8798
      %v8819 = vpack.c.b16 %v8801, %v8800
      %v8820 = vpack.c.b16 %v8803, %v8802
      %v8821 = vpack.c.b16 %v8804, %v8804
      %v8823 = vshrl.u32 %v8805, 16
      %v8825 = vshll.u32 %v8805, 16
      %v8827 = vrot.slane %v8825, 1
      %v8828 = vor.u32 %v8823, %v8827
      %v8830 = vshll.u32 %v8806, 16
      %v8832 = vrot.slane %v8830, 1
      %v8833 = vsel %vm1983, %v8828, %v8832
      %v8834 = vshrl.u32 %v8806, 16
      %v8836 = vor.u32 %v8834, %v8832
      %v8838 = vshll.u32 %v8807, 16
      %v8840 = vrot.slane %v8838, 1
      %v8841 = vsel %vm1983, %v8836, %v8840
      %v8842 = vshrl.u32 %v8807, 16
      %v8844 = vor.u32 %v8842, %v8840
      %v8846 = vshll.u32 %v8808, 16
      %v8848 = vrot.slane %v8846, 1
      %v8849 = vsel %vm1983, %v8844, %v8848
      %v8850 = vshrl.u32 %v8808, 16
      %v8852 = vor.u32 %v8850, %v8848
      %v8854 = vshll.u32 %v8809, 16
      %v8856 = vrot.slane %v8854, 1
      %v8857 = vsel %vm1983, %v8852, %v8856
      %v8858 = vshrl.u32 %v8809, 16
      %v8860 = vor.u32 %v8858, %v8856
      %v8862 = vshll.u32 %v8810, 16
      %v8864 = vrot.slane %v8862, 1
      %v8865 = vsel %vm1983, %v8860, %v8864
      %v8866 = vshrl.u32 %v8810, 16
      %v8868 = vor.u32 %v8866, %v8864
      %v8870 = vshll.u32 %v8811, 16
      %v8872 = vrot.slane %v8870, 1
      %v8873 = vsel %vm1983, %v8868, %v8872
      %v8874 = vshrl.u32 %v8811, 16
      %v8876 = vor.u32 %v8874, %v8872
      %v8878 = vshll.u32 %v8812, 16
      %v8880 = vrot.slane %v8878, 1
      %v8881 = vsel %vm1983, %v8876, %v8880
      %v8882 = vshrl.u32 %v8812, 16
      %v8884 = vor.u32 %v8882, %v8880
      %v8886 = vshll.u32 %v8813, 16
      %v8888 = vrot.slane %v8886, 1
      %v8889 = vsel %vm1983, %v8884, %v8888
      %v8890 = vshrl.u32 %v8813, 16
      %v8892 = vor.u32 %v8890, %v8888
      %v8894 = vshll.u32 %v8814, 16
      %v8896 = vrot.slane %v8894, 1
      %v8897 = vsel %vm1983, %v8892, %v8896
      %v8898 = vshrl.u32 %v8814, 16
      %v8900 = vor.u32 %v8898, %v8896
      %v8902 = vshll.u32 %v8815, 16
      %v8904 = vrot.slane %v8902, 1
      %v8905 = vsel %vm1983, %v8900, %v8904
      %v8906 = vshrl.u32 %v8815, 16
      %v8908 = vor.u32 %v8906, %v8904
      %v8910 = vshll.u32 %v8816, 16
      %v8912 = vrot.slane %v8910, 1
      %v8913 = vsel %vm1983, %v8908, %v8912
      %v8914 = vshrl.u32 %v8816, 16
      %v8916 = vor.u32 %v8914, %v8912
      %v8918 = vshll.u32 %v8817, 16
      %v8920 = vrot.slane %v8918, 1
      %v8921 = vsel %vm1983, %v8916, %v8920
      %v8922 = vshrl.u32 %v8817, 16
      %v8924 = vor.u32 %v8922, %v8920
      %v8926 = vshll.u32 %v8818, 16
      %v8928 = vrot.slane %v8926, 1
      %v8929 = vsel %vm1983, %v8924, %v8928
      %v8930 = vshrl.u32 %v8818, 16
      %v8932 = vor.u32 %v8930, %v8928
      %v8934 = vshll.u32 %v8819, 16
      %v8936 = vrot.slane %v8934, 1
      %v8937 = vsel %vm1983, %v8932, %v8936
      %v8938 = vshrl.u32 %v8819, 16
      %v8940 = vor.u32 %v8938, %v8936
      %v8942 = vshll.u32 %v8820, 16
      %v8944 = vrot.slane %v8942, 1
      %v8945 = vsel %vm1983, %v8940, %v8944
      %v8946 = vshrl.u32 %v8820, 16
      %v8948 = vor.u32 %v8946, %v8944
      %v8950 = vshll.u32 %v8821, 16
      %v8952 = vrot.slane %v8950, 1
      %v8953 = vsel %vm1983, %v8948, %v8952
      %v8986 = vunpack.c.l.b16 %v8723
      %v8987 = vunpack.c.l.b16 %v8724
      %v8988 = vunpack.c.l.b16 %v8725
      %v8989 = vunpack.c.l.b16 %v8726
      %v8990 = vunpack.c.l.b16 %v8727
      %v8991 = vunpack.c.l.b16 %v8728
      %v8992 = vunpack.c.l.b16 %v8729
      %v8993 = vunpack.c.l.b16 %v8730
      %v8994 = vunpack.c.l.b16 %v8731
      %v8995 = vunpack.c.l.b16 %v8732
      %v8996 = vunpack.c.l.b16 %v8733
      %v8997 = vunpack.c.l.b16 %v8734
      %v8998 = vunpack.c.l.b16 %v8735
      %v8999 = vunpack.c.l.b16 %v8736
      %v9000 = vunpack.c.l.b16 %v8737
      %v9001 = vunpack.c.l.b16 %v8738
      %v9002 = vpack.c.b16 %v8987, %v8986
      %v9003 = vpack.c.b16 %v8989, %v8988
      %v9004 = vpack.c.b16 %v8991, %v8990
      %v9005 = vpack.c.b16 %v8993, %v8992
      %v9006 = vpack.c.b16 %v8995, %v8994
      %v9007 = vpack.c.b16 %v8997, %v8996
      %v9008 = vpack.c.b16 %v8999, %v8998
      %v9009 = vpack.c.b16 %v9001, %v9000
      %9018 = vmatpush.bf16.msra.mxu0 %v9009
      %9019 = vmatpush.bf16.msra.mxu0 %v9008
      %9020 = vmatpush.bf16.msra.mxu0 %v9007
      %9021 = vmatpush.bf16.msra.mxu0 %v9006
      %9022 = vmatpush.bf16.msra.mxu0 %v9005
      %9023 = vmatpush.bf16.msra.mxu0 %v9004
      %9024 = vmatpush.bf16.msra.mxu0 %v9003
      %9025 = vmatpush.bf16.msra.mxu0 %v9002
      %9026 = vmatmul.bf16.gmra.mxu0 %v8833
      %v9027 = vpop.f32.mrf.mxu0
      %v9028 = vadd.f32 0.0, %v9027
      %v9029 = vpop.f32.mrf.mxu0
      %v9030 = vadd.f32 0.0, %v9029
      %9031 = vmatmul.bf16.gmra.mxu0 %v8841
      %v9032 = vpop.f32.mrf.mxu0
      %v9033 = vadd.f32 0.0, %v9032
      %v9034 = vpop.f32.mrf.mxu0
      %v9035 = vadd.f32 0.0, %v9034
      %9036 = vmatmul.bf16.gmra.mxu0 %v8849
      %v9037 = vpop.f32.mrf.mxu0
      %v9038 = vadd.f32 0.0, %v9037
      %v9039 = vpop.f32.mrf.mxu0
      %v9040 = vadd.f32 0.0, %v9039
      %9041 = vmatmul.bf16.gmra.mxu0 %v8857
      %v9042 = vpop.f32.mrf.mxu0
      %v9043 = vadd.f32 0.0, %v9042
      %v9044 = vpop.f32.mrf.mxu0
      %v9045 = vadd.f32 0.0, %v9044
      %9046 = vmatmul.bf16.gmra.mxu0 %v8865
      %v9047 = vpop.f32.mrf.mxu0
      %v9048 = vadd.f32 0.0, %v9047
      %v9049 = vpop.f32.mrf.mxu0
      %v9050 = vadd.f32 0.0, %v9049
      %9051 = vmatmul.bf16.gmra.mxu0 %v8873
      %v9052 = vpop.f32.mrf.mxu0
      %v9053 = vadd.f32 0.0, %v9052
      %v9054 = vpop.f32.mrf.mxu0
      %v9055 = vadd.f32 0.0, %v9054
      %9056 = vmatmul.bf16.gmra.mxu0 %v8881
      %v9057 = vpop.f32.mrf.mxu0
      %v9058 = vadd.f32 0.0, %v9057
      %v9059 = vpop.f32.mrf.mxu0
      %v9060 = vadd.f32 0.0, %v9059
      %9061 = vmatmul.bf16.gmra.mxu0 %v8889
      %v9062 = vpop.f32.mrf.mxu0
      %v9063 = vadd.f32 0.0, %v9062
      %v9064 = vpop.f32.mrf.mxu0
      %v9065 = vadd.f32 0.0, %v9064
      %9066 = vmatmul.bf16.gmra.mxu0 %v8897
      %v9067 = vpop.f32.mrf.mxu0
      %v9068 = vadd.f32 0.0, %v9067
      %v9069 = vpop.f32.mrf.mxu0
      %v9070 = vadd.f32 0.0, %v9069
      %9071 = vmatmul.bf16.gmra.mxu0 %v8905
      %v9072 = vpop.f32.mrf.mxu0
      %v9073 = vadd.f32 0.0, %v9072
      %v9074 = vpop.f32.mrf.mxu0
      %v9075 = vadd.f32 0.0, %v9074
      %9076 = vmatmul.bf16.gmra.mxu0 %v8913
      %v9077 = vpop.f32.mrf.mxu0
      %v9078 = vadd.f32 0.0, %v9077
      %v9079 = vpop.f32.mrf.mxu0
      %v9080 = vadd.f32 0.0, %v9079
      %9081 = vmatmul.bf16.gmra.mxu0 %v8921
      %v9082 = vpop.f32.mrf.mxu0
      %v9083 = vadd.f32 0.0, %v9082
      %v9084 = vpop.f32.mrf.mxu0
      %v9085 = vadd.f32 0.0, %v9084
      %9086 = vmatmul.bf16.gmra.mxu0 %v8929
      %v9087 = vpop.f32.mrf.mxu0
      %v9088 = vadd.f32 0.0, %v9087
      %v9089 = vpop.f32.mrf.mxu0
      %v9090 = vadd.f32 0.0, %v9089
      %9091 = vmatmul.bf16.gmra.mxu0 %v8937
      %v9092 = vpop.f32.mrf.mxu0
      %v9093 = vadd.f32 0.0, %v9092
      %v9094 = vpop.f32.mrf.mxu0
      %v9095 = vadd.f32 0.0, %v9094
      %9096 = vmatmul.bf16.gmra.mxu0 %v8945
      %v9097 = vpop.f32.mrf.mxu0
      %v9098 = vadd.f32 0.0, %v9097
      %v9099 = vpop.f32.mrf.mxu0
      %v9100 = vadd.f32 0.0, %v9099
      %9101 = vmatmul.bf16.gmra.mxu0 %v8953
      %v9102 = vpop.f32.mrf.mxu0
      %v9103 = vadd.f32 0.0, %v9102
      %v9104 = vpop.f32.mrf.mxu0
      %v9105 = vadd.f32 0.0, %v9104
      %9106 = vdwg.mxu0
      %v9107 = vadd.f32 %v8690, %v9028
      %v9108 = vadd.f32 %v8691, %v9030
      %v9109 = vadd.f32 %v8692, %v9033
      %v9110 = vadd.f32 %v8693, %v9035
      %v9111 = vadd.f32 %v8694, %v9038
      %v9112 = vadd.f32 %v8695, %v9040
      %v9113 = vadd.f32 %v8696, %v9043
      %v9114 = vadd.f32 %v8697, %v9045
      %v9115 = vadd.f32 %v8698, %v9048
      %v9116 = vadd.f32 %v8699, %v9050
      %v9117 = vadd.f32 %v8700, %v9053
      %v9118 = vadd.f32 %v8701, %v9055
      %v9119 = vadd.f32 %v8702, %v9058
      %v9120 = vadd.f32 %v8703, %v9060
      %v9121 = vadd.f32 %v8704, %v9063
      %v9122 = vadd.f32 %v8705, %v9065
      %v9123 = vadd.f32 %v8706, %v9068
      %v9124 = vadd.f32 %v8707, %v9070
      %v9125 = vadd.f32 %v8708, %v9073
      %v9126 = vadd.f32 %v8709, %v9075
      %v9127 = vadd.f32 %v8710, %v9078
      %v9128 = vadd.f32 %v8711, %v9080
      %v9129 = vadd.f32 %v8712, %v9083
      %v9130 = vadd.f32 %v8713, %v9085
      %v9131 = vadd.f32 %v8714, %v9088
      %v9132 = vadd.f32 %v8715, %v9090
      %v9133 = vadd.f32 %v8716, %v9093
      %v9134 = vadd.f32 %v8717, %v9095
      %v9135 = vadd.f32 %v8718, %v9098
      %v9136 = vadd.f32 %v8719, %v9100
      %v9137 = vadd.f32 %v8720, %v9103
      %v9138 = vadd.f32 %v8721, %v9105
      %9139 = vst [vmem:[#allocation3] sm:$0xff] %v9107
      %9140 = vst [vmem:[#allocation3 + $0x8] sm:$0xff] %v9108
      %9141 = vst [vmem:[#allocation3 + $0x10] sm:$0xff] %v9109
      %9142 = vst [vmem:[#allocation3 + $0x18] sm:$0xff] %v9110
      %9143 = vst [vmem:[#allocation3 + $0x20] sm:$0xff] %v9111
      %9144 = vst [vmem:[#allocation3 + $0x28] sm:$0xff] %v9112
      %9145 = vst [vmem:[#allocation3 + $0x30] sm:$0xff] %v9113
      %9146 = vst [vmem:[#allocation3 + $0x38] sm:$0xff] %v9114
      %9147 = vst [vmem:[#allocation3 + $0x40] sm:$0xff] %v9115
      %9148 = vst [vmem:[#allocation3 + $0x48] sm:$0xff] %v9116
      %9149 = vst [vmem:[#allocation3 + $0x50] sm:$0xff] %v9117
      %9150 = vst [vmem:[#allocation3 + $0x58] sm:$0xff] %v9118
      %9151 = vst [vmem:[#allocation3 + $0x60] sm:$0xff] %v9119
      %9152 = vst [vmem:[#allocation3 + $0x68] sm:$0xff] %v9120
      %9153 = vst [vmem:[#allocation3 + $0x70] sm:$0xff] %v9121
      %9154 = vst [vmem:[#allocation3 + $0x78] sm:$0xff] %v9122
      %9155 = vst [vmem:[#allocation3 + $0x80] sm:$0xff] %v9123
      %9156 = vst [vmem:[#allocation3 + $0x88] sm:$0xff] %v9124
      %9157 = vst [vmem:[#allocation3 + $0x90] sm:$0xff] %v9125
      %9158 = vst [vmem:[#allocation3 + $0x98] sm:$0xff] %v9126
      %9159 = vst [vmem:[#allocation3 + $0xa0] sm:$0xff] %v9127
      %9160 = vst [vmem:[#allocation3 + $0xa8] sm:$0xff] %v9128
      %9161 = vst [vmem:[#allocation3 + $0xb0] sm:$0xff] %v9129
      %9162 = vst [vmem:[#allocation3 + $0xb8] sm:$0xff] %v9130
      %9163 = vst [vmem:[#allocation3 + $0xc0] sm:$0xff] %v9131
      %9164 = vst [vmem:[#allocation3 + $0xc8] sm:$0xff] %v9132
      %9165 = vst [vmem:[#allocation3 + $0xd0] sm:$0xff] %v9133
      %9166 = vst [vmem:[#allocation3 + $0xd8] sm:$0xff] %v9134
      %9167 = vst [vmem:[#allocation3 + $0xe0] sm:$0xff] %v9135
      %9168 = vst [vmem:[#allocation3 + $0xe8] sm:$0xff] %v9136
      %9169 = vst [vmem:[#allocation3 + $0xf0] sm:$0xff] %v9137
      %9170 = vst [vmem:[#allocation3 + $0xf8] sm:$0xff] %v9138
      %v9171 = vld [vmem:[#allocation2 + $0x8] sm:$0xe]
      %v9172 = vld [vmem:[#allocation2 + $0xc] sm:$0xf]
      %v9173 = vld [vmem:[#allocation2 + $0x10] sm:$0xf]
      %v9174 = vld [vmem:[#allocation2 + $0x14] sm:$0xf]
      %v9175 = vld [vmem:[#allocation2 + $0x18] sm:$0xf]
      %v9176 = vld [vmem:[#allocation2 + $0x1c] sm:$0xf]
      %v9177 = vld [vmem:[#allocation2 + $0x20] sm:$0xf]
      %v9178 = vld [vmem:[#allocation2 + $0x24] sm:$0xf]
      %v9179 = vld [vmem:[#allocation2 + $0x28] sm:$0xf]
      %v9180 = vld [vmem:[#allocation2 + $0x2c] sm:$0xf]
      %v9181 = vld [vmem:[#allocation2 + $0x30] sm:$0xf]
      %v9182 = vld [vmem:[#allocation2 + $0x34] sm:$0xf]
      %v9183 = vld [vmem:[#allocation2 + $0x38] sm:$0xf]
      %v9184 = vld [vmem:[#allocation2 + $0x3c] sm:$0xf]
      %v9185 = vld [vmem:[#allocation2 + $0x40] sm:$0xf]
      %v9186 = vld [vmem:[#allocation2 + $0x44] sm:$0xf]
      %v9187 = vld [vmem:[#allocation2 + $0x48] sm:$0xf]
      %v9188 = vld [vmem:[#allocation2 + $0x4c] sm:$0xf]
      %v9189 = vld [vmem:[#allocation2 + $0x50] sm:$0xf]
      %v9190 = vld [vmem:[#allocation2 + $0x54] sm:$0xf]
      %v9191 = vld [vmem:[#allocation2 + $0x58] sm:$0xf]
      %v9192 = vld [vmem:[#allocation2 + $0x5c] sm:$0xf]
      %v9193 = vld [vmem:[#allocation2 + $0x60] sm:$0xf]
      %v9194 = vld [vmem:[#allocation2 + $0x64] sm:$0xf]
      %v9195 = vld [vmem:[#allocation2 + $0x68] sm:$0xf]
      %v9196 = vld [vmem:[#allocation2 + $0x6c] sm:$0xf]
      %v9197 = vld [vmem:[#allocation2 + $0x70] sm:$0xf]
      %v9198 = vld [vmem:[#allocation2 + $0x74] sm:$0xf]
      %v9199 = vld [vmem:[#allocation2 + $0x78] sm:$0xf]
      %v9200 = vld [vmem:[#allocation2 + $0x7c] sm:$0xf]
      %v9201 = vld [vmem:[#allocation2 + $0x80] sm:$0xf]
      %v9202 = vld [vmem:[#allocation2 + $0x84] sm:$0xf]
      %v9203 = vld [vmem:[#allocation2 + $0x88] sm:$0x1]
      %v9204 = vsel %vm2693, %v9171, 0
      %v9205 = vsel %vm2700, %v9172, 0
      %v9206 = vsel %vm2707, %v9173, 0
      %v9207 = vsel %vm2714, %v9174, 0
      %v9208 = vsel %vm2721, %v9175, 0
      %v9209 = vsel %vm2728, %v9176, 0
      %v9210 = vsel %vm2735, %v9177, 0
      %v9211 = vsel %vm2742, %v9178, 0
      %v9212 = vsel %vm2749, %v9179, 0
      %v9213 = vsel %vm2756, %v9180, 0
      %v9214 = vsel %vm2763, %v9181, 0
      %v9215 = vsel %vm2770, %v9182, 0
      %v9216 = vsel %vm2777, %v9183, 0
      %v9217 = vsel %vm2784, %v9184, 0
      %v9218 = vsel %vm2791, %v9185, 0
      %v9219 = vsel %vm2798, %v9186, 0
      %v9220 = vsel %vm2805, %v9187, 0
      %v9221 = vsel %vm2812, %v9188, 0
      %v9222 = vsel %vm2819, %v9189, 0
      %v9223 = vsel %vm2826, %v9190, 0
      %v9224 = vsel %vm2833, %v9191, 0
      %v9225 = vsel %vm2840, %v9192, 0
      %v9226 = vsel %vm2847, %v9193, 0
      %v9227 = vsel %vm2854, %v9194, 0
      %v9228 = vsel %vm2861, %v9195, 0
      %v9229 = vsel %vm2868, %v9196, 0
      %v9230 = vsel %vm2875, %v9197, 0
      %v9231 = vsel %vm2882, %v9198, 0
      %v9232 = vsel %vm2889, %v9199, 0
      %v9233 = vsel %vm2896, %v9200, 0
      %v9234 = vsel %vm2903, %v9201, 0
      %v9235 = vsel %vm2910, %v9202, 0
      %v9236 = vsel %vm2917, %v9203, 0
      %v9237 = vld [vmem:[#allocation3] sm:$0xff]
      %v9238 = vld [vmem:[#allocation3 + $0x8] sm:$0xff]
      %v9239 = vld [vmem:[#allocation3 + $0x10] sm:$0xff]
      %v9240 = vld [vmem:[#allocation3 + $0x18] sm:$0xff]
      %v9241 = vld [vmem:[#allocation3 + $0x20] sm:$0xff]
      %v9242 = vld [vmem:[#allocation3 + $0x28] sm:$0xff]
      %v9243 = vld [vmem:[#allocation3 + $0x30] sm:$0xff]
      %v9244 = vld [vmem:[#allocation3 + $0x38] sm:$0xff]
      %v9245 = vld [vmem:[#allocation3 + $0x40] sm:$0xff]
      %v9246 = vld [vmem:[#allocation3 + $0x48] sm:$0xff]
      %v9247 = vld [vmem:[#allocation3 + $0x50] sm:$0xff]
      %v9248 = vld [vmem:[#allocation3 + $0x58] sm:$0xff]
      %v9249 = vld [vmem:[#allocation3 + $0x60] sm:$0xff]
      %v9250 = vld [vmem:[#allocation3 + $0x68] sm:$0xff]
      %v9251 = vld [vmem:[#allocation3 + $0x70] sm:$0xff]
      %v9252 = vld [vmem:[#allocation3 + $0x78] sm:$0xff]
      %v9253 = vld [vmem:[#allocation3 + $0x80] sm:$0xff]
      %v9254 = vld [vmem:[#allocation3 + $0x88] sm:$0xff]
      %v9255 = vld [vmem:[#allocation3 + $0x90] sm:$0xff]
      %v9256 = vld [vmem:[#allocation3 + $0x98] sm:$0xff]
      %v9257 = vld [vmem:[#allocation3 + $0xa0] sm:$0xff]
      %v9258 = vld [vmem:[#allocation3 + $0xa8] sm:$0xff]
      %v9259 = vld [vmem:[#allocation3 + $0xb0] sm:$0xff]
      %v9260 = vld [vmem:[#allocation3 + $0xb8] sm:$0xff]
      %v9261 = vld [vmem:[#allocation3 + $0xc0] sm:$0xff]
      %v9262 = vld [vmem:[#allocation3 + $0xc8] sm:$0xff]
      %v9263 = vld [vmem:[#allocation3 + $0xd0] sm:$0xff]
      %v9264 = vld [vmem:[#allocation3 + $0xd8] sm:$0xff]
      %v9265 = vld [vmem:[#allocation3 + $0xe0] sm:$0xff]
      %v9266 = vld [vmem:[#allocation3 + $0xe8] sm:$0xff]
      %v9267 = vld [vmem:[#allocation3 + $0xf0] sm:$0xff]
      %v9268 = vld [vmem:[#allocation3 + $0xf8] sm:$0xff]
      %s9269 = scalar_lea.vmem %s8, 320
      %v9270 = vld [vmem:[%s9269] sm:$0xf]
      %v9271 = vld [vmem:[%s9269 + $0x4] sm:$0xf]
      %v9272 = vld [vmem:[%s9269 + $0x8] sm:$0xf]
      %v9273 = vld [vmem:[%s9269 + $0xc] sm:$0xf]
      %v9274 = vld [vmem:[%s9269 + $0x10] sm:$0xf]
      %v9275 = vld [vmem:[%s9269 + $0x14] sm:$0xf]
      %v9276 = vld [vmem:[%s9269 + $0x18] sm:$0xf]
      %v9277 = vld [vmem:[%s9269 + $0x1c] sm:$0xf]
      %v9278 = vld [vmem:[%s9269 + $0x20] sm:$0xf]
      %v9279 = vld [vmem:[%s9269 + $0x24] sm:$0xf]
      %v9280 = vld [vmem:[%s9269 + $0x28] sm:$0xf]
      %v9281 = vld [vmem:[%s9269 + $0x2c] sm:$0xf]
      %v9282 = vld [vmem:[%s9269 + $0x30] sm:$0xf]
      %v9283 = vld [vmem:[%s9269 + $0x34] sm:$0xf]
      %v9284 = vld [vmem:[%s9269 + $0x38] sm:$0xf]
      %v9285 = vld [vmem:[%s9269 + $0x3c] sm:$0xf]
      %v9319 = vunpack.c.l.b16 %v9204
      %v9320 = vunpack.c.l.b16 %v9205
      %v9321 = vunpack.c.l.b16 %v9206
      %v9322 = vunpack.c.l.b16 %v9207
      %v9323 = vunpack.c.l.b16 %v9208
      %v9324 = vunpack.c.l.b16 %v9209
      %v9325 = vunpack.c.l.b16 %v9210
      %v9326 = vunpack.c.l.b16 %v9211
      %v9327 = vunpack.c.l.b16 %v9212
      %v9328 = vunpack.c.l.b16 %v9213
      %v9329 = vunpack.c.l.b16 %v9214
      %v9330 = vunpack.c.l.b16 %v9215
      %v9331 = vunpack.c.l.b16 %v9216
      %v9332 = vunpack.c.l.b16 %v9217
      %v9333 = vunpack.c.l.b16 %v9218
      %v9334 = vunpack.c.l.b16 %v9219
      %v9335 = vunpack.c.l.b16 %v9220
      %v9336 = vunpack.c.l.b16 %v9221
      %v9337 = vunpack.c.l.b16 %v9222
      %v9338 = vunpack.c.l.b16 %v9223
      %v9339 = vunpack.c.l.b16 %v9224
      %v9340 = vunpack.c.l.b16 %v9225
      %v9341 = vunpack.c.l.b16 %v9226
      %v9342 = vunpack.c.l.b16 %v9227
      %v9343 = vunpack.c.l.b16 %v9228
      %v9344 = vunpack.c.l.b16 %v9229
      %v9345 = vunpack.c.l.b16 %v9230
      %v9346 = vunpack.c.l.b16 %v9231
      %v9347 = vunpack.c.l.b16 %v9232
      %v9348 = vunpack.c.l.b16 %v9233
      %v9349 = vunpack.c.l.b16 %v9234
      %v9350 = vunpack.c.l.b16 %v9235
      %v9351 = vunpack.c.l.b16 %v9236
      %v9352 = vpack.c.b16 %v9320, %v9319
      %v9353 = vpack.c.b16 %v9322, %v9321
      %v9354 = vpack.c.b16 %v9324, %v9323
      %v9355 = vpack.c.b16 %v9326, %v9325
      %v9356 = vpack.c.b16 %v9328, %v9327
      %v9357 = vpack.c.b16 %v9330, %v9329
      %v9358 = vpack.c.b16 %v9332, %v9331
      %v9359 = vpack.c.b16 %v9334, %v9333
      %v9360 = vpack.c.b16 %v9336, %v9335
      %v9361 = vpack.c.b16 %v9338, %v9337
      %v9362 = vpack.c.b16 %v9340, %v9339
      %v9363 = vpack.c.b16 %v9342, %v9341
      %v9364 = vpack.c.b16 %v9344, %v9343
      %v9365 = vpack.c.b16 %v9346, %v9345
      %v9366 = vpack.c.b16 %v9348, %v9347
      %v9367 = vpack.c.b16 %v9350, %v9349
      %v9368 = vpack.c.b16 %v9351, %v9351
      %v9369 = vrot.slane %v9352, 1
      %v9370 = vrot.slane %v9353, 1
      %v9371 = vsel %vm3083, %v9369, %v9370
      %v9372 = vrot.slane %v9354, 1
      %v9373 = vsel %vm3083, %v9370, %v9372
      %v9374 = vrot.slane %v9355, 1
      %v9375 = vsel %vm3083, %v9372, %v9374
      %v9376 = vrot.slane %v9356, 1
      %v9377 = vsel %vm3083, %v9374, %v9376
      %v9378 = vrot.slane %v9357, 1
      %v9379 = vsel %vm3083, %v9376, %v9378
      %v9380 = vrot.slane %v9358, 1
      %v9381 = vsel %vm3083, %v9378, %v9380
      %v9382 = vrot.slane %v9359, 1
      %v9383 = vsel %vm3083, %v9380, %v9382
      %v9384 = vrot.slane %v9360, 1
      %v9385 = vsel %vm3083, %v9382, %v9384
      %v9386 = vrot.slane %v9361, 1
      %v9387 = vsel %vm3083, %v9384, %v9386
      %v9388 = vrot.slane %v9362, 1
      %v9389 = vsel %vm3083, %v9386, %v9388
      %v9390 = vrot.slane %v9363, 1
      %v9391 = vsel %vm3083, %v9388, %v9390
      %v9392 = vrot.slane %v9364, 1
      %v9393 = vsel %vm3083, %v9390, %v9392
      %v9394 = vrot.slane %v9365, 1
      %v9395 = vsel %vm3083, %v9392, %v9394
      %v9396 = vrot.slane %v9366, 1
      %v9397 = vsel %vm3083, %v9394, %v9396
      %v9398 = vrot.slane %v9367, 1
      %v9399 = vsel %vm3083, %v9396, %v9398
      %v9400 = vrot.slane %v9368, 1
      %v9401 = vsel %vm3083, %v9398, %v9400
      %v9434 = vunpack.c.l.b16 %v9270
      %v9435 = vunpack.c.l.b16 %v9271
      %v9436 = vunpack.c.l.b16 %v9272
      %v9437 = vunpack.c.l.b16 %v9273
      %v9438 = vunpack.c.l.b16 %v9274
      %v9439 = vunpack.c.l.b16 %v9275
      %v9440 = vunpack.c.l.b16 %v9276
      %v9441 = vunpack.c.l.b16 %v9277
      %v9442 = vunpack.c.l.b16 %v9278
      %v9443 = vunpack.c.l.b16 %v9279
      %v9444 = vunpack.c.l.b16 %v9280
      %v9445 = vunpack.c.l.b16 %v9281
      %v9446 = vunpack.c.l.b16 %v9282
      %v9447 = vunpack.c.l.b16 %v9283
      %v9448 = vunpack.c.l.b16 %v9284
      %v9449 = vunpack.c.l.b16 %v9285
      %v9450 = vpack.c.b16 %v9435, %v9434
      %v9451 = vpack.c.b16 %v9437, %v9436
      %v9452 = vpack.c.b16 %v9439, %v9438
      %v9453 = vpack.c.b16 %v9441, %v9440
      %v9454 = vpack.c.b16 %v9443, %v9442
      %v9455 = vpack.c.b16 %v9445, %v9444
      %v9456 = vpack.c.b16 %v9447, %v9446
      %v9457 = vpack.c.b16 %v9449, %v9448
      %9466 = vmatpush.bf16.msra.mxu0 %v9457
      %9467 = vmatpush.bf16.msra.mxu0 %v9456
      %9468 = vmatpush.bf16.msra.mxu0 %v9455
      %9469 = vmatpush.bf16.msra.mxu0 %v9454
      %9470 = vmatpush.bf16.msra.mxu0 %v9453
      %9471 = vmatpush.bf16.msra.mxu0 %v9452
      %9472 = vmatpush.bf16.msra.mxu0 %v9451
      %9473 = vmatpush.bf16.msra.mxu0 %v9450
      %9474 = vmatmul.bf16.gmra.mxu0 %v9371
      %v9475 = vpop.f32.mrf.mxu0
      %v9476 = vadd.f32 0.0, %v9475
      %v9477 = vpop.f32.mrf.mxu0
      %v9478 = vadd.f32 0.0, %v9477
      %9479 = vmatmul.bf16.gmra.mxu0 %v9373
      %v9480 = vpop.f32.mrf.mxu0
      %v9481 = vadd.f32 0.0, %v9480
      %v9482 = vpop.f32.mrf.mxu0
      %v9483 = vadd.f32 0.0, %v9482
      %9484 = vmatmul.bf16.gmra.mxu0 %v9375
      %v9485 = vpop.f32.mrf.mxu0
      %v9486 = vadd.f32 0.0, %v9485
      %v9487 = vpop.f32.mrf.mxu0
      %v9488 = vadd.f32 0.0, %v9487
      %9489 = vmatmul.bf16.gmra.mxu0 %v9377
      %v9490 = vpop.f32.mrf.mxu0
      %v9491 = vadd.f32 0.0, %v9490
      %v9492 = vpop.f32.mrf.mxu0
      %v9493 = vadd.f32 0.0, %v9492
      %9494 = vmatmul.bf16.gmra.mxu0 %v9379
      %v9495 = vpop.f32.mrf.mxu0
      %v9496 = vadd.f32 0.0, %v9495
      %v9497 = vpop.f32.mrf.mxu0
      %v9498 = vadd.f32 0.0, %v9497
      %9499 = vmatmul.bf16.gmra.mxu0 %v9381
      %v9500 = vpop.f32.mrf.mxu0
      %v9501 = vadd.f32 0.0, %v9500
      %v9502 = vpop.f32.mrf.mxu0
      %v9503 = vadd.f32 0.0, %v9502
      %9504 = vmatmul.bf16.gmra.mxu0 %v9383
      %v9505 = vpop.f32.mrf.mxu0
      %v9506 = vadd.f32 0.0, %v9505
      %v9507 = vpop.f32.mrf.mxu0
      %v9508 = vadd.f32 0.0, %v9507
      %9509 = vmatmul.bf16.gmra.mxu0 %v9385
      %v9510 = vpop.f32.mrf.mxu0
      %v9511 = vadd.f32 0.0, %v9510
      %v9512 = vpop.f32.mrf.mxu0
      %v9513 = vadd.f32 0.0, %v9512
      %9514 = vmatmul.bf16.gmra.mxu0 %v9387
      %v9515 = vpop.f32.mrf.mxu0
      %v9516 = vadd.f32 0.0, %v9515
      %v9517 = vpop.f32.mrf.mxu0
      %v9518 = vadd.f32 0.0, %v9517
      %9519 = vmatmul.bf16.gmra.mxu0 %v9389
      %v9520 = vpop.f32.mrf.mxu0
      %v9521 = vadd.f32 0.0, %v9520
      %v9522 = vpop.f32.mrf.mxu0
      %v9523 = vadd.f32 0.0, %v9522
      %9524 = vmatmul.bf16.gmra.mxu0 %v9391
      %v9525 = vpop.f32.mrf.mxu0
      %v9526 = vadd.f32 0.0, %v9525
      %v9527 = vpop.f32.mrf.mxu0
      %v9528 = vadd.f32 0.0, %v9527
      %9529 = vmatmul.bf16.gmra.mxu0 %v9393
      %v9530 = vpop.f32.mrf.mxu0
      %v9531 = vadd.f32 0.0, %v9530
      %v9532 = vpop.f32.mrf.mxu0
      %v9533 = vadd.f32 0.0, %v9532
      %9534 = vmatmul.bf16.gmra.mxu0 %v9395
      %v9535 = vpop.f32.mrf.mxu0
      %v9536 = vadd.f32 0.0, %v9535
      %v9537 = vpop.f32.mrf.mxu0
      %v9538 = vadd.f32 0.0, %v9537
      %9539 = vmatmul.bf16.gmra.mxu0 %v9397
      %v9540 = vpop.f32.mrf.mxu0
      %v9541 = vadd.f32 0.0, %v9540
      %v9542 = vpop.f32.mrf.mxu0
      %v9543 = vadd.f32 0.0, %v9542
      %9544 = vmatmul.bf16.gmra.mxu0 %v9399
      %v9545 = vpop.f32.mrf.mxu0
      %v9546 = vadd.f32 0.0, %v9545
      %v9547 = vpop.f32.mrf.mxu0
      %v9548 = vadd.f32 0.0, %v9547
      %9549 = vmatmul.bf16.gmra.mxu0 %v9401
      %v9550 = vpop.f32.mrf.mxu0
      %v9551 = vadd.f32 0.0, %v9550
      %v9552 = vpop.f32.mrf.mxu0
      %v9553 = vadd.f32 0.0, %v9552
      %9554 = vdwg.mxu0
      %v9555 = vadd.f32 %v9237, %v9476
      %v9556 = vadd.f32 %v9238, %v9478
      %v9557 = vadd.f32 %v9239, %v9481
      %v9558 = vadd.f32 %v9240, %v9483
      %v9559 = vadd.f32 %v9241, %v9486
      %v9560 = vadd.f32 %v9242, %v9488
      %v9561 = vadd.f32 %v9243, %v9491
      %v9562 = vadd.f32 %v9244, %v9493
      %v9563 = vadd.f32 %v9245, %v9496
      %v9564 = vadd.f32 %v9246, %v9498
      %v9565 = vadd.f32 %v9247, %v9501
      %v9566 = vadd.f32 %v9248, %v9503
      %v9567 = vadd.f32 %v9249, %v9506
      %v9568 = vadd.f32 %v9250, %v9508
      %v9569 = vadd.f32 %v9251, %v9511
      %v9570 = vadd.f32 %v9252, %v9513
      %v9571 = vadd.f32 %v9253, %v9516
      %v9572 = vadd.f32 %v9254, %v9518
      %v9573 = vadd.f32 %v9255, %v9521
      %v9574 = vadd.f32 %v9256, %v9523
      %v9575 = vadd.f32 %v9257, %v9526
      %v9576 = vadd.f32 %v9258, %v9528
      %v9577 = vadd.f32 %v9259, %v9531
      %v9578 = vadd.f32 %v9260, %v9533
      %v9579 = vadd.f32 %v9261, %v9536
      %v9580 = vadd.f32 %v9262, %v9538
      %v9581 = vadd.f32 %v9263, %v9541
      %v9582 = vadd.f32 %v9264, %v9543
      %v9583 = vadd.f32 %v9265, %v9546
      %v9584 = vadd.f32 %v9266, %v9548
      %v9585 = vadd.f32 %v9267, %v9551
      %v9586 = vadd.f32 %v9268, %v9553
      %9587 = vst [vmem:[#allocation3] sm:$0xff] %v9555
      %9588 = vst [vmem:[#allocation3 + $0x8] sm:$0xff] %v9556
      %9589 = vst [vmem:[#allocation3 + $0x10] sm:$0xff] %v9557
      %9590 = vst [vmem:[#allocation3 + $0x18] sm:$0xff] %v9558
      %9591 = vst [vmem:[#allocation3 + $0x20] sm:$0xff] %v9559
      %9592 = vst [vmem:[#allocation3 + $0x28] sm:$0xff] %v9560
      %9593 = vst [vmem:[#allocation3 + $0x30] sm:$0xff] %v9561
      %9594 = vst [vmem:[#allocation3 + $0x38] sm:$0xff] %v9562
      %9595 = vst [vmem:[#allocation3 + $0x40] sm:$0xff] %v9563
      %9596 = vst [vmem:[#allocation3 + $0x48] sm:$0xff] %v9564
      %9597 = vst [vmem:[#allocation3 + $0x50] sm:$0xff] %v9565
      %9598 = vst [vmem:[#allocation3 + $0x58] sm:$0xff] %v9566
      %9599 = vst [vmem:[#allocation3 + $0x60] sm:$0xff] %v9567
      %9600 = vst [vmem:[#allocation3 + $0x68] sm:$0xff] %v9568
      %9601 = vst [vmem:[#allocation3 + $0x70] sm:$0xff] %v9569
      %9602 = vst [vmem:[#allocation3 + $0x78] sm:$0xff] %v9570
      %9603 = vst [vmem:[#allocation3 + $0x80] sm:$0xff] %v9571
      %9604 = vst [vmem:[#allocation3 + $0x88] sm:$0xff] %v9572
      %9605 = vst [vmem:[#allocation3 + $0x90] sm:$0xff] %v9573
      %9606 = vst [vmem:[#allocation3 + $0x98] sm:$0xff] %v9574
      %9607 = vst [vmem:[#allocation3 + $0xa0] sm:$0xff] %v9575
      %9608 = vst [vmem:[#allocation3 + $0xa8] sm:$0xff] %v9576
      %9609 = vst [vmem:[#allocation3 + $0xb0] sm:$0xff] %v9577
      %9610 = vst [vmem:[#allocation3 + $0xb8] sm:$0xff] %v9578
      %9611 = vst [vmem:[#allocation3 + $0xc0] sm:$0xff] %v9579
      %9612 = vst [vmem:[#allocation3 + $0xc8] sm:$0xff] %v9580
      %9613 = vst [vmem:[#allocation3 + $0xd0] sm:$0xff] %v9581
      %9614 = vst [vmem:[#allocation3 + $0xd8] sm:$0xff] %v9582
      %9615 = vst [vmem:[#allocation3 + $0xe0] sm:$0xff] %v9583
      %9616 = vst [vmem:[#allocation3 + $0xe8] sm:$0xff] %v9584
      %9617 = vst [vmem:[#allocation3 + $0xf0] sm:$0xff] %v9585
      %9618 = vst [vmem:[#allocation3 + $0xf8] sm:$0xff] %v9586
      %v9619 = vld [vmem:[#allocation2 + $0x10] sm:$0xf]
      %v9620 = vld [vmem:[#allocation2 + $0x14] sm:$0xf]
      %v9621 = vld [vmem:[#allocation2 + $0x18] sm:$0xf]
      %v9622 = vld [vmem:[#allocation2 + $0x1c] sm:$0xf]
      %v9623 = vld [vmem:[#allocation2 + $0x20] sm:$0xf]
      %v9624 = vld [vmem:[#allocation2 + $0x24] sm:$0xf]
      %v9625 = vld [vmem:[#allocation2 + $0x28] sm:$0xf]
      %v9626 = vld [vmem:[#allocation2 + $0x2c] sm:$0xf]
      %v9627 = vld [vmem:[#allocation2 + $0x30] sm:$0xf]
      %v9628 = vld [vmem:[#allocation2 + $0x34] sm:$0xf]
      %v9629 = vld [vmem:[#allocation2 + $0x38] sm:$0xf]
      %v9630 = vld [vmem:[#allocation2 + $0x3c] sm:$0xf]
      %v9631 = vld [vmem:[#allocation2 + $0x40] sm:$0xf]
      %v9632 = vld [vmem:[#allocation2 + $0x44] sm:$0xf]
      %v9633 = vld [vmem:[#allocation2 + $0x48] sm:$0xf]
      %v9634 = vld [vmem:[#allocation2 + $0x4c] sm:$0xf]
      %v9635 = vld [vmem:[#allocation2 + $0x50] sm:$0xf]
      %v9636 = vld [vmem:[#allocation2 + $0x54] sm:$0xf]
      %v9637 = vld [vmem:[#allocation2 + $0x58] sm:$0xf]
      %v9638 = vld [vmem:[#allocation2 + $0x5c] sm:$0xf]
      %v9639 = vld [vmem:[#allocation2 + $0x60] sm:$0xf]
      %v9640 = vld [vmem:[#allocation2 + $0x64] sm:$0xf]
      %v9641 = vld [vmem:[#allocation2 + $0x68] sm:$0xf]
      %v9642 = vld [vmem:[#allocation2 + $0x6c] sm:$0xf]
      %v9643 = vld [vmem:[#allocation2 + $0x70] sm:$0xf]
      %v9644 = vld [vmem:[#allocation2 + $0x74] sm:$0xf]
      %v9645 = vld [vmem:[#allocation2 + $0x78] sm:$0xf]
      %v9646 = vld [vmem:[#allocation2 + $0x7c] sm:$0xf]
      %v9647 = vld [vmem:[#allocation2 + $0x80] sm:$0xf]
      %v9648 = vld [vmem:[#allocation2 + $0x84] sm:$0xf]
      %v9649 = vld [vmem:[#allocation2 + $0x88] sm:$0xf]
      %v9650 = vld [vmem:[#allocation2 + $0x8c] sm:$0xf]
      %v9651 = vsel %vm1409, %v9619, 0
      %v9652 = vsel %vm1410, %v9620, 0
      %v9653 = vsel %vm1411, %v9621, 0
      %v9654 = vsel %vm1412, %v9622, 0
      %v9655 = vsel %vm1413, %v9623, 0
      %v9656 = vsel %vm1414, %v9624, 0
      %v9657 = vsel %vm1415, %v9625, 0
      %v9658 = vsel %vm1416, %v9626, 0
      %v9659 = vsel %vm1417, %v9627, 0
      %v9660 = vsel %vm1418, %v9628, 0
      %v9661 = vsel %vm1419, %v9629, 0
      %v9662 = vsel %vm1420, %v9630, 0
      %v9663 = vsel %vm1421, %v9631, 0
      %v9664 = vsel %vm1422, %v9632, 0
      %v9665 = vsel %vm1423, %v9633, 0
      %v9666 = vsel %vm1424, %v9634, 0
      %v9667 = vsel %vm1425, %v9635, 0
      %v9668 = vsel %vm1426, %v9636, 0
      %v9669 = vsel %vm1427, %v9637, 0
      %v9670 = vsel %vm1428, %v9638, 0
      %v9671 = vsel %vm1429, %v9639, 0
      %v9672 = vsel %vm1430, %v9640, 0
      %v9673 = vsel %vm1431, %v9641, 0
      %v9674 = vsel %vm1432, %v9642, 0
      %v9675 = vsel %vm1433, %v9643, 0
      %v9676 = vsel %vm1434, %v9644, 0
      %v9677 = vsel %vm1435, %v9645, 0
      %v9678 = vsel %vm1436, %v9646, 0
      %v9679 = vsel %vm1437, %v9647, 0
      %v9680 = vsel %vm1438, %v9648, 0
      %v9681 = vsel %vm1439, %v9649, 0
      %v9682 = vsel %vm1440, %v9650, 0
      %v9683 = vld [vmem:[#allocation3] sm:$0xff]
      %v9684 = vld [vmem:[#allocation3 + $0x8] sm:$0xff]
      %v9685 = vld [vmem:[#allocation3 + $0x10] sm:$0xff]
      %v9686 = vld [vmem:[#allocation3 + $0x18] sm:$0xff]
      %v9687 = vld [vmem:[#allocation3 + $0x20] sm:$0xff]
      %v9688 = vld [vmem:[#allocation3 + $0x28] sm:$0xff]
      %v9689 = vld [vmem:[#allocation3 + $0x30] sm:$0xff]
      %v9690 = vld [vmem:[#allocation3 + $0x38] sm:$0xff]
      %v9691 = vld [vmem:[#allocation3 + $0x40] sm:$0xff]
      %v9692 = vld [vmem:[#allocation3 + $0x48] sm:$0xff]
      %v9693 = vld [vmem:[#allocation3 + $0x50] sm:$0xff]
      %v9694 = vld [vmem:[#allocation3 + $0x58] sm:$0xff]
      %v9695 = vld [vmem:[#allocation3 + $0x60] sm:$0xff]
      %v9696 = vld [vmem:[#allocation3 + $0x68] sm:$0xff]
      %v9697 = vld [vmem:[#allocation3 + $0x70] sm:$0xff]
      %v9698 = vld [vmem:[#allocation3 + $0x78] sm:$0xff]
      %v9699 = vld [vmem:[#allocation3 + $0x80] sm:$0xff]
      %v9700 = vld [vmem:[#allocation3 + $0x88] sm:$0xff]
      %v9701 = vld [vmem:[#allocation3 + $0x90] sm:$0xff]
      %v9702 = vld [vmem:[#allocation3 + $0x98] sm:$0xff]
      %v9703 = vld [vmem:[#allocation3 + $0xa0] sm:$0xff]
      %v9704 = vld [vmem:[#allocation3 + $0xa8] sm:$0xff]
      %v9705 = vld [vmem:[#allocation3 + $0xb0] sm:$0xff]
      %v9706 = vld [vmem:[#allocation3 + $0xb8] sm:$0xff]
      %v9707 = vld [vmem:[#allocation3 + $0xc0] sm:$0xff]
      %v9708 = vld [vmem:[#allocation3 + $0xc8] sm:$0xff]
      %v9709 = vld [vmem:[#allocation3 + $0xd0] sm:$0xff]
      %v9710 = vld [vmem:[#allocation3 + $0xd8] sm:$0xff]
      %v9711 = vld [vmem:[#allocation3 + $0xe0] sm:$0xff]
      %v9712 = vld [vmem:[#allocation3 + $0xe8] sm:$0xff]
      %v9713 = vld [vmem:[#allocation3 + $0xf0] sm:$0xff]
      %v9714 = vld [vmem:[#allocation3 + $0xf8] sm:$0xff]
      %s9715 = scalar_lea.vmem %s8, 384
      %v9716 = vld [vmem:[%s9715] sm:$0xf]
      %v9717 = vld [vmem:[%s9715 + $0x4] sm:$0xf]
      %v9718 = vld [vmem:[%s9715 + $0x8] sm:$0xf]
      %v9719 = vld [vmem:[%s9715 + $0xc] sm:$0xf]
      %v9720 = vld [vmem:[%s9715 + $0x10] sm:$0xf]
      %v9721 = vld [vmem:[%s9715 + $0x14] sm:$0xf]
      %v9722 = vld [vmem:[%s9715 + $0x18] sm:$0xf]
      %v9723 = vld [vmem:[%s9715 + $0x1c] sm:$0xf]
      %v9724 = vld [vmem:[%s9715 + $0x20] sm:$0xf]
      %v9725 = vld [vmem:[%s9715 + $0x24] sm:$0xf]
      %v9726 = vld [vmem:[%s9715 + $0x28] sm:$0xf]
      %v9727 = vld [vmem:[%s9715 + $0x2c] sm:$0xf]
      %v9728 = vld [vmem:[%s9715 + $0x30] sm:$0xf]
      %v9729 = vld [vmem:[%s9715 + $0x34] sm:$0xf]
      %v9730 = vld [vmem:[%s9715 + $0x38] sm:$0xf]
      %v9731 = vld [vmem:[%s9715 + $0x3c] sm:$0xf]
      %v9764 = vunpack.c.l.b16 %v9651
      %v9765 = vunpack.c.l.b16 %v9652
      %v9766 = vunpack.c.l.b16 %v9653
      %v9767 = vunpack.c.l.b16 %v9654
      %v9768 = vunpack.c.l.b16 %v9655
      %v9769 = vunpack.c.l.b16 %v9656
      %v9770 = vunpack.c.l.b16 %v9657
      %v9771 = vunpack.c.l.b16 %v9658
      %v9772 = vunpack.c.l.b16 %v9659
      %v9773 = vunpack.c.l.b16 %v9660
      %v9774 = vunpack.c.l.b16 %v9661
      %v9775 = vunpack.c.l.b16 %v9662
      %v9776 = vunpack.c.l.b16 %v9663
      %v9777 = vunpack.c.l.b16 %v9664
      %v9778 = vunpack.c.l.b16 %v9665
      %v9779 = vunpack.c.l.b16 %v9666
      %v9780 = vunpack.c.l.b16 %v9667
      %v9781 = vunpack.c.l.b16 %v9668
      %v9782 = vunpack.c.l.b16 %v9669
      %v9783 = vunpack.c.l.b16 %v9670
      %v9784 = vunpack.c.l.b16 %v9671
      %v9785 = vunpack.c.l.b16 %v9672
      %v9786 = vunpack.c.l.b16 %v9673
      %v9787 = vunpack.c.l.b16 %v9674
      %v9788 = vunpack.c.l.b16 %v9675
      %v9789 = vunpack.c.l.b16 %v9676
      %v9790 = vunpack.c.l.b16 %v9677
      %v9791 = vunpack.c.l.b16 %v9678
      %v9792 = vunpack.c.l.b16 %v9679
      %v9793 = vunpack.c.l.b16 %v9680
      %v9794 = vunpack.c.l.b16 %v9681
      %v9795 = vunpack.c.l.b16 %v9682
      %v9796 = vpack.c.b16 %v9765, %v9764
      %v9797 = vpack.c.b16 %v9767, %v9766
      %v9798 = vpack.c.b16 %v9769, %v9768
      %v9799 = vpack.c.b16 %v9771, %v9770
      %v9800 = vpack.c.b16 %v9773, %v9772
      %v9801 = vpack.c.b16 %v9775, %v9774
      %v9802 = vpack.c.b16 %v9777, %v9776
      %v9803 = vpack.c.b16 %v9779, %v9778
      %v9804 = vpack.c.b16 %v9781, %v9780
      %v9805 = vpack.c.b16 %v9783, %v9782
      %v9806 = vpack.c.b16 %v9785, %v9784
      %v9807 = vpack.c.b16 %v9787, %v9786
      %v9808 = vpack.c.b16 %v9789, %v9788
      %v9809 = vpack.c.b16 %v9791, %v9790
      %v9810 = vpack.c.b16 %v9793, %v9792
      %v9811 = vpack.c.b16 %v9795, %v9794
      %v9844 = vunpack.c.l.b16 %v9716
      %v9845 = vunpack.c.l.b16 %v9717
      %v9846 = vunpack.c.l.b16 %v9718
      %v9847 = vunpack.c.l.b16 %v9719
      %v9848 = vunpack.c.l.b16 %v9720
      %v9849 = vunpack.c.l.b16 %v9721
      %v9850 = vunpack.c.l.b16 %v9722
      %v9851 = vunpack.c.l.b16 %v9723
      %v9852 = vunpack.c.l.b16 %v9724
      %v9853 = vunpack.c.l.b16 %v9725
      %v9854 = vunpack.c.l.b16 %v9726
      %v9855 = vunpack.c.l.b16 %v9727
      %v9856 = vunpack.c.l.b16 %v9728
      %v9857 = vunpack.c.l.b16 %v9729
      %v9858 = vunpack.c.l.b16 %v9730
      %v9859 = vunpack.c.l.b16 %v9731
      %v9860 = vpack.c.b16 %v9845, %v9844
      %v9861 = vpack.c.b16 %v9847, %v9846
      %v9862 = vpack.c.b16 %v9849, %v9848
      %v9863 = vpack.c.b16 %v9851, %v9850
      %v9864 = vpack.c.b16 %v9853, %v9852
      %v9865 = vpack.c.b16 %v9855, %v9854
      %v9866 = vpack.c.b16 %v9857, %v9856
      %v9867 = vpack.c.b16 %v9859, %v9858
      %9876 = vmatpush.bf16.msra.mxu0 %v9867
      %9877 = vmatpush.bf16.msra.mxu0 %v9866
      %9878 = vmatpush.bf16.msra.mxu0 %v9865
      %9879 = vmatpush.bf16.msra.mxu0 %v9864
      %9880 = vmatpush.bf16.msra.mxu0 %v9863
      %9881 = vmatpush.bf16.msra.mxu0 %v9862
      %9882 = vmatpush.bf16.msra.mxu0 %v9861
      %9883 = vmatpush.bf16.msra.mxu0 %v9860
      %9884 = vmatmul.bf16.gmra.mxu0 %v9796
      %v9885 = vpop.f32.mrf.mxu0
      %v9886 = vadd.f32 0.0, %v9885
      %v9887 = vpop.f32.mrf.mxu0
      %v9888 = vadd.f32 0.0, %v9887
      %9889 = vmatmul.bf16.gmra.mxu0 %v9797
      %v9890 = vpop.f32.mrf.mxu0
      %v9891 = vadd.f32 0.0, %v9890
      %v9892 = vpop.f32.mrf.mxu0
      %v9893 = vadd.f32 0.0, %v9892
      %9894 = vmatmul.bf16.gmra.mxu0 %v9798
      %v9895 = vpop.f32.mrf.mxu0
      %v9896 = vadd.f32 0.0, %v9895
      %v9897 = vpop.f32.mrf.mxu0
      %v9898 = vadd.f32 0.0, %v9897
      %9899 = vmatmul.bf16.gmra.mxu0 %v9799
      %v9900 = vpop.f32.mrf.mxu0
      %v9901 = vadd.f32 0.0, %v9900
      %v9902 = vpop.f32.mrf.mxu0
      %v9903 = vadd.f32 0.0, %v9902
      %9904 = vmatmul.bf16.gmra.mxu0 %v9800
      %v9905 = vpop.f32.mrf.mxu0
      %v9906 = vadd.f32 0.0, %v9905
      %v9907 = vpop.f32.mrf.mxu0
      %v9908 = vadd.f32 0.0, %v9907
      %9909 = vmatmul.bf16.gmra.mxu0 %v9801
      %v9910 = vpop.f32.mrf.mxu0
      %v9911 = vadd.f32 0.0, %v9910
      %v9912 = vpop.f32.mrf.mxu0
      %v9913 = vadd.f32 0.0, %v9912
      %9914 = vmatmul.bf16.gmra.mxu0 %v9802
      %v9915 = vpop.f32.mrf.mxu0
      %v9916 = vadd.f32 0.0, %v9915
      %v9917 = vpop.f32.mrf.mxu0
      %v9918 = vadd.f32 0.0, %v9917
      %9919 = vmatmul.bf16.gmra.mxu0 %v9803
      %v9920 = vpop.f32.mrf.mxu0
      %v9921 = vadd.f32 0.0, %v9920
      %v9922 = vpop.f32.mrf.mxu0
      %v9923 = vadd.f32 0.0, %v9922
      %9924 = vmatmul.bf16.gmra.mxu0 %v9804
      %v9925 = vpop.f32.mrf.mxu0
      %v9926 = vadd.f32 0.0, %v9925
      %v9927 = vpop.f32.mrf.mxu0
      %v9928 = vadd.f32 0.0, %v9927
      %9929 = vmatmul.bf16.gmra.mxu0 %v9805
      %v9930 = vpop.f32.mrf.mxu0
      %v9931 = vadd.f32 0.0, %v9930
      %v9932 = vpop.f32.mrf.mxu0
      %v9933 = vadd.f32 0.0, %v9932
      %9934 = vmatmul.bf16.gmra.mxu0 %v9806
      %v9935 = vpop.f32.mrf.mxu0
      %v9936 = vadd.f32 0.0, %v9935
      %v9937 = vpop.f32.mrf.mxu0
      %v9938 = vadd.f32 0.0, %v9937
      %9939 = vmatmul.bf16.gmra.mxu0 %v9807
      %v9940 = vpop.f32.mrf.mxu0
      %v9941 = vadd.f32 0.0, %v9940
      %v9942 = vpop.f32.mrf.mxu0
      %v9943 = vadd.f32 0.0, %v9942
      %9944 = vmatmul.bf16.gmra.mxu0 %v9808
      %v9945 = vpop.f32.mrf.mxu0
      %v9946 = vadd.f32 0.0, %v9945
      %v9947 = vpop.f32.mrf.mxu0
      %v9948 = vadd.f32 0.0, %v9947
      %9949 = vmatmul.bf16.gmra.mxu0 %v9809
      %v9950 = vpop.f32.mrf.mxu0
      %v9951 = vadd.f32 0.0, %v9950
      %v9952 = vpop.f32.mrf.mxu0
      %v9953 = vadd.f32 0.0, %v9952
      %9954 = vmatmul.bf16.gmra.mxu0 %v9810
      %v9955 = vpop.f32.mrf.mxu0
      %v9956 = vadd.f32 0.0, %v9955
      %v9957 = vpop.f32.mrf.mxu0
      %v9958 = vadd.f32 0.0, %v9957
      %9959 = vmatmul.bf16.gmra.mxu0 %v9811
      %v9960 = vpop.f32.mrf.mxu0
      %v9961 = vadd.f32 0.0, %v9960
      %v9962 = vpop.f32.mrf.mxu0
      %v9963 = vadd.f32 0.0, %v9962
      %9964 = vdwg.mxu0
      %v9965 = vadd.f32 %v9683, %v9886
      %v9966 = vadd.f32 %v9684, %v9888
      %v9967 = vadd.f32 %v9685, %v9891
      %v9968 = vadd.f32 %v9686, %v9893
      %v9969 = vadd.f32 %v9687, %v9896
      %v9970 = vadd.f32 %v9688, %v9898
      %v9971 = vadd.f32 %v9689, %v9901
      %v9972 = vadd.f32 %v9690, %v9903
      %v9973 = vadd.f32 %v9691, %v9906
      %v9974 = vadd.f32 %v9692, %v9908
      %v9975 = vadd.f32 %v9693, %v9911
      %v9976 = vadd.f32 %v9694, %v9913
      %v9977 = vadd.f32 %v9695, %v9916
      %v9978 = vadd.f32 %v9696, %v9918
      %v9979 = vadd.f32 %v9697, %v9921
      %v9980 = vadd.f32 %v9698, %v9923
      %v9981 = vadd.f32 %v9699, %v9926
      %v9982 = vadd.f32 %v9700, %v9928
      %v9983 = vadd.f32 %v9701, %v9931
      %v9984 = vadd.f32 %v9702, %v9933
      %v9985 = vadd.f32 %v9703, %v9936
      %v9986 = vadd.f32 %v9704, %v9938
      %v9987 = vadd.f32 %v9705, %v9941
      %v9988 = vadd.f32 %v9706, %v9943
      %v9989 = vadd.f32 %v9707, %v9946
      %v9990 = vadd.f32 %v9708, %v9948
      %v9991 = vadd.f32 %v9709, %v9951
      %v9992 = vadd.f32 %v9710, %v9953
      %v9993 = vadd.f32 %v9711, %v9956
      %v9994 = vadd.f32 %v9712, %v9958
      %v9995 = vadd.f32 %v9713, %v9961
      %v9996 = vadd.f32 %v9714, %v9963
      %9997 = vst [vmem:[#allocation3] sm:$0xff] %v9965
      %9998 = vst [vmem:[#allocation3 + $0x8] sm:$0xff] %v9966
      %9999 = vst [vmem:[#allocation3 + $0x10] sm:$0xff] %v9967
      %10000 = vst [vmem:[#allocation3 + $0x18] sm:$0xff] %v9968
      %10001 = vst [vmem:[#allocation3 + $0x20] sm:$0xff] %v9969
      %10002 = vst [vmem:[#allocation3 + $0x28] sm:$0xff] %v9970
      %10003 = vst [vmem:[#allocation3 + $0x30] sm:$0xff] %v9971
      %10004 = vst [vmem:[#allocation3 + $0x38] sm:$0xff] %v9972
      %10005 = vst [vmem:[#allocation3 + $0x40] sm:$0xff] %v9973
      %10006 = vst [vmem:[#allocation3 + $0x48] sm:$0xff] %v9974
      %10007 = vst [vmem:[#allocation3 + $0x50] sm:$0xff] %v9975
      %10008 = vst [vmem:[#allocation3 + $0x58] sm:$0xff] %v9976
      %10009 = vst [vmem:[#allocation3 + $0x60] sm:$0xff] %v9977
      %10010 = vst [vmem:[#allocation3 + $0x68] sm:$0xff] %v9978
      %10011 = vst [vmem:[#allocation3 + $0x70] sm:$0xff] %v9979
      %10012 = vst [vmem:[#allocation3 + $0x78] sm:$0xff] %v9980
      %10013 = vst [vmem:[#allocation3 + $0x80] sm:$0xff] %v9981
      %10014 = vst [vmem:[#allocation3 + $0x88] sm:$0xff] %v9982
      %10015 = vst [vmem:[#allocation3 + $0x90] sm:$0xff] %v9983
      %10016 = vst [vmem:[#allocation3 + $0x98] sm:$0xff] %v9984
      %10017 = vst [vmem:[#allocation3 + $0xa0] sm:$0xff] %v9985
      %10018 = vst [vmem:[#allocation3 + $0xa8] sm:$0xff] %v9986
      %10019 = vst [vmem:[#allocation3 + $0xb0] sm:$0xff] %v9987
      %10020 = vst [vmem:[#allocation3 + $0xb8] sm:$0xff] %v9988
      %10021 = vst [vmem:[#allocation3 + $0xc0] sm:$0xff] %v9989
      %10022 = vst [vmem:[#allocation3 + $0xc8] sm:$0xff] %v9990
      %10023 = vst [vmem:[#allocation3 + $0xd0] sm:$0xff] %v9991
      %10024 = vst [vmem:[#allocation3 + $0xd8] sm:$0xff] %v9992
      %10025 = vst [vmem:[#allocation3 + $0xe0] sm:$0xff] %v9993
      %10026 = vst [vmem:[#allocation3 + $0xe8] sm:$0xff] %v9994
      %10027 = vst [vmem:[#allocation3 + $0xf0] sm:$0xff] %v9995
      %10028 = vst [vmem:[#allocation3 + $0xf8] sm:$0xff] %v9996
      %v10029 = vld [vmem:[#allocation2 + $0x10] sm:$0xf]
      %v10030 = vld [vmem:[#allocation2 + $0x14] sm:$0xf]
      %v10031 = vld [vmem:[#allocation2 + $0x18] sm:$0xf]
      %v10032 = vld [vmem:[#allocation2 + $0x1c] sm:$0xf]
      %v10033 = vld [vmem:[#allocation2 + $0x20] sm:$0xf]
      %v10034 = vld [vmem:[#allocation2 + $0x24] sm:$0xf]
      %v10035 = vld [vmem:[#allocation2 + $0x28] sm:$0xf]
      %v10036 = vld [vmem:[#allocation2 + $0x2c] sm:$0xf]
      %v10037 = vld [vmem:[#allocation2 + $0x30] sm:$0xf]
      %v10038 = vld [vmem:[#allocation2 + $0x34] sm:$0xf]
      %v10039 = vld [vmem:[#allocation2 + $0x38] sm:$0xf]
      %v10040 = vld [vmem:[#allocation2 + $0x3c] sm:$0xf]
      %v10041 = vld [vmem:[#allocation2 + $0x40] sm:$0xf]
      %v10042 = vld [vmem:[#allocation2 + $0x44] sm:$0xf]
      %v10043 = vld [vmem:[#allocation2 + $0x48] sm:$0xf]
      %v10044 = vld [vmem:[#allocation2 + $0x4c] sm:$0xf]
      %v10045 = vld [vmem:[#allocation2 + $0x50] sm:$0xf]
      %v10046 = vld [vmem:[#allocation2 + $0x54] sm:$0xf]
      %v10047 = vld [vmem:[#allocation2 + $0x58] sm:$0xf]
      %v10048 = vld [vmem:[#allocation2 + $0x5c] sm:$0xf]
      %v10049 = vld [vmem:[#allocation2 + $0x60] sm:$0xf]
      %v10050 = vld [vmem:[#allocation2 + $0x64] sm:$0xf]
      %v10051 = vld [vmem:[#allocation2 + $0x68] sm:$0xf]
      %v10052 = vld [vmem:[#allocation2 + $0x6c] sm:$0xf]
      %v10053 = vld [vmem:[#allocation2 + $0x70] sm:$0xf]
      %v10054 = vld [vmem:[#allocation2 + $0x74] sm:$0xf]
      %v10055 = vld [vmem:[#allocation2 + $0x78] sm:$0xf]
      %v10056 = vld [vmem:[#allocation2 + $0x7c] sm:$0xf]
      %v10057 = vld [vmem:[#allocation2 + $0x80] sm:$0xf]
      %v10058 = vld [vmem:[#allocation2 + $0x84] sm:$0xf]
      %v10059 = vld [vmem:[#allocation2 + $0x88] sm:$0xf]
      %v10060 = vld [vmem:[#allocation2 + $0x8c] sm:$0xf]
      %v10061 = vld [vmem:[#allocation2 + $0x90] sm:$0x1]
      %v10062 = vld [vmem:[#allocation3] sm:$0xff]
      %v10063 = vld [vmem:[#allocation3 + $0x8] sm:$0xff]
      %v10064 = vld [vmem:[#allocation3 + $0x10] sm:$0xff]
      %v10065 = vld [vmem:[#allocation3 + $0x18] sm:$0xff]
      %v10066 = vld [vmem:[#allocation3 + $0x20] sm:$0xff]
      %v10067 = vld [vmem:[#allocation3 + $0x28] sm:$0xff]
      %v10068 = vld [vmem:[#allocation3 + $0x30] sm:$0xff]
      %v10069 = vld [vmem:[#allocation3 + $0x38] sm:$0xff]
      %v10070 = vld [vmem:[#allocation3 + $0x40] sm:$0xff]
      %v10071 = vld [vmem:[#allocation3 + $0x48] sm:$0xff]
      %v10072 = vld [vmem:[#allocation3 + $0x50] sm:$0xff]
      %v10073 = vld [vmem:[#allocation3 + $0x58] sm:$0xff]
      %v10074 = vld [vmem:[#allocation3 + $0x60] sm:$0xff]
      %v10075 = vld [vmem:[#allocation3 + $0x68] sm:$0xff]
      %v10076 = vld [vmem:[#allocation3 + $0x70] sm:$0xff]
      %v10077 = vld [vmem:[#allocation3 + $0x78] sm:$0xff]
      %v10078 = vld [vmem:[#allocation3 + $0x80] sm:$0xff]
      %v10079 = vld [vmem:[#allocation3 + $0x88] sm:$0xff]
      %v10080 = vld [vmem:[#allocation3 + $0x90] sm:$0xff]
      %v10081 = vld [vmem:[#allocation3 + $0x98] sm:$0xff]
      %v10082 = vld [vmem:[#allocation3 + $0xa0] sm:$0xff]
      %v10083 = vld [vmem:[#allocation3 + $0xa8] sm:$0xff]
      %v10084 = vld [vmem:[#allocation3 + $0xb0] sm:$0xff]
      %v10085 = vld [vmem:[#allocation3 + $0xb8] sm:$0xff]
      %v10086 = vld [vmem:[#allocation3 + $0xc0] sm:$0xff]
      %v10087 = vld [vmem:[#allocation3 + $0xc8] sm:$0xff]
      %v10088 = vld [vmem:[#allocation3 + $0xd0] sm:$0xff]
      %v10089 = vld [vmem:[#allocation3 + $0xd8] sm:$0xff]
      %v10090 = vld [vmem:[#allocation3 + $0xe0] sm:$0xff]
      %v10091 = vld [vmem:[#allocation3 + $0xe8] sm:$0xff]
      %v10092 = vld [vmem:[#allocation3 + $0xf0] sm:$0xff]
      %v10093 = vld [vmem:[#allocation3 + $0xf8] sm:$0xff]
      %s10094 = scalar_lea.vmem %s8, 448
      %v10095 = vld [vmem:[%s10094] sm:$0xf]
      %v10096 = vld [vmem:[%s10094 + $0x4] sm:$0xf]
      %v10097 = vld [vmem:[%s10094 + $0x8] sm:$0xf]
      %v10098 = vld [vmem:[%s10094 + $0xc] sm:$0xf]
      %v10099 = vld [vmem:[%s10094 + $0x10] sm:$0xf]
      %v10100 = vld [vmem:[%s10094 + $0x14] sm:$0xf]
      %v10101 = vld [vmem:[%s10094 + $0x18] sm:$0xf]
      %v10102 = vld [vmem:[%s10094 + $0x1c] sm:$0xf]
      %v10103 = vld [vmem:[%s10094 + $0x20] sm:$0xf]
      %v10104 = vld [vmem:[%s10094 + $0x24] sm:$0xf]
      %v10105 = vld [vmem:[%s10094 + $0x28] sm:$0xf]
      %v10106 = vld [vmem:[%s10094 + $0x2c] sm:$0xf]
      %v10107 = vld [vmem:[%s10094 + $0x30] sm:$0xf]
      %v10108 = vld [vmem:[%s10094 + $0x34] sm:$0xf]
      %v10109 = vld [vmem:[%s10094 + $0x38] sm:$0xf]
      %v10110 = vld [vmem:[%s10094 + $0x3c] sm:$0xf]
      %v10144 = vunpack.c.l.b16 %v10029
      %v10145 = vunpack.c.l.b16 %v10030
      %v10146 = vunpack.c.l.b16 %v10031
      %v10147 = vunpack.c.l.b16 %v10032
      %v10148 = vunpack.c.l.b16 %v10033
      %v10149 = vunpack.c.l.b16 %v10034
      %v10150 = vunpack.c.l.b16 %v10035
      %v10151 = vunpack.c.l.b16 %v10036
      %v10152 = vunpack.c.l.b16 %v10037
      %v10153 = vunpack.c.l.b16 %v10038
      %v10154 = vunpack.c.l.b16 %v10039
      %v10155 = vunpack.c.l.b16 %v10040
      %v10156 = vunpack.c.l.b16 %v10041
      %v10157 = vunpack.c.l.b16 %v10042
      %v10158 = vunpack.c.l.b16 %v10043
      %v10159 = vunpack.c.l.b16 %v10044
      %v10160 = vunpack.c.l.b16 %v10045
      %v10161 = vunpack.c.l.b16 %v10046
      %v10162 = vunpack.c.l.b16 %v10047
      %v10163 = vunpack.c.l.b16 %v10048
      %v10164 = vunpack.c.l.b16 %v10049
      %v10165 = vunpack.c.l.b16 %v10050
      %v10166 = vunpack.c.l.b16 %v10051
      %v10167 = vunpack.c.l.b16 %v10052
      %v10168 = vunpack.c.l.b16 %v10053
      %v10169 = vunpack.c.l.b16 %v10054
      %v10170 = vunpack.c.l.b16 %v10055
      %v10171 = vunpack.c.l.b16 %v10056
      %v10172 = vunpack.c.l.b16 %v10057
      %v10173 = vunpack.c.l.b16 %v10058
      %v10174 = vunpack.c.l.b16 %v10059
      %v10175 = vunpack.c.l.b16 %v10060
      %v10176 = vunpack.c.l.b16 %v10061
      %v10177 = vpack.c.b16 %v10145, %v10144
      %v10178 = vpack.c.b16 %v10147, %v10146
      %v10179 = vpack.c.b16 %v10149, %v10148
      %v10180 = vpack.c.b16 %v10151, %v10150
      %v10181 = vpack.c.b16 %v10153, %v10152
      %v10182 = vpack.c.b16 %v10155, %v10154
      %v10183 = vpack.c.b16 %v10157, %v10156
      %v10184 = vpack.c.b16 %v10159, %v10158
      %v10185 = vpack.c.b16 %v10161, %v10160
      %v10186 = vpack.c.b16 %v10163, %v10162
      %v10187 = vpack.c.b16 %v10165, %v10164
      %v10188 = vpack.c.b16 %v10167, %v10166
      %v10189 = vpack.c.b16 %v10169, %v10168
      %v10190 = vpack.c.b16 %v10171, %v10170
      %v10191 = vpack.c.b16 %v10173, %v10172
      %v10192 = vpack.c.b16 %v10175, %v10174
      %v10193 = vpack.c.b16 %v10176, %v10176
      %v10195 = vshrl.u32 %v10177, 16
      %v10197 = vshll.u32 %v10177, 16
      %v10199 = vrot.slane %v10197, 1
      %v10200 = vor.u32 %v10195, %v10199
      %v10202 = vshll.u32 %v10178, 16
      %v10204 = vrot.slane %v10202, 1
      %v10205 = vsel %vm1983, %v10200, %v10204
      %v10206 = vshrl.u32 %v10178, 16
      %v10208 = vor.u32 %v10206, %v10204
      %v10210 = vshll.u32 %v10179, 16
      %v10212 = vrot.slane %v10210, 1
      %v10213 = vsel %vm1983, %v10208, %v10212
      %v10214 = vshrl.u32 %v10179, 16
      %v10216 = vor.u32 %v10214, %v10212
      %v10218 = vshll.u32 %v10180, 16
      %v10220 = vrot.slane %v10218, 1
      %v10221 = vsel %vm1983, %v10216, %v10220
      %v10222 = vshrl.u32 %v10180, 16
      %v10224 = vor.u32 %v10222, %v10220
      %v10226 = vshll.u32 %v10181, 16
      %v10228 = vrot.slane %v10226, 1
      %v10229 = vsel %vm1983, %v10224, %v10228
      %v10230 = vshrl.u32 %v10181, 16
      %v10232 = vor.u32 %v10230, %v10228
      %v10234 = vshll.u32 %v10182, 16
      %v10236 = vrot.slane %v10234, 1
      %v10237 = vsel %vm1983, %v10232, %v10236
      %v10238 = vshrl.u32 %v10182, 16
      %v10240 = vor.u32 %v10238, %v10236
      %v10242 = vshll.u32 %v10183, 16
      %v10244 = vrot.slane %v10242, 1
      %v10245 = vsel %vm1983, %v10240, %v10244
      %v10246 = vshrl.u32 %v10183, 16
      %v10248 = vor.u32 %v10246, %v10244
      %v10250 = vshll.u32 %v10184, 16
      %v10252 = vrot.slane %v10250, 1
      %v10253 = vsel %vm1983, %v10248, %v10252
      %v10254 = vshrl.u32 %v10184, 16
      %v10256 = vor.u32 %v10254, %v10252
      %v10258 = vshll.u32 %v10185, 16
      %v10260 = vrot.slane %v10258, 1
      %v10261 = vsel %vm1983, %v10256, %v10260
      %v10262 = vshrl.u32 %v10185, 16
      %v10264 = vor.u32 %v10262, %v10260
      %v10266 = vshll.u32 %v10186, 16
      %v10268 = vrot.slane %v10266, 1
      %v10269 = vsel %vm1983, %v10264, %v10268
      %v10270 = vshrl.u32 %v10186, 16
      %v10272 = vor.u32 %v10270, %v10268
      %v10274 = vshll.u32 %v10187, 16
      %v10276 = vrot.slane %v10274, 1
      %v10277 = vsel %vm1983, %v10272, %v10276
      %v10278 = vshrl.u32 %v10187, 16
      %v10280 = vor.u32 %v10278, %v10276
      %v10282 = vshll.u32 %v10188, 16
      %v10284 = vrot.slane %v10282, 1
      %v10285 = vsel %vm1983, %v10280, %v10284
      %v10286 = vshrl.u32 %v10188, 16
      %v10288 = vor.u32 %v10286, %v10284
      %v10290 = vshll.u32 %v10189, 16
      %v10292 = vrot.slane %v10290, 1
      %v10293 = vsel %vm1983, %v10288, %v10292
      %v10294 = vshrl.u32 %v10189, 16
      %v10296 = vor.u32 %v10294, %v10292
      %v10298 = vshll.u32 %v10190, 16
      %v10300 = vrot.slane %v10298, 1
      %v10301 = vsel %vm1983, %v10296, %v10300
      %v10302 = vshrl.u32 %v10190, 16
      %v10304 = vor.u32 %v10302, %v10300
      %v10306 = vshll.u32 %v10191, 16
      %v10308 = vrot.slane %v10306, 1
      %v10309 = vsel %vm1983, %v10304, %v10308
      %v10310 = vshrl.u32 %v10191, 16
      %v10312 = vor.u32 %v10310, %v10308
      %v10314 = vshll.u32 %v10192, 16
      %v10316 = vrot.slane %v10314, 1
      %v10317 = vsel %vm1983, %v10312, %v10316
      %v10318 = vshrl.u32 %v10192, 16
      %v10320 = vor.u32 %v10318, %v10316
      %v10322 = vshll.u32 %v10193, 16
      %v10324 = vrot.slane %v10322, 1
      %v10325 = vsel %vm1983, %v10320, %v10324
      %v10358 = vunpack.c.l.b16 %v10095
      %v10359 = vunpack.c.l.b16 %v10096
      %v10360 = vunpack.c.l.b16 %v10097
      %v10361 = vunpack.c.l.b16 %v10098
      %v10362 = vunpack.c.l.b16 %v10099
      %v10363 = vunpack.c.l.b16 %v10100
      %v10364 = vunpack.c.l.b16 %v10101
      %v10365 = vunpack.c.l.b16 %v10102
      %v10366 = vunpack.c.l.b16 %v10103
      %v10367 = vunpack.c.l.b16 %v10104
      %v10368 = vunpack.c.l.b16 %v10105
      %v10369 = vunpack.c.l.b16 %v10106
      %v10370 = vunpack.c.l.b16 %v10107
      %v10371 = vunpack.c.l.b16 %v10108
      %v10372 = vunpack.c.l.b16 %v10109
      %v10373 = vunpack.c.l.b16 %v10110
      %v10374 = vpack.c.b16 %v10359, %v10358
      %v10375 = vpack.c.b16 %v10361, %v10360
      %v10376 = vpack.c.b16 %v10363, %v10362
      %v10377 = vpack.c.b16 %v10365, %v10364
      %v10378 = vpack.c.b16 %v10367, %v10366
      %v10379 = vpack.c.b16 %v10369, %v10368
      %v10380 = vpack.c.b16 %v10371, %v10370
      %v10381 = vpack.c.b16 %v10373, %v10372
      %10390 = vmatpush.bf16.msra.mxu0 %v10381
      %10391 = vmatpush.bf16.msra.mxu0 %v10380
      %10392 = vmatpush.bf16.msra.mxu0 %v10379
      %10393 = vmatpush.bf16.msra.mxu0 %v10378
      %10394 = vmatpush.bf16.msra.mxu0 %v10377
      %10395 = vmatpush.bf16.msra.mxu0 %v10376
      %10396 = vmatpush.bf16.msra.mxu0 %v10375
      %10397 = vmatpush.bf16.msra.mxu0 %v10374
      %10398 = vmatmul.bf16.gmra.mxu0 %v10205
      %v10399 = vpop.f32.mrf.mxu0
      %v10400 = vadd.f32 0.0, %v10399
      %v10401 = vpop.f32.mrf.mxu0
      %v10402 = vadd.f32 0.0, %v10401
      %10403 = vmatmul.bf16.gmra.mxu0 %v10213
      %v10404 = vpop.f32.mrf.mxu0
      %v10405 = vadd.f32 0.0, %v10404
      %v10406 = vpop.f32.mrf.mxu0
      %v10407 = vadd.f32 0.0, %v10406
      %10408 = vmatmul.bf16.gmra.mxu0 %v10221
      %v10409 = vpop.f32.mrf.mxu0
      %v10410 = vadd.f32 0.0, %v10409
      %v10411 = vpop.f32.mrf.mxu0
      %v10412 = vadd.f32 0.0, %v10411
      %10413 = vmatmul.bf16.gmra.mxu0 %v10229
      %v10414 = vpop.f32.mrf.mxu0
      %v10415 = vadd.f32 0.0, %v10414
      %v10416 = vpop.f32.mrf.mxu0
      %v10417 = vadd.f32 0.0, %v10416
      %10418 = vmatmul.bf16.gmra.mxu0 %v10237
      %v10419 = vpop.f32.mrf.mxu0
      %v10420 = vadd.f32 0.0, %v10419
      %v10421 = vpop.f32.mrf.mxu0
      %v10422 = vadd.f32 0.0, %v10421
      %10423 = vmatmul.bf16.gmra.mxu0 %v10245
      %v10424 = vpop.f32.mrf.mxu0
      %v10425 = vadd.f32 0.0, %v10424
      %v10426 = vpop.f32.mrf.mxu0
      %v10427 = vadd.f32 0.0, %v10426
      %10428 = vmatmul.bf16.gmra.mxu0 %v10253
      %v10429 = vpop.f32.mrf.mxu0
      %v10430 = vadd.f32 0.0, %v10429
      %v10431 = vpop.f32.mrf.mxu0
      %v10432 = vadd.f32 0.0, %v10431
      %10433 = vmatmul.bf16.gmra.mxu0 %v10261
      %v10434 = vpop.f32.mrf.mxu0
      %v10435 = vadd.f32 0.0, %v10434
      %v10436 = vpop.f32.mrf.mxu0
      %v10437 = vadd.f32 0.0, %v10436
      %10438 = vmatmul.bf16.gmra.mxu0 %v10269
      %v10439 = vpop.f32.mrf.mxu0
      %v10440 = vadd.f32 0.0, %v10439
      %v10441 = vpop.f32.mrf.mxu0
      %v10442 = vadd.f32 0.0, %v10441
      %10443 = vmatmul.bf16.gmra.mxu0 %v10277
      %v10444 = vpop.f32.mrf.mxu0
      %v10445 = vadd.f32 0.0, %v10444
      %v10446 = vpop.f32.mrf.mxu0
      %v10447 = vadd.f32 0.0, %v10446
      %10448 = vmatmul.bf16.gmra.mxu0 %v10285
      %v10449 = vpop.f32.mrf.mxu0
      %v10450 = vadd.f32 0.0, %v10449
      %v10451 = vpop.f32.mrf.mxu0
      %v10452 = vadd.f32 0.0, %v10451
      %10453 = vmatmul.bf16.gmra.mxu0 %v10293
      %v10454 = vpop.f32.mrf.mxu0
      %v10455 = vadd.f32 0.0, %v10454
      %v10456 = vpop.f32.mrf.mxu0
      %v10457 = vadd.f32 0.0, %v10456
      %10458 = vmatmul.bf16.gmra.mxu0 %v10301
      %v10459 = vpop.f32.mrf.mxu0
      %v10460 = vadd.f32 0.0, %v10459
      %v10461 = vpop.f32.mrf.mxu0
      %v10462 = vadd.f32 0.0, %v10461
      %10463 = vmatmul.bf16.gmra.mxu0 %v10309
      %v10464 = vpop.f32.mrf.mxu0
      %v10465 = vadd.f32 0.0, %v10464
      %v10466 = vpop.f32.mrf.mxu0
      %v10467 = vadd.f32 0.0, %v10466
      %10468 = vmatmul.bf16.gmra.mxu0 %v10317
      %v10469 = vpop.f32.mrf.mxu0
      %v10470 = vadd.f32 0.0, %v10469
      %v10471 = vpop.f32.mrf.mxu0
      %v10472 = vadd.f32 0.0, %v10471
      %10473 = vmatmul.bf16.gmra.mxu0 %v10325
      %v10474 = vpop.f32.mrf.mxu0
      %v10475 = vadd.f32 0.0, %v10474
      %v10476 = vpop.f32.mrf.mxu0
      %v10477 = vadd.f32 0.0, %v10476
      %10478 = vdwg.mxu0
      %v10479 = vadd.f32 %v10062, %v10400
      %v10480 = vadd.f32 %v10063, %v10402
      %v10481 = vadd.f32 %v10064, %v10405
      %v10482 = vadd.f32 %v10065, %v10407
      %v10483 = vadd.f32 %v10066, %v10410
      %v10484 = vadd.f32 %v10067, %v10412
      %v10485 = vadd.f32 %v10068, %v10415
      %v10486 = vadd.f32 %v10069, %v10417
      %v10487 = vadd.f32 %v10070, %v10420
      %v10488 = vadd.f32 %v10071, %v10422
      %v10489 = vadd.f32 %v10072, %v10425
      %v10490 = vadd.f32 %v10073, %v10427
      %v10491 = vadd.f32 %v10074, %v10430
      %v10492 = vadd.f32 %v10075, %v10432
      %v10493 = vadd.f32 %v10076, %v10435
      %v10494 = vadd.f32 %v10077, %v10437
      %v10495 = vadd.f32 %v10078, %v10440
      %v10496 = vadd.f32 %v10079, %v10442
      %v10497 = vadd.f32 %v10080, %v10445
      %v10498 = vadd.f32 %v10081, %v10447
      %v10499 = vadd.f32 %v10082, %v10450
      %v10500 = vadd.f32 %v10083, %v10452
      %v10501 = vadd.f32 %v10084, %v10455
      %v10502 = vadd.f32 %v10085, %v10457
      %v10503 = vadd.f32 %v10086, %v10460
      %v10504 = vadd.f32 %v10087, %v10462
      %v10505 = vadd.f32 %v10088, %v10465
      %v10506 = vadd.f32 %v10089, %v10467
      %v10507 = vadd.f32 %v10090, %v10470
      %v10508 = vadd.f32 %v10091, %v10472
      %v10509 = vadd.f32 %v10092, %v10475
      %v10510 = vadd.f32 %v10093, %v10477
      %10511 = vst [vmem:[#allocation3] sm:$0xff] %v10479
      %10512 = vst [vmem:[#allocation3 + $0x8] sm:$0xff] %v10480
      %10513 = vst [vmem:[#allocation3 + $0x10] sm:$0xff] %v10481
      %10514 = vst [vmem:[#allocation3 + $0x18] sm:$0xff] %v10482
      %10515 = vst [vmem:[#allocation3 + $0x20] sm:$0xff] %v10483
      %10516 = vst [vmem:[#allocation3 + $0x28] sm:$0xff] %v10484
      %10517 = vst [vmem:[#allocation3 + $0x30] sm:$0xff] %v10485
      %10518 = vst [vmem:[#allocation3 + $0x38] sm:$0xff] %v10486
      %10519 = vst [vmem:[#allocation3 + $0x40] sm:$0xff] %v10487
      %10520 = vst [vmem:[#allocation3 + $0x48] sm:$0xff] %v10488
      %10521 = vst [vmem:[#allocation3 + $0x50] sm:$0xff] %v10489
      %10522 = vst [vmem:[#allocation3 + $0x58] sm:$0xff] %v10490
      %10523 = vst [vmem:[#allocation3 + $0x60] sm:$0xff] %v10491
      %10524 = vst [vmem:[#allocation3 + $0x68] sm:$0xff] %v10492
      %10525 = vst [vmem:[#allocation3 + $0x70] sm:$0xff] %v10493
      %10526 = vst [vmem:[#allocation3 + $0x78] sm:$0xff] %v10494
      %10527 = vst [vmem:[#allocation3 + $0x80] sm:$0xff] %v10495
      %10528 = vst [vmem:[#allocation3 + $0x88] sm:$0xff] %v10496
      %10529 = vst [vmem:[#allocation3 + $0x90] sm:$0xff] %v10497
      %10530 = vst [vmem:[#allocation3 + $0x98] sm:$0xff] %v10498
      %10531 = vst [vmem:[#allocation3 + $0xa0] sm:$0xff] %v10499
      %10532 = vst [vmem:[#allocation3 + $0xa8] sm:$0xff] %v10500
      %10533 = vst [vmem:[#allocation3 + $0xb0] sm:$0xff] %v10501
      %10534 = vst [vmem:[#allocation3 + $0xb8] sm:$0xff] %v10502
      %10535 = vst [vmem:[#allocation3 + $0xc0] sm:$0xff] %v10503
      %10536 = vst [vmem:[#allocation3 + $0xc8] sm:$0xff] %v10504
      %10537 = vst [vmem:[#allocation3 + $0xd0] sm:$0xff] %v10505
      %10538 = vst [vmem:[#allocation3 + $0xd8] sm:$0xff] %v10506
      %10539 = vst [vmem:[#allocation3 + $0xe0] sm:$0xff] %v10507
      %10540 = vst [vmem:[#allocation3 + $0xe8] sm:$0xff] %v10508
      %10541 = vst [vmem:[#allocation3 + $0xf0] sm:$0xff] %v10509
      %10542 = vst [vmem:[#allocation3 + $0xf8] sm:$0xff] %v10510
      %v10543 = vld [vmem:[#allocation2 + $0x10] sm:$0xe]
      %v10544 = vld [vmem:[#allocation2 + $0x14] sm:$0xf]
      %v10545 = vld [vmem:[#allocation2 + $0x18] sm:$0xf]
      %v10546 = vld [vmem:[#allocation2 + $0x1c] sm:$0xf]
      %v10547 = vld [vmem:[#allocation2 + $0x20] sm:$0xf]
      %v10548 = vld [vmem:[#allocation2 + $0x24] sm:$0xf]
      %v10549 = vld [vmem:[#allocation2 + $0x28] sm:$0xf]
      %v10550 = vld [vmem:[#allocation2 + $0x2c] sm:$0xf]
      %v10551 = vld [vmem:[#allocation2 + $0x30] sm:$0xf]
      %v10552 = vld [vmem:[#allocation2 + $0x34] sm:$0xf]
      %v10553 = vld [vmem:[#allocation2 + $0x38] sm:$0xf]
      %v10554 = vld [vmem:[#allocation2 + $0x3c] sm:$0xf]
      %v10555 = vld [vmem:[#allocation2 + $0x40] sm:$0xf]
      %v10556 = vld [vmem:[#allocation2 + $0x44] sm:$0xf]
      %v10557 = vld [vmem:[#allocation2 + $0x48] sm:$0xf]
      %v10558 = vld [vmem:[#allocation2 + $0x4c] sm:$0xf]
      %v10559 = vld [vmem:[#allocation2 + $0x50] sm:$0xf]
      %v10560 = vld [vmem:[#allocation2 + $0x54] sm:$0xf]
      %v10561 = vld [vmem:[#allocation2 + $0x58] sm:$0xf]
      %v10562 = vld [vmem:[#allocation2 + $0x5c] sm:$0xf]
      %v10563 = vld [vmem:[#allocation2 + $0x60] sm:$0xf]
      %v10564 = vld [vmem:[#allocation2 + $0x64] sm:$0xf]
      %v10565 = vld [vmem:[#allocation2 + $0x68] sm:$0xf]
      %v10566 = vld [vmem:[#allocation2 + $0x6c] sm:$0xf]
      %v10567 = vld [vmem:[#allocation2 + $0x70] sm:$0xf]
      %v10568 = vld [vmem:[#allocation2 + $0x74] sm:$0xf]
      %v10569 = vld [vmem:[#allocation2 + $0x78] sm:$0xf]
      %v10570 = vld [vmem:[#allocation2 + $0x7c] sm:$0xf]
      %v10571 = vld [vmem:[#allocation2 + $0x80] sm:$0xf]
      %v10572 = vld [vmem:[#allocation2 + $0x84] sm:$0xf]
      %v10573 = vld [vmem:[#allocation2 + $0x88] sm:$0xf]
      %v10574 = vld [vmem:[#allocation2 + $0x8c] sm:$0xf]
      %v10575 = vld [vmem:[#allocation2 + $0x90] sm:$0x1]
      %v10576 = vsel %vm2693, %v10543, 0
      %v10577 = vsel %vm2700, %v10544, 0
      %v10578 = vsel %vm2707, %v10545, 0
      %v10579 = vsel %vm2714, %v10546, 0
      %v10580 = vsel %vm2721, %v10547, 0
      %v10581 = vsel %vm2728, %v10548, 0
      %v10582 = vsel %vm2735, %v10549, 0
      %v10583 = vsel %vm2742, %v10550, 0
      %v10584 = vsel %vm2749, %v10551, 0
      %v10585 = vsel %vm2756, %v10552, 0
      %v10586 = vsel %vm2763, %v10553, 0
      %v10587 = vsel %vm2770, %v10554, 0
      %v10588 = vsel %vm2777, %v10555, 0
      %v10589 = vsel %vm2784, %v10556, 0
      %v10590 = vsel %vm2791, %v10557, 0
      %v10591 = vsel %vm2798, %v10558, 0
      %v10592 = vsel %vm2805, %v10559, 0
      %v10593 = vsel %vm2812, %v10560, 0
      %v10594 = vsel %vm2819, %v10561, 0
      %v10595 = vsel %vm2826, %v10562, 0
      %v10596 = vsel %vm2833, %v10563, 0
      %v10597 = vsel %vm2840, %v10564, 0
      %v10598 = vsel %vm2847, %v10565, 0
      %v10599 = vsel %vm2854, %v10566, 0
      %v10600 = vsel %vm2861, %v10567, 0
      %v10601 = vsel %vm2868, %v10568, 0
      %v10602 = vsel %vm2875, %v10569, 0
      %v10603 = vsel %vm2882, %v10570, 0
      %v10604 = vsel %vm2889, %v10571, 0
      %v10605 = vsel %vm2896, %v10572, 0
      %v10606 = vsel %vm2903, %v10573, 0
      %v10607 = vsel %vm2910, %v10574, 0
      %v10608 = vsel %vm2917, %v10575, 0
      %v10609 = vld [vmem:[#allocation3] sm:$0xff]
      %v10610 = vld [vmem:[#allocation3 + $0x8] sm:$0xff]
      %v10611 = vld [vmem:[#allocation3 + $0x10] sm:$0xff]
      %v10612 = vld [vmem:[#allocation3 + $0x18] sm:$0xff]
      %v10613 = vld [vmem:[#allocation3 + $0x20] sm:$0xff]
      %v10614 = vld [vmem:[#allocation3 + $0x28] sm:$0xff]
      %v10615 = vld [vmem:[#allocation3 + $0x30] sm:$0xff]
      %v10616 = vld [vmem:[#allocation3 + $0x38] sm:$0xff]
      %v10617 = vld [vmem:[#allocation3 + $0x40] sm:$0xff]
      %v10618 = vld [vmem:[#allocation3 + $0x48] sm:$0xff]
      %v10619 = vld [vmem:[#allocation3 + $0x50] sm:$0xff]
      %v10620 = vld [vmem:[#allocation3 + $0x58] sm:$0xff]
      %v10621 = vld [vmem:[#allocation3 + $0x60] sm:$0xff]
      %v10622 = vld [vmem:[#allocation3 + $0x68] sm:$0xff]
      %v10623 = vld [vmem:[#allocation3 + $0x70] sm:$0xff]
      %v10624 = vld [vmem:[#allocation3 + $0x78] sm:$0xff]
      %v10625 = vld [vmem:[#allocation3 + $0x80] sm:$0xff]
      %v10626 = vld [vmem:[#allocation3 + $0x88] sm:$0xff]
      %v10627 = vld [vmem:[#allocation3 + $0x90] sm:$0xff]
      %v10628 = vld [vmem:[#allocation3 + $0x98] sm:$0xff]
      %v10629 = vld [vmem:[#allocation3 + $0xa0] sm:$0xff]
      %v10630 = vld [vmem:[#allocation3 + $0xa8] sm:$0xff]
      %v10631 = vld [vmem:[#allocation3 + $0xb0] sm:$0xff]
      %v10632 = vld [vmem:[#allocation3 + $0xb8] sm:$0xff]
      %v10633 = vld [vmem:[#allocation3 + $0xc0] sm:$0xff]
      %v10634 = vld [vmem:[#allocation3 + $0xc8] sm:$0xff]
      %v10635 = vld [vmem:[#allocation3 + $0xd0] sm:$0xff]
      %v10636 = vld [vmem:[#allocation3 + $0xd8] sm:$0xff]
      %v10637 = vld [vmem:[#allocation3 + $0xe0] sm:$0xff]
      %v10638 = vld [vmem:[#allocation3 + $0xe8] sm:$0xff]
      %v10639 = vld [vmem:[#allocation3 + $0xf0] sm:$0xff]
      %v10640 = vld [vmem:[#allocation3 + $0xf8] sm:$0xff]
      %s10641 = scalar_lea.vmem %s8, 512
      %v10642 = vld [vmem:[%s10641] sm:$0xf]
      %v10643 = vld [vmem:[%s10641 + $0x4] sm:$0xf]
      %v10644 = vld [vmem:[%s10641 + $0x8] sm:$0xf]
      %v10645 = vld [vmem:[%s10641 + $0xc] sm:$0xf]
      %v10646 = vld [vmem:[%s10641 + $0x10] sm:$0xf]
      %v10647 = vld [vmem:[%s10641 + $0x14] sm:$0xf]
      %v10648 = vld [vmem:[%s10641 + $0x18] sm:$0xf]
      %v10649 = vld [vmem:[%s10641 + $0x1c] sm:$0xf]
      %v10650 = vld [vmem:[%s10641 + $0x20] sm:$0xf]
      %v10651 = vld [vmem:[%s10641 + $0x24] sm:$0xf]
      %v10652 = vld [vmem:[%s10641 + $0x28] sm:$0xf]
      %v10653 = vld [vmem:[%s10641 + $0x2c] sm:$0xf]
      %v10654 = vld [vmem:[%s10641 + $0x30] sm:$0xf]
      %v10655 = vld [vmem:[%s10641 + $0x34] sm:$0xf]
      %v10656 = vld [vmem:[%s10641 + $0x38] sm:$0xf]
      %v10657 = vld [vmem:[%s10641 + $0x3c] sm:$0xf]
      %v10691 = vunpack.c.l.b16 %v10576
      %v10692 = vunpack.c.l.b16 %v10577
      %v10693 = vunpack.c.l.b16 %v10578
      %v10694 = vunpack.c.l.b16 %v10579
      %v10695 = vunpack.c.l.b16 %v10580
      %v10696 = vunpack.c.l.b16 %v10581
      %v10697 = vunpack.c.l.b16 %v10582
      %v10698 = vunpack.c.l.b16 %v10583
      %v10699 = vunpack.c.l.b16 %v10584
      %v10700 = vunpack.c.l.b16 %v10585
      %v10701 = vunpack.c.l.b16 %v10586
      %v10702 = vunpack.c.l.b16 %v10587
      %v10703 = vunpack.c.l.b16 %v10588
      %v10704 = vunpack.c.l.b16 %v10589
      %v10705 = vunpack.c.l.b16 %v10590
      %v10706 = vunpack.c.l.b16 %v10591
      %v10707 = vunpack.c.l.b16 %v10592
      %v10708 = vunpack.c.l.b16 %v10593
      %v10709 = vunpack.c.l.b16 %v10594
      %v10710 = vunpack.c.l.b16 %v10595
      %v10711 = vunpack.c.l.b16 %v10596
      %v10712 = vunpack.c.l.b16 %v10597
      %v10713 = vunpack.c.l.b16 %v10598
      %v10714 = vunpack.c.l.b16 %v10599
      %v10715 = vunpack.c.l.b16 %v10600
      %v10716 = vunpack.c.l.b16 %v10601
      %v10717 = vunpack.c.l.b16 %v10602
      %v10718 = vunpack.c.l.b16 %v10603
      %v10719 = vunpack.c.l.b16 %v10604
      %v10720 = vunpack.c.l.b16 %v10605
      %v10721 = vunpack.c.l.b16 %v10606
      %v10722 = vunpack.c.l.b16 %v10607
      %v10723 = vunpack.c.l.b16 %v10608
      %v10724 = vpack.c.b16 %v10692, %v10691
      %v10725 = vpack.c.b16 %v10694, %v10693
      %v10726 = vpack.c.b16 %v10696, %v10695
      %v10727 = vpack.c.b16 %v10698, %v10697
      %v10728 = vpack.c.b16 %v10700, %v10699
      %v10729 = vpack.c.b16 %v10702, %v10701
      %v10730 = vpack.c.b16 %v10704, %v10703
      %v10731 = vpack.c.b16 %v10706, %v10705
      %v10732 = vpack.c.b16 %v10708, %v10707
      %v10733 = vpack.c.b16 %v10710, %v10709
      %v10734 = vpack.c.b16 %v10712, %v10711
      %v10735 = vpack.c.b16 %v10714, %v10713
      %v10736 = vpack.c.b16 %v10716, %v10715
      %v10737 = vpack.c.b16 %v10718, %v10717
      %v10738 = vpack.c.b16 %v10720, %v10719
      %v10739 = vpack.c.b16 %v10722, %v10721
      %v10740 = vpack.c.b16 %v10723, %v10723
      %v10741 = vrot.slane %v10724, 1
      %v10742 = vrot.slane %v10725, 1
      %v10743 = vsel %vm3083, %v10741, %v10742
      %v10744 = vrot.slane %v10726, 1
      %v10745 = vsel %vm3083, %v10742, %v10744
      %v10746 = vrot.slane %v10727, 1
      %v10747 = vsel %vm3083, %v10744, %v10746
      %v10748 = vrot.slane %v10728, 1
      %v10749 = vsel %vm3083, %v10746, %v10748
      %v10750 = vrot.slane %v10729, 1
      %v10751 = vsel %vm3083, %v10748, %v10750
      %v10752 = vrot.slane %v10730, 1
      %v10753 = vsel %vm3083, %v10750, %v10752
      %v10754 = vrot.slane %v10731, 1
      %v10755 = vsel %vm3083, %v10752, %v10754
      %v10756 = vrot.slane %v10732, 1
      %v10757 = vsel %vm3083, %v10754, %v10756
      %v10758 = vrot.slane %v10733, 1
      %v10759 = vsel %vm3083, %v10756, %v10758
      %v10760 = vrot.slane %v10734, 1
      %v10761 = vsel %vm3083, %v10758, %v10760
      %v10762 = vrot.slane %v10735, 1
      %v10763 = vsel %vm3083, %v10760, %v10762
      %v10764 = vrot.slane %v10736, 1
      %v10765 = vsel %vm3083, %v10762, %v10764
      %v10766 = vrot.slane %v10737, 1
      %v10767 = vsel %vm3083, %v10764, %v10766
      %v10768 = vrot.slane %v10738, 1
      %v10769 = vsel %vm3083, %v10766, %v10768
      %v10770 = vrot.slane %v10739, 1
      %v10771 = vsel %vm3083, %v10768, %v10770
      %v10772 = vrot.slane %v10740, 1
      %v10773 = vsel %vm3083, %v10770, %v10772
      %v10806 = vunpack.c.l.b16 %v10642
      %v10807 = vunpack.c.l.b16 %v10643
      %v10808 = vunpack.c.l.b16 %v10644
      %v10809 = vunpack.c.l.b16 %v10645
      %v10810 = vunpack.c.l.b16 %v10646
      %v10811 = vunpack.c.l.b16 %v10647
      %v10812 = vunpack.c.l.b16 %v10648
      %v10813 = vunpack.c.l.b16 %v10649
      %v10814 = vunpack.c.l.b16 %v10650
      %v10815 = vunpack.c.l.b16 %v10651
      %v10816 = vunpack.c.l.b16 %v10652
      %v10817 = vunpack.c.l.b16 %v10653
      %v10818 = vunpack.c.l.b16 %v10654
      %v10819 = vunpack.c.l.b16 %v10655
      %v10820 = vunpack.c.l.b16 %v10656
      %v10821 = vunpack.c.l.b16 %v10657
      %v10822 = vpack.c.b16 %v10807, %v10806
      %v10823 = vpack.c.b16 %v10809, %v10808
      %v10824 = vpack.c.b16 %v10811, %v10810
      %v10825 = vpack.c.b16 %v10813, %v10812
      %v10826 = vpack.c.b16 %v10815, %v10814
      %v10827 = vpack.c.b16 %v10817, %v10816
      %v10828 = vpack.c.b16 %v10819, %v10818
      %v10829 = vpack.c.b16 %v10821, %v10820
      %10838 = vmatpush.bf16.msra.mxu0 %v10829
      %10839 = vmatpush.bf16.msra.mxu0 %v10828
      %10840 = vmatpush.bf16.msra.mxu0 %v10827
      %10841 = vmatpush.bf16.msra.mxu0 %v10826
      %10842 = vmatpush.bf16.msra.mxu0 %v10825
      %10843 = vmatpush.bf16.msra.mxu0 %v10824
      %10844 = vmatpush.bf16.msra.mxu0 %v10823
      %10845 = vmatpush.bf16.msra.mxu0 %v10822
      %10846 = vmatmul.bf16.gmra.mxu0 %v10743
      %v10847 = vpop.f32.mrf.mxu0
      %v10848 = vadd.f32 0.0, %v10847
      %v10849 = vpop.f32.mrf.mxu0
      %v10850 = vadd.f32 0.0, %v10849
      %10851 = vmatmul.bf16.gmra.mxu0 %v10745
      %v10852 = vpop.f32.mrf.mxu0
      %v10853 = vadd.f32 0.0, %v10852
      %v10854 = vpop.f32.mrf.mxu0
      %v10855 = vadd.f32 0.0, %v10854
      %10856 = vmatmul.bf16.gmra.mxu0 %v10747
      %v10857 = vpop.f32.mrf.mxu0
      %v10858 = vadd.f32 0.0, %v10857
      %v10859 = vpop.f32.mrf.mxu0
      %v10860 = vadd.f32 0.0, %v10859
      %10861 = vmatmul.bf16.gmra.mxu0 %v10749
      %v10862 = vpop.f32.mrf.mxu0
      %v10863 = vadd.f32 0.0, %v10862
      %v10864 = vpop.f32.mrf.mxu0
      %v10865 = vadd.f32 0.0, %v10864
      %10866 = vmatmul.bf16.gmra.mxu0 %v10751
      %v10867 = vpop.f32.mrf.mxu0
      %v10868 = vadd.f32 0.0, %v10867
      %v10869 = vpop.f32.mrf.mxu0
      %v10870 = vadd.f32 0.0, %v10869
      %10871 = vmatmul.bf16.gmra.mxu0 %v10753
      %v10872 = vpop.f32.mrf.mxu0
      %v10873 = vadd.f32 0.0, %v10872
      %v10874 = vpop.f32.mrf.mxu0
      %v10875 = vadd.f32 0.0, %v10874
      %10876 = vmatmul.bf16.gmra.mxu0 %v10755
      %v10877 = vpop.f32.mrf.mxu0
      %v10878 = vadd.f32 0.0, %v10877
      %v10879 = vpop.f32.mrf.mxu0
      %v10880 = vadd.f32 0.0, %v10879
      %10881 = vmatmul.bf16.gmra.mxu0 %v10757
      %v10882 = vpop.f32.mrf.mxu0
      %v10883 = vadd.f32 0.0, %v10882
      %v10884 = vpop.f32.mrf.mxu0
      %v10885 = vadd.f32 0.0, %v10884
      %10886 = vmatmul.bf16.gmra.mxu0 %v10759
      %v10887 = vpop.f32.mrf.mxu0
      %v10888 = vadd.f32 0.0, %v10887
      %v10889 = vpop.f32.mrf.mxu0
      %v10890 = vadd.f32 0.0, %v10889
      %10891 = vmatmul.bf16.gmra.mxu0 %v10761
      %v10892 = vpop.f32.mrf.mxu0
      %v10893 = vadd.f32 0.0, %v10892
      %v10894 = vpop.f32.mrf.mxu0
      %v10895 = vadd.f32 0.0, %v10894
      %10896 = vmatmul.bf16.gmra.mxu0 %v10763
      %v10897 = vpop.f32.mrf.mxu0
      %v10898 = vadd.f32 0.0, %v10897
      %v10899 = vpop.f32.mrf.mxu0
      %v10900 = vadd.f32 0.0, %v10899
      %10901 = vmatmul.bf16.gmra.mxu0 %v10765
      %v10902 = vpop.f32.mrf.mxu0
      %v10903 = vadd.f32 0.0, %v10902
      %v10904 = vpop.f32.mrf.mxu0
      %v10905 = vadd.f32 0.0, %v10904
      %10906 = vmatmul.bf16.gmra.mxu0 %v10767
      %v10907 = vpop.f32.mrf.mxu0
      %v10908 = vadd.f32 0.0, %v10907
      %v10909 = vpop.f32.mrf.mxu0
      %v10910 = vadd.f32 0.0, %v10909
      %10911 = vmatmul.bf16.gmra.mxu0 %v10769
      %v10912 = vpop.f32.mrf.mxu0
      %v10913 = vadd.f32 0.0, %v10912
      %v10914 = vpop.f32.mrf.mxu0
      %v10915 = vadd.f32 0.0, %v10914
      %10916 = vmatmul.bf16.gmra.mxu0 %v10771
      %v10917 = vpop.f32.mrf.mxu0
      %v10918 = vadd.f32 0.0, %v10917
      %v10919 = vpop.f32.mrf.mxu0
      %v10920 = vadd.f32 0.0, %v10919
      %10921 = vmatmul.bf16.gmra.mxu0 %v10773
      %v10922 = vpop.f32.mrf.mxu0
      %v10923 = vadd.f32 0.0, %v10922
      %v10924 = vpop.f32.mrf.mxu0
      %v10925 = vadd.f32 0.0, %v10924
      %10926 = vdwg.mxu0
      %v10927 = vadd.f32 %v10609, %v10848
      %v10928 = vadd.f32 %v10610, %v10850
      %v10929 = vadd.f32 %v10611, %v10853
      %v10930 = vadd.f32 %v10612, %v10855
      %v10931 = vadd.f32 %v10613, %v10858
      %v10932 = vadd.f32 %v10614, %v10860
      %v10933 = vadd.f32 %v10615, %v10863
      %v10934 = vadd.f32 %v10616, %v10865
      %v10935 = vadd.f32 %v10617, %v10868
      %v10936 = vadd.f32 %v10618, %v10870
      %v10937 = vadd.f32 %v10619, %v10873
      %v10938 = vadd.f32 %v10620, %v10875
      %v10939 = vadd.f32 %v10621, %v10878
      %v10940 = vadd.f32 %v10622, %v10880
      %v10941 = vadd.f32 %v10623, %v10883
      %v10942 = vadd.f32 %v10624, %v10885
      %v10943 = vadd.f32 %v10625, %v10888
      %v10944 = vadd.f32 %v10626, %v10890
      %v10945 = vadd.f32 %v10627, %v10893
      %v10946 = vadd.f32 %v10628, %v10895
      %v10947 = vadd.f32 %v10629, %v10898
      %v10948 = vadd.f32 %v10630, %v10900
      %v10949 = vadd.f32 %v10631, %v10903
      %v10950 = vadd.f32 %v10632, %v10905
      %v10951 = vadd.f32 %v10633, %v10908
      %v10952 = vadd.f32 %v10634, %v10910
      %v10953 = vadd.f32 %v10635, %v10913
      %v10954 = vadd.f32 %v10636, %v10915
      %v10955 = vadd.f32 %v10637, %v10918
      %v10956 = vadd.f32 %v10638, %v10920
      %v10957 = vadd.f32 %v10639, %v10923
      %v10958 = vadd.f32 %v10640, %v10925
      %10959 = vst [vmem:[#allocation3] sm:$0xff] %v10927
      %10960 = vst [vmem:[#allocation3 + $0x8] sm:$0xff] %v10928
      %10961 = vst [vmem:[#allocation3 + $0x10] sm:$0xff] %v10929
      %10962 = vst [vmem:[#allocation3 + $0x18] sm:$0xff] %v10930
      %10963 = vst [vmem:[#allocation3 + $0x20] sm:$0xff] %v10931
      %10964 = vst [vmem:[#allocation3 + $0x28] sm:$0xff] %v10932
      %10965 = vst [vmem:[#allocation3 + $0x30] sm:$0xff] %v10933
      %10966 = vst [vmem:[#allocation3 + $0x38] sm:$0xff] %v10934
      %10967 = vst [vmem:[#allocation3 + $0x40] sm:$0xff] %v10935
      %10968 = vst [vmem:[#allocation3 + $0x48] sm:$0xff] %v10936
      %10969 = vst [vmem:[#allocation3 + $0x50] sm:$0xff] %v10937
      %10970 = vst [vmem:[#allocation3 + $0x58] sm:$0xff] %v10938
      %10971 = vst [vmem:[#allocation3 + $0x60] sm:$0xff] %v10939
      %10972 = vst [vmem:[#allocation3 + $0x68] sm:$0xff] %v10940
      %10973 = vst [vmem:[#allocation3 + $0x70] sm:$0xff] %v10941
      %10974 = vst [vmem:[#allocation3 + $0x78] sm:$0xff] %v10942
      %10975 = vst [vmem:[#allocation3 + $0x80] sm:$0xff] %v10943
      %10976 = vst [vmem:[#allocation3 + $0x88] sm:$0xff] %v10944
      %10977 = vst [vmem:[#allocation3 + $0x90] sm:$0xff] %v10945
      %10978 = vst [vmem:[#allocation3 + $0x98] sm:$0xff] %v10946
      %10979 = vst [vmem:[#allocation3 + $0xa0] sm:$0xff] %v10947
      %10980 = vst [vmem:[#allocation3 + $0xa8] sm:$0xff] %v10948
      %10981 = vst [vmem:[#allocation3 + $0xb0] sm:$0xff] %v10949
      %10982 = vst [vmem:[#allocation3 + $0xb8] sm:$0xff] %v10950
      %10983 = vst [vmem:[#allocation3 + $0xc0] sm:$0xff] %v10951
      %10984 = vst [vmem:[#allocation3 + $0xc8] sm:$0xff] %v10952
      %10985 = vst [vmem:[#allocation3 + $0xd0] sm:$0xff] %v10953
      %10986 = vst [vmem:[#allocation3 + $0xd8] sm:$0xff] %v10954
      %10987 = vst [vmem:[#allocation3 + $0xe0] sm:$0xff] %v10955
      %10988 = vst [vmem:[#allocation3 + $0xe8] sm:$0xff] %v10956
      %10989 = vst [vmem:[#allocation3 + $0xf0] sm:$0xff] %v10957
      %10990 = vst [vmem:[#allocation3 + $0xf8] sm:$0xff] %v10958
      %v10991 = vld [vmem:[#allocation3] sm:$0xff]
      %v10992 = vld [vmem:[#allocation3 + $0x8] sm:$0xff]
      %v10993 = vld [vmem:[#allocation3 + $0x10] sm:$0xff]
      %v10994 = vld [vmem:[#allocation3 + $0x18] sm:$0xff]
      %v10995 = vld [vmem:[#allocation3 + $0x20] sm:$0xff]
      %v10996 = vld [vmem:[#allocation3 + $0x28] sm:$0xff]
      %v10997 = vld [vmem:[#allocation3 + $0x30] sm:$0xff]
      %v10998 = vld [vmem:[#allocation3 + $0x38] sm:$0xff]
      %v10999 = vld [vmem:[#allocation3 + $0x40] sm:$0xff]
      %v11000 = vld [vmem:[#allocation3 + $0x48] sm:$0xff]
      %v11001 = vld [vmem:[#allocation3 + $0x50] sm:$0xff]
      %v11002 = vld [vmem:[#allocation3 + $0x58] sm:$0xff]
      %v11003 = vld [vmem:[#allocation3 + $0x60] sm:$0xff]
      %v11004 = vld [vmem:[#allocation3 + $0x68] sm:$0xff]
      %v11005 = vld [vmem:[#allocation3 + $0x70] sm:$0xff]
      %v11006 = vld [vmem:[#allocation3 + $0x78] sm:$0xff]
      %v11007 = vld [vmem:[#allocation3 + $0x80] sm:$0xff]
      %v11008 = vld [vmem:[#allocation3 + $0x88] sm:$0xff]
      %v11009 = vld [vmem:[#allocation3 + $0x90] sm:$0xff]
      %v11010 = vld [vmem:[#allocation3 + $0x98] sm:$0xff]
      %v11011 = vld [vmem:[#allocation3 + $0xa0] sm:$0xff]
      %v11012 = vld [vmem:[#allocation3 + $0xa8] sm:$0xff]
      %v11013 = vld [vmem:[#allocation3 + $0xb0] sm:$0xff]
      %v11014 = vld [vmem:[#allocation3 + $0xb8] sm:$0xff]
      %v11015 = vld [vmem:[#allocation3 + $0xc0] sm:$0xff]
      %v11016 = vld [vmem:[#allocation3 + $0xc8] sm:$0xff]
      %v11017 = vld [vmem:[#allocation3 + $0xd0] sm:$0xff]
      %v11018 = vld [vmem:[#allocation3 + $0xd8] sm:$0xff]
      %v11019 = vld [vmem:[#allocation3 + $0xe0] sm:$0xff]
      %v11020 = vld [vmem:[#allocation3 + $0xe8] sm:$0xff]
      %v11021 = vld [vmem:[#allocation3 + $0xf0] sm:$0xff]
      %v11022 = vld [vmem:[#allocation3 + $0xf8] sm:$0xff]
      %11023 = vst [vmem:[%s332] sm:$0xff] %v10991
      %11024 = vst [vmem:[%s332 + $0x8] sm:$0xff] %v10992
      %11025 = vst [vmem:[%s332 + $0x10] sm:$0xff] %v10993
      %11026 = vst [vmem:[%s332 + $0x18] sm:$0xff] %v10994
      %11027 = vst [vmem:[%s332 + $0x20] sm:$0xff] %v10995
      %11028 = vst [vmem:[%s332 + $0x28] sm:$0xff] %v10996
      %11029 = vst [vmem:[%s332 + $0x30] sm:$0xff] %v10997
      %11030 = vst [vmem:[%s332 + $0x38] sm:$0xff] %v10998
      %11031 = vst [vmem:[%s332 + $0x40] sm:$0xff] %v10999
      %11032 = vst [vmem:[%s332 + $0x48] sm:$0xff] %v11000
      %11033 = vst [vmem:[%s332 + $0x50] sm:$0xff] %v11001
      %11034 = vst [vmem:[%s332 + $0x58] sm:$0xff] %v11002
      %11035 = vst [vmem:[%s332 + $0x60] sm:$0xff] %v11003
      %11036 = vst [vmem:[%s332 + $0x68] sm:$0xff] %v11004
      %11037 = vst [vmem:[%s332 + $0x70] sm:$0xff] %v11005
      %11038 = vst [vmem:[%s332 + $0x78] sm:$0xff] %v11006
      %11039 = vst [vmem:[%s332 + $0x80] sm:$0xff] %v11007
      %11040 = vst [vmem:[%s332 + $0x88] sm:$0xff] %v11008
      %11041 = vst [vmem:[%s332 + $0x90] sm:$0xff] %v11009
      %11042 = vst [vmem:[%s332 + $0x98] sm:$0xff] %v11010
      %11043 = vst [vmem:[%s332 + $0xa0] sm:$0xff] %v11011
      %11044 = vst [vmem:[%s332 + $0xa8] sm:$0xff] %v11012
      %11045 = vst [vmem:[%s332 + $0xb0] sm:$0xff] %v11013
      %11046 = vst [vmem:[%s332 + $0xb8] sm:$0xff] %v11014
      %11047 = vst [vmem:[%s332 + $0xc0] sm:$0xff] %v11015
      %11048 = vst [vmem:[%s332 + $0xc8] sm:$0xff] %v11016
      %11049 = vst [vmem:[%s332 + $0xd0] sm:$0xff] %v11017
      %11050 = vst [vmem:[%s332 + $0xd8] sm:$0xff] %v11018
      %11051 = vst [vmem:[%s332 + $0xe0] sm:$0xff] %v11019
      %11052 = vst [vmem:[%s332 + $0xe8] sm:$0xff] %v11020
      %11053 = vst [vmem:[%s332 + $0xf0] sm:$0xff] %v11021
      %11054 = vst [vmem:[%s332 + $0xf8] sm:$0xff] %v11022
      %p11055 = scmp.lt.s32.totalorder %s20, 1
      %s11056 = scalar_select %p11055, %s20, 1
      %s11057 = smul.addr %s11056, 32
      %s11058 = smul.addr %s11057, 8
      %s11059 = scalar_lea.vmem %s9, %s11058
      // Predicated region
      $region57: #{resblock_forward.1} parent=55 // pred_check
        %p11060 = pneg %p232
      $region58: #{resblock_forward.1} parent=55 // pred_check_branch
        %11062 = sbr.rel (%p11060) target = $region60
      $region59: #{resblock_forward.1} parent=55 // pred_region
        _
      $region60: #{resblock_forward.1} parent=55 // pred_fallthru
        _
    $region56: #{resblock_forward.1} parent=5 // pred_fallthru
      _
    %p11063 = scmp.le.s32.totalorder 2, %s15
    // Predicated region
    $region61: #{resblock_forward.1} parent=5 // pred_check
      %p11064 = pneg %p11063
    $region62: #{resblock_forward.1} parent=5 // pred_check_branch
      %11066 = sbr.rel (%p11064) target = $region64
    $region63: #{resblock_forward.1} parent=5 // pred_region
      %s11067 = ssub.s32 %s15, 2
      // Predicated region
      $region65: #{resblock_forward.1} parent=63 // pred_check
        %p11068 = pneg %p238
      $region66: #{resblock_forward.1} parent=63 // pred_check_branch
        %11070 = sbr.rel (%p11068) target = $region68
      $region67: #{resblock_forward.1} parent=63 // pred_region
        %p11071 = scmp.lt.s32.totalorder %s21, 1
        %s11072 = scalar_select %p11071, %s21, 1
        %s11073 = smul.addr %s11072, 32
        %s11074 = smul.addr %s11073, 8
        %s11075 = scalar_lea.vmem %s9, %s11074
      $region68: #{resblock_forward.1} parent=63 // pred_fallthru
        _
    $region64: #{resblock_forward.1} parent=5 // pred_fallthru
      _
  $region6: #{resblock_forward.1} parent=0 // loop_footer
    %s19 = sadd.s32 1, %s15
  $region7: #{resblock_forward.1} parent=0 // loop_footer_branch
    %14 = sbr.rel target = $region3
  $region8: #{resblock_forward.1} parent=0 // loop_exit
    _

</llo_original>
